<compile_context>
chip_gen: v5e
topology: v5e:2x2
jax: 0.10.0
libtpu: 0.0.40
codegen_flags: <defaults>
</compile_context>

<pallas_src>
import functools

import jax
import jax.numpy as jnp
from jax import lax
from jax.experimental import pallas as pl
from jax.experimental.pallas import tpu as pltpu


# ----------------------------------------------------------------------------
# Pallas kernel: the whole Expand.forward for one batch element
# ----------------------------------------------------------------------------
def _expand_kernel(x_ref, wa_ref, sa_ref, ba_ref, wb_ref, sb_ref, bb_ref,
                   o_ref, xpa_ref, xpb_ref, *,
                   H, W, CIN, COUT, HA, KHA, PHA, KHB, PHB):
    """Fused (deconv-as-conv)+BN+ReLU -> conv+BN+ReLU.

    x_ref  : (1, H, W*CIN)          input, flattened NHWC (lanes = W*CIN), f32
    wa_ref : (KHA*W*CIN,  W*COUT)   banded bf16 weight, stage A (W pad folded in)
    wb_ref : (KHB*W*COUT, W*COUT)   banded bf16 weight, stage B (W pad folded in)
    s*/b*  : (1, W*COUT)            folded BN scale / bias (tiled over W), f32
    o_ref  : (1, HA, W*COUT)        output, flattened NHWC, f32
    xpa_ref: (H  + 2*PHA, W*CIN)    bf16 VMEM scratch, H-padded input
    xpb_ref: (HA + 2*PHB, W*COUT)   bf16 VMEM scratch, H-padded stage-A output
    """
    WCIN = W * CIN
    WCOUT = W * COUT

    # ------------- stage A: ConvTranspose2d(21x3, pad=1) as a conv -------------
    # zero only the H halo rows (W boundary handling lives in the banded
    # weight); interior rows are fully overwritten every grid step.
    xpa_ref[0:PHA, :] = jnp.zeros((PHA, WCIN), xpa_ref.dtype)
    xpa_ref[PHA + H:2 * PHA + H, :] = jnp.zeros((PHA, WCIN), xpa_ref.dtype)
    xpa_ref[PHA:PHA + H, :] = x_ref[0].astype(xpa_ref.dtype)

    # deep-K matmul: lhs[h, kh*W*CIN + j] = xpa[h + kh, j]   (bf16 directly)
    lhs_a = jnp.concatenate(
        [xpa_ref[kh:kh + HA, :] for kh in range(KHA)], axis=-1)   # (HA, KHA*WCIN)
    acc_a = jnp.dot(lhs_a, wa_ref[...],
                    preferred_element_type=jnp.float32)           # (HA, WCOUT) f32
    y1 = jnp.maximum(acc_a * sa_ref[0] + ba_ref[0], 0.0)          # BN + ReLU, f32

    # ------------- stage B: Conv2d(3x3, pad=1) -------------
    xpb_ref[0:PHB, :] = jnp.zeros((PHB, WCOUT), xpb_ref.dtype)
    xpb_ref[PHB + HA:2 * PHB + HA, :] = jnp.zeros((PHB, WCOUT), xpb_ref.dtype)
    xpb_ref[PHB:PHB + HA, :] = y1.astype(xpb_ref.dtype)           # bf16 store

    # chunks are 512 lanes wide -> every concat offset is 128-lane aligned
    lhs_b = jnp.concatenate(
        [xpb_ref[kh:kh + HA, :] for kh in range(KHB)], axis=-1)   # (HA, KHB*WCOUT)
    acc_b = jnp.dot(lhs_b, wb_ref[...],
                    preferred_element_type=jnp.float32)           # (HA, WCOUT) f32
    y2 = jnp.maximum(acc_b * sb_ref[0] + bb_ref[0], 0.0)

    o_ref[0] = y2.astype(o_ref.dtype)                             # 512-lane store


# ----------------------------------------------------------------------------
# Parameter preparation (host side, runs once)
# ----------------------------------------------------------------------------
def _banded_weight(w_hwio, w_out, pw, dtype):
    """Banded matrix over the UNPADDED W axis: (KH*W*CIN, W*COUT).

    band[kh*W*CIN + w_in*CIN + ci, w*COUT + co] = w_hwio[kh, w_in - w + pw, ci, co]
    whenever 0 <= w_in - w + pw < KW; positions that would read the implicit
    W zero padding are simply dropped (stay zero), so the activation scratch
    never needs W padding.
    """
    KH, KW, CIN, COUT = (int(d) for d in w_hwio.shape)
    wb = jnp.zeros((KH, w_out, CIN, w_out, COUT), jnp.float32)
    for w in range(w_out):
        for kw in range(KW):
            w_in = w + kw - pw
            if 0 <= w_in < w_out:
                wb = wb.at[:, w_in, :, w, :].set(w_hwio[:, kw, :, :])
    return wb.reshape(KH * w_out * CIN, w_out * COUT).astype(dtype)


def _fold_bn(conv_bias, gamma, beta, mean, var, eps=1e-5):
    scale = gamma / jnp.sqrt(var + eps)
    bias = (conv_bias - mean) * scale + beta
    return scale.astype(jnp.float32), bias.astype(jnp.float32)


def prepare_expand_params(raw, H, W):
    """raw holds PyTorch-layout tensors; returns kernel-ready arrays + config."""
    wt = raw["deconv_w"]                       # (CIN, COUT, 21, 3)
    CIN, COUT, KHA, KWA = (int(d) for d in wt.shape)
    w2 = raw["conv_w"]                         # (COUT, COUT, 3, 3)
    KHB, KWB = int(w2.shape[2]), int(w2.shape[3])

    # ConvTranspose2d(stride=1, padding=1)  ==  conv(flip(W)^T, padding=K-1-1)
    PHA, PWA = KHA - 1 - 1, KWA - 1 - 1
    wa_hwio = jnp.transpose(wt[:, :, ::-1, ::-1], (2, 3, 0, 1))   # HWIO
    PHB, PWB = 1, 1
    wb_hwio = jnp.transpose(w2, (2, 3, 1, 0))                     # HWIO

    HA = H + KHA - 1 - 2                       # transposed-conv output height

    sa, ba = _fold_bn(raw["deconv_b"], raw["bn1_gamma"], raw["bn1_beta"],
                      raw["bn1_mean"], raw["bn1_var"])
    sb, bb = _fold_bn(raw["conv_b"], raw["bn2_gamma"], raw["bn2_beta"],
                      raw["bn2_mean"], raw["bn2_var"])

    return {
        # W padding folded into the band  ->  K_A = KHA*W*CIN, K_B = KHB*W*COUT
        "wa": _banded_weight(wa_hwio, W, PWA, jnp.bfloat16),
        "wb": _banded_weight(wb_hwio, W, PWB, jnp.bfloat16),
        "sa": jnp.tile(sa, W).reshape(1, W * COUT),
        "ba": jnp.tile(ba, W).reshape(1, W * COUT),
        "sb": jnp.tile(sb, W).reshape(1, W * COUT),
        "bb": jnp.tile(bb, W).reshape(1, W * COUT),
        # kept for the numerics-matched reference
        "wa_hwio": wa_hwio, "wb_hwio": wb_hwio,
        "sa_vec": sa, "ba_vec": ba, "sb_vec": sb, "bb_vec": bb,
        "cfg": dict(H=H, W=W, CIN=CIN, COUT=COUT, HA=HA,
                    KHA=KHA, PHA=PHA, PWA=PWA,
                    KHB=KHB, PHB=PHB, PWB=PWB),
    }


# ----------------------------------------------------------------------------
# Forward wrapper (NCHW in / NCHW out, like the PyTorch module)
# ----------------------------------------------------------------------------
def expand_forward(prep, x_nchw):
    cfg = prep["cfg"]
    N, CIN, H, W = x_nchw.shape
    COUT, HA = cfg["COUT"], cfg["HA"]
    PHA, PHB = cfg["PHA"], cfg["PHB"]

    # NCHW -> flattened NHWC (lane axis = W*CIN, lane-dense loads)
    x = jnp.transpose(x_nchw, (0, 2, 3, 1)).reshape(N, H, W * CIN)

    kernel = functools.partial(
        _expand_kernel,
        H=H, W=W, CIN=CIN, COUT=COUT, HA=HA,
        KHA=cfg["KHA"], PHA=PHA, KHB=cfg["KHB"], PHB=PHB)

    # Constant index_maps on weights/scales => fetched once per call.
    # (For VMEM-tight production sizes, additionally pass
    #  pipeline_mode=pl.Buffered(1) on these specs to avoid double-buffering.)
    const2d = lambda shape: pl.BlockSpec(shape, lambda n: (0, 0))

    out_flat = pl.pallas_call(
        kernel,
        out_shape=jax.ShapeDtypeStruct((N, HA, W * COUT), jnp.float32),
        grid_spec=pltpu.PrefetchScalarGridSpec(
            num_scalar_prefetch=0,
            grid=(N,),
            in_specs=[
                pl.BlockSpec((1, H, W * CIN), lambda n: (n, 0, 0)),
                const2d(prep["wa"].shape),
                const2d((1, W * COUT)),
                const2d((1, W * COUT)),
                const2d(prep["wb"].shape),
                const2d((1, W * COUT)),
                const2d((1, W * COUT)),
            ],
            out_specs=pl.BlockSpec((1, HA, W * COUT), lambda n: (n, 0, 0)),
            scratch_shapes=[
                pltpu.VMEM((H + 2 * PHA, W * CIN), jnp.bfloat16),
                pltpu.VMEM((HA + 2 * PHB, W * COUT), jnp.bfloat16),
            ]),
        compiler_params=pltpu.CompilerParams(
            dimension_semantics=("parallel",),
            vmem_limit_bytes=32 * 1024 * 1024),
    )(x, prep["wa"], prep["sa"], prep["ba"], prep["wb"], prep["sb"], prep["bb"])

    out = out_flat.reshape(N, HA, W, COUT)          # free (row-major) unflatten
    return jnp.transpose(out, (0, 3, 1, 2))         # NHWC -> NCHW


# ----------------------------------------------------------------------------
# References
# ----------------------------------------------------------------------------
def _conv_transpose2d_ref(x, w, b, ph, pw):
    """PyTorch ConvTranspose2d(stride=1) straight from its scatter definition."""
    N, CI, H, W = x.shape
    _, CO, KH, KW = w.shape
    full = jnp.zeros((N, CO, H + KH - 1, W + KW - 1), jnp.float32)
    for kh in range(KH):
        for kw in range(KW):
            full = full.at[:, :, kh:kh + H, kw:kw + W].add(
                jnp.einsum("nchw,cd->ndhw", x, w[:, :, kh, kw]))
    out = full[:, :, ph:full.shape[2] - ph, pw:full.shape[3] - pw]
    return out + b[None, :, None, None]


def _bn_relu_ref(y, gamma, beta, mean, var, eps=1e-5):
    g = gamma[None, :, None, None]
    b = beta[None, :, None, None]
    m = mean[None, :, None, None]
    v = var[None, :, None, None]
    return jnp.maximum((y - m) / jnp.sqrt(v + eps) * g + b, 0.0)


def expand_reference_f32(raw, x):
    """Independent full-f32 reference (validates the deconv->conv rewrite)."""
    y = _conv_transpose2d_ref(x, raw["deconv_w"], raw["deconv_b"], 1, 1)
    y = _bn_relu_ref(y, raw["bn1_gamma"], raw["bn1_beta"],
                     raw["bn1_mean"], raw["bn1_var"])
    y = lax.conv_general_dilated(y, raw["conv_w"], (1, 1), [(1, 1), (1, 1)],
                                 dimension_numbers=("NCHW", "OIHW", "NCHW"))
    y = y + raw["conv_b"][None, :, None, None]
    y = _bn_relu_ref(y, raw["bn2_gamma"], raw["bn2_beta"],
                     raw["bn2_mean"], raw["bn2_var"])
    return y


def expand_reference_matched(prep, x_nchw):
    """Same numerics path as the kernel (bf16 MXU operands, f32 accumulation)."""
    cfg = prep["cfg"]
    x = jnp.transpose(x_nchw, (0, 2, 3, 1))
    ya = lax.conv_general_dilated(
        x.astype(jnp.bfloat16), prep["wa_hwio"].astype(jnp.bfloat16), (1, 1),
        [(cfg["PHA"], cfg["PHA"]), (cfg["PWA"], cfg["PWA"])],
        dimension_numbers=("NHWC", "HWIO", "NHWC"),
        preferred_element_type=jnp.float32)
    y1 = jnp.maximum(ya * prep["sa_vec"] + prep["ba_vec"], 0.0)
    yb = lax.conv_general_dilated(
        y1.astype(jnp.bfloat16), prep["wb_hwio"].astype(jnp.bfloat16), (1, 1),
        [(1, 1), (1, 1)],
        dimension_numbers=("NHWC", "HWIO", "NHWC"),
        preferred_element_type=jnp.float32)
    y2 = jnp.maximum(yb * prep["sb_vec"] + prep["bb_vec"], 0.0)
    return jnp.transpose(y2, (0, 3, 1, 2))


# ----------------------------------------------------------------------------
if __name__ == "__main__":
    key = jax.random.PRNGKey(0)
    N, IN_CH, OUT_CH, H, W = 2, 4, 32, 16, 16
    ks = jax.random.split(key, 13)

    raw = {
        "deconv_w": 0.1 * jax.random.normal(ks[0], (IN_CH, OUT_CH, 21, 3), jnp.float32),
        "deconv_b": 0.1 * jax.random.normal(ks[1], (OUT_CH,), jnp.float32),
        "bn1_gamma": 1.0 + 0.1 * jax.random.normal(ks[2], (OUT_CH,), jnp.float32),
        "bn1_beta": 0.1 * jax.random.normal(ks[3], (OUT_CH,), jnp.float32),
        "bn1_mean": 0.1 * jax.random.normal(ks[4], (OUT_CH,), jnp.float32),
        "bn1_var": 0.5 + 0.2 * jax.random.uniform(ks[5], (OUT_CH,), jnp.float32),
        "conv_w": 0.1 * jax.random.normal(ks[6], (OUT_CH, OUT_CH, 3, 3), jnp.float32),
        "conv_b": 0.1 * jax.random.normal(ks[7], (OUT_CH,), jnp.float32),
        "bn2_gamma": 1.0 + 0.1 * jax.random.normal(ks[8], (OUT_CH,), jnp.float32),
        "bn2_beta": 0.1 * jax.random.normal(ks[9], (OUT_CH,), jnp.float32),
        "bn2_mean": 0.1 * jax.random.normal(ks[10], (OUT_CH,), jnp.float32),
        "bn2_var": 0.5 + 0.2 * jax.random.uniform(ks[11], (OUT_CH,), jnp.float32),
    }
    x = jax.random.normal(ks[12], (N, IN_CH, H, W), jnp.float32)   # NCHW

    prep = prepare_expand_params(raw, H, W)
    fwd = jax.jit(lambda inp: expand_forward(prep, inp))
    out = jax.block_until_ready(fwd(x))

    HA = H + 21 - 1 - 2
    assert out.shape == (N, OUT_CH, HA, W), out.shape

    ref_matched = jax.block_until_ready(expand_reference_matched(prep, x))
    ref_f32 = jax.block_until_ready(expand_reference_f32(raw, x))

    err_matched = float(jnp.max(jnp.abs(out - ref_matched)))
    err_f32 = float(jnp.max(jnp.abs(out - ref_f32)))
    # tight check vs the numerics-matched (bf16-MXU) reference
    assert jnp.allclose(out, ref_matched, atol=2e-3, rtol=2e-3), err_matched
    # loose check vs the independent full-f32 reference (bf16 rounding only)
    assert jnp.allclose(out, ref_f32, atol=0.25, rtol=0.1), err_f32

    print("KERNEL_OK")
</pallas_src>

<mosaic_0001>
module attributes {stable_mosaic.version = 11 : i64} {
  func.func @_expand_kernel(%arg0: i32, %arg1: memref<1x16x64xf32, #tpu.memory_space<vmem>>, %arg2: memref<1344x512xbf16, #tpu.memory_space<vmem>>, %arg3: memref<1x512xf32, #tpu.memory_space<vmem>>, %arg4: memref<1x512xf32, #tpu.memory_space<vmem>>, %arg5: memref<1536x512xbf16, #tpu.memory_space<vmem>>, %arg6: memref<1x512xf32, #tpu.memory_space<vmem>>, %arg7: memref<1x512xf32, #tpu.memory_space<vmem>>, %arg8: memref<1x34x512xf32, #tpu.memory_space<vmem>>, %arg9: memref<54x64xbf16, #tpu.memory_space<vmem>>, %arg10: memref<36x512xbf16, #tpu.memory_space<vmem>>) attributes {dimension_semantics = [#tpu.dimension_semantics<parallel>], iteration_bounds = array<i64: 2>, scalar_prefetch = 0 : i64, scratch_operands = 2 : i64, tpu.core_type = #tpu.core_type<tc>, window_params = [{transform_indices = @transform_0, window_bounds = array<i64: 1, 16, 64>}, {pipeline_mode = #tpu.pipeline_mode<synchronous>, transform_indices = @transform_1, window_bounds = array<i64: 1344, 512>}, {pipeline_mode = #tpu.pipeline_mode<synchronous>, transform_indices = @transform_2, window_bounds = array<i64: 1, 512>}, {pipeline_mode = #tpu.pipeline_mode<synchronous>, transform_indices = @transform_3, window_bounds = array<i64: 1, 512>}, {pipeline_mode = #tpu.pipeline_mode<synchronous>, transform_indices = @transform_4, window_bounds = array<i64: 1536, 512>}, {pipeline_mode = #tpu.pipeline_mode<synchronous>, transform_indices = @transform_5, window_bounds = array<i64: 1, 512>}, {pipeline_mode = #tpu.pipeline_mode<synchronous>, transform_indices = @transform_6, window_bounds = array<i64: 1, 512>}, {transform_indices = @transform_7, window_bounds = array<i64: 1, 34, 512>}]} {
    %cst = arith.constant 0.000000e+00 : bf16
    %0 = vector.broadcast %cst : bf16 to vector<19x64xbf16>
    %c0 = arith.constant 0 : index
    %c0_0 = arith.constant 0 : index
    %1 = vector.load %arg9[%c0, %c0_0] : memref<54x64xbf16, #tpu.memory_space<vmem>>, vector<19x64xbf16>
    tpu.vector_store %arg9[%c0, %c0_0], %0 {strides = array<i32>} : memref<54x64xbf16, #tpu.memory_space<vmem>>, vector<19x64xbf16>,
    %cst_1 = arith.constant 0.000000e+00 : bf16
    %2 = vector.broadcast %cst_1 : bf16 to vector<19x64xbf16>
    %c35 = arith.constant 35 : index
    %c0_2 = arith.constant 0 : index
    %3 = vector.load %arg9[%c35, %c0_2] : memref<54x64xbf16, #tpu.memory_space<vmem>>, vector<19x64xbf16>
    tpu.vector_store %arg9[%c35, %c0_2], %2 {strides = array<i32>} : memref<54x64xbf16, #tpu.memory_space<vmem>>, vector<19x64xbf16>,
    %c0_3 = arith.constant 0 : index
    %c0_4 = arith.constant 0 : index
    %c0_5 = arith.constant 0 : index
    %4 = vector.load %arg1[%c0_3, %c0_4, %c0_5] : memref<1x16x64xf32, #tpu.memory_space<vmem>>, vector<1x16x64xf32>
    %5 = vector.shape_cast %4 : vector<1x16x64xf32> to vector<16x64xf32>
    %6 = arith.truncf %5 : vector<16x64xf32> to vector<16x64xbf16>
    %c19 = arith.constant 19 : index
    %c0_6 = arith.constant 0 : index
    %7 = vector.load %arg9[%c19, %c0_6] : memref<54x64xbf16, #tpu.memory_space<vmem>>, vector<16x64xbf16>
    tpu.vector_store %arg9[%c19, %c0_6], %6 {strides = array<i32>} : memref<54x64xbf16, #tpu.memory_space<vmem>>, vector<16x64xbf16>,
    %c0_7 = arith.constant 0 : index
    %c0_8 = arith.constant 0 : index
    %8 = vector.load %arg9[%c0_7, %c0_8] : memref<54x64xbf16, #tpu.memory_space<vmem>>, vector<34x64xbf16>
    %c1 = arith.constant 1 : index
    %c0_9 = arith.constant 0 : index
    %9 = vector.load %arg9[%c1, %c0_9] : memref<54x64xbf16, #tpu.memory_space<vmem>>, vector<34x64xbf16>
    %c2 = arith.constant 2 : index
    %c0_10 = arith.constant 0 : index
    %10 = vector.load %arg9[%c2, %c0_10] : memref<54x64xbf16, #tpu.memory_space<vmem>>, vector<34x64xbf16>
    %c3 = arith.constant 3 : index
    %c0_11 = arith.constant 0 : index
    %11 = vector.load %arg9[%c3, %c0_11] : memref<54x64xbf16, #tpu.memory_space<vmem>>, vector<34x64xbf16>
    %c4 = arith.constant 4 : index
    %c0_12 = arith.constant 0 : index
    %12 = vector.load %arg9[%c4, %c0_12] : memref<54x64xbf16, #tpu.memory_space<vmem>>, vector<34x64xbf16>
    %c5 = arith.constant 5 : index
    %c0_13 = arith.constant 0 : index
    %13 = vector.load %arg9[%c5, %c0_13] : memref<54x64xbf16, #tpu.memory_space<vmem>>, vector<34x64xbf16>
    %c6 = arith.constant 6 : index
    %c0_14 = arith.constant 0 : index
    %14 = vector.load %arg9[%c6, %c0_14] : memref<54x64xbf16, #tpu.memory_space<vmem>>, vector<34x64xbf16>
    %c7 = arith.constant 7 : index
    %c0_15 = arith.constant 0 : index
    %15 = vector.load %arg9[%c7, %c0_15] : memref<54x64xbf16, #tpu.memory_space<vmem>>, vector<34x64xbf16>
    %c8 = arith.constant 8 : index
    %c0_16 = arith.constant 0 : index
    %16 = vector.load %arg9[%c8, %c0_16] : memref<54x64xbf16, #tpu.memory_space<vmem>>, vector<34x64xbf16>
    %c9 = arith.constant 9 : index
    %c0_17 = arith.constant 0 : index
    %17 = vector.load %arg9[%c9, %c0_17] : memref<54x64xbf16, #tpu.memory_space<vmem>>, vector<34x64xbf16>
    %c10 = arith.constant 10 : index
    %c0_18 = arith.constant 0 : index
    %18 = vector.load %arg9[%c10, %c0_18] : memref<54x64xbf16, #tpu.memory_space<vmem>>, vector<34x64xbf16>
    %c11 = arith.constant 11 : index
    %c0_19 = arith.constant 0 : index
    %19 = vector.load %arg9[%c11, %c0_19] : memref<54x64xbf16, #tpu.memory_space<vmem>>, vector<34x64xbf16>
    %c12 = arith.constant 12 : index
    %c0_20 = arith.constant 0 : index
    %20 = vector.load %arg9[%c12, %c0_20] : memref<54x64xbf16, #tpu.memory_space<vmem>>, vector<34x64xbf16>
    %c13 = arith.constant 13 : index
    %c0_21 = arith.constant 0 : index
    %21 = vector.load %arg9[%c13, %c0_21] : memref<54x64xbf16, #tpu.memory_space<vmem>>, vector<34x64xbf16>
    %c14 = arith.constant 14 : index
    %c0_22 = arith.constant 0 : index
    %22 = vector.load %arg9[%c14, %c0_22] : memref<54x64xbf16, #tpu.memory_space<vmem>>, vector<34x64xbf16>
    %c15 = arith.constant 15 : index
    %c0_23 = arith.constant 0 : index
    %23 = vector.load %arg9[%c15, %c0_23] : memref<54x64xbf16, #tpu.memory_space<vmem>>, vector<34x64xbf16>
    %c16 = arith.constant 16 : index
    %c0_24 = arith.constant 0 : index
    %24 = vector.load %arg9[%c16, %c0_24] : memref<54x64xbf16, #tpu.memory_space<vmem>>, vector<34x64xbf16>
    %c17 = arith.constant 17 : index
    %c0_25 = arith.constant 0 : index
    %25 = vector.load %arg9[%c17, %c0_25] : memref<54x64xbf16, #tpu.memory_space<vmem>>, vector<34x64xbf16>
    %c18 = arith.constant 18 : index
    %c0_26 = arith.constant 0 : index
    %26 = vector.load %arg9[%c18, %c0_26] : memref<54x64xbf16, #tpu.memory_space<vmem>>, vector<34x64xbf16>
    %c19_27 = arith.constant 19 : index
    %c0_28 = arith.constant 0 : index
    %27 = vector.load %arg9[%c19_27, %c0_28] : memref<54x64xbf16, #tpu.memory_space<vmem>>, vector<34x64xbf16>
    %c20 = arith.constant 20 : index
    %c0_29 = arith.constant 0 : index
    %28 = vector.load %arg9[%c20, %c0_29] : memref<54x64xbf16, #tpu.memory_space<vmem>>, vector<34x64xbf16>
    %29 = tpu.concatenate %8, %9, %10, %11, %12, %13, %14, %15, %16, %17, %18, %19, %20, %21, %22, %23 in 1 : vector<34x64xbf16>, vector<34x64xbf16>, vector<34x64xbf16>, vector<34x64xbf16>, vector<34x64xbf16>, vector<34x64xbf16>, vector<34x64xbf16>, vector<34x64xbf16>, vector<34x64xbf16>, vector<34x64xbf16>, vector<34x64xbf16>, vector<34x64xbf16>, vector<34x64xbf16>, vector<34x64xbf16>, vector<34x64xbf16>, vector<34x64xbf16> -> vector<34x1024xbf16>
    %30 = tpu.concatenate %24, %25, %26, %27, %28 in 1 : vector<34x64xbf16>, vector<34x64xbf16>, vector<34x64xbf16>, vector<34x64xbf16>, vector<34x64xbf16> -> vector<34x320xbf16>
    %31 = tpu.concatenate %29, %30 in 1 : vector<34x1024xbf16>, vector<34x320xbf16> -> vector<34x1344xbf16>
    %c0_30 = arith.constant 0 : index
    %c0_31 = arith.constant 0 : index
    %32 = vector.load %arg2[%c0_30, %c0_31] : memref<1344x512xbf16, #tpu.memory_space<vmem>>, vector<1344x512xbf16>
    %cst_32 = arith.constant dense<0.000000e+00> : vector<34x512xf32>
    %33 = tpu.matmul %31, %32, %cst_32 {dimension_numbers = #tpu.dot_dimension_numbers<[1], [0], [0], [1], [0, 0, 1, 1], [], []>} : vector<34x1344xbf16>, vector<1344x512xbf16>, vector<34x512xf32> -> vector<34x512xf32>
    %c0_33 = arith.constant 0 : index
    %c0_34 = arith.constant 0 : index
    %34 = vector.load %arg3[%c0_33, %c0_34] : memref<1x512xf32, #tpu.memory_space<vmem>>, vector<1x512xf32>
    %35 = vector.shape_cast %34 : vector<1x512xf32> to vector<512xf32>
    %36 = vector.shape_cast %35 : vector<512xf32> to vector<1x512xf32>
    %37 = vector.broadcast %36 : vector<1x512xf32> to vector<34x512xf32>
    %38 = arith.mulf %33, %37 : vector<34x512xf32>
    %c0_35 = arith.constant 0 : index
    %c0_36 = arith.constant 0 : index
    %39 = vector.load %arg4[%c0_35, %c0_36] : memref<1x512xf32, #tpu.memory_space<vmem>>, vector<1x512xf32>
    %40 = vector.shape_cast %39 : vector<1x512xf32> to vector<512xf32>
    %41 = vector.shape_cast %40 : vector<512xf32> to vector<1x512xf32>
    %42 = vector.broadcast %41 : vector<1x512xf32> to vector<34x512xf32>
    %43 = arith.addf %38, %42 : vector<34x512xf32>
    %cst_37 = arith.constant 0.000000e+00 : f32
    %44 = vector.broadcast %cst_37 : f32 to vector<34x512xf32>
    %45 = arith.maximumf %43, %44 : vector<34x512xf32>
    %cst_38 = arith.constant 0.000000e+00 : bf16
    %46 = vector.broadcast %cst_38 : bf16 to vector<1x512xbf16>
    %c0_39 = arith.constant 0 : index
    %c0_40 = arith.constant 0 : index
    %47 = vector.load %arg10[%c0_39, %c0_40] : memref<36x512xbf16, #tpu.memory_space<vmem>>, vector<1x512xbf16>
    tpu.vector_store %arg10[%c0_39, %c0_40], %46 {strides = array<i32>} : memref<36x512xbf16, #tpu.memory_space<vmem>>, vector<1x512xbf16>,
    %cst_41 = arith.constant 0.000000e+00 : bf16
    %48 = vector.broadcast %cst_41 : bf16 to vector<1x512xbf16>
    %c35_42 = arith.constant 35 : index
    %c0_43 = arith.constant 0 : index
    %49 = vector.load %arg10[%c35_42, %c0_43] : memref<36x512xbf16, #tpu.memory_space<vmem>>, vector<1x512xbf16>
    tpu.vector_store %arg10[%c35_42, %c0_43], %48 {strides = array<i32>} : memref<36x512xbf16, #tpu.memory_space<vmem>>, vector<1x512xbf16>,
    %50 = arith.truncf %45 : vector<34x512xf32> to vector<34x512xbf16>
    %c1_44 = arith.constant 1 : index
    %c0_45 = arith.constant 0 : index
    %51 = vector.load %arg10[%c1_44, %c0_45] : memref<36x512xbf16, #tpu.memory_space<vmem>>, vector<34x512xbf16>
    tpu.vector_store %arg10[%c1_44, %c0_45], %50 {strides = array<i32>} : memref<36x512xbf16, #tpu.memory_space<vmem>>, vector<34x512xbf16>,
    %c0_46 = arith.constant 0 : index
    %c0_47 = arith.constant 0 : index
    %52 = vector.load %arg10[%c0_46, %c0_47] : memref<36x512xbf16, #tpu.memory_space<vmem>>, vector<34x512xbf16>
    %c1_48 = arith.constant 1 : index
    %c0_49 = arith.constant 0 : index
    %53 = vector.load %arg10[%c1_48, %c0_49] : memref<36x512xbf16, #tpu.memory_space<vmem>>, vector<34x512xbf16>
    %c2_50 = arith.constant 2 : index
    %c0_51 = arith.constant 0 : index
    %54 = vector.load %arg10[%c2_50, %c0_51] : memref<36x512xbf16, #tpu.memory_space<vmem>>, vector<34x512xbf16>
    %55 = tpu.concatenate %52, %53, %54 in 1 : vector<34x512xbf16>, vector<34x512xbf16>, vector<34x512xbf16> -> vector<34x1536xbf16>
    %c0_52 = arith.constant 0 : index
    %c0_53 = arith.constant 0 : index
    %56 = vector.load %arg5[%c0_52, %c0_53] : memref<1536x512xbf16, #tpu.memory_space<vmem>>, vector<1536x512xbf16>
    %cst_54 = arith.constant dense<0.000000e+00> : vector<34x512xf32>
    %57 = tpu.matmul %55, %56, %cst_54 {dimension_numbers = #tpu.dot_dimension_numbers<[1], [0], [0], [1], [0, 0, 1, 1], [], []>} : vector<34x1536xbf16>, vector<1536x512xbf16>, vector<34x512xf32> -> vector<34x512xf32>
    %c0_55 = arith.constant 0 : index
    %c0_56 = arith.constant 0 : index
    %58 = vector.load %arg6[%c0_55, %c0_56] : memref<1x512xf32, #tpu.memory_space<vmem>>, vector<1x512xf32>
    %59 = vector.shape_cast %58 : vector<1x512xf32> to vector<512xf32>
    %60 = vector.shape_cast %59 : vector<512xf32> to vector<1x512xf32>
    %61 = vector.broadcast %60 : vector<1x512xf32> to vector<34x512xf32>
    %62 = arith.mulf %57, %61 : vector<34x512xf32>
    %c0_57 = arith.constant 0 : index
    %c0_58 = arith.constant 0 : index
    %63 = vector.load %arg7[%c0_57, %c0_58] : memref<1x512xf32, #tpu.memory_space<vmem>>, vector<1x512xf32>
    %64 = vector.shape_cast %63 : vector<1x512xf32> to vector<512xf32>
    %65 = vector.shape_cast %64 : vector<512xf32> to vector<1x512xf32>
    %66 = vector.broadcast %65 : vector<1x512xf32> to vector<34x512xf32>
    %67 = arith.addf %62, %66 : vector<34x512xf32>
    %cst_59 = arith.constant 0.000000e+00 : f32
    %68 = vector.broadcast %cst_59 : f32 to vector<34x512xf32>
    %69 = arith.maximumf %67, %68 : vector<34x512xf32>
    %c0_60 = arith.constant 0 : index
    %c0_61 = arith.constant 0 : index
    %c0_62 = arith.constant 0 : index
    %70 = vector.load %arg8[%c0_60, %c0_61, %c0_62] : memref<1x34x512xf32, #tpu.memory_space<vmem>>, vector<1x34x512xf32>
    %71 = vector.shape_cast %70 : vector<1x34x512xf32> to vector<34x512xf32>
    %72 = vector.shape_cast %69 : vector<34x512xf32> to vector<1x34x512xf32>
    tpu.vector_store %arg8[%c0_60, %c0_61, %c0_62], %72 {strides = array<i32>} : memref<1x34x512xf32, #tpu.memory_space<vmem>>, vector<1x34x512xf32>,
    return
  }
  func.func @transform_0(%arg0: i32) -> (i32, i32, i32) {
    %c0_i32 = arith.constant 0 : i32
    %c0_i32_0 = arith.constant 0 : i32
    %c0_i32_1 = arith.constant 0 : i32
    return %arg0, %c0_i32, %c0_i32_0 : i32, i32, i32
  }
  func.func @transform_1(%arg0: i32) -> (i32, i32) {
    %c0_i32 = arith.constant 0 : i32
    %c0_i32_0 = arith.constant 0 : i32
    %c0_i32_1 = arith.constant 0 : i32
    return %c0_i32, %c0_i32_0 : i32, i32
  }
  func.func @transform_2(%arg0: i32) -> (i32, i32) {
    %c0_i32 = arith.constant 0 : i32
    %c0_i32_0 = arith.constant 0 : i32
    %c0_i32_1 = arith.constant 0 : i32
    return %c0_i32, %c0_i32_0 : i32, i32
  }
  func.func @transform_3(%arg0: i32) -> (i32, i32) {
    %c0_i32 = arith.constant 0 : i32
    %c0_i32_0 = arith.constant 0 : i32
    %c0_i32_1 = arith.constant 0 : i32
    return %c0_i32, %c0_i32_0 : i32, i32
  }
  func.func @transform_4(%arg0: i32) -> (i32, i32) {
    %c0_i32 = arith.constant 0 : i32
    %c0_i32_0 = arith.constant 0 : i32
    %c0_i32_1 = arith.constant 0 : i32
    return %c0_i32, %c0_i32_0 : i32, i32
  }
  func.func @transform_5(%arg0: i32) -> (i32, i32) {
    %c0_i32 = arith.constant 0 : i32
    %c0_i32_0 = arith.constant 0 : i32
    %c0_i32_1 = arith.constant 0 : i32
    return %c0_i32, %c0_i32_0 : i32, i32
  }
  func.func @transform_6(%arg0: i32) -> (i32, i32) {
    %c0_i32 = arith.constant 0 : i32
    %c0_i32_0 = arith.constant 0 : i32
    %c0_i32_1 = arith.constant 0 : i32
    return %c0_i32, %c0_i32_0 : i32, i32
  }
  func.func @transform_7(%arg0: i32) -> (i32, i32, i32) {
    %c0_i32 = arith.constant 0 : i32
    %c0_i32_0 = arith.constant 0 : i32
    %c0_i32_1 = arith.constant 0 : i32
    return %arg0, %c0_i32, %c0_i32_0 : i32, i32, i32
  }
}

</mosaic_0001>

<llo_original>
// kernel: _lambda_.1
$region0: #{_lambda_.1}
  #allocation0 [shape = 'u32[]', space=smem, size = 0x4, offset = 0x4, fixed_abs, tag = 'smem constant byte address 0x4 - core index']
  #allocation1 [shape = 'u32[72,128]{1,0:T(1,128)}', space=vmem, size = 0x9000, scoped, tag = 'internal scratch']
  #allocation2 [shape = 'bf16[54,64]{1,0:T(8,128)(2,1)}', space=vmem, size = 0x3800, scoped, tag = 'scratch operand']
  #allocation3 [shape = 'bf16[36,512]{1,0:T(8,128)(2,1)}', space=vmem, size = 0xa000, scoped, tag = 'scratch operand']
  %s0 = inlined_call_operand.vmem [shape: f32[2,16,64], index: 0, kind: input, shape index: {}]
  %s1 = inlined_call_operand.hbm [shape: bf16[1344,512], index: 1, kind: input, shape index: {}]
  %s2 = inlined_call_operand.hbm [shape: f32[1,512], index: 2, kind: input, shape index: {}]
  %s3 = inlined_call_operand.hbm [shape: f32[1,512], index: 3, kind: input, shape index: {}]
  %s4 = inlined_call_operand.hbm [shape: bf16[1536,512], index: 4, kind: input, shape index: {}]
  %s5 = inlined_call_operand.hbm [shape: f32[1,512], index: 5, kind: input, shape index: {}]
  %s6 = inlined_call_operand.hbm [shape: f32[1,512], index: 6, kind: input, shape index: {}]
  %s7 = inlined_call_operand.vmem [shape: f32[2,34,512], index: 7, kind: output, shape index: {}]
  %s8 = sld [smem:[#allocation0]]
  $region85: #{_lambda_.1} parent=0
    _
  %s10 = ssub.s32 1, %s8
  %s11 = scalar_select 0, %s10, %s8
  $region1: #{_lambda_.1} parent=0
    #allocation4 [shape = 'u8[1376256]{0}', space=vmem, size = 0x150000, scoped, tag = 'input window, operand 1, single buffered']
    #allocation5 [shape = 's32[2]{0}', space=sflag, size = 0x8, scoped, tag = 'scoped memory for _lambda_.1']
    #allocation6 [shape = 'u8[2048]{0}', space=vmem, size = 0x800, scoped, tag = 'input window, operand 2, single buffered']
    #allocation7 [shape = 's32[1]{0}', space=sflag, size = 0x4, scoped, tag = 'scoped memory for _lambda_.1']
    #allocation8 [shape = 'u8[2048]{0}', space=vmem, size = 0x800, scoped, tag = 'input window, operand 3, single buffered']
    #allocation9 [shape = 'u8[1572864]{0}', space=vmem, size = 0x180000, scoped, tag = 'input window, operand 4, single buffered']
    #allocation10 [shape = 's32[1]{0}', space=sflag, size = 0x4, scoped, tag = 'scoped memory for _lambda_.1']
    #allocation11 [shape = 'u8[2048]{0}', space=vmem, size = 0x800, scoped, tag = 'input window, operand 5, single buffered']
    #allocation12 [shape = 'u8[2048]{0}', space=vmem, size = 0x800, scoped, tag = 'input window, operand 6, single buffered']
    #allocation13 [shape = 's32[1]{0}', space=sflag, size = 0x4, scoped, tag = 'scoped memory for _lambda_.1']
    %12 = vsyncpa [#allocation5], 0
    %13 = vsyncpa [#allocation7], 0
    %14 = vsyncpa [#allocation10], 0
    %15 = vsyncpa [#allocation13], 0
    loop: start=0, step=1, limit=4
    $region2: #{_lambda_.1} parent=1 // loop_pre_header
      _
    $region3: #{_lambda_.1} parent=1 // loop_header
      %s17 = sphi 0, %s21
      %p18 = scmp.ge.s32.totalorder %s17, 4
      %s27 = sphi 0, %s29
      %s30 = sphi 0, %s27
      %s31 = sphi 0, %s30
      %s47 = sphi 0, %s31
      %s51 = sphi 0, %s51
      %s53 = sphi 0, %s51
      %s54 = sphi 0, %s53
      %s68 = sphi 0, %s54
      %s72 = sphi 0, %s72
      %s74 = sphi 0, %s72
      %s75 = sphi 0, %s74
      %s89 = sphi 0, %s75
      %s93 = sphi 0, %s93
      %s95 = sphi 0, %s93
      %s96 = sphi 0, %s95
      %s110 = sphi 0, %s96
      %s114 = sphi 0, %s114
      %s116 = sphi 0, %s114
      %s117 = sphi 0, %s116
      %s131 = sphi 0, %s117
      %s135 = sphi 0, %s135
      %s137 = sphi 0, %s135
      %s138 = sphi 0, %s137
      %s152 = sphi 0, %s138
      %s156 = sphi 0, %s156
      %s158 = sphi 0, %s156
      %s159 = sphi 0, %s158
      %s173 = sphi 0, %s159
      %s179 = sphi 0, %s181
      %s182 = sphi 0, %s179
      %s183 = sphi 0, %s182
      %s199 = sphi 0, %s183
    $region4: #{_lambda_.1} parent=1 // loop_header_branch
      %20 = sbr.rel (%p18) target = $region8
    $region5: #{_lambda_.1} parent=1 // loop_body
      %s22 = ssub.s32 %s17, 1
      %s23 = ssub.s32 %s17, 2
      %s24 = sadd.s32 %s17, 1
      %s25 = ssub.s32 %s17, %s24
      %p26 = scmp.eq.s32.totalorder %s25, 0
      %s28 = sadd.s32 %s27, 1
      %s29 = scalar_select %p26, %s27, %s28
      %p32 = pneg %p26
      %p33 = scmp.eq.s32.totalorder %s17, 1
      %p34 = por %p32, %p33
      %p35 = scmp.ne.s32.totalorder %s27, %s30
      %p36 = scmp.eq.s32.totalorder %s17, 0
      %p37 = por %p35, %p36
      %p38 = scmp.ne.s32.totalorder %s27, %s30
      %p39 = scmp.eq.s32.totalorder %s22, 1
      %p40 = por %p38, %p39
      %p41 = scmp.ne.s32.totalorder %s30, %s31
      %p42 = scmp.eq.s32.totalorder %s22, 0
      %p43 = por %p41, %p42
      %p44 = scmp.ne.s32.totalorder %s30, %s31
      %p45 = scmp.eq.s32.totalorder %s23, 1
      %p46 = por %p44, %p45
      %p48 = scmp.ne.s32.totalorder %s31, %s47
      %p49 = scmp.eq.s32.totalorder %s23, 0
      %p50 = por %p48, %p49
      %s52 = sadd.s32 %s51, 1
      %p55 = scmp.eq.s32.totalorder %s17, 1
      %p56 = scmp.ne.s32.totalorder %s51, %s53
      %p57 = scmp.eq.s32.totalorder %s17, 0
      %p58 = por %p56, %p57
      %p59 = scmp.ne.s32.totalorder %s51, %s53
      %p60 = scmp.eq.s32.totalorder %s22, 1
      %p61 = por %p59, %p60
      %p62 = scmp.ne.s32.totalorder %s53, %s54
      %p63 = scmp.eq.s32.totalorder %s22, 0
      %p64 = por %p62, %p63
      %p65 = scmp.ne.s32.totalorder %s53, %s54
      %p66 = scmp.eq.s32.totalorder %s23, 1
      %p67 = por %p65, %p66
      %p69 = scmp.ne.s32.totalorder %s54, %s68
      %p70 = scmp.eq.s32.totalorder %s23, 0
      %p71 = por %p69, %p70
      %s73 = sadd.s32 %s72, 1
      %p76 = scmp.eq.s32.totalorder %s17, 1
      %p77 = scmp.ne.s32.totalorder %s72, %s74
      %p78 = scmp.eq.s32.totalorder %s17, 0
      %p79 = por %p77, %p78
      %p80 = scmp.ne.s32.totalorder %s72, %s74
      %p81 = scmp.eq.s32.totalorder %s22, 1
      %p82 = por %p80, %p81
      %p83 = scmp.ne.s32.totalorder %s74, %s75
      %p84 = scmp.eq.s32.totalorder %s22, 0
      %p85 = por %p83, %p84
      %p86 = scmp.ne.s32.totalorder %s74, %s75
      %p87 = scmp.eq.s32.totalorder %s23, 1
      %p88 = por %p86, %p87
      %p90 = scmp.ne.s32.totalorder %s75, %s89
      %p91 = scmp.eq.s32.totalorder %s23, 0
      %p92 = por %p90, %p91
      %s94 = sadd.s32 %s93, 1
      %p97 = scmp.eq.s32.totalorder %s17, 1
      %p98 = scmp.ne.s32.totalorder %s93, %s95
      %p99 = scmp.eq.s32.totalorder %s17, 0
      %p100 = por %p98, %p99
      %p101 = scmp.ne.s32.totalorder %s93, %s95
      %p102 = scmp.eq.s32.totalorder %s22, 1
      %p103 = por %p101, %p102
      %p104 = scmp.ne.s32.totalorder %s95, %s96
      %p105 = scmp.eq.s32.totalorder %s22, 0
      %p106 = por %p104, %p105
      %p107 = scmp.ne.s32.totalorder %s95, %s96
      %p108 = scmp.eq.s32.totalorder %s23, 1
      %p109 = por %p107, %p108
      %p111 = scmp.ne.s32.totalorder %s96, %s110
      %p112 = scmp.eq.s32.totalorder %s23, 0
      %p113 = por %p111, %p112
      %s115 = sadd.s32 %s114, 1
      %p118 = scmp.eq.s32.totalorder %s17, 1
      %p119 = scmp.ne.s32.totalorder %s114, %s116
      %p120 = scmp.eq.s32.totalorder %s17, 0
      %p121 = por %p119, %p120
      %p122 = scmp.ne.s32.totalorder %s114, %s116
      %p123 = scmp.eq.s32.totalorder %s22, 1
      %p124 = por %p122, %p123
      %p125 = scmp.ne.s32.totalorder %s116, %s117
      %p126 = scmp.eq.s32.totalorder %s22, 0
      %p127 = por %p125, %p126
      %p128 = scmp.ne.s32.totalorder %s116, %s117
      %p129 = scmp.eq.s32.totalorder %s23, 1
      %p130 = por %p128, %p129
      %p132 = scmp.ne.s32.totalorder %s117, %s131
      %p133 = scmp.eq.s32.totalorder %s23, 0
      %p134 = por %p132, %p133
      %s136 = sadd.s32 %s135, 1
      %p139 = scmp.eq.s32.totalorder %s17, 1
      %p140 = scmp.ne.s32.totalorder %s135, %s137
      %p141 = scmp.eq.s32.totalorder %s17, 0
      %p142 = por %p140, %p141
      %p143 = scmp.ne.s32.totalorder %s135, %s137
      %p144 = scmp.eq.s32.totalorder %s22, 1
      %p145 = por %p143, %p144
      %p146 = scmp.ne.s32.totalorder %s137, %s138
      %p147 = scmp.eq.s32.totalorder %s22, 0
      %p148 = por %p146, %p147
      %p149 = scmp.ne.s32.totalorder %s137, %s138
      %p150 = scmp.eq.s32.totalorder %s23, 1
      %p151 = por %p149, %p150
      %p153 = scmp.ne.s32.totalorder %s138, %s152
      %p154 = scmp.eq.s32.totalorder %s23, 0
      %p155 = por %p153, %p154
      %s157 = sadd.s32 %s156, 1
      %p160 = scmp.eq.s32.totalorder %s17, 1
      %p161 = scmp.ne.s32.totalorder %s156, %s158
      %p162 = scmp.eq.s32.totalorder %s17, 0
      %p163 = por %p161, %p162
      %p164 = scmp.ne.s32.totalorder %s156, %s158
      %p165 = scmp.eq.s32.totalorder %s22, 1
      %p166 = por %p164, %p165
      %p167 = scmp.ne.s32.totalorder %s158, %s159
      %p168 = scmp.eq.s32.totalorder %s22, 0
      %p169 = por %p167, %p168
      %p170 = scmp.ne.s32.totalorder %s158, %s159
      %p171 = scmp.eq.s32.totalorder %s23, 1
      %p172 = por %p170, %p171
      %p174 = scmp.ne.s32.totalorder %s159, %s173
      %p175 = scmp.eq.s32.totalorder %s23, 0
      %p176 = por %p174, %p175
      %s177 = ssub.s32 %s17, %s24
      %p178 = scmp.eq.s32.totalorder %s177, 0
      %s180 = sadd.s32 %s179, 1
      %s181 = scalar_select %p178, %s179, %s180
      %p184 = pneg %p178
      %p185 = scmp.eq.s32.totalorder %s17, 1
      %p186 = por %p184, %p185
      %p187 = scmp.ne.s32.totalorder %s179, %s182
      %p188 = scmp.eq.s32.totalorder %s17, 0
      %p189 = por %p187, %p188
      %p190 = scmp.ne.s32.totalorder %s179, %s182
      %p191 = scmp.eq.s32.totalorder %s22, 1
      %p192 = por %p190, %p191
      %p193 = scmp.ne.s32.totalorder %s182, %s183
      %p194 = scmp.eq.s32.totalorder %s22, 0
      %p195 = por %p193, %p194
      %p196 = scmp.ne.s32.totalorder %s182, %s183
      %p197 = scmp.eq.s32.totalorder %s23, 1
      %p198 = por %p196, %p197
      %p200 = scmp.ne.s32.totalorder %s183, %s199
      %p201 = scmp.eq.s32.totalorder %s23, 0
      %p202 = por %p200, %p201
      %p203 = scmp.le.s32.totalorder 1, %s17
      %p204 = scmp.lt.s32.totalorder %s17, 3
      %p205 = pnand %p203, %p204
      %p206 = pneg %p205
      // Predicated region
      $region9: #{_lambda_.1} parent=5 // pred_check
        _
      $region10: #{_lambda_.1} parent=5 // pred_check_branch
        %208 = sbr.rel (%p205) target = $region12
      $region11: #{_lambda_.1} parent=5 // pred_region
        %s209 = ssub.s32 %s17, 1
        // Predicated region
        $region13: #{_lambda_.1} parent=11 // pred_check
          %p210 = pneg %p64
        $region14: #{_lambda_.1} parent=11 // pred_check_branch
          %212 = sbr.rel (%p210) target = $region16
        $region15: #{_lambda_.1} parent=11 // pred_region
          %214 = vsyncadd [#allocation5], 0
          %s215 = sshll.u32 %s1, 4
          %s216 = int_to_ptr.hbm [resolvable:$true] %s215
          %s217 = sshll.u32 [#allocation4], 4
          %s218 = int_to_ptr.vmem [resolvable:$true] %s217
          %223 = dma.hbm_to_vmem [thread:$0]  %s216, 43008, %s218, [#allocation5], 256, 256, 16
        $region16: #{_lambda_.1} parent=11 // pred_fallthru
          _
        // Predicated region
        $region17: #{_lambda_.1} parent=11 // pred_check
          %p224 = pneg %p85
        $region18: #{_lambda_.1} parent=11 // pred_check_branch
          %226 = sbr.rel (%p224) target = $region20
        $region19: #{_lambda_.1} parent=11 // pred_region
          %228 = vsyncadd [#allocation7], 0
          %s230 = sshll.u32 %s2, 4
          %s231 = int_to_ptr.hbm [resolvable:$true] %s230
          %s232 = sshll.u32 [#allocation6], 4
          %s233 = int_to_ptr.vmem [resolvable:$true] %s232
          %235 = dma.hbm_to_vmem [thread:$0]  %s231, 64, %s233, [#allocation7]
        $region20: #{_lambda_.1} parent=11 // pred_fallthru
          _
        // Predicated region
        $region21: #{_lambda_.1} parent=11 // pred_check
          %p236 = pneg %p106
        $region22: #{_lambda_.1} parent=11 // pred_check_branch
          %238 = sbr.rel (%p236) target = $region24
        $region23: #{_lambda_.1} parent=11 // pred_region
          %240 = vsyncadd [#allocation7], 0
          %s242 = sshll.u32 %s3, 4
          %s243 = int_to_ptr.hbm [resolvable:$true] %s242
          %s244 = sshll.u32 [#allocation8], 4
          %s245 = int_to_ptr.vmem [resolvable:$true] %s244
          %247 = dma.hbm_to_vmem [thread:$0]  %s243, 64, %s245, [#allocation7]
        $region24: #{_lambda_.1} parent=11 // pred_fallthru
          _
        // Predicated region
        $region25: #{_lambda_.1} parent=11 // pred_check
          %p248 = pneg %p127
        $region26: #{_lambda_.1} parent=11 // pred_check_branch
          %250 = sbr.rel (%p248) target = $region28
        $region27: #{_lambda_.1} parent=11 // pred_region
          %252 = vsyncadd [#allocation10], 0
          %s253 = sshll.u32 %s4, 4
          %s254 = int_to_ptr.hbm [resolvable:$true] %s253
          %s255 = sshll.u32 [#allocation9], 4
          %s256 = int_to_ptr.vmem [resolvable:$true] %s255
          %261 = dma.hbm_to_vmem [thread:$0]  %s254, 49152, %s256, [#allocation10], 256, 256, 16
        $region28: #{_lambda_.1} parent=11 // pred_fallthru
          _
        // Predicated region
        $region29: #{_lambda_.1} parent=11 // pred_check
          %p262 = pneg %p148
        $region30: #{_lambda_.1} parent=11 // pred_check_branch
          %264 = sbr.rel (%p262) target = $region32
        $region31: #{_lambda_.1} parent=11 // pred_region
          %266 = vsyncadd [#allocation10], 0
          %s268 = sshll.u32 %s5, 4
          %s269 = int_to_ptr.hbm [resolvable:$true] %s268
          %s270 = sshll.u32 [#allocation11], 4
          %s271 = int_to_ptr.vmem [resolvable:$true] %s270
          %273 = dma.hbm_to_vmem [thread:$0]  %s269, 64, %s271, [#allocation10]
        $region32: #{_lambda_.1} parent=11 // pred_fallthru
          _
        // Predicated region
        $region33: #{_lambda_.1} parent=11 // pred_check
          %p274 = pneg %p169
        $region34: #{_lambda_.1} parent=11 // pred_check_branch
          %276 = sbr.rel (%p274) target = $region36
        $region35: #{_lambda_.1} parent=11 // pred_region
          %278 = vsyncadd [#allocation13], 0
          %s280 = sshll.u32 %s6, 4
          %s281 = int_to_ptr.hbm [resolvable:$true] %s280
          %s282 = sshll.u32 [#allocation12], 4
          %s283 = int_to_ptr.vmem [resolvable:$true] %s282
          %285 = dma.hbm_to_vmem [thread:$0]  %s281, 64, %s283, [#allocation13]
        $region36: #{_lambda_.1} parent=11 // pred_fallthru
          _
      $region12: #{_lambda_.1} parent=5 // pred_fallthru
        _
      %p286 = scmp.lt.s32.totalorder %s17, 2
      // Predicated region
      $region37: #{_lambda_.1} parent=5 // pred_check
        %p287 = pneg %p286
      $region38: #{_lambda_.1} parent=5 // pred_check_branch
        %289 = sbr.rel (%p287) target = $region40
      $region39: #{_lambda_.1} parent=5 // pred_region
        // Predicated region
        $region41: #{_lambda_.1} parent=39 // pred_check
          %p290 = pneg %p37
        $region42: #{_lambda_.1} parent=39 // pred_check_branch
          %292 = sbr.rel (%p290) target = $region44
        $region43: #{_lambda_.1} parent=39 // pred_region
          %p293 = scmp.lt.s32.totalorder %s17, 1
          %s294 = scalar_select %p293, %s17, 1
          %s295 = smul.addr %s294, 2
          %s296 = smul.addr %s295, 8
          %s297 = scalar_lea.vmem %s0, %s296
        $region44: #{_lambda_.1} parent=39 // pred_fallthru
          _
      $region40: #{_lambda_.1} parent=5 // pred_fallthru
        _
      %p298 = scmp.le.s32.totalorder 1, %s17
      %p299 = scmp.lt.s32.totalorder %s17, 3
      %p300 = pnand %p298, %p299
      %p301 = pneg %p300
      // Predicated region
      $region45: #{_lambda_.1} parent=5 // pred_check
        _
      $region46: #{_lambda_.1} parent=5 // pred_check_branch
        %303 = sbr.rel (%p300) target = $region48
      $region47: #{_lambda_.1} parent=5 // pred_region
        %s304 = ssub.s32 %s17, 1
        // Predicated region
        $region49: #{_lambda_.1} parent=47 // pred_check
          %p305 = pneg %p64
        $region50: #{_lambda_.1} parent=47 // pred_check_branch
          %307 = sbr.rel (%p305) target = $region52
        $region51: #{_lambda_.1} parent=47 // pred_region
          %309 = dma.done [#allocation5], 43008
        $region52: #{_lambda_.1} parent=47 // pred_fallthru
          _
        // Predicated region
        $region53: #{_lambda_.1} parent=47 // pred_check
          %p310 = pneg %p85
        $region54: #{_lambda_.1} parent=47 // pred_check_branch
          %312 = sbr.rel (%p310) target = $region56
        $region55: #{_lambda_.1} parent=47 // pred_region
          %314 = dma.done [#allocation7], 64
        $region56: #{_lambda_.1} parent=47 // pred_fallthru
          _
        // Predicated region
        $region57: #{_lambda_.1} parent=47 // pred_check
          %p315 = pneg %p106
        $region58: #{_lambda_.1} parent=47 // pred_check_branch
          %317 = sbr.rel (%p315) target = $region60
        $region59: #{_lambda_.1} parent=47 // pred_region
          %319 = dma.done [#allocation7], 64
        $region60: #{_lambda_.1} parent=47 // pred_fallthru
          _
        // Predicated region
        $region61: #{_lambda_.1} parent=47 // pred_check
          %p320 = pneg %p127
        $region62: #{_lambda_.1} parent=47 // pred_check_branch
          %322 = sbr.rel (%p320) target = $region64
        $region63: #{_lambda_.1} parent=47 // pred_region
          %324 = dma.done [#allocation10], 49152
        $region64: #{_lambda_.1} parent=47 // pred_fallthru
          _
        // Predicated region
        $region65: #{_lambda_.1} parent=47 // pred_check
          %p325 = pneg %p148
        $region66: #{_lambda_.1} parent=47 // pred_check_branch
          %327 = sbr.rel (%p325) target = $region68
        $region67: #{_lambda_.1} parent=47 // pred_region
          %329 = dma.done [#allocation10], 64
        $region68: #{_lambda_.1} parent=47 // pred_fallthru
          _
        // Predicated region
        $region69: #{_lambda_.1} parent=47 // pred_check
          %p330 = pneg %p169
        $region70: #{_lambda_.1} parent=47 // pred_check_branch
          %332 = sbr.rel (%p330) target = $region72
        $region71: #{_lambda_.1} parent=47 // pred_region
          %334 = dma.done [#allocation13], 64
        $region72: #{_lambda_.1} parent=47 // pred_fallthru
          _
        %p335 = scmp.lt.s32.totalorder %s22, 1
        %s336 = scalar_select %p335, %s22, 1
        %s337 = smul.addr %s336, 2
        %s338 = smul.addr %s337, 8
        %s339 = scalar_lea.vmem %s0, %s338
        %p340 = pneg %p43
        %p341 = pneg %p40
        %p342 = pneg %p64
        %p343 = pneg %p61
        %p344 = pneg %p85
        %p345 = pneg %p82
        %p346 = pneg %p106
        %p347 = pneg %p103
        %p348 = pneg %p127
        %p349 = pneg %p124
        %p350 = pneg %p148
        %p351 = pneg %p145
        %p352 = pneg %p169
        %p353 = pneg %p166
        %p354 = pneg %p195
        %p355 = pneg %p192
        %p356 = scmp.lt.s32.totalorder %s22, 1
        %s357 = scalar_select %p356, %s22, 1
        %s358 = smul.addr %s357, 20
        %s359 = smul.addr %s358, 8
        %s360 = scalar_lea.vmem %s7, %s359
        %p361 = scmp.lt.s32.totalorder %s22, 1
        %s362 = scalar_select %p361, %s22, 1
        %s363 = smul.addr %s362, 2
        %s364 = smul.addr %s363, 8
        %s365 = scalar_lea.vmem %s0, %s364
        %p366 = scmp.lt.s32.totalorder %s22, 1
        %s367 = scalar_select %p366, %s22, 1
        %s368 = smul.addr %s367, 20
        %s369 = smul.addr %s368, 8
        %s370 = scalar_lea.vmem %s7, %s369
        %vm372 = vcmask 519168
        %373 = vst.msk [vmem:[#allocation2] sm:$0xf] %vm372, 0
        %374 = vst.msk [vmem:[#allocation2 + $0x4] sm:$0xf] %vm372, 0
        %vm375 = vcmask 517120
        %vm376 = vsmask.f32 1280
        %vm377 = vmand %vm375, %vm376
        %v378 = vld [vmem:[#allocation2 + $0x8] sm:$0x3]
        %v379 = vsel %vm377, 0, %v378
        %380 = vst [vmem:[#allocation2 + $0x8] sm:$0x3] %v379
        %vm381 = vcmask 519169
        %vm382 = vsmask.f32 7942
        %vm383 = vmand %vm381, %vm382
        %v384 = vld [vmem:[#allocation2 + $0x10] sm:$0xe]
        %v385 = vsel %vm383, 0, %v384
        %386 = vst [vmem:[#allocation2 + $0x10] sm:$0xe] %v385
        %387 = vst.msk [vmem:[#allocation2 + $0x14] sm:$0xf] %vm372, 0
        %vm388 = vcmask 518144
        %389 = vst.msk [vmem:[#allocation2 + $0x18] sm:$0x7] %vm388, 0
        %v390 = vld [vmem:[%s365] sm:$0xff]
        %v391 = vld [vmem:[%s365 + $0x8] sm:$0xff]
        %v392 = vpack.c.bf16 %v390, %v390
        %v393 = vpack.c.bf16 %v391, %v391
        %vm394 = vsmask.f32 5392
        %vm395 = vmor %vm376, %vm394
        %v397 = vshrl.u32 %v392, 16
        %v399 = vrot.slane %v397, 6
        %v400 = vshll.u32 %v392, 16
        %v402 = vrot.slane %v400, 7
        %v403 = vor.u32 %v399, %v402
        %v404 = vrot.slane %v403, 4
        %v406 = vshrl.u32 %v393, 16
        %v408 = vrot.slane %v406, 6
        %v409 = vshll.u32 %v393, 16
        %v411 = vrot.slane %v409, 7
        %v412 = vor.u32 %v408, %v411
        %v413 = vsel %vm395, %v404, %v412
        %v414 = vrot.slane %v412, 4
        %v418 = vld [vmem:[#allocation2 + $0x8] sm:$0xe]
        %v419 = vsel %vm383, %v403, %v418
        %420 = vst [vmem:[#allocation2 + $0x8] sm:$0xe] %v419
        %421 = vst.msk [vmem:[#allocation2 + $0xc] sm:$0xf] %vm372, %v413
        %v422 = vld [vmem:[#allocation2 + $0x10] sm:$0x3]
        %v423 = vsel %vm377, %v414, %v422
        %424 = vst [vmem:[#allocation2 + $0x10] sm:$0x3] %v423
        %v425 = vld [vmem:[#allocation2] sm:$0xf]
        %v426 = vld [vmem:[#allocation2 + $0x4] sm:$0xf]
        %v427 = vld [vmem:[#allocation2 + $0x8] sm:$0xf]
        %v428 = vld [vmem:[#allocation2 + $0xc] sm:$0xf]
        %v429 = vld [vmem:[#allocation2 + $0x10] sm:$0x1]
        %v430 = vld [vmem:[#allocation2 + $0x10] sm:$0x3]
        %v431 = vld [vmem:[#allocation2] sm:$0xe]
        %v432 = vld [vmem:[#allocation2 + $0x10] sm:$0x7]
        %v433 = vld [vmem:[#allocation2] sm:$0xc]
        %v434 = vld [vmem:[#allocation2 + $0x10] sm:$0xf]
        %v435 = vld [vmem:[#allocation2] sm:$0x8]
        %v436 = vld [vmem:[#allocation2 + $0x14] sm:$0x1]
        %v437 = vld [vmem:[#allocation2 + $0x14] sm:$0x3]
        %v438 = vld [vmem:[#allocation2 + $0x4] sm:$0xe]
        %v439 = vld [vmem:[#allocation2 + $0x14] sm:$0x7]
        %v440 = vld [vmem:[#allocation2 + $0x4] sm:$0xc]
        %v441 = vld [vmem:[#allocation2 + $0x14] sm:$0xf]
        %v442 = vld [vmem:[#allocation2 + $0x4] sm:$0x8]
        %v443 = vld [vmem:[#allocation2 + $0x18] sm:$0x1]
        %v444 = vld [vmem:[#allocation2 + $0x18] sm:$0x3]
        %v445 = vld [vmem:[#allocation2 + $0x8] sm:$0xe]
        %v446 = vld [vmem:[#allocation2 + $0x18] sm:$0x7]
        %v447 = vld [vmem:[#allocation2 + $0x8] sm:$0xc]
        %v453 = vunpack.c.l.b16 %v425
        %v454 = vunpack.c.l.b16 %v426
        %v455 = vunpack.c.l.b16 %v427
        %v456 = vunpack.c.l.b16 %v428
        %v457 = vunpack.c.l.b16 %v429
        %v458 = vpack.c.b16 %v454, %v453
        %v459 = vpack.c.b16 %v456, %v455
        %v460 = vpack.c.b16 %v457, %v457
        %v462 = vunpack.c.l.b16 %v430
        %v463 = vpack.c.b16 %v462, %v462
        %vm464 = vsmask.f32 7424
        %v466 = vshrl.u32 %v458, 16
        %v468 = vshll.u32 %v458, 16
        %v470 = vrot.slane %v468, 1
        %v471 = vor.u32 %v466, %v470
        %v473 = vshll.u32 %v459, 16
        %v475 = vrot.slane %v473, 1
        %v476 = vsel %vm464, %v471, %v475
        %v477 = vshrl.u32 %v459, 16
        %v479 = vor.u32 %v477, %v475
        %v481 = vshll.u32 %v463, 16
        %v483 = vrot.slane %v481, 1
        %v484 = vsel %vm464, %v479, %v483
        %v485 = vshrl.u32 %v463, 16
        %v487 = vor.u32 %v485, %v483
        %488 = vrot.lane.b32.xlu0 %v476, 64
        %v489 = vpop.permute.xlu0 %488
        %490 = vrot.lane.b32.xlu0 %v484, 64
        %v491 = vpop.permute.xlu0 %490
        %492 = vrot.lane.b32.xlu0 %v487, 64
        %v493 = vpop.permute.xlu0 %492
        %v495 = vunpack.c.l.b16 %v431
        %v496 = vpack.c.b16 %v454, %v495
        %vm497 = vcmask 1046528
        %v498 = vrot.slane %v496, 1
        %v499 = vrot.slane %v459, 1
        %v500 = vsel %vm497, %v498, %v499
        %v501 = vrot.slane %v463, 1
        %v502 = vsel %vm497, %v499, %v501
        %v504 = vunpack.c.l.b16 %v432
        %v505 = vpack.c.b16 %v504, %v504
        %vm506 = vsmask.f32 6400
        %v508 = vshrl.u32 %v496, 16
        %v510 = vrot.slane %v508, 1
        %v511 = vshll.u32 %v496, 16
        %v513 = vrot.slane %v511, 2
        %v514 = vor.u32 %v510, %v513
        %v515 = vrot.slane %v477, 1
        %v516 = vrot.slane %v473, 2
        %v517 = vor.u32 %v515, %v516
        %v518 = vsel %vm506, %v514, %v517
        %v520 = vshrl.u32 %v505, 16
        %v522 = vrot.slane %v520, 1
        %v523 = vshll.u32 %v505, 16
        %v525 = vrot.slane %v523, 2
        %v526 = vor.u32 %v522, %v525
        %v527 = vsel %vm506, %v517, %v526
        %528 = vrot.lane.b32.xlu0 %v518, 64
        %v529 = vpop.permute.xlu0 %528
        %530 = vrot.lane.b32.xlu0 %v527, 64
        %v531 = vpop.permute.xlu0 %530
        %532 = vrot.lane.b32.xlu0 %v526, 64
        %v533 = vpop.permute.xlu0 %532
        %v535 = vunpack.c.l.b16 %v433
        %v536 = vpack.c.b16 %v454, %v535
        %vm537 = vcmask 1045504
        %v538 = vrot.slane %v536, 2
        %v539 = vrot.slane %v459, 2
        %v540 = vsel %vm537, %v538, %v539
        %v541 = vrot.slane %v505, 2
        %v542 = vsel %vm537, %v539, %v541
        %v544 = vunpack.c.l.b16 %v434
        %v545 = vpack.c.b16 %v544, %v544
        %vm546 = vsmask.f32 5376
        %v548 = vshrl.u32 %v536, 16
        %v550 = vrot.slane %v548, 2
        %v551 = vshll.u32 %v536, 16
        %v553 = vrot.slane %v551, 3
        %v554 = vor.u32 %v550, %v553
        %v555 = vrot.slane %v477, 2
        %v556 = vrot.slane %v473, 3
        %v557 = vor.u32 %v555, %v556
        %v558 = vsel %vm546, %v554, %v557
        %v560 = vshrl.u32 %v545, 16
        %v562 = vrot.slane %v560, 2
        %v563 = vshll.u32 %v545, 16
        %v565 = vrot.slane %v563, 3
        %v566 = vor.u32 %v562, %v565
        %v567 = vsel %vm546, %v557, %v566
        %568 = vrot.lane.b32.xlu0 %v558, 64
        %v569 = vpop.permute.xlu0 %568
        %570 = vrot.lane.b32.xlu0 %v567, 64
        %v571 = vpop.permute.xlu0 %570
        %572 = vrot.lane.b32.xlu0 %v566, 64
        %v573 = vpop.permute.xlu0 %572
        %v575 = vunpack.c.l.b16 %v435
        %v576 = vpack.c.b16 %v454, %v575
        %vm577 = vcmask 1044480
        %v578 = vrot.slane %v576, 3
        %v579 = vrot.slane %v459, 3
        %v580 = vsel %vm577, %v578, %v579
        %v581 = vrot.slane %v545, 3
        %v582 = vsel %vm577, %v579, %v581
        %v584 = vunpack.c.l.b16 %v436
        %v585 = vpack.c.b16 %v584, %v544
        %vm586 = vsmask.f32 4352
        %v588 = vshrl.u32 %v576, 16
        %v590 = vrot.slane %v588, 3
        %v591 = vshll.u32 %v576, 16
        %v593 = vrot.slane %v591, 4
        %v594 = vor.u32 %v590, %v593
        %v595 = vrot.slane %v477, 3
        %v596 = vrot.slane %v473, 4
        %v597 = vor.u32 %v595, %v596
        %v598 = vsel %vm586, %v594, %v597
        %v600 = vshrl.u32 %v585, 16
        %v602 = vrot.slane %v600, 3
        %v603 = vshll.u32 %v585, 16
        %v605 = vrot.slane %v603, 4
        %v606 = vor.u32 %v602, %v605
        %v607 = vsel %vm586, %v597, %v606
        %608 = vrot.lane.b32.xlu0 %v598, 64
        %v609 = vpop.permute.xlu0 %608
        %610 = vrot.lane.b32.xlu0 %v607, 64
        %v611 = vpop.permute.xlu0 %610
        %612 = vrot.lane.b32.xlu0 %v606, 64
        %v613 = vpop.permute.xlu0 %612
        %v614 = vpack.c.b16 %v455, %v454
        %v615 = vpack.c.b16 %v544, %v456
        %v616 = vpack.c.b16 %v584, %v584
        %v618 = vunpack.c.l.b16 %v437
        %v619 = vpack.c.b16 %v618, %v618
        %v621 = vshrl.u32 %v614, 16
        %v623 = vshll.u32 %v614, 16
        %v625 = vrot.slane %v623, 1
        %v626 = vor.u32 %v621, %v625
        %v628 = vshll.u32 %v615, 16
        %v630 = vrot.slane %v628, 1
        %v631 = vsel %vm464, %v626, %v630
        %v632 = vshrl.u32 %v615, 16
        %v634 = vor.u32 %v632, %v630
        %v636 = vshll.u32 %v619, 16
        %v638 = vrot.slane %v636, 1
        %v639 = vsel %vm464, %v634, %v638
        %v640 = vshrl.u32 %v619, 16
        %v642 = vor.u32 %v640, %v638
        %643 = vrot.lane.b32.xlu0 %v631, 64
        %v644 = vpop.permute.xlu0 %643
        %645 = vrot.lane.b32.xlu0 %v639, 64
        %v646 = vpop.permute.xlu0 %645
        %647 = vrot.lane.b32.xlu0 %v642, 64
        %v648 = vpop.permute.xlu0 %647
        %v650 = vunpack.c.l.b16 %v438
        %v651 = vpack.c.b16 %v455, %v650
        %v652 = vrot.slane %v651, 1
        %v653 = vrot.slane %v615, 1
        %v654 = vsel %vm497, %v652, %v653
        %v655 = vrot.slane %v619, 1
        %v656 = vsel %vm497, %v653, %v655
        %v658 = vunpack.c.l.b16 %v439
        %v659 = vpack.c.b16 %v658, %v658
        %v661 = vshrl.u32 %v651, 16
        %v663 = vrot.slane %v661, 1
        %v664 = vshll.u32 %v651, 16
        %v666 = vrot.slane %v664, 2
        %v667 = vor.u32 %v663, %v666
        %v668 = vrot.slane %v632, 1
        %v669 = vrot.slane %v628, 2
        %v670 = vor.u32 %v668, %v669
        %v671 = vsel %vm506, %v667, %v670
        %v673 = vshrl.u32 %v659, 16
        %v675 = vrot.slane %v673, 1
        %v676 = vshll.u32 %v659, 16
        %v678 = vrot.slane %v676, 2
        %v679 = vor.u32 %v675, %v678
        %v680 = vsel %vm506, %v670, %v679
        %681 = vrot.lane.b32.xlu0 %v671, 64
        %v682 = vpop.permute.xlu0 %681
        %683 = vrot.lane.b32.xlu0 %v680, 64
        %v684 = vpop.permute.xlu0 %683
        %685 = vrot.lane.b32.xlu0 %v679, 64
        %v686 = vpop.permute.xlu0 %685
        %v688 = vunpack.c.l.b16 %v440
        %v689 = vpack.c.b16 %v455, %v688
        %v690 = vrot.slane %v689, 2
        %v691 = vrot.slane %v615, 2
        %v692 = vsel %vm537, %v690, %v691
        %v693 = vrot.slane %v659, 2
        %v694 = vsel %vm537, %v691, %v693
        %v696 = vunpack.c.l.b16 %v441
        %v697 = vpack.c.b16 %v696, %v696
        %v699 = vshrl.u32 %v689, 16
        %v701 = vrot.slane %v699, 2
        %v702 = vshll.u32 %v689, 16
        %v704 = vrot.slane %v702, 3
        %v705 = vor.u32 %v701, %v704
        %v706 = vrot.slane %v632, 2
        %v707 = vrot.slane %v628, 3
        %v708 = vor.u32 %v706, %v707
        %v709 = vsel %vm546, %v705, %v708
        %v711 = vshrl.u32 %v697, 16
        %v713 = vrot.slane %v711, 2
        %v714 = vshll.u32 %v697, 16
        %v716 = vrot.slane %v714, 3
        %v717 = vor.u32 %v713, %v716
        %v718 = vsel %vm546, %v708, %v717
        %719 = vrot.lane.b32.xlu0 %v709, 64
        %v720 = vpop.permute.xlu0 %719
        %721 = vrot.lane.b32.xlu0 %v718, 64
        %v722 = vpop.permute.xlu0 %721
        %723 = vrot.lane.b32.xlu0 %v717, 64
        %v724 = vpop.permute.xlu0 %723
        %v726 = vunpack.c.l.b16 %v442
        %v727 = vpack.c.b16 %v455, %v726
        %v728 = vrot.slane %v727, 3
        %v729 = vrot.slane %v615, 3
        %v730 = vsel %vm577, %v728, %v729
        %v731 = vrot.slane %v697, 3
        %v732 = vsel %vm577, %v729, %v731
        %v734 = vunpack.c.l.b16 %v443
        %v735 = vpack.c.b16 %v734, %v696
        %v737 = vshrl.u32 %v727, 16
        %v739 = vrot.slane %v737, 3
        %v740 = vshll.u32 %v727, 16
        %v742 = vrot.slane %v740, 4
        %v743 = vor.u32 %v739, %v742
        %v744 = vrot.slane %v632, 3
        %v745 = vrot.slane %v628, 4
        %v746 = vor.u32 %v744, %v745
        %v747 = vsel %vm586, %v743, %v746
        %v749 = vshrl.u32 %v735, 16
        %v751 = vrot.slane %v749, 3
        %v752 = vshll.u32 %v735, 16
        %v754 = vrot.slane %v752, 4
        %v755 = vor.u32 %v751, %v754
        %v756 = vsel %vm586, %v746, %v755
        %757 = vrot.lane.b32.xlu0 %v747, 64
        %v758 = vpop.permute.xlu0 %757
        %759 = vrot.lane.b32.xlu0 %v756, 64
        %v760 = vpop.permute.xlu0 %759
        %761 = vrot.lane.b32.xlu0 %v755, 64
        %v762 = vpop.permute.xlu0 %761
        %vm763 = vcmask 523264
        %v765 = vsel %vm763, %v458, %v489
        %v768 = vsel %vm763, %v459, %v491
        %v772 = vsel %vm763, %v460, %v493
        %v776 = vsel %vm763, %v500, %v529
        %v780 = vsel %vm763, %v502, %v531
        %v784 = vsel %vm763, %v501, %v533
        %v788 = vsel %vm763, %v540, %v569
        %v792 = vsel %vm763, %v542, %v571
        %v796 = vsel %vm763, %v541, %v573
        %v800 = vsel %vm763, %v580, %v609
        %v804 = vsel %vm763, %v582, %v611
        %v808 = vsel %vm763, %v581, %v613
        %v811 = vsel %vm763, %v614, %v644
        %v814 = vsel %vm763, %v615, %v646
        %v818 = vsel %vm763, %v616, %v648
        %v822 = vsel %vm763, %v654, %v682
        %v826 = vsel %vm763, %v656, %v684
        %v830 = vsel %vm763, %v655, %v686
        %v834 = vsel %vm763, %v692, %v720
        %v838 = vsel %vm763, %v694, %v722
        %v842 = vsel %vm763, %v693, %v724
        %v846 = vsel %vm763, %v730, %v758
        %v850 = vsel %vm763, %v732, %v760
        %v854 = vsel %vm763, %v731, %v762
        %v856 = vpack.c.b16 %v696, %v544
        %v857 = vpack.c.b16 %v734, %v734
        %v859 = vunpack.c.l.b16 %v444
        %v860 = vpack.c.b16 %v859, %v859
        %v862 = vshll.u32 %v856, 16
        %v864 = vrot.slane %v862, 1
        %v865 = vsel %vm464, %v479, %v864
        %v866 = vshrl.u32 %v856, 16
        %v868 = vor.u32 %v866, %v864
        %v870 = vshll.u32 %v860, 16
        %v872 = vrot.slane %v870, 1
        %v873 = vsel %vm464, %v868, %v872
        %v874 = vshrl.u32 %v860, 16
        %v876 = vor.u32 %v874, %v872
        %877 = vrot.lane.b32.xlu0 %v865, 64
        %v878 = vpop.permute.xlu0 %877
        %879 = vrot.lane.b32.xlu0 %v873, 64
        %v880 = vpop.permute.xlu0 %879
        %881 = vrot.lane.b32.xlu0 %v876, 64
        %v882 = vpop.permute.xlu0 %881
        %v884 = vunpack.c.l.b16 %v445
        %v885 = vpack.c.b16 %v456, %v884
        %v886 = vrot.slane %v885, 1
        %v887 = vrot.slane %v856, 1
        %v888 = vsel %vm497, %v886, %v887
        %v889 = vrot.slane %v860, 1
        %v890 = vsel %vm497, %v887, %v889
        %v892 = vunpack.c.l.b16 %v446
        %v893 = vpack.c.b16 %v892, %v892
        %v895 = vshrl.u32 %v885, 16
        %v897 = vrot.slane %v895, 1
        %v898 = vshll.u32 %v885, 16
        %v900 = vrot.slane %v898, 2
        %v901 = vor.u32 %v897, %v900
        %v902 = vrot.slane %v866, 1
        %v903 = vrot.slane %v862, 2
        %v904 = vor.u32 %v902, %v903
        %v905 = vsel %vm506, %v901, %v904
        %v907 = vshrl.u32 %v893, 16
        %v909 = vrot.slane %v907, 1
        %v910 = vshll.u32 %v893, 16
        %v912 = vrot.slane %v910, 2
        %v913 = vor.u32 %v909, %v912
        %v914 = vsel %vm506, %v904, %v913
        %915 = vrot.lane.b32.xlu0 %v905, 64
        %v916 = vpop.permute.xlu0 %915
        %917 = vrot.lane.b32.xlu0 %v914, 64
        %v918 = vpop.permute.xlu0 %917
        %919 = vrot.lane.b32.xlu0 %v913, 64
        %v920 = vpop.permute.xlu0 %919
        %v922 = vunpack.c.l.b16 %v447
        %v923 = vpack.c.b16 %v456, %v922
        %v924 = vrot.slane %v923, 2
        %v925 = vrot.slane %v856, 2
        %v926 = vsel %vm537, %v924, %v925
        %v927 = vrot.slane %v893, 2
        %v928 = vsel %vm537, %v925, %v927
        %v930 = vsel %vm763, %v459, %v878
        %v933 = vsel %vm763, %v856, %v880
        %v937 = vsel %vm763, %v857, %v882
        %v941 = vsel %vm763, %v888, %v916
        %v945 = vsel %vm763, %v890, %v918
        %v949 = vsel %vm763, %v889, %v920
        %v951 = vld [vmem:[#allocation4] sm:$0xff]
        %v952 = vld [vmem:[#allocation4 + $0x8] sm:$0xff]
        %v953 = vld [vmem:[#allocation4 + $0x10] sm:$0xff]
        %v954 = vld [vmem:[#allocation4 + $0x18] sm:$0xff]
        %v955 = vld [vmem:[#allocation4 + $0x20] sm:$0xff]
        %v956 = vld [vmem:[#allocation4 + $0x28] sm:$0xff]
        %v957 = vld [vmem:[#allocation4 + $0x30] sm:$0xff]
        %v958 = vld [vmem:[#allocation4 + $0x38] sm:$0xff]
        %v959 = vld [vmem:[#allocation4 + $0x40] sm:$0xff]
        %v960 = vld [vmem:[#allocation4 + $0x48] sm:$0xff]
        %v961 = vld [vmem:[#allocation4 + $0x50] sm:$0xff]
        %v962 = vld [vmem:[#allocation4 + $0x58] sm:$0xff]
        %v963 = vld [vmem:[#allocation4 + $0x60] sm:$0xff]
        %v964 = vld [vmem:[#allocation4 + $0x68] sm:$0xff]
        %v965 = vld [vmem:[#allocation4 + $0x70] sm:$0xff]
        %v966 = vld [vmem:[#allocation4 + $0x78] sm:$0xff]
        %v967 = vld [vmem:[#allocation4 + $0x80] sm:$0xff]
        %v968 = vld [vmem:[#allocation4 + $0x88] sm:$0xff]
        %v969 = vld [vmem:[#allocation4 + $0x90] sm:$0xff]
        %v970 = vld [vmem:[#allocation4 + $0x98] sm:$0xff]
        %v971 = vld [vmem:[#allocation4 + $0xa0] sm:$0xff]
        %v972 = vld [vmem:[#allocation4 + $0xa8] sm:$0xff]
        %v973 = vld [vmem:[#allocation4 + $0xb0] sm:$0xff]
        %v974 = vld [vmem:[#allocation4 + $0xb8] sm:$0xff]
        %v975 = vld [vmem:[#allocation4 + $0xc0] sm:$0xff]
        %v976 = vld [vmem:[#allocation4 + $0xc8] sm:$0xff]
        %v977 = vld [vmem:[#allocation4 + $0xd0] sm:$0xff]
        %v978 = vld [vmem:[#allocation4 + $0xd8] sm:$0xff]
        %v979 = vld [vmem:[#allocation4 + $0xe0] sm:$0xff]
        %v980 = vld [vmem:[#allocation4 + $0xe8] sm:$0xff]
        %v981 = vld [vmem:[#allocation4 + $0xf0] sm:$0xff]
        %v982 = vld [vmem:[#allocation4 + $0xf8] sm:$0xff]
        %v983 = vld [vmem:[#allocation4 + $0x100] sm:$0xff]
        %v984 = vld [vmem:[#allocation4 + $0x108] sm:$0xff]
        %v985 = vld [vmem:[#allocation4 + $0x110] sm:$0xff]
        %v986 = vld [vmem:[#allocation4 + $0x118] sm:$0xff]
        %v987 = vld [vmem:[#allocation4 + $0x120] sm:$0xff]
        %v988 = vld [vmem:[#allocation4 + $0x128] sm:$0xff]
        %v989 = vld [vmem:[#allocation4 + $0x130] sm:$0xff]
        %v990 = vld [vmem:[#allocation4 + $0x138] sm:$0xff]
        %v991 = vld [vmem:[#allocation4 + $0x140] sm:$0xff]
        %v992 = vld [vmem:[#allocation4 + $0x148] sm:$0xff]
        %v993 = vld [vmem:[#allocation4 + $0x150] sm:$0xff]
        %v994 = vld [vmem:[#allocation4 + $0x158] sm:$0xff]
        %v995 = vld [vmem:[#allocation4 + $0x160] sm:$0xff]
        %v996 = vld [vmem:[#allocation4 + $0x168] sm:$0xff]
        %v997 = vld [vmem:[#allocation4 + $0x170] sm:$0xff]
        %v998 = vld [vmem:[#allocation4 + $0x178] sm:$0xff]
        %v999 = vld [vmem:[#allocation4 + $0x180] sm:$0xff]
        %v1000 = vld [vmem:[#allocation4 + $0x188] sm:$0xff]
        %v1001 = vld [vmem:[#allocation4 + $0x190] sm:$0xff]
        %v1002 = vld [vmem:[#allocation4 + $0x198] sm:$0xff]
        %v1003 = vld [vmem:[#allocation4 + $0x1a0] sm:$0xff]
        %v1004 = vld [vmem:[#allocation4 + $0x1a8] sm:$0xff]
        %v1005 = vld [vmem:[#allocation4 + $0x1b0] sm:$0xff]
        %v1006 = vld [vmem:[#allocation4 + $0x1b8] sm:$0xff]
        %v1007 = vld [vmem:[#allocation4 + $0x1c0] sm:$0xff]
        %v1008 = vld [vmem:[#allocation4 + $0x1c8] sm:$0xff]
        %v1009 = vld [vmem:[#allocation4 + $0x1d0] sm:$0xff]
        %v1010 = vld [vmem:[#allocation4 + $0x1d8] sm:$0xff]
        %v1011 = vld [vmem:[#allocation4 + $0x1e0] sm:$0xff]
        %v1012 = vld [vmem:[#allocation4 + $0x1e8] sm:$0xff]
        %v1013 = vld [vmem:[#allocation4 + $0x1f0] sm:$0xff]
        %v1014 = vld [vmem:[#allocation4 + $0x1f8] sm:$0xff]
        %v1015 = vld [vmem:[#allocation4 + $0x200] sm:$0xff]
        %v1016 = vld [vmem:[#allocation4 + $0x208] sm:$0xff]
        %v1017 = vld [vmem:[#allocation4 + $0x210] sm:$0xff]
        %v1018 = vld [vmem:[#allocation4 + $0x218] sm:$0xff]
        %v1019 = vld [vmem:[#allocation4 + $0x220] sm:$0xff]
        %v1020 = vld [vmem:[#allocation4 + $0x228] sm:$0xff]
        %v1021 = vld [vmem:[#allocation4 + $0x230] sm:$0xff]
        %v1022 = vld [vmem:[#allocation4 + $0x238] sm:$0xff]
        %v1023 = vld [vmem:[#allocation4 + $0x240] sm:$0xff]
        %v1024 = vld [vmem:[#allocation4 + $0x248] sm:$0xff]
        %v1025 = vld [vmem:[#allocation4 + $0x250] sm:$0xff]
        %v1026 = vld [vmem:[#allocation4 + $0x258] sm:$0xff]
        %v1027 = vld [vmem:[#allocation4 + $0x260] sm:$0xff]
        %v1028 = vld [vmem:[#allocation4 + $0x268] sm:$0xff]
        %v1029 = vld [vmem:[#allocation4 + $0x270] sm:$0xff]
        %v1030 = vld [vmem:[#allocation4 + $0x278] sm:$0xff]
        %v1031 = vld [vmem:[#allocation4 + $0x280] sm:$0xff]
        %v1032 = vld [vmem:[#allocation4 + $0x288] sm:$0xff]
        %v1033 = vld [vmem:[#allocation4 + $0x290] sm:$0xff]
        %v1034 = vld [vmem:[#allocation4 + $0x298] sm:$0xff]
        %v1035 = vld [vmem:[#allocation4 + $0x2a0] sm:$0xff]
        %v1036 = vld [vmem:[#allocation4 + $0x2a8] sm:$0xff]
        %v1037 = vld [vmem:[#allocation4 + $0x2b0] sm:$0xff]
        %v1038 = vld [vmem:[#allocation4 + $0x2b8] sm:$0xff]
        %v1039 = vld [vmem:[#allocation4 + $0x2c0] sm:$0xff]
        %v1040 = vld [vmem:[#allocation4 + $0x2c8] sm:$0xff]
        %v1041 = vld [vmem:[#allocation4 + $0x2d0] sm:$0xff]
        %v1042 = vld [vmem:[#allocation4 + $0x2d8] sm:$0xff]
        %v1043 = vld [vmem:[#allocation4 + $0x2e0] sm:$0xff]
        %v1044 = vld [vmem:[#allocation4 + $0x2e8] sm:$0xff]
        %v1045 = vld [vmem:[#allocation4 + $0x2f0] sm:$0xff]
        %v1046 = vld [vmem:[#allocation4 + $0x2f8] sm:$0xff]
        %v1047 = vld [vmem:[#allocation4 + $0x300] sm:$0xff]
        %v1048 = vld [vmem:[#allocation4 + $0x308] sm:$0xff]
        %v1049 = vld [vmem:[#allocation4 + $0x310] sm:$0xff]
        %v1050 = vld [vmem:[#allocation4 + $0x318] sm:$0xff]
        %v1051 = vld [vmem:[#allocation4 + $0x320] sm:$0xff]
        %v1052 = vld [vmem:[#allocation4 + $0x328] sm:$0xff]
        %v1053 = vld [vmem:[#allocation4 + $0x330] sm:$0xff]
        %v1054 = vld [vmem:[#allocation4 + $0x338] sm:$0xff]
        %v1055 = vld [vmem:[#allocation4 + $0x340] sm:$0xff]
        %v1056 = vld [vmem:[#allocation4 + $0x348] sm:$0xff]
        %v1057 = vld [vmem:[#allocation4 + $0x350] sm:$0xff]
        %v1058 = vld [vmem:[#allocation4 + $0x358] sm:$0xff]
        %v1059 = vld [vmem:[#allocation4 + $0x360] sm:$0xff]
        %v1060 = vld [vmem:[#allocation4 + $0x368] sm:$0xff]
        %v1061 = vld [vmem:[#allocation4 + $0x370] sm:$0xff]
        %v1062 = vld [vmem:[#allocation4 + $0x378] sm:$0xff]
        %v1063 = vld [vmem:[#allocation4 + $0x380] sm:$0xff]
        %v1064 = vld [vmem:[#allocation4 + $0x388] sm:$0xff]
        %v1065 = vld [vmem:[#allocation4 + $0x390] sm:$0xff]
        %v1066 = vld [vmem:[#allocation4 + $0x398] sm:$0xff]
        %v1067 = vld [vmem:[#allocation4 + $0x3a0] sm:$0xff]
        %v1068 = vld [vmem:[#allocation4 + $0x3a8] sm:$0xff]
        %v1069 = vld [vmem:[#allocation4 + $0x3b0] sm:$0xff]
        %v1070 = vld [vmem:[#allocation4 + $0x3b8] sm:$0xff]
        %v1071 = vld [vmem:[#allocation4 + $0x3c0] sm:$0xff]
        %v1072 = vld [vmem:[#allocation4 + $0x3c8] sm:$0xff]
        %v1073 = vld [vmem:[#allocation4 + $0x3d0] sm:$0xff]
        %v1074 = vld [vmem:[#allocation4 + $0x3d8] sm:$0xff]
        %v1075 = vld [vmem:[#allocation4 + $0x3e0] sm:$0xff]
        %v1076 = vld [vmem:[#allocation4 + $0x3e8] sm:$0xff]
        %v1077 = vld [vmem:[#allocation4 + $0x3f0] sm:$0xff]
        %v1078 = vld [vmem:[#allocation4 + $0x3f8] sm:$0xff]
        %v1079 = vld [vmem:[#allocation4 + $0x400] sm:$0xff]
        %v1080 = vld [vmem:[#allocation4 + $0x408] sm:$0xff]
        %v1081 = vld [vmem:[#allocation4 + $0x410] sm:$0xff]
        %v1082 = vld [vmem:[#allocation4 + $0x418] sm:$0xff]
        %v1083 = vld [vmem:[#allocation4 + $0x420] sm:$0xff]
        %v1084 = vld [vmem:[#allocation4 + $0x428] sm:$0xff]
        %v1085 = vld [vmem:[#allocation4 + $0x430] sm:$0xff]
        %v1086 = vld [vmem:[#allocation4 + $0x438] sm:$0xff]
        %v1087 = vld [vmem:[#allocation4 + $0x440] sm:$0xff]
        %v1088 = vld [vmem:[#allocation4 + $0x448] sm:$0xff]
        %v1089 = vld [vmem:[#allocation4 + $0x450] sm:$0xff]
        %v1090 = vld [vmem:[#allocation4 + $0x458] sm:$0xff]
        %v1091 = vld [vmem:[#allocation4 + $0x460] sm:$0xff]
        %v1092 = vld [vmem:[#allocation4 + $0x468] sm:$0xff]
        %v1093 = vld [vmem:[#allocation4 + $0x470] sm:$0xff]
        %v1094 = vld [vmem:[#allocation4 + $0x478] sm:$0xff]
        %v1095 = vld [vmem:[#allocation4 + $0x480] sm:$0xff]
        %v1096 = vld [vmem:[#allocation4 + $0x488] sm:$0xff]
        %v1097 = vld [vmem:[#allocation4 + $0x490] sm:$0xff]
        %v1098 = vld [vmem:[#allocation4 + $0x498] sm:$0xff]
        %v1099 = vld [vmem:[#allocation4 + $0x4a0] sm:$0xff]
        %v1100 = vld [vmem:[#allocation4 + $0x4a8] sm:$0xff]
        %v1101 = vld [vmem:[#allocation4 + $0x4b0] sm:$0xff]
        %v1102 = vld [vmem:[#allocation4 + $0x4b8] sm:$0xff]
        %v1103 = vld [vmem:[#allocation4 + $0x4c0] sm:$0xff]
        %v1104 = vld [vmem:[#allocation4 + $0x4c8] sm:$0xff]
        %v1105 = vld [vmem:[#allocation4 + $0x4d0] sm:$0xff]
        %v1106 = vld [vmem:[#allocation4 + $0x4d8] sm:$0xff]
        %v1107 = vld [vmem:[#allocation4 + $0x4e0] sm:$0xff]
        %v1108 = vld [vmem:[#allocation4 + $0x4e8] sm:$0xff]
        %v1109 = vld [vmem:[#allocation4 + $0x4f0] sm:$0xff]
        %v1110 = vld [vmem:[#allocation4 + $0x4f8] sm:$0xff]
        %v1111 = vld [vmem:[#allocation4 + $0x500] sm:$0xff]
        %v1112 = vld [vmem:[#allocation4 + $0x508] sm:$0xff]
        %v1113 = vld [vmem:[#allocation4 + $0x510] sm:$0xff]
        %v1114 = vld [vmem:[#allocation4 + $0x518] sm:$0xff]
        %v1115 = vld [vmem:[#allocation4 + $0x520] sm:$0xff]
        %v1116 = vld [vmem:[#allocation4 + $0x528] sm:$0xff]
        %v1117 = vld [vmem:[#allocation4 + $0x530] sm:$0xff]
        %v1118 = vld [vmem:[#allocation4 + $0x538] sm:$0xff]
        %v1119 = vld [vmem:[#allocation4 + $0x540] sm:$0xff]
        %v1120 = vld [vmem:[#allocation4 + $0x548] sm:$0xff]
        %v1121 = vld [vmem:[#allocation4 + $0x550] sm:$0xff]
        %v1122 = vld [vmem:[#allocation4 + $0x558] sm:$0xff]
        %v1123 = vld [vmem:[#allocation4 + $0x560] sm:$0xff]
        %v1124 = vld [vmem:[#allocation4 + $0x568] sm:$0xff]
        %v1125 = vld [vmem:[#allocation4 + $0x570] sm:$0xff]
        %v1126 = vld [vmem:[#allocation4 + $0x578] sm:$0xff]
        %v1127 = vld [vmem:[#allocation4 + $0x580] sm:$0xff]
        %v1128 = vld [vmem:[#allocation4 + $0x588] sm:$0xff]
        %v1129 = vld [vmem:[#allocation4 + $0x590] sm:$0xff]
        %v1130 = vld [vmem:[#allocation4 + $0x598] sm:$0xff]
        %v1131 = vld [vmem:[#allocation4 + $0x5a0] sm:$0xff]
        %v1132 = vld [vmem:[#allocation4 + $0x5a8] sm:$0xff]
        %v1133 = vld [vmem:[#allocation4 + $0x5b0] sm:$0xff]
        %v1134 = vld [vmem:[#allocation4 + $0x5b8] sm:$0xff]
        %v1135 = vld [vmem:[#allocation4 + $0x5c0] sm:$0xff]
        %v1136 = vld [vmem:[#allocation4 + $0x5c8] sm:$0xff]
        %v1137 = vld [vmem:[#allocation4 + $0x5d0] sm:$0xff]
        %v1138 = vld [vmem:[#allocation4 + $0x5d8] sm:$0xff]
        %v1139 = vld [vmem:[#allocation4 + $0x5e0] sm:$0xff]
        %v1140 = vld [vmem:[#allocation4 + $0x5e8] sm:$0xff]
        %v1141 = vld [vmem:[#allocation4 + $0x5f0] sm:$0xff]
        %v1142 = vld [vmem:[#allocation4 + $0x5f8] sm:$0xff]
        %v1143 = vld [vmem:[#allocation4 + $0x600] sm:$0xff]
        %v1144 = vld [vmem:[#allocation4 + $0x608] sm:$0xff]
        %v1145 = vld [vmem:[#allocation4 + $0x610] sm:$0xff]
        %v1146 = vld [vmem:[#allocation4 + $0x618] sm:$0xff]
        %v1147 = vld [vmem:[#allocation4 + $0x620] sm:$0xff]
        %v1148 = vld [vmem:[#allocation4 + $0x628] sm:$0xff]
        %v1149 = vld [vmem:[#allocation4 + $0x630] sm:$0xff]
        %v1150 = vld [vmem:[#allocation4 + $0x638] sm:$0xff]
        %v1151 = vld [vmem:[#allocation4 + $0x640] sm:$0xff]
        %v1152 = vld [vmem:[#allocation4 + $0x648] sm:$0xff]
        %v1153 = vld [vmem:[#allocation4 + $0x650] sm:$0xff]
        %v1154 = vld [vmem:[#allocation4 + $0x658] sm:$0xff]
        %v1155 = vld [vmem:[#allocation4 + $0x660] sm:$0xff]
        %v1156 = vld [vmem:[#allocation4 + $0x668] sm:$0xff]
        %v1157 = vld [vmem:[#allocation4 + $0x670] sm:$0xff]
        %v1158 = vld [vmem:[#allocation4 + $0x678] sm:$0xff]
        %v1159 = vld [vmem:[#allocation4 + $0x680] sm:$0xff]
        %v1160 = vld [vmem:[#allocation4 + $0x688] sm:$0xff]
        %v1161 = vld [vmem:[#allocation4 + $0x690] sm:$0xff]
        %v1162 = vld [vmem:[#allocation4 + $0x698] sm:$0xff]
        %v1163 = vld [vmem:[#allocation4 + $0x6a0] sm:$0xff]
        %v1164 = vld [vmem:[#allocation4 + $0x6a8] sm:$0xff]
        %v1165 = vld [vmem:[#allocation4 + $0x6b0] sm:$0xff]
        %v1166 = vld [vmem:[#allocation4 + $0x6b8] sm:$0xff]
        %v1167 = vld [vmem:[#allocation4 + $0x6c0] sm:$0xff]
        %v1168 = vld [vmem:[#allocation4 + $0x6c8] sm:$0xff]
        %v1169 = vld [vmem:[#allocation4 + $0x6d0] sm:$0xff]
        %v1170 = vld [vmem:[#allocation4 + $0x6d8] sm:$0xff]
        %v1171 = vld [vmem:[#allocation4 + $0x6e0] sm:$0xff]
        %v1172 = vld [vmem:[#allocation4 + $0x6e8] sm:$0xff]
        %v1173 = vld [vmem:[#allocation4 + $0x6f0] sm:$0xff]
        %v1174 = vld [vmem:[#allocation4 + $0x6f8] sm:$0xff]
        %v1175 = vld [vmem:[#allocation4 + $0x700] sm:$0xff]
        %v1176 = vld [vmem:[#allocation4 + $0x708] sm:$0xff]
        %v1177 = vld [vmem:[#allocation4 + $0x710] sm:$0xff]
        %v1178 = vld [vmem:[#allocation4 + $0x718] sm:$0xff]
        %v1179 = vld [vmem:[#allocation4 + $0x720] sm:$0xff]
        %v1180 = vld [vmem:[#allocation4 + $0x728] sm:$0xff]
        %v1181 = vld [vmem:[#allocation4 + $0x730] sm:$0xff]
        %v1182 = vld [vmem:[#allocation4 + $0x738] sm:$0xff]
        %v1183 = vld [vmem:[#allocation4 + $0x740] sm:$0xff]
        %v1184 = vld [vmem:[#allocation4 + $0x748] sm:$0xff]
        %v1185 = vld [vmem:[#allocation4 + $0x750] sm:$0xff]
        %v1186 = vld [vmem:[#allocation4 + $0x758] sm:$0xff]
        %v1187 = vld [vmem:[#allocation4 + $0x760] sm:$0xff]
        %v1188 = vld [vmem:[#allocation4 + $0x768] sm:$0xff]
        %v1189 = vld [vmem:[#allocation4 + $0x770] sm:$0xff]
        %v1190 = vld [vmem:[#allocation4 + $0x778] sm:$0xff]
        %v1191 = vld [vmem:[#allocation4 + $0x780] sm:$0xff]
        %v1192 = vld [vmem:[#allocation4 + $0x788] sm:$0xff]
        %v1193 = vld [vmem:[#allocation4 + $0x790] sm:$0xff]
        %v1194 = vld [vmem:[#allocation4 + $0x798] sm:$0xff]
        %v1195 = vld [vmem:[#allocation4 + $0x7a0] sm:$0xff]
        %v1196 = vld [vmem:[#allocation4 + $0x7a8] sm:$0xff]
        %v1197 = vld [vmem:[#allocation4 + $0x7b0] sm:$0xff]
        %v1198 = vld [vmem:[#allocation4 + $0x7b8] sm:$0xff]
        %v1199 = vld [vmem:[#allocation4 + $0x7c0] sm:$0xff]
        %v1200 = vld [vmem:[#allocation4 + $0x7c8] sm:$0xff]
        %v1201 = vld [vmem:[#allocation4 + $0x7d0] sm:$0xff]
        %v1202 = vld [vmem:[#allocation4 + $0x7d8] sm:$0xff]
        %v1203 = vld [vmem:[#allocation4 + $0x7e0] sm:$0xff]
        %v1204 = vld [vmem:[#allocation4 + $0x7e8] sm:$0xff]
        %v1205 = vld [vmem:[#allocation4 + $0x7f0] sm:$0xff]
        %v1206 = vld [vmem:[#allocation4 + $0x7f8] sm:$0xff]
        %v1207 = vld [vmem:[#allocation4 + $0x800] sm:$0xff]
        %v1208 = vld [vmem:[#allocation4 + $0x808] sm:$0xff]
        %v1209 = vld [vmem:[#allocation4 + $0x810] sm:$0xff]
        %v1210 = vld [vmem:[#allocation4 + $0x818] sm:$0xff]
        %v1211 = vld [vmem:[#allocation4 + $0x820] sm:$0xff]
        %v1212 = vld [vmem:[#allocation4 + $0x828] sm:$0xff]
        %v1213 = vld [vmem:[#allocation4 + $0x830] sm:$0xff]
        %v1214 = vld [vmem:[#allocation4 + $0x838] sm:$0xff]
        %v1215 = vld [vmem:[#allocation4 + $0x840] sm:$0xff]
        %v1216 = vld [vmem:[#allocation4 + $0x848] sm:$0xff]
        %v1217 = vld [vmem:[#allocation4 + $0x850] sm:$0xff]
        %v1218 = vld [vmem:[#allocation4 + $0x858] sm:$0xff]
        %v1219 = vld [vmem:[#allocation4 + $0x860] sm:$0xff]
        %v1220 = vld [vmem:[#allocation4 + $0x868] sm:$0xff]
        %v1221 = vld [vmem:[#allocation4 + $0x870] sm:$0xff]
        %v1222 = vld [vmem:[#allocation4 + $0x878] sm:$0xff]
        %v1223 = vld [vmem:[#allocation4 + $0x880] sm:$0xff]
        %v1224 = vld [vmem:[#allocation4 + $0x888] sm:$0xff]
        %v1225 = vld [vmem:[#allocation4 + $0x890] sm:$0xff]
        %v1226 = vld [vmem:[#allocation4 + $0x898] sm:$0xff]
        %v1227 = vld [vmem:[#allocation4 + $0x8a0] sm:$0xff]
        %v1228 = vld [vmem:[#allocation4 + $0x8a8] sm:$0xff]
        %v1229 = vld [vmem:[#allocation4 + $0x8b0] sm:$0xff]
        %v1230 = vld [vmem:[#allocation4 + $0x8b8] sm:$0xff]
        %v1231 = vld [vmem:[#allocation4 + $0x8c0] sm:$0xff]
        %v1232 = vld [vmem:[#allocation4 + $0x8c8] sm:$0xff]
        %v1233 = vld [vmem:[#allocation4 + $0x8d0] sm:$0xff]
        %v1234 = vld [vmem:[#allocation4 + $0x8d8] sm:$0xff]
        %v1235 = vld [vmem:[#allocation4 + $0x8e0] sm:$0xff]
        %v1236 = vld [vmem:[#allocation4 + $0x8e8] sm:$0xff]
        %v1237 = vld [vmem:[#allocation4 + $0x8f0] sm:$0xff]
        %v1238 = vld [vmem:[#allocation4 + $0x8f8] sm:$0xff]
        %v1239 = vld [vmem:[#allocation4 + $0x900] sm:$0xff]
        %v1240 = vld [vmem:[#allocation4 + $0x908] sm:$0xff]
        %v1241 = vld [vmem:[#allocation4 + $0x910] sm:$0xff]
        %v1242 = vld [vmem:[#allocation4 + $0x918] sm:$0xff]
        %v1243 = vld [vmem:[#allocation4 + $0x920] sm:$0xff]
        %v1244 = vld [vmem:[#allocation4 + $0x928] sm:$0xff]
        %v1245 = vld [vmem:[#allocation4 + $0x930] sm:$0xff]
        %v1246 = vld [vmem:[#allocation4 + $0x938] sm:$0xff]
        %v1247 = vld [vmem:[#allocation4 + $0x940] sm:$0xff]
        %v1248 = vld [vmem:[#allocation4 + $0x948] sm:$0xff]
        %v1249 = vld [vmem:[#allocation4 + $0x950] sm:$0xff]
        %v1250 = vld [vmem:[#allocation4 + $0x958] sm:$0xff]
        %v1251 = vld [vmem:[#allocation4 + $0x960] sm:$0xff]
        %v1252 = vld [vmem:[#allocation4 + $0x968] sm:$0xff]
        %v1253 = vld [vmem:[#allocation4 + $0x970] sm:$0xff]
        %v1254 = vld [vmem:[#allocation4 + $0x978] sm:$0xff]
        %v1255 = vld [vmem:[#allocation4 + $0x980] sm:$0xff]
        %v1256 = vld [vmem:[#allocation4 + $0x988] sm:$0xff]
        %v1257 = vld [vmem:[#allocation4 + $0x990] sm:$0xff]
        %v1258 = vld [vmem:[#allocation4 + $0x998] sm:$0xff]
        %v1259 = vld [vmem:[#allocation4 + $0x9a0] sm:$0xff]
        %v1260 = vld [vmem:[#allocation4 + $0x9a8] sm:$0xff]
        %v1261 = vld [vmem:[#allocation4 + $0x9b0] sm:$0xff]
        %v1262 = vld [vmem:[#allocation4 + $0x9b8] sm:$0xff]
        %v1263 = vld [vmem:[#allocation4 + $0x9c0] sm:$0xff]
        %v1264 = vld [vmem:[#allocation4 + $0x9c8] sm:$0xff]
        %v1265 = vld [vmem:[#allocation4 + $0x9d0] sm:$0xff]
        %v1266 = vld [vmem:[#allocation4 + $0x9d8] sm:$0xff]
        %v1267 = vld [vmem:[#allocation4 + $0x9e0] sm:$0xff]
        %v1268 = vld [vmem:[#allocation4 + $0x9e8] sm:$0xff]
        %v1269 = vld [vmem:[#allocation4 + $0x9f0] sm:$0xff]
        %v1270 = vld [vmem:[#allocation4 + $0x9f8] sm:$0xff]
        %v1271 = vld [vmem:[#allocation4 + $0xa00] sm:$0xff]
        %v1272 = vld [vmem:[#allocation4 + $0xa08] sm:$0xff]
        %v1273 = vld [vmem:[#allocation4 + $0xa10] sm:$0xff]
        %v1274 = vld [vmem:[#allocation4 + $0xa18] sm:$0xff]
        %v1275 = vld [vmem:[#allocation4 + $0xa20] sm:$0xff]
        %v1276 = vld [vmem:[#allocation4 + $0xa28] sm:$0xff]
        %v1277 = vld [vmem:[#allocation4 + $0xa30] sm:$0xff]
        %v1278 = vld [vmem:[#allocation4 + $0xa38] sm:$0xff]
        %v1279 = vld [vmem:[#allocation4 + $0xa40] sm:$0xff]
        %v1280 = vld [vmem:[#allocation4 + $0xa48] sm:$0xff]
        %v1281 = vld [vmem:[#allocation4 + $0xa50] sm:$0xff]
        %v1282 = vld [vmem:[#allocation4 + $0xa58] sm:$0xff]
        %v1283 = vld [vmem:[#allocation4 + $0xa60] sm:$0xff]
        %v1284 = vld [vmem:[#allocation4 + $0xa68] sm:$0xff]
        %v1285 = vld [vmem:[#allocation4 + $0xa70] sm:$0xff]
        %v1286 = vld [vmem:[#allocation4 + $0xa78] sm:$0xff]
        %v1623 = vunpack.c.l.b16 %v951
        %v1624 = vunpack.c.h.b16 %v951
        %v1625 = vunpack.c.l.b16 %v952
        %v1626 = vunpack.c.h.b16 %v952
        %v1627 = vunpack.c.l.b16 %v953
        %v1628 = vunpack.c.h.b16 %v953
        %v1629 = vunpack.c.l.b16 %v954
        %v1630 = vunpack.c.h.b16 %v954
        %v1631 = vunpack.c.l.b16 %v955
        %v1632 = vunpack.c.h.b16 %v955
        %v1633 = vunpack.c.l.b16 %v956
        %v1634 = vunpack.c.h.b16 %v956
        %v1635 = vunpack.c.l.b16 %v957
        %v1636 = vunpack.c.h.b16 %v957
        %v1637 = vunpack.c.l.b16 %v958
        %v1638 = vunpack.c.h.b16 %v958
        %v1639 = vunpack.c.l.b16 %v959
        %v1640 = vunpack.c.h.b16 %v959
        %v1641 = vunpack.c.l.b16 %v960
        %v1642 = vunpack.c.h.b16 %v960
        %v1643 = vunpack.c.l.b16 %v961
        %v1644 = vunpack.c.h.b16 %v961
        %v1645 = vunpack.c.l.b16 %v962
        %v1646 = vunpack.c.h.b16 %v962
        %v1647 = vunpack.c.l.b16 %v963
        %v1648 = vunpack.c.h.b16 %v963
        %v1649 = vunpack.c.l.b16 %v964
        %v1650 = vunpack.c.h.b16 %v964
        %v1651 = vunpack.c.l.b16 %v965
        %v1652 = vunpack.c.h.b16 %v965
        %v1653 = vunpack.c.l.b16 %v966
        %v1654 = vunpack.c.h.b16 %v966
        %v1655 = vunpack.c.l.b16 %v967
        %v1656 = vunpack.c.h.b16 %v967
        %v1657 = vunpack.c.l.b16 %v968
        %v1658 = vunpack.c.h.b16 %v968
        %v1659 = vunpack.c.l.b16 %v969
        %v1660 = vunpack.c.h.b16 %v969
        %v1661 = vunpack.c.l.b16 %v970
        %v1662 = vunpack.c.h.b16 %v970
        %v1663 = vunpack.c.l.b16 %v971
        %v1664 = vunpack.c.h.b16 %v971
        %v1665 = vunpack.c.l.b16 %v972
        %v1666 = vunpack.c.h.b16 %v972
        %v1667 = vunpack.c.l.b16 %v973
        %v1668 = vunpack.c.h.b16 %v973
        %v1669 = vunpack.c.l.b16 %v974
        %v1670 = vunpack.c.h.b16 %v974
        %v1671 = vunpack.c.l.b16 %v975
        %v1672 = vunpack.c.h.b16 %v975
        %v1673 = vunpack.c.l.b16 %v976
        %v1674 = vunpack.c.h.b16 %v976
        %v1675 = vunpack.c.l.b16 %v977
        %v1676 = vunpack.c.h.b16 %v977
        %v1677 = vunpack.c.l.b16 %v978
        %v1678 = vunpack.c.h.b16 %v978
        %v1679 = vunpack.c.l.b16 %v979
        %v1680 = vunpack.c.h.b16 %v979
        %v1681 = vunpack.c.l.b16 %v980
        %v1682 = vunpack.c.h.b16 %v980
        %v1683 = vunpack.c.l.b16 %v981
        %v1684 = vunpack.c.h.b16 %v981
        %v1685 = vunpack.c.l.b16 %v982
        %v1686 = vunpack.c.h.b16 %v982
        %v1687 = vunpack.c.l.b16 %v983
        %v1688 = vunpack.c.h.b16 %v983
        %v1689 = vunpack.c.l.b16 %v984
        %v1690 = vunpack.c.h.b16 %v984
        %v1691 = vunpack.c.l.b16 %v985
        %v1692 = vunpack.c.h.b16 %v985
        %v1693 = vunpack.c.l.b16 %v986
        %v1694 = vunpack.c.h.b16 %v986
        %v1695 = vunpack.c.l.b16 %v987
        %v1696 = vunpack.c.h.b16 %v987
        %v1697 = vunpack.c.l.b16 %v988
        %v1698 = vunpack.c.h.b16 %v988
        %v1699 = vunpack.c.l.b16 %v989
        %v1700 = vunpack.c.h.b16 %v989
        %v1701 = vunpack.c.l.b16 %v990
        %v1702 = vunpack.c.h.b16 %v990
        %v1703 = vunpack.c.l.b16 %v991
        %v1704 = vunpack.c.h.b16 %v991
        %v1705 = vunpack.c.l.b16 %v992
        %v1706 = vunpack.c.h.b16 %v992
        %v1707 = vunpack.c.l.b16 %v993
        %v1708 = vunpack.c.h.b16 %v993
        %v1709 = vunpack.c.l.b16 %v994
        %v1710 = vunpack.c.h.b16 %v994
        %v1711 = vunpack.c.l.b16 %v995
        %v1712 = vunpack.c.h.b16 %v995
        %v1713 = vunpack.c.l.b16 %v996
        %v1714 = vunpack.c.h.b16 %v996
        %v1715 = vunpack.c.l.b16 %v997
        %v1716 = vunpack.c.h.b16 %v997
        %v1717 = vunpack.c.l.b16 %v998
        %v1718 = vunpack.c.h.b16 %v998
        %v1719 = vunpack.c.l.b16 %v999
        %v1720 = vunpack.c.h.b16 %v999
        %v1721 = vunpack.c.l.b16 %v1000
        %v1722 = vunpack.c.h.b16 %v1000
        %v1723 = vunpack.c.l.b16 %v1001
        %v1724 = vunpack.c.h.b16 %v1001
        %v1725 = vunpack.c.l.b16 %v1002
        %v1726 = vunpack.c.h.b16 %v1002
        %v1727 = vunpack.c.l.b16 %v1003
        %v1728 = vunpack.c.h.b16 %v1003
        %v1729 = vunpack.c.l.b16 %v1004
        %v1730 = vunpack.c.h.b16 %v1004
        %v1731 = vunpack.c.l.b16 %v1005
        %v1732 = vunpack.c.h.b16 %v1005
        %v1733 = vunpack.c.l.b16 %v1006
        %v1734 = vunpack.c.h.b16 %v1006
        %v1735 = vunpack.c.l.b16 %v1007
        %v1736 = vunpack.c.h.b16 %v1007
        %v1737 = vunpack.c.l.b16 %v1008
        %v1738 = vunpack.c.h.b16 %v1008
        %v1739 = vunpack.c.l.b16 %v1009
        %v1740 = vunpack.c.h.b16 %v1009
        %v1741 = vunpack.c.l.b16 %v1010
        %v1742 = vunpack.c.h.b16 %v1010
        %v1743 = vunpack.c.l.b16 %v1011
        %v1744 = vunpack.c.h.b16 %v1011
        %v1745 = vunpack.c.l.b16 %v1012
        %v1746 = vunpack.c.h.b16 %v1012
        %v1747 = vunpack.c.l.b16 %v1013
        %v1748 = vunpack.c.h.b16 %v1013
        %v1749 = vunpack.c.l.b16 %v1014
        %v1750 = vunpack.c.h.b16 %v1014
        %v1751 = vunpack.c.l.b16 %v1015
        %v1752 = vunpack.c.h.b16 %v1015
        %v1753 = vunpack.c.l.b16 %v1016
        %v1754 = vunpack.c.h.b16 %v1016
        %v1755 = vunpack.c.l.b16 %v1017
        %v1756 = vunpack.c.h.b16 %v1017
        %v1757 = vunpack.c.l.b16 %v1018
        %v1758 = vunpack.c.h.b16 %v1018
        %v1759 = vunpack.c.l.b16 %v1019
        %v1760 = vunpack.c.h.b16 %v1019
        %v1761 = vunpack.c.l.b16 %v1020
        %v1762 = vunpack.c.h.b16 %v1020
        %v1763 = vunpack.c.l.b16 %v1021
        %v1764 = vunpack.c.h.b16 %v1021
        %v1765 = vunpack.c.l.b16 %v1022
        %v1766 = vunpack.c.h.b16 %v1022
        %v1767 = vunpack.c.l.b16 %v1023
        %v1768 = vunpack.c.h.b16 %v1023
        %v1769 = vunpack.c.l.b16 %v1024
        %v1770 = vunpack.c.h.b16 %v1024
        %v1771 = vunpack.c.l.b16 %v1025
        %v1772 = vunpack.c.h.b16 %v1025
        %v1773 = vunpack.c.l.b16 %v1026
        %v1774 = vunpack.c.h.b16 %v1026
        %v1775 = vunpack.c.l.b16 %v1027
        %v1776 = vunpack.c.h.b16 %v1027
        %v1777 = vunpack.c.l.b16 %v1028
        %v1778 = vunpack.c.h.b16 %v1028
        %v1779 = vunpack.c.l.b16 %v1029
        %v1780 = vunpack.c.h.b16 %v1029
        %v1781 = vunpack.c.l.b16 %v1030
        %v1782 = vunpack.c.h.b16 %v1030
        %v1783 = vunpack.c.l.b16 %v1031
        %v1784 = vunpack.c.h.b16 %v1031
        %v1785 = vunpack.c.l.b16 %v1032
        %v1786 = vunpack.c.h.b16 %v1032
        %v1787 = vunpack.c.l.b16 %v1033
        %v1788 = vunpack.c.h.b16 %v1033
        %v1789 = vunpack.c.l.b16 %v1034
        %v1790 = vunpack.c.h.b16 %v1034
        %v1791 = vunpack.c.l.b16 %v1035
        %v1792 = vunpack.c.h.b16 %v1035
        %v1793 = vunpack.c.l.b16 %v1036
        %v1794 = vunpack.c.h.b16 %v1036
        %v1795 = vunpack.c.l.b16 %v1037
        %v1796 = vunpack.c.h.b16 %v1037
        %v1797 = vunpack.c.l.b16 %v1038
        %v1798 = vunpack.c.h.b16 %v1038
        %v1799 = vunpack.c.l.b16 %v1039
        %v1800 = vunpack.c.h.b16 %v1039
        %v1801 = vunpack.c.l.b16 %v1040
        %v1802 = vunpack.c.h.b16 %v1040
        %v1803 = vunpack.c.l.b16 %v1041
        %v1804 = vunpack.c.h.b16 %v1041
        %v1805 = vunpack.c.l.b16 %v1042
        %v1806 = vunpack.c.h.b16 %v1042
        %v1807 = vunpack.c.l.b16 %v1043
        %v1808 = vunpack.c.h.b16 %v1043
        %v1809 = vunpack.c.l.b16 %v1044
        %v1810 = vunpack.c.h.b16 %v1044
        %v1811 = vunpack.c.l.b16 %v1045
        %v1812 = vunpack.c.h.b16 %v1045
        %v1813 = vunpack.c.l.b16 %v1046
        %v1814 = vunpack.c.h.b16 %v1046
        %v1815 = vunpack.c.l.b16 %v1047
        %v1816 = vunpack.c.h.b16 %v1047
        %v1817 = vunpack.c.l.b16 %v1048
        %v1818 = vunpack.c.h.b16 %v1048
        %v1819 = vunpack.c.l.b16 %v1049
        %v1820 = vunpack.c.h.b16 %v1049
        %v1821 = vunpack.c.l.b16 %v1050
        %v1822 = vunpack.c.h.b16 %v1050
        %v1823 = vunpack.c.l.b16 %v1051
        %v1824 = vunpack.c.h.b16 %v1051
        %v1825 = vunpack.c.l.b16 %v1052
        %v1826 = vunpack.c.h.b16 %v1052
        %v1827 = vunpack.c.l.b16 %v1053
        %v1828 = vunpack.c.h.b16 %v1053
        %v1829 = vunpack.c.l.b16 %v1054
        %v1830 = vunpack.c.h.b16 %v1054
        %v1831 = vunpack.c.l.b16 %v1055
        %v1832 = vunpack.c.h.b16 %v1055
        %v1833 = vunpack.c.l.b16 %v1056
        %v1834 = vunpack.c.h.b16 %v1056
        %v1835 = vunpack.c.l.b16 %v1057
        %v1836 = vunpack.c.h.b16 %v1057
        %v1837 = vunpack.c.l.b16 %v1058
        %v1838 = vunpack.c.h.b16 %v1058
        %v1839 = vunpack.c.l.b16 %v1059
        %v1840 = vunpack.c.h.b16 %v1059
        %v1841 = vunpack.c.l.b16 %v1060
        %v1842 = vunpack.c.h.b16 %v1060
        %v1843 = vunpack.c.l.b16 %v1061
        %v1844 = vunpack.c.h.b16 %v1061
        %v1845 = vunpack.c.l.b16 %v1062
        %v1846 = vunpack.c.h.b16 %v1062
        %v1847 = vunpack.c.l.b16 %v1063
        %v1848 = vunpack.c.h.b16 %v1063
        %v1849 = vunpack.c.l.b16 %v1064
        %v1850 = vunpack.c.h.b16 %v1064
        %v1851 = vunpack.c.l.b16 %v1065
        %v1852 = vunpack.c.h.b16 %v1065
        %v1853 = vunpack.c.l.b16 %v1066
        %v1854 = vunpack.c.h.b16 %v1066
        %v1855 = vunpack.c.l.b16 %v1067
        %v1856 = vunpack.c.h.b16 %v1067
        %v1857 = vunpack.c.l.b16 %v1068
        %v1858 = vunpack.c.h.b16 %v1068
        %v1859 = vunpack.c.l.b16 %v1069
        %v1860 = vunpack.c.h.b16 %v1069
        %v1861 = vunpack.c.l.b16 %v1070
        %v1862 = vunpack.c.h.b16 %v1070
        %v1863 = vunpack.c.l.b16 %v1071
        %v1864 = vunpack.c.h.b16 %v1071
        %v1865 = vunpack.c.l.b16 %v1072
        %v1866 = vunpack.c.h.b16 %v1072
        %v1867 = vunpack.c.l.b16 %v1073
        %v1868 = vunpack.c.h.b16 %v1073
        %v1869 = vunpack.c.l.b16 %v1074
        %v1870 = vunpack.c.h.b16 %v1074
        %v1871 = vunpack.c.l.b16 %v1075
        %v1872 = vunpack.c.h.b16 %v1075
        %v1873 = vunpack.c.l.b16 %v1076
        %v1874 = vunpack.c.h.b16 %v1076
        %v1875 = vunpack.c.l.b16 %v1077
        %v1876 = vunpack.c.h.b16 %v1077
        %v1877 = vunpack.c.l.b16 %v1078
        %v1878 = vunpack.c.h.b16 %v1078
        %v1879 = vunpack.c.l.b16 %v1079
        %v1880 = vunpack.c.h.b16 %v1079
        %v1881 = vunpack.c.l.b16 %v1080
        %v1882 = vunpack.c.h.b16 %v1080
        %v1883 = vunpack.c.l.b16 %v1081
        %v1884 = vunpack.c.h.b16 %v1081
        %v1885 = vunpack.c.l.b16 %v1082
        %v1886 = vunpack.c.h.b16 %v1082
        %v1887 = vunpack.c.l.b16 %v1083
        %v1888 = vunpack.c.h.b16 %v1083
        %v1889 = vunpack.c.l.b16 %v1084
        %v1890 = vunpack.c.h.b16 %v1084
        %v1891 = vunpack.c.l.b16 %v1085
        %v1892 = vunpack.c.h.b16 %v1085
        %v1893 = vunpack.c.l.b16 %v1086
        %v1894 = vunpack.c.h.b16 %v1086
        %v1895 = vunpack.c.l.b16 %v1087
        %v1896 = vunpack.c.h.b16 %v1087
        %v1897 = vunpack.c.l.b16 %v1088
        %v1898 = vunpack.c.h.b16 %v1088
        %v1899 = vunpack.c.l.b16 %v1089
        %v1900 = vunpack.c.h.b16 %v1089
        %v1901 = vunpack.c.l.b16 %v1090
        %v1902 = vunpack.c.h.b16 %v1090
        %v1903 = vunpack.c.l.b16 %v1091
        %v1904 = vunpack.c.h.b16 %v1091
        %v1905 = vunpack.c.l.b16 %v1092
        %v1906 = vunpack.c.h.b16 %v1092
        %v1907 = vunpack.c.l.b16 %v1093
        %v1908 = vunpack.c.h.b16 %v1093
        %v1909 = vunpack.c.l.b16 %v1094
        %v1910 = vunpack.c.h.b16 %v1094
        %v1911 = vunpack.c.l.b16 %v1095
        %v1912 = vunpack.c.h.b16 %v1095
        %v1913 = vunpack.c.l.b16 %v1096
        %v1914 = vunpack.c.h.b16 %v1096
        %v1915 = vunpack.c.l.b16 %v1097
        %v1916 = vunpack.c.h.b16 %v1097
        %v1917 = vunpack.c.l.b16 %v1098
        %v1918 = vunpack.c.h.b16 %v1098
        %v1919 = vunpack.c.l.b16 %v1099
        %v1920 = vunpack.c.h.b16 %v1099
        %v1921 = vunpack.c.l.b16 %v1100
        %v1922 = vunpack.c.h.b16 %v1100
        %v1923 = vunpack.c.l.b16 %v1101
        %v1924 = vunpack.c.h.b16 %v1101
        %v1925 = vunpack.c.l.b16 %v1102
        %v1926 = vunpack.c.h.b16 %v1102
        %v1927 = vunpack.c.l.b16 %v1103
        %v1928 = vunpack.c.h.b16 %v1103
        %v1929 = vunpack.c.l.b16 %v1104
        %v1930 = vunpack.c.h.b16 %v1104
        %v1931 = vunpack.c.l.b16 %v1105
        %v1932 = vunpack.c.h.b16 %v1105
        %v1933 = vunpack.c.l.b16 %v1106
        %v1934 = vunpack.c.h.b16 %v1106
        %v1935 = vunpack.c.l.b16 %v1107
        %v1936 = vunpack.c.h.b16 %v1107
        %v1937 = vunpack.c.l.b16 %v1108
        %v1938 = vunpack.c.h.b16 %v1108
        %v1939 = vunpack.c.l.b16 %v1109
        %v1940 = vunpack.c.h.b16 %v1109
        %v1941 = vunpack.c.l.b16 %v1110
        %v1942 = vunpack.c.h.b16 %v1110
        %v1943 = vunpack.c.l.b16 %v1111
        %v1944 = vunpack.c.h.b16 %v1111
        %v1945 = vunpack.c.l.b16 %v1112
        %v1946 = vunpack.c.h.b16 %v1112
        %v1947 = vunpack.c.l.b16 %v1113
        %v1948 = vunpack.c.h.b16 %v1113
        %v1949 = vunpack.c.l.b16 %v1114
        %v1950 = vunpack.c.h.b16 %v1114
        %v1951 = vunpack.c.l.b16 %v1115
        %v1952 = vunpack.c.h.b16 %v1115
        %v1953 = vunpack.c.l.b16 %v1116
        %v1954 = vunpack.c.h.b16 %v1116
        %v1955 = vunpack.c.l.b16 %v1117
        %v1956 = vunpack.c.h.b16 %v1117
        %v1957 = vunpack.c.l.b16 %v1118
        %v1958 = vunpack.c.h.b16 %v1118
        %v1959 = vunpack.c.l.b16 %v1119
        %v1960 = vunpack.c.h.b16 %v1119
        %v1961 = vunpack.c.l.b16 %v1120
        %v1962 = vunpack.c.h.b16 %v1120
        %v1963 = vunpack.c.l.b16 %v1121
        %v1964 = vunpack.c.h.b16 %v1121
        %v1965 = vunpack.c.l.b16 %v1122
        %v1966 = vunpack.c.h.b16 %v1122
        %v1967 = vunpack.c.l.b16 %v1123
        %v1968 = vunpack.c.h.b16 %v1123
        %v1969 = vunpack.c.l.b16 %v1124
        %v1970 = vunpack.c.h.b16 %v1124
        %v1971 = vunpack.c.l.b16 %v1125
        %v1972 = vunpack.c.h.b16 %v1125
        %v1973 = vunpack.c.l.b16 %v1126
        %v1974 = vunpack.c.h.b16 %v1126
        %v1975 = vunpack.c.l.b16 %v1127
        %v1976 = vunpack.c.h.b16 %v1127
        %v1977 = vunpack.c.l.b16 %v1128
        %v1978 = vunpack.c.h.b16 %v1128
        %v1979 = vunpack.c.l.b16 %v1129
        %v1980 = vunpack.c.h.b16 %v1129
        %v1981 = vunpack.c.l.b16 %v1130
        %v1982 = vunpack.c.h.b16 %v1130
        %v1983 = vunpack.c.l.b16 %v1131
        %v1984 = vunpack.c.h.b16 %v1131
        %v1985 = vunpack.c.l.b16 %v1132
        %v1986 = vunpack.c.h.b16 %v1132
        %v1987 = vunpack.c.l.b16 %v1133
        %v1988 = vunpack.c.h.b16 %v1133
        %v1989 = vunpack.c.l.b16 %v1134
        %v1990 = vunpack.c.h.b16 %v1134
        %v1991 = vunpack.c.l.b16 %v1135
        %v1992 = vunpack.c.h.b16 %v1135
        %v1993 = vunpack.c.l.b16 %v1136
        %v1994 = vunpack.c.h.b16 %v1136
        %v1995 = vunpack.c.l.b16 %v1137
        %v1996 = vunpack.c.h.b16 %v1137
        %v1997 = vunpack.c.l.b16 %v1138
        %v1998 = vunpack.c.h.b16 %v1138
        %v1999 = vunpack.c.l.b16 %v1139
        %v2000 = vunpack.c.h.b16 %v1139
        %v2001 = vunpack.c.l.b16 %v1140
        %v2002 = vunpack.c.h.b16 %v1140
        %v2003 = vunpack.c.l.b16 %v1141
        %v2004 = vunpack.c.h.b16 %v1141
        %v2005 = vunpack.c.l.b16 %v1142
        %v2006 = vunpack.c.h.b16 %v1142
        %v2007 = vunpack.c.l.b16 %v1143
        %v2008 = vunpack.c.h.b16 %v1143
        %v2009 = vunpack.c.l.b16 %v1144
        %v2010 = vunpack.c.h.b16 %v1144
        %v2011 = vunpack.c.l.b16 %v1145
        %v2012 = vunpack.c.h.b16 %v1145
        %v2013 = vunpack.c.l.b16 %v1146
        %v2014 = vunpack.c.h.b16 %v1146
        %v2015 = vunpack.c.l.b16 %v1147
        %v2016 = vunpack.c.h.b16 %v1147
        %v2017 = vunpack.c.l.b16 %v1148
        %v2018 = vunpack.c.h.b16 %v1148
        %v2019 = vunpack.c.l.b16 %v1149
        %v2020 = vunpack.c.h.b16 %v1149
        %v2021 = vunpack.c.l.b16 %v1150
        %v2022 = vunpack.c.h.b16 %v1150
        %v2023 = vunpack.c.l.b16 %v1151
        %v2024 = vunpack.c.h.b16 %v1151
        %v2025 = vunpack.c.l.b16 %v1152
        %v2026 = vunpack.c.h.b16 %v1152
        %v2027 = vunpack.c.l.b16 %v1153
        %v2028 = vunpack.c.h.b16 %v1153
        %v2029 = vunpack.c.l.b16 %v1154
        %v2030 = vunpack.c.h.b16 %v1154
        %v2031 = vunpack.c.l.b16 %v1155
        %v2032 = vunpack.c.h.b16 %v1155
        %v2033 = vunpack.c.l.b16 %v1156
        %v2034 = vunpack.c.h.b16 %v1156
        %v2035 = vunpack.c.l.b16 %v1157
        %v2036 = vunpack.c.h.b16 %v1157
        %v2037 = vunpack.c.l.b16 %v1158
        %v2038 = vunpack.c.h.b16 %v1158
        %v2039 = vunpack.c.l.b16 %v1159
        %v2040 = vunpack.c.h.b16 %v1159
        %v2041 = vunpack.c.l.b16 %v1160
        %v2042 = vunpack.c.h.b16 %v1160
        %v2043 = vunpack.c.l.b16 %v1161
        %v2044 = vunpack.c.h.b16 %v1161
        %v2045 = vunpack.c.l.b16 %v1162
        %v2046 = vunpack.c.h.b16 %v1162
        %v2047 = vunpack.c.l.b16 %v1163
        %v2048 = vunpack.c.h.b16 %v1163
        %v2049 = vunpack.c.l.b16 %v1164
        %v2050 = vunpack.c.h.b16 %v1164
        %v2051 = vunpack.c.l.b16 %v1165
        %v2052 = vunpack.c.h.b16 %v1165
        %v2053 = vunpack.c.l.b16 %v1166
        %v2054 = vunpack.c.h.b16 %v1166
        %v2055 = vunpack.c.l.b16 %v1167
        %v2056 = vunpack.c.h.b16 %v1167
        %v2057 = vunpack.c.l.b16 %v1168
        %v2058 = vunpack.c.h.b16 %v1168
        %v2059 = vunpack.c.l.b16 %v1169
        %v2060 = vunpack.c.h.b16 %v1169
        %v2061 = vunpack.c.l.b16 %v1170
        %v2062 = vunpack.c.h.b16 %v1170
        %v2063 = vunpack.c.l.b16 %v1171
        %v2064 = vunpack.c.h.b16 %v1171
        %v2065 = vunpack.c.l.b16 %v1172
        %v2066 = vunpack.c.h.b16 %v1172
        %v2067 = vunpack.c.l.b16 %v1173
        %v2068 = vunpack.c.h.b16 %v1173
        %v2069 = vunpack.c.l.b16 %v1174
        %v2070 = vunpack.c.h.b16 %v1174
        %v2071 = vunpack.c.l.b16 %v1175
        %v2072 = vunpack.c.h.b16 %v1175
        %v2073 = vunpack.c.l.b16 %v1176
        %v2074 = vunpack.c.h.b16 %v1176
        %v2075 = vunpack.c.l.b16 %v1177
        %v2076 = vunpack.c.h.b16 %v1177
        %v2077 = vunpack.c.l.b16 %v1178
        %v2078 = vunpack.c.h.b16 %v1178
        %v2079 = vunpack.c.l.b16 %v1179
        %v2080 = vunpack.c.h.b16 %v1179
        %v2081 = vunpack.c.l.b16 %v1180
        %v2082 = vunpack.c.h.b16 %v1180
        %v2083 = vunpack.c.l.b16 %v1181
        %v2084 = vunpack.c.h.b16 %v1181
        %v2085 = vunpack.c.l.b16 %v1182
        %v2086 = vunpack.c.h.b16 %v1182
        %v2087 = vunpack.c.l.b16 %v1183
        %v2088 = vunpack.c.h.b16 %v1183
        %v2089 = vunpack.c.l.b16 %v1184
        %v2090 = vunpack.c.h.b16 %v1184
        %v2091 = vunpack.c.l.b16 %v1185
        %v2092 = vunpack.c.h.b16 %v1185
        %v2093 = vunpack.c.l.b16 %v1186
        %v2094 = vunpack.c.h.b16 %v1186
        %v2095 = vunpack.c.l.b16 %v1187
        %v2096 = vunpack.c.h.b16 %v1187
        %v2097 = vunpack.c.l.b16 %v1188
        %v2098 = vunpack.c.h.b16 %v1188
        %v2099 = vunpack.c.l.b16 %v1189
        %v2100 = vunpack.c.h.b16 %v1189
        %v2101 = vunpack.c.l.b16 %v1190
        %v2102 = vunpack.c.h.b16 %v1190
        %v2103 = vunpack.c.l.b16 %v1191
        %v2104 = vunpack.c.h.b16 %v1191
        %v2105 = vunpack.c.l.b16 %v1192
        %v2106 = vunpack.c.h.b16 %v1192
        %v2107 = vunpack.c.l.b16 %v1193
        %v2108 = vunpack.c.h.b16 %v1193
        %v2109 = vunpack.c.l.b16 %v1194
        %v2110 = vunpack.c.h.b16 %v1194
        %v2111 = vunpack.c.l.b16 %v1195
        %v2112 = vunpack.c.h.b16 %v1195
        %v2113 = vunpack.c.l.b16 %v1196
        %v2114 = vunpack.c.h.b16 %v1196
        %v2115 = vunpack.c.l.b16 %v1197
        %v2116 = vunpack.c.h.b16 %v1197
        %v2117 = vunpack.c.l.b16 %v1198
        %v2118 = vunpack.c.h.b16 %v1198
        %v2119 = vunpack.c.l.b16 %v1199
        %v2120 = vunpack.c.h.b16 %v1199
        %v2121 = vunpack.c.l.b16 %v1200
        %v2122 = vunpack.c.h.b16 %v1200
        %v2123 = vunpack.c.l.b16 %v1201
        %v2124 = vunpack.c.h.b16 %v1201
        %v2125 = vunpack.c.l.b16 %v1202
        %v2126 = vunpack.c.h.b16 %v1202
        %v2127 = vunpack.c.l.b16 %v1203
        %v2128 = vunpack.c.h.b16 %v1203
        %v2129 = vunpack.c.l.b16 %v1204
        %v2130 = vunpack.c.h.b16 %v1204
        %v2131 = vunpack.c.l.b16 %v1205
        %v2132 = vunpack.c.h.b16 %v1205
        %v2133 = vunpack.c.l.b16 %v1206
        %v2134 = vunpack.c.h.b16 %v1206
        %v2135 = vunpack.c.l.b16 %v1207
        %v2136 = vunpack.c.h.b16 %v1207
        %v2137 = vunpack.c.l.b16 %v1208
        %v2138 = vunpack.c.h.b16 %v1208
        %v2139 = vunpack.c.l.b16 %v1209
        %v2140 = vunpack.c.h.b16 %v1209
        %v2141 = vunpack.c.l.b16 %v1210
        %v2142 = vunpack.c.h.b16 %v1210
        %v2143 = vunpack.c.l.b16 %v1211
        %v2144 = vunpack.c.h.b16 %v1211
        %v2145 = vunpack.c.l.b16 %v1212
        %v2146 = vunpack.c.h.b16 %v1212
        %v2147 = vunpack.c.l.b16 %v1213
        %v2148 = vunpack.c.h.b16 %v1213
        %v2149 = vunpack.c.l.b16 %v1214
        %v2150 = vunpack.c.h.b16 %v1214
        %v2151 = vunpack.c.l.b16 %v1215
        %v2152 = vunpack.c.h.b16 %v1215
        %v2153 = vunpack.c.l.b16 %v1216
        %v2154 = vunpack.c.h.b16 %v1216
        %v2155 = vunpack.c.l.b16 %v1217
        %v2156 = vunpack.c.h.b16 %v1217
        %v2157 = vunpack.c.l.b16 %v1218
        %v2158 = vunpack.c.h.b16 %v1218
        %v2159 = vunpack.c.l.b16 %v1219
        %v2160 = vunpack.c.h.b16 %v1219
        %v2161 = vunpack.c.l.b16 %v1220
        %v2162 = vunpack.c.h.b16 %v1220
        %v2163 = vunpack.c.l.b16 %v1221
        %v2164 = vunpack.c.h.b16 %v1221
        %v2165 = vunpack.c.l.b16 %v1222
        %v2166 = vunpack.c.h.b16 %v1222
        %v2167 = vunpack.c.l.b16 %v1223
        %v2168 = vunpack.c.h.b16 %v1223
        %v2169 = vunpack.c.l.b16 %v1224
        %v2170 = vunpack.c.h.b16 %v1224
        %v2171 = vunpack.c.l.b16 %v1225
        %v2172 = vunpack.c.h.b16 %v1225
        %v2173 = vunpack.c.l.b16 %v1226
        %v2174 = vunpack.c.h.b16 %v1226
        %v2175 = vunpack.c.l.b16 %v1227
        %v2176 = vunpack.c.h.b16 %v1227
        %v2177 = vunpack.c.l.b16 %v1228
        %v2178 = vunpack.c.h.b16 %v1228
        %v2179 = vunpack.c.l.b16 %v1229
        %v2180 = vunpack.c.h.b16 %v1229
        %v2181 = vunpack.c.l.b16 %v1230
        %v2182 = vunpack.c.h.b16 %v1230
        %v2183 = vunpack.c.l.b16 %v1231
        %v2184 = vunpack.c.h.b16 %v1231
        %v2185 = vunpack.c.l.b16 %v1232
        %v2186 = vunpack.c.h.b16 %v1232
        %v2187 = vunpack.c.l.b16 %v1233
        %v2188 = vunpack.c.h.b16 %v1233
        %v2189 = vunpack.c.l.b16 %v1234
        %v2190 = vunpack.c.h.b16 %v1234
        %v2191 = vunpack.c.l.b16 %v1235
        %v2192 = vunpack.c.h.b16 %v1235
        %v2193 = vunpack.c.l.b16 %v1236
        %v2194 = vunpack.c.h.b16 %v1236
        %v2195 = vunpack.c.l.b16 %v1237
        %v2196 = vunpack.c.h.b16 %v1237
        %v2197 = vunpack.c.l.b16 %v1238
        %v2198 = vunpack.c.h.b16 %v1238
        %v2199 = vunpack.c.l.b16 %v1239
        %v2200 = vunpack.c.h.b16 %v1239
        %v2201 = vunpack.c.l.b16 %v1240
        %v2202 = vunpack.c.h.b16 %v1240
        %v2203 = vunpack.c.l.b16 %v1241
        %v2204 = vunpack.c.h.b16 %v1241
        %v2205 = vunpack.c.l.b16 %v1242
        %v2206 = vunpack.c.h.b16 %v1242
        %v2207 = vunpack.c.l.b16 %v1243
        %v2208 = vunpack.c.h.b16 %v1243
        %v2209 = vunpack.c.l.b16 %v1244
        %v2210 = vunpack.c.h.b16 %v1244
        %v2211 = vunpack.c.l.b16 %v1245
        %v2212 = vunpack.c.h.b16 %v1245
        %v2213 = vunpack.c.l.b16 %v1246
        %v2214 = vunpack.c.h.b16 %v1246
        %v2215 = vunpack.c.l.b16 %v1247
        %v2216 = vunpack.c.h.b16 %v1247
        %v2217 = vunpack.c.l.b16 %v1248
        %v2218 = vunpack.c.h.b16 %v1248
        %v2219 = vunpack.c.l.b16 %v1249
        %v2220 = vunpack.c.h.b16 %v1249
        %v2221 = vunpack.c.l.b16 %v1250
        %v2222 = vunpack.c.h.b16 %v1250
        %v2223 = vunpack.c.l.b16 %v1251
        %v2224 = vunpack.c.h.b16 %v1251
        %v2225 = vunpack.c.l.b16 %v1252
        %v2226 = vunpack.c.h.b16 %v1252
        %v2227 = vunpack.c.l.b16 %v1253
        %v2228 = vunpack.c.h.b16 %v1253
        %v2229 = vunpack.c.l.b16 %v1254
        %v2230 = vunpack.c.h.b16 %v1254
        %v2231 = vunpack.c.l.b16 %v1255
        %v2232 = vunpack.c.h.b16 %v1255
        %v2233 = vunpack.c.l.b16 %v1256
        %v2234 = vunpack.c.h.b16 %v1256
        %v2235 = vunpack.c.l.b16 %v1257
        %v2236 = vunpack.c.h.b16 %v1257
        %v2237 = vunpack.c.l.b16 %v1258
        %v2238 = vunpack.c.h.b16 %v1258
        %v2239 = vunpack.c.l.b16 %v1259
        %v2240 = vunpack.c.h.b16 %v1259
        %v2241 = vunpack.c.l.b16 %v1260
        %v2242 = vunpack.c.h.b16 %v1260
        %v2243 = vunpack.c.l.b16 %v1261
        %v2244 = vunpack.c.h.b16 %v1261
        %v2245 = vunpack.c.l.b16 %v1262
        %v2246 = vunpack.c.h.b16 %v1262
        %v2247 = vunpack.c.l.b16 %v1263
        %v2248 = vunpack.c.h.b16 %v1263
        %v2249 = vunpack.c.l.b16 %v1264
        %v2250 = vunpack.c.h.b16 %v1264
        %v2251 = vunpack.c.l.b16 %v1265
        %v2252 = vunpack.c.h.b16 %v1265
        %v2253 = vunpack.c.l.b16 %v1266
        %v2254 = vunpack.c.h.b16 %v1266
        %v2255 = vunpack.c.l.b16 %v1267
        %v2256 = vunpack.c.h.b16 %v1267
        %v2257 = vunpack.c.l.b16 %v1268
        %v2258 = vunpack.c.h.b16 %v1268
        %v2259 = vunpack.c.l.b16 %v1269
        %v2260 = vunpack.c.h.b16 %v1269
        %v2261 = vunpack.c.l.b16 %v1270
        %v2262 = vunpack.c.h.b16 %v1270
        %v2263 = vunpack.c.l.b16 %v1271
        %v2264 = vunpack.c.h.b16 %v1271
        %v2265 = vunpack.c.l.b16 %v1272
        %v2266 = vunpack.c.h.b16 %v1272
        %v2267 = vunpack.c.l.b16 %v1273
        %v2268 = vunpack.c.h.b16 %v1273
        %v2269 = vunpack.c.l.b16 %v1274
        %v2270 = vunpack.c.h.b16 %v1274
        %v2271 = vunpack.c.l.b16 %v1275
        %v2272 = vunpack.c.h.b16 %v1275
        %v2273 = vunpack.c.l.b16 %v1276
        %v2274 = vunpack.c.h.b16 %v1276
        %v2275 = vunpack.c.l.b16 %v1277
        %v2276 = vunpack.c.h.b16 %v1277
        %v2277 = vunpack.c.l.b16 %v1278
        %v2278 = vunpack.c.h.b16 %v1278
        %v2279 = vunpack.c.l.b16 %v1279
        %v2280 = vunpack.c.h.b16 %v1279
        %v2281 = vunpack.c.l.b16 %v1280
        %v2282 = vunpack.c.h.b16 %v1280
        %v2283 = vunpack.c.l.b16 %v1281
        %v2284 = vunpack.c.h.b16 %v1281
        %v2285 = vunpack.c.l.b16 %v1282
        %v2286 = vunpack.c.h.b16 %v1282
        %v2287 = vunpack.c.l.b16 %v1283
        %v2288 = vunpack.c.h.b16 %v1283
        %v2289 = vunpack.c.l.b16 %v1284
        %v2290 = vunpack.c.h.b16 %v1284
        %v2291 = vunpack.c.l.b16 %v1285
        %v2292 = vunpack.c.h.b16 %v1285
        %v2293 = vunpack.c.l.b16 %v1286
        %v2294 = vunpack.c.h.b16 %v1286
        %v2295 = vpack.c.b16 %v1627, %v1623
        %v2296 = vpack.c.b16 %v1628, %v1624
        %v2297 = vpack.c.b16 %v1629, %v1625
        %v2298 = vpack.c.b16 %v1630, %v1626
        %v2299 = vpack.c.b16 %v1635, %v1631
        %v2300 = vpack.c.b16 %v1636, %v1632
        %v2301 = vpack.c.b16 %v1637, %v1633
        %v2302 = vpack.c.b16 %v1638, %v1634
        %v2303 = vpack.c.b16 %v1643, %v1639
        %v2304 = vpack.c.b16 %v1644, %v1640
        %v2305 = vpack.c.b16 %v1645, %v1641
        %v2306 = vpack.c.b16 %v1646, %v1642
        %v2307 = vpack.c.b16 %v1651, %v1647
        %v2308 = vpack.c.b16 %v1652, %v1648
        %v2309 = vpack.c.b16 %v1653, %v1649
        %v2310 = vpack.c.b16 %v1654, %v1650
        %v2311 = vpack.c.b16 %v1659, %v1655
        %v2312 = vpack.c.b16 %v1660, %v1656
        %v2313 = vpack.c.b16 %v1661, %v1657
        %v2314 = vpack.c.b16 %v1662, %v1658
        %v2315 = vpack.c.b16 %v1667, %v1663
        %v2316 = vpack.c.b16 %v1668, %v1664
        %v2317 = vpack.c.b16 %v1669, %v1665
        %v2318 = vpack.c.b16 %v1670, %v1666
        %v2319 = vpack.c.b16 %v1675, %v1671
        %v2320 = vpack.c.b16 %v1676, %v1672
        %v2321 = vpack.c.b16 %v1677, %v1673
        %v2322 = vpack.c.b16 %v1678, %v1674
        %v2323 = vpack.c.b16 %v1683, %v1679
        %v2324 = vpack.c.b16 %v1684, %v1680
        %v2325 = vpack.c.b16 %v1685, %v1681
        %v2326 = vpack.c.b16 %v1686, %v1682
        %v2327 = vpack.c.b16 %v1691, %v1687
        %v2328 = vpack.c.b16 %v1692, %v1688
        %v2329 = vpack.c.b16 %v1693, %v1689
        %v2330 = vpack.c.b16 %v1694, %v1690
        %v2331 = vpack.c.b16 %v1699, %v1695
        %v2332 = vpack.c.b16 %v1700, %v1696
        %v2333 = vpack.c.b16 %v1701, %v1697
        %v2334 = vpack.c.b16 %v1702, %v1698
        %v2335 = vpack.c.b16 %v1707, %v1703
        %v2336 = vpack.c.b16 %v1708, %v1704
        %v2337 = vpack.c.b16 %v1709, %v1705
        %v2338 = vpack.c.b16 %v1710, %v1706
        %v2339 = vpack.c.b16 %v1715, %v1711
        %v2340 = vpack.c.b16 %v1716, %v1712
        %v2341 = vpack.c.b16 %v1717, %v1713
        %v2342 = vpack.c.b16 %v1718, %v1714
        %v2343 = vpack.c.b16 %v1723, %v1719
        %v2344 = vpack.c.b16 %v1724, %v1720
        %v2345 = vpack.c.b16 %v1725, %v1721
        %v2346 = vpack.c.b16 %v1726, %v1722
        %v2347 = vpack.c.b16 %v1731, %v1727
        %v2348 = vpack.c.b16 %v1732, %v1728
        %v2349 = vpack.c.b16 %v1733, %v1729
        %v2350 = vpack.c.b16 %v1734, %v1730
        %v2351 = vpack.c.b16 %v1739, %v1735
        %v2352 = vpack.c.b16 %v1740, %v1736
        %v2353 = vpack.c.b16 %v1741, %v1737
        %v2354 = vpack.c.b16 %v1742, %v1738
        %v2355 = vpack.c.b16 %v1747, %v1743
        %v2356 = vpack.c.b16 %v1748, %v1744
        %v2357 = vpack.c.b16 %v1749, %v1745
        %v2358 = vpack.c.b16 %v1750, %v1746
        %v2359 = vpack.c.b16 %v1755, %v1751
        %v2360 = vpack.c.b16 %v1756, %v1752
        %v2361 = vpack.c.b16 %v1757, %v1753
        %v2362 = vpack.c.b16 %v1758, %v1754
        %v2363 = vpack.c.b16 %v1763, %v1759
        %v2364 = vpack.c.b16 %v1764, %v1760
        %v2365 = vpack.c.b16 %v1765, %v1761
        %v2366 = vpack.c.b16 %v1766, %v1762
        %v2367 = vpack.c.b16 %v1771, %v1767
        %v2368 = vpack.c.b16 %v1772, %v1768
        %v2369 = vpack.c.b16 %v1773, %v1769
        %v2370 = vpack.c.b16 %v1774, %v1770
        %v2371 = vpack.c.b16 %v1779, %v1775
        %v2372 = vpack.c.b16 %v1780, %v1776
        %v2373 = vpack.c.b16 %v1781, %v1777
        %v2374 = vpack.c.b16 %v1782, %v1778
        %v2375 = vpack.c.b16 %v1787, %v1783
        %v2376 = vpack.c.b16 %v1788, %v1784
        %v2377 = vpack.c.b16 %v1789, %v1785
        %v2378 = vpack.c.b16 %v1790, %v1786
        %v2379 = vpack.c.b16 %v1795, %v1791
        %v2380 = vpack.c.b16 %v1796, %v1792
        %v2381 = vpack.c.b16 %v1797, %v1793
        %v2382 = vpack.c.b16 %v1798, %v1794
        %v2383 = vpack.c.b16 %v1803, %v1799
        %v2384 = vpack.c.b16 %v1804, %v1800
        %v2385 = vpack.c.b16 %v1805, %v1801
        %v2386 = vpack.c.b16 %v1806, %v1802
        %v2387 = vpack.c.b16 %v1811, %v1807
        %v2388 = vpack.c.b16 %v1812, %v1808
        %v2389 = vpack.c.b16 %v1813, %v1809
        %v2390 = vpack.c.b16 %v1814, %v1810
        %v2391 = vpack.c.b16 %v1819, %v1815
        %v2392 = vpack.c.b16 %v1820, %v1816
        %v2393 = vpack.c.b16 %v1821, %v1817
        %v2394 = vpack.c.b16 %v1822, %v1818
        %v2395 = vpack.c.b16 %v1827, %v1823
        %v2396 = vpack.c.b16 %v1828, %v1824
        %v2397 = vpack.c.b16 %v1829, %v1825
        %v2398 = vpack.c.b16 %v1830, %v1826
        %v2399 = vpack.c.b16 %v1835, %v1831
        %v2400 = vpack.c.b16 %v1836, %v1832
        %v2401 = vpack.c.b16 %v1837, %v1833
        %v2402 = vpack.c.b16 %v1838, %v1834
        %v2403 = vpack.c.b16 %v1843, %v1839
        %v2404 = vpack.c.b16 %v1844, %v1840
        %v2405 = vpack.c.b16 %v1845, %v1841
        %v2406 = vpack.c.b16 %v1846, %v1842
        %v2407 = vpack.c.b16 %v1851, %v1847
        %v2408 = vpack.c.b16 %v1852, %v1848
        %v2409 = vpack.c.b16 %v1853, %v1849
        %v2410 = vpack.c.b16 %v1854, %v1850
        %v2411 = vpack.c.b16 %v1859, %v1855
        %v2412 = vpack.c.b16 %v1860, %v1856
        %v2413 = vpack.c.b16 %v1861, %v1857
        %v2414 = vpack.c.b16 %v1862, %v1858
        %v2415 = vpack.c.b16 %v1867, %v1863
        %v2416 = vpack.c.b16 %v1868, %v1864
        %v2417 = vpack.c.b16 %v1869, %v1865
        %v2418 = vpack.c.b16 %v1870, %v1866
        %v2419 = vpack.c.b16 %v1875, %v1871
        %v2420 = vpack.c.b16 %v1876, %v1872
        %v2421 = vpack.c.b16 %v1877, %v1873
        %v2422 = vpack.c.b16 %v1878, %v1874
        %v2423 = vpack.c.b16 %v1883, %v1879
        %v2424 = vpack.c.b16 %v1884, %v1880
        %v2425 = vpack.c.b16 %v1885, %v1881
        %v2426 = vpack.c.b16 %v1886, %v1882
        %v2427 = vpack.c.b16 %v1891, %v1887
        %v2428 = vpack.c.b16 %v1892, %v1888
        %v2429 = vpack.c.b16 %v1893, %v1889
        %v2430 = vpack.c.b16 %v1894, %v1890
        %v2431 = vpack.c.b16 %v1899, %v1895
        %v2432 = vpack.c.b16 %v1900, %v1896
        %v2433 = vpack.c.b16 %v1901, %v1897
        %v2434 = vpack.c.b16 %v1902, %v1898
        %v2435 = vpack.c.b16 %v1907, %v1903
        %v2436 = vpack.c.b16 %v1908, %v1904
        %v2437 = vpack.c.b16 %v1909, %v1905
        %v2438 = vpack.c.b16 %v1910, %v1906
        %v2439 = vpack.c.b16 %v1915, %v1911
        %v2440 = vpack.c.b16 %v1916, %v1912
        %v2441 = vpack.c.b16 %v1917, %v1913
        %v2442 = vpack.c.b16 %v1918, %v1914
        %v2443 = vpack.c.b16 %v1923, %v1919
        %v2444 = vpack.c.b16 %v1924, %v1920
        %v2445 = vpack.c.b16 %v1925, %v1921
        %v2446 = vpack.c.b16 %v1926, %v1922
        %v2447 = vpack.c.b16 %v1931, %v1927
        %v2448 = vpack.c.b16 %v1932, %v1928
        %v2449 = vpack.c.b16 %v1933, %v1929
        %v2450 = vpack.c.b16 %v1934, %v1930
        %v2451 = vpack.c.b16 %v1939, %v1935
        %v2452 = vpack.c.b16 %v1940, %v1936
        %v2453 = vpack.c.b16 %v1941, %v1937
        %v2454 = vpack.c.b16 %v1942, %v1938
        %v2455 = vpack.c.b16 %v1947, %v1943
        %v2456 = vpack.c.b16 %v1948, %v1944
        %v2457 = vpack.c.b16 %v1949, %v1945
        %v2458 = vpack.c.b16 %v1950, %v1946
        %v2459 = vpack.c.b16 %v1955, %v1951
        %v2460 = vpack.c.b16 %v1956, %v1952
        %v2461 = vpack.c.b16 %v1957, %v1953
        %v2462 = vpack.c.b16 %v1958, %v1954
        %v2463 = vpack.c.b16 %v1963, %v1959
        %v2464 = vpack.c.b16 %v1964, %v1960
        %v2465 = vpack.c.b16 %v1965, %v1961
        %v2466 = vpack.c.b16 %v1966, %v1962
        %v2467 = vpack.c.b16 %v1971, %v1967
        %v2468 = vpack.c.b16 %v1972, %v1968
        %v2469 = vpack.c.b16 %v1973, %v1969
        %v2470 = vpack.c.b16 %v1974, %v1970
        %v2471 = vpack.c.b16 %v1979, %v1975
        %v2472 = vpack.c.b16 %v1980, %v1976
        %v2473 = vpack.c.b16 %v1981, %v1977
        %v2474 = vpack.c.b16 %v1982, %v1978
        %v2475 = vpack.c.b16 %v1987, %v1983
        %v2476 = vpack.c.b16 %v1988, %v1984
        %v2477 = vpack.c.b16 %v1989, %v1985
        %v2478 = vpack.c.b16 %v1990, %v1986
        %v2479 = vpack.c.b16 %v1995, %v1991
        %v2480 = vpack.c.b16 %v1996, %v1992
        %v2481 = vpack.c.b16 %v1997, %v1993
        %v2482 = vpack.c.b16 %v1998, %v1994
        %v2483 = vpack.c.b16 %v2003, %v1999
        %v2484 = vpack.c.b16 %v2004, %v2000
        %v2485 = vpack.c.b16 %v2005, %v2001
        %v2486 = vpack.c.b16 %v2006, %v2002
        %v2487 = vpack.c.b16 %v2011, %v2007
        %v2488 = vpack.c.b16 %v2012, %v2008
        %v2489 = vpack.c.b16 %v2013, %v2009
        %v2490 = vpack.c.b16 %v2014, %v2010
        %v2491 = vpack.c.b16 %v2019, %v2015
        %v2492 = vpack.c.b16 %v2020, %v2016
        %v2493 = vpack.c.b16 %v2021, %v2017
        %v2494 = vpack.c.b16 %v2022, %v2018
        %v2495 = vpack.c.b16 %v2027, %v2023
        %v2496 = vpack.c.b16 %v2028, %v2024
        %v2497 = vpack.c.b16 %v2029, %v2025
        %v2498 = vpack.c.b16 %v2030, %v2026
        %v2499 = vpack.c.b16 %v2035, %v2031
        %v2500 = vpack.c.b16 %v2036, %v2032
        %v2501 = vpack.c.b16 %v2037, %v2033
        %v2502 = vpack.c.b16 %v2038, %v2034
        %v2503 = vpack.c.b16 %v2043, %v2039
        %v2504 = vpack.c.b16 %v2044, %v2040
        %v2505 = vpack.c.b16 %v2045, %v2041
        %v2506 = vpack.c.b16 %v2046, %v2042
        %v2507 = vpack.c.b16 %v2051, %v2047
        %v2508 = vpack.c.b16 %v2052, %v2048
        %v2509 = vpack.c.b16 %v2053, %v2049
        %v2510 = vpack.c.b16 %v2054, %v2050
        %v2511 = vpack.c.b16 %v2059, %v2055
        %v2512 = vpack.c.b16 %v2060, %v2056
        %v2513 = vpack.c.b16 %v2061, %v2057
        %v2514 = vpack.c.b16 %v2062, %v2058
        %v2515 = vpack.c.b16 %v2067, %v2063
        %v2516 = vpack.c.b16 %v2068, %v2064
        %v2517 = vpack.c.b16 %v2069, %v2065
        %v2518 = vpack.c.b16 %v2070, %v2066
        %v2519 = vpack.c.b16 %v2075, %v2071
        %v2520 = vpack.c.b16 %v2076, %v2072
        %v2521 = vpack.c.b16 %v2077, %v2073
        %v2522 = vpack.c.b16 %v2078, %v2074
        %v2523 = vpack.c.b16 %v2083, %v2079
        %v2524 = vpack.c.b16 %v2084, %v2080
        %v2525 = vpack.c.b16 %v2085, %v2081
        %v2526 = vpack.c.b16 %v2086, %v2082
        %v2527 = vpack.c.b16 %v2091, %v2087
        %v2528 = vpack.c.b16 %v2092, %v2088
        %v2529 = vpack.c.b16 %v2093, %v2089
        %v2530 = vpack.c.b16 %v2094, %v2090
        %v2531 = vpack.c.b16 %v2099, %v2095
        %v2532 = vpack.c.b16 %v2100, %v2096
        %v2533 = vpack.c.b16 %v2101, %v2097
        %v2534 = vpack.c.b16 %v2102, %v2098
        %v2535 = vpack.c.b16 %v2107, %v2103
        %v2536 = vpack.c.b16 %v2108, %v2104
        %v2537 = vpack.c.b16 %v2109, %v2105
        %v2538 = vpack.c.b16 %v2110, %v2106
        %v2539 = vpack.c.b16 %v2115, %v2111
        %v2540 = vpack.c.b16 %v2116, %v2112
        %v2541 = vpack.c.b16 %v2117, %v2113
        %v2542 = vpack.c.b16 %v2118, %v2114
        %v2543 = vpack.c.b16 %v2123, %v2119
        %v2544 = vpack.c.b16 %v2124, %v2120
        %v2545 = vpack.c.b16 %v2125, %v2121
        %v2546 = vpack.c.b16 %v2126, %v2122
        %v2547 = vpack.c.b16 %v2131, %v2127
        %v2548 = vpack.c.b16 %v2132, %v2128
        %v2549 = vpack.c.b16 %v2133, %v2129
        %v2550 = vpack.c.b16 %v2134, %v2130
        %v2551 = vpack.c.b16 %v2139, %v2135
        %v2552 = vpack.c.b16 %v2140, %v2136
        %v2553 = vpack.c.b16 %v2141, %v2137
        %v2554 = vpack.c.b16 %v2142, %v2138
        %v2555 = vpack.c.b16 %v2147, %v2143
        %v2556 = vpack.c.b16 %v2148, %v2144
        %v2557 = vpack.c.b16 %v2149, %v2145
        %v2558 = vpack.c.b16 %v2150, %v2146
        %v2559 = vpack.c.b16 %v2155, %v2151
        %v2560 = vpack.c.b16 %v2156, %v2152
        %v2561 = vpack.c.b16 %v2157, %v2153
        %v2562 = vpack.c.b16 %v2158, %v2154
        %v2563 = vpack.c.b16 %v2163, %v2159
        %v2564 = vpack.c.b16 %v2164, %v2160
        %v2565 = vpack.c.b16 %v2165, %v2161
        %v2566 = vpack.c.b16 %v2166, %v2162
        %v2567 = vpack.c.b16 %v2171, %v2167
        %v2568 = vpack.c.b16 %v2172, %v2168
        %v2569 = vpack.c.b16 %v2173, %v2169
        %v2570 = vpack.c.b16 %v2174, %v2170
        %v2571 = vpack.c.b16 %v2179, %v2175
        %v2572 = vpack.c.b16 %v2180, %v2176
        %v2573 = vpack.c.b16 %v2181, %v2177
        %v2574 = vpack.c.b16 %v2182, %v2178
        %v2575 = vpack.c.b16 %v2187, %v2183
        %v2576 = vpack.c.b16 %v2188, %v2184
        %v2577 = vpack.c.b16 %v2189, %v2185
        %v2578 = vpack.c.b16 %v2190, %v2186
        %v2579 = vpack.c.b16 %v2195, %v2191
        %v2580 = vpack.c.b16 %v2196, %v2192
        %v2581 = vpack.c.b16 %v2197, %v2193
        %v2582 = vpack.c.b16 %v2198, %v2194
        %v2583 = vpack.c.b16 %v2203, %v2199
        %v2584 = vpack.c.b16 %v2204, %v2200
        %v2585 = vpack.c.b16 %v2205, %v2201
        %v2586 = vpack.c.b16 %v2206, %v2202
        %v2587 = vpack.c.b16 %v2211, %v2207
        %v2588 = vpack.c.b16 %v2212, %v2208
        %v2589 = vpack.c.b16 %v2213, %v2209
        %v2590 = vpack.c.b16 %v2214, %v2210
        %v2591 = vpack.c.b16 %v2219, %v2215
        %v2592 = vpack.c.b16 %v2220, %v2216
        %v2593 = vpack.c.b16 %v2221, %v2217
        %v2594 = vpack.c.b16 %v2222, %v2218
        %v2595 = vpack.c.b16 %v2227, %v2223
        %v2596 = vpack.c.b16 %v2228, %v2224
        %v2597 = vpack.c.b16 %v2229, %v2225
        %v2598 = vpack.c.b16 %v2230, %v2226
        %v2599 = vpack.c.b16 %v2235, %v2231
        %v2600 = vpack.c.b16 %v2236, %v2232
        %v2601 = vpack.c.b16 %v2237, %v2233
        %v2602 = vpack.c.b16 %v2238, %v2234
        %v2603 = vpack.c.b16 %v2243, %v2239
        %v2604 = vpack.c.b16 %v2244, %v2240
        %v2605 = vpack.c.b16 %v2245, %v2241
        %v2606 = vpack.c.b16 %v2246, %v2242
        %v2607 = vpack.c.b16 %v2251, %v2247
        %v2608 = vpack.c.b16 %v2252, %v2248
        %v2609 = vpack.c.b16 %v2253, %v2249
        %v2610 = vpack.c.b16 %v2254, %v2250
        %v2611 = vpack.c.b16 %v2259, %v2255
        %v2612 = vpack.c.b16 %v2260, %v2256
        %v2613 = vpack.c.b16 %v2261, %v2257
        %v2614 = vpack.c.b16 %v2262, %v2258
        %v2615 = vpack.c.b16 %v2267, %v2263
        %v2616 = vpack.c.b16 %v2268, %v2264
        %v2617 = vpack.c.b16 %v2269, %v2265
        %v2618 = vpack.c.b16 %v2270, %v2266
        %v2619 = vpack.c.b16 %v2275, %v2271
        %v2620 = vpack.c.b16 %v2276, %v2272
        %v2621 = vpack.c.b16 %v2277, %v2273
        %v2622 = vpack.c.b16 %v2278, %v2274
        %v2623 = vpack.c.b16 %v2283, %v2279
        %v2624 = vpack.c.b16 %v2284, %v2280
        %v2625 = vpack.c.b16 %v2285, %v2281
        %v2626 = vpack.c.b16 %v2286, %v2282
        %v2627 = vpack.c.b16 %v2291, %v2287
        %v2628 = vpack.c.b16 %v2292, %v2288
        %v2629 = vpack.c.b16 %v2293, %v2289
        %v2630 = vpack.c.b16 %v2294, %v2290
        %v2968 = vsel %vm763, %v926, 0
        %v2971 = vsel %vm763, %v928, 0
        %v2974 = vsel %vm763, %v927, 0
        %2976 = vmatpush.bf16.msra.mxu0 %v2323
        %2977 = vmatpush.bf16.msra.mxu0 %v2319
        %2978 = vmatpush.bf16.msra.mxu0 %v2315
        %2979 = vmatpush.bf16.msra.mxu0 %v2311
        %2980 = vmatpush.bf16.msra.mxu0 %v2307
        %2981 = vmatpush.bf16.msra.mxu0 %v2303
        %2982 = vmatpush.bf16.msra.mxu0 %v2299
        %2983 = vmatpush.bf16.msra.mxu0 %v2295
        %2984 = vmatmul.bf16.gmra.mxu0 %v765
        %v2985 = vpop.f32.mrf.mxu0
        %v2986 = vadd.f32 0.0, %v2985
        %v2987 = vpop.f32.mrf.mxu0
        %v2988 = vadd.f32 0.0, %v2987
        %2989 = vmatmul.bf16.gmra.mxu0 %v768
        %v2990 = vpop.f32.mrf.mxu0
        %v2991 = vadd.f32 0.0, %v2990
        %v2992 = vpop.f32.mrf.mxu0
        %v2993 = vadd.f32 0.0, %v2992
        %2994 = vmatmul.bf16.gmra.mxu0 %v772
        %v2995 = vpop.f32.mrf.mxu0
        %v2996 = vadd.f32 0.0, %v2995
        %v2997 = vpop.f32.mrf.mxu0
        %2998 = vdwg.mxu0
        %2999 = vmatpush.bf16.msra.mxu0 %v2355
        %3000 = vmatpush.bf16.msra.mxu0 %v2351
        %3001 = vmatpush.bf16.msra.mxu0 %v2347
        %3002 = vmatpush.bf16.msra.mxu0 %v2343
        %3003 = vmatpush.bf16.msra.mxu0 %v2339
        %3004 = vmatpush.bf16.msra.mxu0 %v2335
        %3005 = vmatpush.bf16.msra.mxu0 %v2331
        %3006 = vmatpush.bf16.msra.mxu0 %v2327
        %3007 = vmatmul.bf16.gmra.mxu0 %v776
        %v3008 = vpop.f32.mrf.mxu0
        %v3009 = vadd.f32 %v2986, %v3008
        %v3010 = vpop.f32.mrf.mxu0
        %v3011 = vadd.f32 %v2988, %v3010
        %3012 = vmatmul.bf16.gmra.mxu0 %v780
        %v3013 = vpop.f32.mrf.mxu0
        %v3014 = vadd.f32 %v2991, %v3013
        %v3015 = vpop.f32.mrf.mxu0
        %v3016 = vadd.f32 %v2993, %v3015
        %3017 = vmatmul.bf16.gmra.mxu0 %v784
        %v3018 = vpop.f32.mrf.mxu0
        %v3019 = vadd.f32 %v2996, %v3018
        %v3020 = vpop.f32.mrf.mxu0
        %3021 = vdwg.mxu0
        %3022 = vmatpush.bf16.msra.mxu0 %v2387
        %3023 = vmatpush.bf16.msra.mxu0 %v2383
        %3024 = vmatpush.bf16.msra.mxu0 %v2379
        %3025 = vmatpush.bf16.msra.mxu0 %v2375
        %3026 = vmatpush.bf16.msra.mxu0 %v2371
        %3027 = vmatpush.bf16.msra.mxu0 %v2367
        %3028 = vmatpush.bf16.msra.mxu0 %v2363
        %3029 = vmatpush.bf16.msra.mxu0 %v2359
        %3030 = vmatmul.bf16.gmra.mxu0 %v788
        %v3031 = vpop.f32.mrf.mxu0
        %v3032 = vadd.f32 %v3009, %v3031
        %v3033 = vpop.f32.mrf.mxu0
        %v3034 = vadd.f32 %v3011, %v3033
        %3035 = vmatmul.bf16.gmra.mxu0 %v792
        %v3036 = vpop.f32.mrf.mxu0
        %v3037 = vadd.f32 %v3014, %v3036
        %v3038 = vpop.f32.mrf.mxu0
        %v3039 = vadd.f32 %v3016, %v3038
        %3040 = vmatmul.bf16.gmra.mxu0 %v796
        %v3041 = vpop.f32.mrf.mxu0
        %v3042 = vadd.f32 %v3019, %v3041
        %v3043 = vpop.f32.mrf.mxu0
        %3044 = vdwg.mxu0
        %3045 = vmatpush.bf16.msra.mxu0 %v2419
        %3046 = vmatpush.bf16.msra.mxu0 %v2415
        %3047 = vmatpush.bf16.msra.mxu0 %v2411
        %3048 = vmatpush.bf16.msra.mxu0 %v2407
        %3049 = vmatpush.bf16.msra.mxu0 %v2403
        %3050 = vmatpush.bf16.msra.mxu0 %v2399
        %3051 = vmatpush.bf16.msra.mxu0 %v2395
        %3052 = vmatpush.bf16.msra.mxu0 %v2391
        %3053 = vmatmul.bf16.gmra.mxu0 %v800
        %v3054 = vpop.f32.mrf.mxu0
        %v3055 = vadd.f32 %v3032, %v3054
        %v3056 = vpop.f32.mrf.mxu0
        %v3057 = vadd.f32 %v3034, %v3056
        %3058 = vmatmul.bf16.gmra.mxu0 %v804
        %v3059 = vpop.f32.mrf.mxu0
        %v3060 = vadd.f32 %v3037, %v3059
        %v3061 = vpop.f32.mrf.mxu0
        %v3062 = vadd.f32 %v3039, %v3061
        %3063 = vmatmul.bf16.gmra.mxu0 %v808
        %v3064 = vpop.f32.mrf.mxu0
        %v3065 = vadd.f32 %v3042, %v3064
        %v3066 = vpop.f32.mrf.mxu0
        %3067 = vdwg.mxu0
        %3068 = vmatpush.bf16.msra.mxu0 %v2451
        %3069 = vmatpush.bf16.msra.mxu0 %v2447
        %3070 = vmatpush.bf16.msra.mxu0 %v2443
        %3071 = vmatpush.bf16.msra.mxu0 %v2439
        %3072 = vmatpush.bf16.msra.mxu0 %v2435
        %3073 = vmatpush.bf16.msra.mxu0 %v2431
        %3074 = vmatpush.bf16.msra.mxu0 %v2427
        %3075 = vmatpush.bf16.msra.mxu0 %v2423
        %3076 = vmatmul.bf16.gmra.mxu0 %v811
        %v3077 = vpop.f32.mrf.mxu0
        %v3078 = vadd.f32 %v3055, %v3077
        %v3079 = vpop.f32.mrf.mxu0
        %v3080 = vadd.f32 %v3057, %v3079
        %3081 = vmatmul.bf16.gmra.mxu0 %v814
        %v3082 = vpop.f32.mrf.mxu0
        %v3083 = vadd.f32 %v3060, %v3082
        %v3084 = vpop.f32.mrf.mxu0
        %v3085 = vadd.f32 %v3062, %v3084
        %3086 = vmatmul.bf16.gmra.mxu0 %v818
        %v3087 = vpop.f32.mrf.mxu0
        %v3088 = vadd.f32 %v3065, %v3087
        %v3089 = vpop.f32.mrf.mxu0
        %3090 = vdwg.mxu0
        %3091 = vmatpush.bf16.msra.mxu0 %v2483
        %3092 = vmatpush.bf16.msra.mxu0 %v2479
        %3093 = vmatpush.bf16.msra.mxu0 %v2475
        %3094 = vmatpush.bf16.msra.mxu0 %v2471
        %3095 = vmatpush.bf16.msra.mxu0 %v2467
        %3096 = vmatpush.bf16.msra.mxu0 %v2463
        %3097 = vmatpush.bf16.msra.mxu0 %v2459
        %3098 = vmatpush.bf16.msra.mxu0 %v2455
        %3099 = vmatmul.bf16.gmra.mxu0 %v822
        %v3100 = vpop.f32.mrf.mxu0
        %v3101 = vadd.f32 %v3078, %v3100
        %v3102 = vpop.f32.mrf.mxu0
        %v3103 = vadd.f32 %v3080, %v3102
        %3104 = vmatmul.bf16.gmra.mxu0 %v826
        %v3105 = vpop.f32.mrf.mxu0
        %v3106 = vadd.f32 %v3083, %v3105
        %v3107 = vpop.f32.mrf.mxu0
        %v3108 = vadd.f32 %v3085, %v3107
        %3109 = vmatmul.bf16.gmra.mxu0 %v830
        %v3110 = vpop.f32.mrf.mxu0
        %v3111 = vadd.f32 %v3088, %v3110
        %v3112 = vpop.f32.mrf.mxu0
        %3113 = vdwg.mxu0
        %3114 = vmatpush.bf16.msra.mxu0 %v2515
        %3115 = vmatpush.bf16.msra.mxu0 %v2511
        %3116 = vmatpush.bf16.msra.mxu0 %v2507
        %3117 = vmatpush.bf16.msra.mxu0 %v2503
        %3118 = vmatpush.bf16.msra.mxu0 %v2499
        %3119 = vmatpush.bf16.msra.mxu0 %v2495
        %3120 = vmatpush.bf16.msra.mxu0 %v2491
        %3121 = vmatpush.bf16.msra.mxu0 %v2487
        %3122 = vmatmul.bf16.gmra.mxu0 %v834
        %v3123 = vpop.f32.mrf.mxu0
        %v3124 = vadd.f32 %v3101, %v3123
        %v3125 = vpop.f32.mrf.mxu0
        %v3126 = vadd.f32 %v3103, %v3125
        %3127 = vmatmul.bf16.gmra.mxu0 %v838
        %v3128 = vpop.f32.mrf.mxu0
        %v3129 = vadd.f32 %v3106, %v3128
        %v3130 = vpop.f32.mrf.mxu0
        %v3131 = vadd.f32 %v3108, %v3130
        %3132 = vmatmul.bf16.gmra.mxu0 %v842
        %v3133 = vpop.f32.mrf.mxu0
        %v3134 = vadd.f32 %v3111, %v3133
        %v3135 = vpop.f32.mrf.mxu0
        %3136 = vdwg.mxu0
        %3137 = vmatpush.bf16.msra.mxu0 %v2547
        %3138 = vmatpush.bf16.msra.mxu0 %v2543
        %3139 = vmatpush.bf16.msra.mxu0 %v2539
        %3140 = vmatpush.bf16.msra.mxu0 %v2535
        %3141 = vmatpush.bf16.msra.mxu0 %v2531
        %3142 = vmatpush.bf16.msra.mxu0 %v2527
        %3143 = vmatpush.bf16.msra.mxu0 %v2523
        %3144 = vmatpush.bf16.msra.mxu0 %v2519
        %3145 = vmatmul.bf16.gmra.mxu0 %v846
        %v3146 = vpop.f32.mrf.mxu0
        %v3147 = vadd.f32 %v3124, %v3146
        %v3148 = vpop.f32.mrf.mxu0
        %v3149 = vadd.f32 %v3126, %v3148
        %3150 = vmatmul.bf16.gmra.mxu0 %v850
        %v3151 = vpop.f32.mrf.mxu0
        %v3152 = vadd.f32 %v3129, %v3151
        %v3153 = vpop.f32.mrf.mxu0
        %v3154 = vadd.f32 %v3131, %v3153
        %3155 = vmatmul.bf16.gmra.mxu0 %v854
        %v3156 = vpop.f32.mrf.mxu0
        %v3157 = vadd.f32 %v3134, %v3156
        %v3158 = vpop.f32.mrf.mxu0
        %3159 = vdwg.mxu0
        %3160 = vmatpush.bf16.msra.mxu0 %v2579
        %3161 = vmatpush.bf16.msra.mxu0 %v2575
        %3162 = vmatpush.bf16.msra.mxu0 %v2571
        %3163 = vmatpush.bf16.msra.mxu0 %v2567
        %3164 = vmatpush.bf16.msra.mxu0 %v2563
        %3165 = vmatpush.bf16.msra.mxu0 %v2559
        %3166 = vmatpush.bf16.msra.mxu0 %v2555
        %3167 = vmatpush.bf16.msra.mxu0 %v2551
        %3168 = vmatmul.bf16.gmra.mxu0 %v930
        %v3169 = vpop.f32.mrf.mxu0
        %v3170 = vadd.f32 %v3147, %v3169
        %v3171 = vpop.f32.mrf.mxu0
        %v3172 = vadd.f32 %v3149, %v3171
        %3173 = vmatmul.bf16.gmra.mxu0 %v933
        %v3174 = vpop.f32.mrf.mxu0
        %v3175 = vadd.f32 %v3152, %v3174
        %v3176 = vpop.f32.mrf.mxu0
        %v3177 = vadd.f32 %v3154, %v3176
        %3178 = vmatmul.bf16.gmra.mxu0 %v937
        %v3179 = vpop.f32.mrf.mxu0
        %v3180 = vadd.f32 %v3157, %v3179
        %v3181 = vpop.f32.mrf.mxu0
        %3182 = vdwg.mxu0
        %3183 = vmatpush.bf16.msra.mxu0 %v2611
        %3184 = vmatpush.bf16.msra.mxu0 %v2607
        %3185 = vmatpush.bf16.msra.mxu0 %v2603
        %3186 = vmatpush.bf16.msra.mxu0 %v2599
        %3187 = vmatpush.bf16.msra.mxu0 %v2595
        %3188 = vmatpush.bf16.msra.mxu0 %v2591
        %3189 = vmatpush.bf16.msra.mxu0 %v2587
        %3190 = vmatpush.bf16.msra.mxu0 %v2583
        %3191 = vmatmul.bf16.gmra.mxu0 %v941
        %v3192 = vpop.f32.mrf.mxu0
        %v3193 = vadd.f32 %v3170, %v3192
        %v3194 = vpop.f32.mrf.mxu0
        %v3195 = vadd.f32 %v3172, %v3194
        %3196 = vmatmul.bf16.gmra.mxu0 %v945
        %v3197 = vpop.f32.mrf.mxu0
        %v3198 = vadd.f32 %v3175, %v3197
        %v3199 = vpop.f32.mrf.mxu0
        %v3200 = vadd.f32 %v3177, %v3199
        %3201 = vmatmul.bf16.gmra.mxu0 %v949
        %v3202 = vpop.f32.mrf.mxu0
        %v3203 = vadd.f32 %v3180, %v3202
        %v3204 = vpop.f32.mrf.mxu0
        %3205 = vdwg.mxu0
        %3206 = vmatpush.bf16.msra.mxu0 0
        %3207 = vmatpush.bf16.msra.mxu0 0
        %3208 = vmatpush.bf16.msra.mxu0 0
        %3209 = vmatpush.bf16.msra.mxu0 0
        %3210 = vmatpush.bf16.msra.mxu0 %v2627
        %3211 = vmatpush.bf16.msra.mxu0 %v2623
        %3212 = vmatpush.bf16.msra.mxu0 %v2619
        %3213 = vmatpush.bf16.msra.mxu0 %v2615
        %3214 = vmatmul.bf16.gmra.mxu0 %v2968
        %v3215 = vpop.f32.mrf.mxu0
        %v3216 = vadd.f32 %v3193, %v3215
        %v3217 = vpop.f32.mrf.mxu0
        %v3218 = vadd.f32 %v3195, %v3217
        %3219 = vmatmul.bf16.gmra.mxu0 %v2971
        %v3220 = vpop.f32.mrf.mxu0
        %v3221 = vadd.f32 %v3198, %v3220
        %v3222 = vpop.f32.mrf.mxu0
        %v3223 = vadd.f32 %v3200, %v3222
        %3224 = vmatmul.bf16.gmra.mxu0 %v2974
        %v3225 = vpop.f32.mrf.mxu0
        %v3226 = vadd.f32 %v3203, %v3225
        %v3227 = vpop.f32.mrf.mxu0
        %3228 = vdwg.mxu0
        %3229 = vmatpush.bf16.msra.mxu0 %v2324
        %3230 = vmatpush.bf16.msra.mxu0 %v2320
        %3231 = vmatpush.bf16.msra.mxu0 %v2316
        %3232 = vmatpush.bf16.msra.mxu0 %v2312
        %3233 = vmatpush.bf16.msra.mxu0 %v2308
        %3234 = vmatpush.bf16.msra.mxu0 %v2304
        %3235 = vmatpush.bf16.msra.mxu0 %v2300
        %3236 = vmatpush.bf16.msra.mxu0 %v2296
        %3237 = vmatmul.bf16.gmra.mxu0 %v765
        %v3238 = vpop.f32.mrf.mxu0
        %v3239 = vadd.f32 0.0, %v3238
        %v3240 = vpop.f32.mrf.mxu0
        %v3241 = vadd.f32 0.0, %v3240
        %3242 = vmatmul.bf16.gmra.mxu0 %v768
        %v3243 = vpop.f32.mrf.mxu0
        %v3244 = vadd.f32 0.0, %v3243
        %v3245 = vpop.f32.mrf.mxu0
        %v3246 = vadd.f32 0.0, %v3245
        %3247 = vmatmul.bf16.gmra.mxu0 %v772
        %v3248 = vpop.f32.mrf.mxu0
        %v3249 = vadd.f32 0.0, %v3248
        %v3250 = vpop.f32.mrf.mxu0
        %3251 = vdwg.mxu0
        %3252 = vmatpush.bf16.msra.mxu0 %v2356
        %3253 = vmatpush.bf16.msra.mxu0 %v2352
        %3254 = vmatpush.bf16.msra.mxu0 %v2348
        %3255 = vmatpush.bf16.msra.mxu0 %v2344
        %3256 = vmatpush.bf16.msra.mxu0 %v2340
        %3257 = vmatpush.bf16.msra.mxu0 %v2336
        %3258 = vmatpush.bf16.msra.mxu0 %v2332
        %3259 = vmatpush.bf16.msra.mxu0 %v2328
        %3260 = vmatmul.bf16.gmra.mxu0 %v776
        %v3261 = vpop.f32.mrf.mxu0
        %v3262 = vadd.f32 %v3239, %v3261
        %v3263 = vpop.f32.mrf.mxu0
        %v3264 = vadd.f32 %v3241, %v3263
        %3265 = vmatmul.bf16.gmra.mxu0 %v780
        %v3266 = vpop.f32.mrf.mxu0
        %v3267 = vadd.f32 %v3244, %v3266
        %v3268 = vpop.f32.mrf.mxu0
        %v3269 = vadd.f32 %v3246, %v3268
        %3270 = vmatmul.bf16.gmra.mxu0 %v784
        %v3271 = vpop.f32.mrf.mxu0
        %v3272 = vadd.f32 %v3249, %v3271
        %v3273 = vpop.f32.mrf.mxu0
        %3274 = vdwg.mxu0
        %3275 = vmatpush.bf16.msra.mxu0 %v2388
        %3276 = vmatpush.bf16.msra.mxu0 %v2384
        %3277 = vmatpush.bf16.msra.mxu0 %v2380
        %3278 = vmatpush.bf16.msra.mxu0 %v2376
        %3279 = vmatpush.bf16.msra.mxu0 %v2372
        %3280 = vmatpush.bf16.msra.mxu0 %v2368
        %3281 = vmatpush.bf16.msra.mxu0 %v2364
        %3282 = vmatpush.bf16.msra.mxu0 %v2360
        %3283 = vmatmul.bf16.gmra.mxu0 %v788
        %v3284 = vpop.f32.mrf.mxu0
        %v3285 = vadd.f32 %v3262, %v3284
        %v3286 = vpop.f32.mrf.mxu0
        %v3287 = vadd.f32 %v3264, %v3286
        %3288 = vmatmul.bf16.gmra.mxu0 %v792
        %v3289 = vpop.f32.mrf.mxu0
        %v3290 = vadd.f32 %v3267, %v3289
        %v3291 = vpop.f32.mrf.mxu0
        %v3292 = vadd.f32 %v3269, %v3291
        %3293 = vmatmul.bf16.gmra.mxu0 %v796
        %v3294 = vpop.f32.mrf.mxu0
        %v3295 = vadd.f32 %v3272, %v3294
        %v3296 = vpop.f32.mrf.mxu0
        %3297 = vdwg.mxu0
        %3298 = vmatpush.bf16.msra.mxu0 %v2420
        %3299 = vmatpush.bf16.msra.mxu0 %v2416
        %3300 = vmatpush.bf16.msra.mxu0 %v2412
        %3301 = vmatpush.bf16.msra.mxu0 %v2408
        %3302 = vmatpush.bf16.msra.mxu0 %v2404
        %3303 = vmatpush.bf16.msra.mxu0 %v2400
        %3304 = vmatpush.bf16.msra.mxu0 %v2396
        %3305 = vmatpush.bf16.msra.mxu0 %v2392
        %3306 = vmatmul.bf16.gmra.mxu0 %v800
        %v3307 = vpop.f32.mrf.mxu0
        %v3308 = vadd.f32 %v3285, %v3307
        %v3309 = vpop.f32.mrf.mxu0
        %v3310 = vadd.f32 %v3287, %v3309
        %3311 = vmatmul.bf16.gmra.mxu0 %v804
        %v3312 = vpop.f32.mrf.mxu0
        %v3313 = vadd.f32 %v3290, %v3312
        %v3314 = vpop.f32.mrf.mxu0
        %v3315 = vadd.f32 %v3292, %v3314
        %3316 = vmatmul.bf16.gmra.mxu0 %v808
        %v3317 = vpop.f32.mrf.mxu0
        %v3318 = vadd.f32 %v3295, %v3317
        %v3319 = vpop.f32.mrf.mxu0
        %3320 = vdwg.mxu0
        %3321 = vmatpush.bf16.msra.mxu0 %v2452
        %3322 = vmatpush.bf16.msra.mxu0 %v2448
        %3323 = vmatpush.bf16.msra.mxu0 %v2444
        %3324 = vmatpush.bf16.msra.mxu0 %v2440
        %3325 = vmatpush.bf16.msra.mxu0 %v2436
        %3326 = vmatpush.bf16.msra.mxu0 %v2432
        %3327 = vmatpush.bf16.msra.mxu0 %v2428
        %3328 = vmatpush.bf16.msra.mxu0 %v2424
        %3329 = vmatmul.bf16.gmra.mxu0 %v811
        %v3330 = vpop.f32.mrf.mxu0
        %v3331 = vadd.f32 %v3308, %v3330
        %v3332 = vpop.f32.mrf.mxu0
        %v3333 = vadd.f32 %v3310, %v3332
        %3334 = vmatmul.bf16.gmra.mxu0 %v814
        %v3335 = vpop.f32.mrf.mxu0
        %v3336 = vadd.f32 %v3313, %v3335
        %v3337 = vpop.f32.mrf.mxu0
        %v3338 = vadd.f32 %v3315, %v3337
        %3339 = vmatmul.bf16.gmra.mxu0 %v818
        %v3340 = vpop.f32.mrf.mxu0
        %v3341 = vadd.f32 %v3318, %v3340
        %v3342 = vpop.f32.mrf.mxu0
        %3343 = vdwg.mxu0
        %3344 = vmatpush.bf16.msra.mxu0 %v2484
        %3345 = vmatpush.bf16.msra.mxu0 %v2480
        %3346 = vmatpush.bf16.msra.mxu0 %v2476
        %3347 = vmatpush.bf16.msra.mxu0 %v2472
        %3348 = vmatpush.bf16.msra.mxu0 %v2468
        %3349 = vmatpush.bf16.msra.mxu0 %v2464
        %3350 = vmatpush.bf16.msra.mxu0 %v2460
        %3351 = vmatpush.bf16.msra.mxu0 %v2456
        %3352 = vmatmul.bf16.gmra.mxu0 %v822
        %v3353 = vpop.f32.mrf.mxu0
        %v3354 = vadd.f32 %v3331, %v3353
        %v3355 = vpop.f32.mrf.mxu0
        %v3356 = vadd.f32 %v3333, %v3355
        %3357 = vmatmul.bf16.gmra.mxu0 %v826
        %v3358 = vpop.f32.mrf.mxu0
        %v3359 = vadd.f32 %v3336, %v3358
        %v3360 = vpop.f32.mrf.mxu0
        %v3361 = vadd.f32 %v3338, %v3360
        %3362 = vmatmul.bf16.gmra.mxu0 %v830
        %v3363 = vpop.f32.mrf.mxu0
        %v3364 = vadd.f32 %v3341, %v3363
        %v3365 = vpop.f32.mrf.mxu0
        %3366 = vdwg.mxu0
        %3367 = vmatpush.bf16.msra.mxu0 %v2516
        %3368 = vmatpush.bf16.msra.mxu0 %v2512
        %3369 = vmatpush.bf16.msra.mxu0 %v2508
        %3370 = vmatpush.bf16.msra.mxu0 %v2504
        %3371 = vmatpush.bf16.msra.mxu0 %v2500
        %3372 = vmatpush.bf16.msra.mxu0 %v2496
        %3373 = vmatpush.bf16.msra.mxu0 %v2492
        %3374 = vmatpush.bf16.msra.mxu0 %v2488
        %3375 = vmatmul.bf16.gmra.mxu0 %v834
        %v3376 = vpop.f32.mrf.mxu0
        %v3377 = vadd.f32 %v3354, %v3376
        %v3378 = vpop.f32.mrf.mxu0
        %v3379 = vadd.f32 %v3356, %v3378
        %3380 = vmatmul.bf16.gmra.mxu0 %v838
        %v3381 = vpop.f32.mrf.mxu0
        %v3382 = vadd.f32 %v3359, %v3381
        %v3383 = vpop.f32.mrf.mxu0
        %v3384 = vadd.f32 %v3361, %v3383
        %3385 = vmatmul.bf16.gmra.mxu0 %v842
        %v3386 = vpop.f32.mrf.mxu0
        %v3387 = vadd.f32 %v3364, %v3386
        %v3388 = vpop.f32.mrf.mxu0
        %3389 = vdwg.mxu0
        %3390 = vmatpush.bf16.msra.mxu0 %v2548
        %3391 = vmatpush.bf16.msra.mxu0 %v2544
        %3392 = vmatpush.bf16.msra.mxu0 %v2540
        %3393 = vmatpush.bf16.msra.mxu0 %v2536
        %3394 = vmatpush.bf16.msra.mxu0 %v2532
        %3395 = vmatpush.bf16.msra.mxu0 %v2528
        %3396 = vmatpush.bf16.msra.mxu0 %v2524
        %3397 = vmatpush.bf16.msra.mxu0 %v2520
        %3398 = vmatmul.bf16.gmra.mxu0 %v846
        %v3399 = vpop.f32.mrf.mxu0
        %v3400 = vadd.f32 %v3377, %v3399
        %v3401 = vpop.f32.mrf.mxu0
        %v3402 = vadd.f32 %v3379, %v3401
        %3403 = vmatmul.bf16.gmra.mxu0 %v850
        %v3404 = vpop.f32.mrf.mxu0
        %v3405 = vadd.f32 %v3382, %v3404
        %v3406 = vpop.f32.mrf.mxu0
        %v3407 = vadd.f32 %v3384, %v3406
        %3408 = vmatmul.bf16.gmra.mxu0 %v854
        %v3409 = vpop.f32.mrf.mxu0
        %v3410 = vadd.f32 %v3387, %v3409
        %v3411 = vpop.f32.mrf.mxu0
        %3412 = vdwg.mxu0
        %3413 = vmatpush.bf16.msra.mxu0 %v2580
        %3414 = vmatpush.bf16.msra.mxu0 %v2576
        %3415 = vmatpush.bf16.msra.mxu0 %v2572
        %3416 = vmatpush.bf16.msra.mxu0 %v2568
        %3417 = vmatpush.bf16.msra.mxu0 %v2564
        %3418 = vmatpush.bf16.msra.mxu0 %v2560
        %3419 = vmatpush.bf16.msra.mxu0 %v2556
        %3420 = vmatpush.bf16.msra.mxu0 %v2552
        %3421 = vmatmul.bf16.gmra.mxu0 %v930
        %v3422 = vpop.f32.mrf.mxu0
        %v3423 = vadd.f32 %v3400, %v3422
        %v3424 = vpop.f32.mrf.mxu0
        %v3425 = vadd.f32 %v3402, %v3424
        %3426 = vmatmul.bf16.gmra.mxu0 %v933
        %v3427 = vpop.f32.mrf.mxu0
        %v3428 = vadd.f32 %v3405, %v3427
        %v3429 = vpop.f32.mrf.mxu0
        %v3430 = vadd.f32 %v3407, %v3429
        %3431 = vmatmul.bf16.gmra.mxu0 %v937
        %v3432 = vpop.f32.mrf.mxu0
        %v3433 = vadd.f32 %v3410, %v3432
        %v3434 = vpop.f32.mrf.mxu0
        %3435 = vdwg.mxu0
        %3436 = vmatpush.bf16.msra.mxu0 %v2612
        %3437 = vmatpush.bf16.msra.mxu0 %v2608
        %3438 = vmatpush.bf16.msra.mxu0 %v2604
        %3439 = vmatpush.bf16.msra.mxu0 %v2600
        %3440 = vmatpush.bf16.msra.mxu0 %v2596
        %3441 = vmatpush.bf16.msra.mxu0 %v2592
        %3442 = vmatpush.bf16.msra.mxu0 %v2588
        %3443 = vmatpush.bf16.msra.mxu0 %v2584
        %3444 = vmatmul.bf16.gmra.mxu0 %v941
        %v3445 = vpop.f32.mrf.mxu0
        %v3446 = vadd.f32 %v3423, %v3445
        %v3447 = vpop.f32.mrf.mxu0
        %v3448 = vadd.f32 %v3425, %v3447
        %3449 = vmatmul.bf16.gmra.mxu0 %v945
        %v3450 = vpop.f32.mrf.mxu0
        %v3451 = vadd.f32 %v3428, %v3450
        %v3452 = vpop.f32.mrf.mxu0
        %v3453 = vadd.f32 %v3430, %v3452
        %3454 = vmatmul.bf16.gmra.mxu0 %v949
        %v3455 = vpop.f32.mrf.mxu0
        %v3456 = vadd.f32 %v3433, %v3455
        %v3457 = vpop.f32.mrf.mxu0
        %3458 = vdwg.mxu0
        %3459 = vmatpush.bf16.msra.mxu0 0
        %3460 = vmatpush.bf16.msra.mxu0 0
        %3461 = vmatpush.bf16.msra.mxu0 0
        %3462 = vmatpush.bf16.msra.mxu0 0
        %3463 = vmatpush.bf16.msra.mxu0 %v2628
        %3464 = vmatpush.bf16.msra.mxu0 %v2624
        %3465 = vmatpush.bf16.msra.mxu0 %v2620
        %3466 = vmatpush.bf16.msra.mxu0 %v2616
        %3467 = vmatmul.bf16.gmra.mxu0 %v2968
        %v3468 = vpop.f32.mrf.mxu0
        %v3469 = vadd.f32 %v3446, %v3468
        %v3470 = vpop.f32.mrf.mxu0
        %v3471 = vadd.f32 %v3448, %v3470
        %3472 = vmatmul.bf16.gmra.mxu0 %v2971
        %v3473 = vpop.f32.mrf.mxu0
        %v3474 = vadd.f32 %v3451, %v3473
        %v3475 = vpop.f32.mrf.mxu0
        %v3476 = vadd.f32 %v3453, %v3475
        %3477 = vmatmul.bf16.gmra.mxu0 %v2974
        %v3478 = vpop.f32.mrf.mxu0
        %v3479 = vadd.f32 %v3456, %v3478
        %v3480 = vpop.f32.mrf.mxu0
        %3481 = vdwg.mxu0
        %3482 = vmatpush.bf16.msra.mxu0 %v2325
        %3483 = vmatpush.bf16.msra.mxu0 %v2321
        %3484 = vmatpush.bf16.msra.mxu0 %v2317
        %3485 = vmatpush.bf16.msra.mxu0 %v2313
        %3486 = vmatpush.bf16.msra.mxu0 %v2309
        %3487 = vmatpush.bf16.msra.mxu0 %v2305
        %3488 = vmatpush.bf16.msra.mxu0 %v2301
        %3489 = vmatpush.bf16.msra.mxu0 %v2297
        %3490 = vmatmul.bf16.gmra.mxu0 %v765
        %v3491 = vpop.f32.mrf.mxu0
        %v3492 = vadd.f32 0.0, %v3491
        %v3493 = vpop.f32.mrf.mxu0
        %v3494 = vadd.f32 0.0, %v3493
        %3495 = vmatmul.bf16.gmra.mxu0 %v768
        %v3496 = vpop.f32.mrf.mxu0
        %v3497 = vadd.f32 0.0, %v3496
        %v3498 = vpop.f32.mrf.mxu0
        %v3499 = vadd.f32 0.0, %v3498
        %3500 = vmatmul.bf16.gmra.mxu0 %v772
        %v3501 = vpop.f32.mrf.mxu0
        %v3502 = vadd.f32 0.0, %v3501
        %v3503 = vpop.f32.mrf.mxu0
        %3504 = vdwg.mxu0
        %3505 = vmatpush.bf16.msra.mxu0 %v2357
        %3506 = vmatpush.bf16.msra.mxu0 %v2353
        %3507 = vmatpush.bf16.msra.mxu0 %v2349
        %3508 = vmatpush.bf16.msra.mxu0 %v2345
        %3509 = vmatpush.bf16.msra.mxu0 %v2341
        %3510 = vmatpush.bf16.msra.mxu0 %v2337
        %3511 = vmatpush.bf16.msra.mxu0 %v2333
        %3512 = vmatpush.bf16.msra.mxu0 %v2329
        %3513 = vmatmul.bf16.gmra.mxu0 %v776
        %v3514 = vpop.f32.mrf.mxu0
        %v3515 = vadd.f32 %v3492, %v3514
        %v3516 = vpop.f32.mrf.mxu0
        %v3517 = vadd.f32 %v3494, %v3516
        %3518 = vmatmul.bf16.gmra.mxu0 %v780
        %v3519 = vpop.f32.mrf.mxu0
        %v3520 = vadd.f32 %v3497, %v3519
        %v3521 = vpop.f32.mrf.mxu0
        %v3522 = vadd.f32 %v3499, %v3521
        %3523 = vmatmul.bf16.gmra.mxu0 %v784
        %v3524 = vpop.f32.mrf.mxu0
        %v3525 = vadd.f32 %v3502, %v3524
        %v3526 = vpop.f32.mrf.mxu0
        %3527 = vdwg.mxu0
        %3528 = vmatpush.bf16.msra.mxu0 %v2389
        %3529 = vmatpush.bf16.msra.mxu0 %v2385
        %3530 = vmatpush.bf16.msra.mxu0 %v2381
        %3531 = vmatpush.bf16.msra.mxu0 %v2377
        %3532 = vmatpush.bf16.msra.mxu0 %v2373
        %3533 = vmatpush.bf16.msra.mxu0 %v2369
        %3534 = vmatpush.bf16.msra.mxu0 %v2365
        %3535 = vmatpush.bf16.msra.mxu0 %v2361
        %3536 = vmatmul.bf16.gmra.mxu0 %v788
        %v3537 = vpop.f32.mrf.mxu0
        %v3538 = vadd.f32 %v3515, %v3537
        %v3539 = vpop.f32.mrf.mxu0
        %v3540 = vadd.f32 %v3517, %v3539
        %3541 = vmatmul.bf16.gmra.mxu0 %v792
        %v3542 = vpop.f32.mrf.mxu0
        %v3543 = vadd.f32 %v3520, %v3542
        %v3544 = vpop.f32.mrf.mxu0
        %v3545 = vadd.f32 %v3522, %v3544
        %3546 = vmatmul.bf16.gmra.mxu0 %v796
        %v3547 = vpop.f32.mrf.mxu0
        %v3548 = vadd.f32 %v3525, %v3547
        %v3549 = vpop.f32.mrf.mxu0
        %3550 = vdwg.mxu0
        %3551 = vmatpush.bf16.msra.mxu0 %v2421
        %3552 = vmatpush.bf16.msra.mxu0 %v2417
        %3553 = vmatpush.bf16.msra.mxu0 %v2413
        %3554 = vmatpush.bf16.msra.mxu0 %v2409
        %3555 = vmatpush.bf16.msra.mxu0 %v2405
        %3556 = vmatpush.bf16.msra.mxu0 %v2401
        %3557 = vmatpush.bf16.msra.mxu0 %v2397
        %3558 = vmatpush.bf16.msra.mxu0 %v2393
        %3559 = vmatmul.bf16.gmra.mxu0 %v800
        %v3560 = vpop.f32.mrf.mxu0
        %v3561 = vadd.f32 %v3538, %v3560
        %v3562 = vpop.f32.mrf.mxu0
        %v3563 = vadd.f32 %v3540, %v3562
        %3564 = vmatmul.bf16.gmra.mxu0 %v804
        %v3565 = vpop.f32.mrf.mxu0
        %v3566 = vadd.f32 %v3543, %v3565
        %v3567 = vpop.f32.mrf.mxu0
        %v3568 = vadd.f32 %v3545, %v3567
        %3569 = vmatmul.bf16.gmra.mxu0 %v808
        %v3570 = vpop.f32.mrf.mxu0
        %v3571 = vadd.f32 %v3548, %v3570
        %v3572 = vpop.f32.mrf.mxu0
        %3573 = vdwg.mxu0
        %3574 = vmatpush.bf16.msra.mxu0 %v2453
        %3575 = vmatpush.bf16.msra.mxu0 %v2449
        %3576 = vmatpush.bf16.msra.mxu0 %v2445
        %3577 = vmatpush.bf16.msra.mxu0 %v2441
        %3578 = vmatpush.bf16.msra.mxu0 %v2437
        %3579 = vmatpush.bf16.msra.mxu0 %v2433
        %3580 = vmatpush.bf16.msra.mxu0 %v2429
        %3581 = vmatpush.bf16.msra.mxu0 %v2425
        %3582 = vmatmul.bf16.gmra.mxu0 %v811
        %v3583 = vpop.f32.mrf.mxu0
        %v3584 = vadd.f32 %v3561, %v3583
        %v3585 = vpop.f32.mrf.mxu0
        %v3586 = vadd.f32 %v3563, %v3585
        %3587 = vmatmul.bf16.gmra.mxu0 %v814
        %v3588 = vpop.f32.mrf.mxu0
        %v3589 = vadd.f32 %v3566, %v3588
        %v3590 = vpop.f32.mrf.mxu0
        %v3591 = vadd.f32 %v3568, %v3590
        %3592 = vmatmul.bf16.gmra.mxu0 %v818
        %v3593 = vpop.f32.mrf.mxu0
        %v3594 = vadd.f32 %v3571, %v3593
        %v3595 = vpop.f32.mrf.mxu0
        %3596 = vdwg.mxu0
        %3597 = vmatpush.bf16.msra.mxu0 %v2485
        %3598 = vmatpush.bf16.msra.mxu0 %v2481
        %3599 = vmatpush.bf16.msra.mxu0 %v2477
        %3600 = vmatpush.bf16.msra.mxu0 %v2473
        %3601 = vmatpush.bf16.msra.mxu0 %v2469
        %3602 = vmatpush.bf16.msra.mxu0 %v2465
        %3603 = vmatpush.bf16.msra.mxu0 %v2461
        %3604 = vmatpush.bf16.msra.mxu0 %v2457
        %3605 = vmatmul.bf16.gmra.mxu0 %v822
        %v3606 = vpop.f32.mrf.mxu0
        %v3607 = vadd.f32 %v3584, %v3606
        %v3608 = vpop.f32.mrf.mxu0
        %v3609 = vadd.f32 %v3586, %v3608
        %3610 = vmatmul.bf16.gmra.mxu0 %v826
        %v3611 = vpop.f32.mrf.mxu0
        %v3612 = vadd.f32 %v3589, %v3611
        %v3613 = vpop.f32.mrf.mxu0
        %v3614 = vadd.f32 %v3591, %v3613
        %3615 = vmatmul.bf16.gmra.mxu0 %v830
        %v3616 = vpop.f32.mrf.mxu0
        %v3617 = vadd.f32 %v3594, %v3616
        %v3618 = vpop.f32.mrf.mxu0
        %3619 = vdwg.mxu0
        %3620 = vmatpush.bf16.msra.mxu0 %v2517
        %3621 = vmatpush.bf16.msra.mxu0 %v2513
        %3622 = vmatpush.bf16.msra.mxu0 %v2509
        %3623 = vmatpush.bf16.msra.mxu0 %v2505
        %3624 = vmatpush.bf16.msra.mxu0 %v2501
        %3625 = vmatpush.bf16.msra.mxu0 %v2497
        %3626 = vmatpush.bf16.msra.mxu0 %v2493
        %3627 = vmatpush.bf16.msra.mxu0 %v2489
        %3628 = vmatmul.bf16.gmra.mxu0 %v834
        %v3629 = vpop.f32.mrf.mxu0
        %v3630 = vadd.f32 %v3607, %v3629
        %v3631 = vpop.f32.mrf.mxu0
        %v3632 = vadd.f32 %v3609, %v3631
        %3633 = vmatmul.bf16.gmra.mxu0 %v838
        %v3634 = vpop.f32.mrf.mxu0
        %v3635 = vadd.f32 %v3612, %v3634
        %v3636 = vpop.f32.mrf.mxu0
        %v3637 = vadd.f32 %v3614, %v3636
        %3638 = vmatmul.bf16.gmra.mxu0 %v842
        %v3639 = vpop.f32.mrf.mxu0
        %v3640 = vadd.f32 %v3617, %v3639
        %v3641 = vpop.f32.mrf.mxu0
        %3642 = vdwg.mxu0
        %3643 = vmatpush.bf16.msra.mxu0 %v2549
        %3644 = vmatpush.bf16.msra.mxu0 %v2545
        %3645 = vmatpush.bf16.msra.mxu0 %v2541
        %3646 = vmatpush.bf16.msra.mxu0 %v2537
        %3647 = vmatpush.bf16.msra.mxu0 %v2533
        %3648 = vmatpush.bf16.msra.mxu0 %v2529
        %3649 = vmatpush.bf16.msra.mxu0 %v2525
        %3650 = vmatpush.bf16.msra.mxu0 %v2521
        %3651 = vmatmul.bf16.gmra.mxu0 %v846
        %v3652 = vpop.f32.mrf.mxu0
        %v3653 = vadd.f32 %v3630, %v3652
        %v3654 = vpop.f32.mrf.mxu0
        %v3655 = vadd.f32 %v3632, %v3654
        %3656 = vmatmul.bf16.gmra.mxu0 %v850
        %v3657 = vpop.f32.mrf.mxu0
        %v3658 = vadd.f32 %v3635, %v3657
        %v3659 = vpop.f32.mrf.mxu0
        %v3660 = vadd.f32 %v3637, %v3659
        %3661 = vmatmul.bf16.gmra.mxu0 %v854
        %v3662 = vpop.f32.mrf.mxu0
        %v3663 = vadd.f32 %v3640, %v3662
        %v3664 = vpop.f32.mrf.mxu0
        %3665 = vdwg.mxu0
        %3666 = vmatpush.bf16.msra.mxu0 %v2581
        %3667 = vmatpush.bf16.msra.mxu0 %v2577
        %3668 = vmatpush.bf16.msra.mxu0 %v2573
        %3669 = vmatpush.bf16.msra.mxu0 %v2569
        %3670 = vmatpush.bf16.msra.mxu0 %v2565
        %3671 = vmatpush.bf16.msra.mxu0 %v2561
        %3672 = vmatpush.bf16.msra.mxu0 %v2557
        %3673 = vmatpush.bf16.msra.mxu0 %v2553
        %3674 = vmatmul.bf16.gmra.mxu0 %v930
        %v3675 = vpop.f32.mrf.mxu0
        %v3676 = vadd.f32 %v3653, %v3675
        %v3677 = vpop.f32.mrf.mxu0
        %v3678 = vadd.f32 %v3655, %v3677
        %3679 = vmatmul.bf16.gmra.mxu0 %v933
        %v3680 = vpop.f32.mrf.mxu0
        %v3681 = vadd.f32 %v3658, %v3680
        %v3682 = vpop.f32.mrf.mxu0
        %v3683 = vadd.f32 %v3660, %v3682
        %3684 = vmatmul.bf16.gmra.mxu0 %v937
        %v3685 = vpop.f32.mrf.mxu0
        %v3686 = vadd.f32 %v3663, %v3685
        %v3687 = vpop.f32.mrf.mxu0
        %3688 = vdwg.mxu0
        %3689 = vmatpush.bf16.msra.mxu0 %v2613
        %3690 = vmatpush.bf16.msra.mxu0 %v2609
        %3691 = vmatpush.bf16.msra.mxu0 %v2605
        %3692 = vmatpush.bf16.msra.mxu0 %v2601
        %3693 = vmatpush.bf16.msra.mxu0 %v2597
        %3694 = vmatpush.bf16.msra.mxu0 %v2593
        %3695 = vmatpush.bf16.msra.mxu0 %v2589
        %3696 = vmatpush.bf16.msra.mxu0 %v2585
        %3697 = vmatmul.bf16.gmra.mxu0 %v941
        %v3698 = vpop.f32.mrf.mxu0
        %v3699 = vadd.f32 %v3676, %v3698
        %v3700 = vpop.f32.mrf.mxu0
        %v3701 = vadd.f32 %v3678, %v3700
        %3702 = vmatmul.bf16.gmra.mxu0 %v945
        %v3703 = vpop.f32.mrf.mxu0
        %v3704 = vadd.f32 %v3681, %v3703
        %v3705 = vpop.f32.mrf.mxu0
        %v3706 = vadd.f32 %v3683, %v3705
        %3707 = vmatmul.bf16.gmra.mxu0 %v949
        %v3708 = vpop.f32.mrf.mxu0
        %v3709 = vadd.f32 %v3686, %v3708
        %v3710 = vpop.f32.mrf.mxu0
        %3711 = vdwg.mxu0
        %3712 = vmatpush.bf16.msra.mxu0 0
        %3713 = vmatpush.bf16.msra.mxu0 0
        %3714 = vmatpush.bf16.msra.mxu0 0
        %3715 = vmatpush.bf16.msra.mxu0 0
        %3716 = vmatpush.bf16.msra.mxu0 %v2629
        %3717 = vmatpush.bf16.msra.mxu0 %v2625
        %3718 = vmatpush.bf16.msra.mxu0 %v2621
        %3719 = vmatpush.bf16.msra.mxu0 %v2617
        %3720 = vmatmul.bf16.gmra.mxu0 %v2968
        %v3721 = vpop.f32.mrf.mxu0
        %v3722 = vadd.f32 %v3699, %v3721
        %v3723 = vpop.f32.mrf.mxu0
        %v3724 = vadd.f32 %v3701, %v3723
        %3725 = vmatmul.bf16.gmra.mxu0 %v2971
        %v3726 = vpop.f32.mrf.mxu0
        %v3727 = vadd.f32 %v3704, %v3726
        %v3728 = vpop.f32.mrf.mxu0
        %v3729 = vadd.f32 %v3706, %v3728
        %3730 = vmatmul.bf16.gmra.mxu0 %v2974
        %v3731 = vpop.f32.mrf.mxu0
        %v3732 = vadd.f32 %v3709, %v3731
        %v3733 = vpop.f32.mrf.mxu0
        %3734 = vdwg.mxu0
        %3735 = vmatpush.bf16.msra.mxu0 %v2326
        %3736 = vmatpush.bf16.msra.mxu0 %v2322
        %3737 = vmatpush.bf16.msra.mxu0 %v2318
        %3738 = vmatpush.bf16.msra.mxu0 %v2314
        %3739 = vmatpush.bf16.msra.mxu0 %v2310
        %3740 = vmatpush.bf16.msra.mxu0 %v2306
        %3741 = vmatpush.bf16.msra.mxu0 %v2302
        %3742 = vmatpush.bf16.msra.mxu0 %v2298
        %3743 = vmatmul.bf16.gmra.mxu0 %v765
        %v3744 = vpop.f32.mrf.mxu0
        %v3745 = vadd.f32 0.0, %v3744
        %v3746 = vpop.f32.mrf.mxu0
        %v3747 = vadd.f32 0.0, %v3746
        %3748 = vmatmul.bf16.gmra.mxu0 %v768
        %v3749 = vpop.f32.mrf.mxu0
        %v3750 = vadd.f32 0.0, %v3749
        %v3751 = vpop.f32.mrf.mxu0
        %v3752 = vadd.f32 0.0, %v3751
        %3753 = vmatmul.bf16.gmra.mxu0 %v772
        %v3754 = vpop.f32.mrf.mxu0
        %v3755 = vadd.f32 0.0, %v3754
        %v3756 = vpop.f32.mrf.mxu0
        %3757 = vdwg.mxu0
        %3758 = vmatpush.bf16.msra.mxu0 %v2358
        %3759 = vmatpush.bf16.msra.mxu0 %v2354
        %3760 = vmatpush.bf16.msra.mxu0 %v2350
        %3761 = vmatpush.bf16.msra.mxu0 %v2346
        %3762 = vmatpush.bf16.msra.mxu0 %v2342
        %3763 = vmatpush.bf16.msra.mxu0 %v2338
        %3764 = vmatpush.bf16.msra.mxu0 %v2334
        %3765 = vmatpush.bf16.msra.mxu0 %v2330
        %3766 = vmatmul.bf16.gmra.mxu0 %v776
        %v3767 = vpop.f32.mrf.mxu0
        %v3768 = vadd.f32 %v3745, %v3767
        %v3769 = vpop.f32.mrf.mxu0
        %v3770 = vadd.f32 %v3747, %v3769
        %3771 = vmatmul.bf16.gmra.mxu0 %v780
        %v3772 = vpop.f32.mrf.mxu0
        %v3773 = vadd.f32 %v3750, %v3772
        %v3774 = vpop.f32.mrf.mxu0
        %v3775 = vadd.f32 %v3752, %v3774
        %3776 = vmatmul.bf16.gmra.mxu0 %v784
        %v3777 = vpop.f32.mrf.mxu0
        %v3778 = vadd.f32 %v3755, %v3777
        %v3779 = vpop.f32.mrf.mxu0
        %3780 = vdwg.mxu0
        %3781 = vmatpush.bf16.msra.mxu0 %v2390
        %3782 = vmatpush.bf16.msra.mxu0 %v2386
        %3783 = vmatpush.bf16.msra.mxu0 %v2382
        %3784 = vmatpush.bf16.msra.mxu0 %v2378
        %3785 = vmatpush.bf16.msra.mxu0 %v2374
        %3786 = vmatpush.bf16.msra.mxu0 %v2370
        %3787 = vmatpush.bf16.msra.mxu0 %v2366
        %3788 = vmatpush.bf16.msra.mxu0 %v2362
        %3789 = vmatmul.bf16.gmra.mxu0 %v788
        %v3790 = vpop.f32.mrf.mxu0
        %v3791 = vadd.f32 %v3768, %v3790
        %v3792 = vpop.f32.mrf.mxu0
        %v3793 = vadd.f32 %v3770, %v3792
        %3794 = vmatmul.bf16.gmra.mxu0 %v792
        %v3795 = vpop.f32.mrf.mxu0
        %v3796 = vadd.f32 %v3773, %v3795
        %v3797 = vpop.f32.mrf.mxu0
        %v3798 = vadd.f32 %v3775, %v3797
        %3799 = vmatmul.bf16.gmra.mxu0 %v796
        %v3800 = vpop.f32.mrf.mxu0
        %v3801 = vadd.f32 %v3778, %v3800
        %v3802 = vpop.f32.mrf.mxu0
        %3803 = vdwg.mxu0
        %3804 = vmatpush.bf16.msra.mxu0 %v2422
        %3805 = vmatpush.bf16.msra.mxu0 %v2418
        %3806 = vmatpush.bf16.msra.mxu0 %v2414
        %3807 = vmatpush.bf16.msra.mxu0 %v2410
        %3808 = vmatpush.bf16.msra.mxu0 %v2406
        %3809 = vmatpush.bf16.msra.mxu0 %v2402
        %3810 = vmatpush.bf16.msra.mxu0 %v2398
        %3811 = vmatpush.bf16.msra.mxu0 %v2394
        %3812 = vmatmul.bf16.gmra.mxu0 %v800
        %v3813 = vpop.f32.mrf.mxu0
        %v3814 = vadd.f32 %v3791, %v3813
        %v3815 = vpop.f32.mrf.mxu0
        %v3816 = vadd.f32 %v3793, %v3815
        %3817 = vmatmul.bf16.gmra.mxu0 %v804
        %v3818 = vpop.f32.mrf.mxu0
        %v3819 = vadd.f32 %v3796, %v3818
        %v3820 = vpop.f32.mrf.mxu0
        %v3821 = vadd.f32 %v3798, %v3820
        %3822 = vmatmul.bf16.gmra.mxu0 %v808
        %v3823 = vpop.f32.mrf.mxu0
        %v3824 = vadd.f32 %v3801, %v3823
        %v3825 = vpop.f32.mrf.mxu0
        %3826 = vdwg.mxu0
        %3827 = vmatpush.bf16.msra.mxu0 %v2454
        %3828 = vmatpush.bf16.msra.mxu0 %v2450
        %3829 = vmatpush.bf16.msra.mxu0 %v2446
        %3830 = vmatpush.bf16.msra.mxu0 %v2442
        %3831 = vmatpush.bf16.msra.mxu0 %v2438
        %3832 = vmatpush.bf16.msra.mxu0 %v2434
        %3833 = vmatpush.bf16.msra.mxu0 %v2430
        %3834 = vmatpush.bf16.msra.mxu0 %v2426
        %3835 = vmatmul.bf16.gmra.mxu0 %v811
        %v3836 = vpop.f32.mrf.mxu0
        %v3837 = vadd.f32 %v3814, %v3836
        %v3838 = vpop.f32.mrf.mxu0
        %v3839 = vadd.f32 %v3816, %v3838
        %3840 = vmatmul.bf16.gmra.mxu0 %v814
        %v3841 = vpop.f32.mrf.mxu0
        %v3842 = vadd.f32 %v3819, %v3841
        %v3843 = vpop.f32.mrf.mxu0
        %v3844 = vadd.f32 %v3821, %v3843
        %3845 = vmatmul.bf16.gmra.mxu0 %v818
        %v3846 = vpop.f32.mrf.mxu0
        %v3847 = vadd.f32 %v3824, %v3846
        %v3848 = vpop.f32.mrf.mxu0
        %3849 = vdwg.mxu0
        %3850 = vmatpush.bf16.msra.mxu0 %v2486
        %3851 = vmatpush.bf16.msra.mxu0 %v2482
        %3852 = vmatpush.bf16.msra.mxu0 %v2478
        %3853 = vmatpush.bf16.msra.mxu0 %v2474
        %3854 = vmatpush.bf16.msra.mxu0 %v2470
        %3855 = vmatpush.bf16.msra.mxu0 %v2466
        %3856 = vmatpush.bf16.msra.mxu0 %v2462
        %3857 = vmatpush.bf16.msra.mxu0 %v2458
        %3858 = vmatmul.bf16.gmra.mxu0 %v822
        %v3859 = vpop.f32.mrf.mxu0
        %v3860 = vadd.f32 %v3837, %v3859
        %v3861 = vpop.f32.mrf.mxu0
        %v3862 = vadd.f32 %v3839, %v3861
        %3863 = vmatmul.bf16.gmra.mxu0 %v826
        %v3864 = vpop.f32.mrf.mxu0
        %v3865 = vadd.f32 %v3842, %v3864
        %v3866 = vpop.f32.mrf.mxu0
        %v3867 = vadd.f32 %v3844, %v3866
        %3868 = vmatmul.bf16.gmra.mxu0 %v830
        %v3869 = vpop.f32.mrf.mxu0
        %v3870 = vadd.f32 %v3847, %v3869
        %v3871 = vpop.f32.mrf.mxu0
        %3872 = vdwg.mxu0
        %3873 = vmatpush.bf16.msra.mxu0 %v2518
        %3874 = vmatpush.bf16.msra.mxu0 %v2514
        %3875 = vmatpush.bf16.msra.mxu0 %v2510
        %3876 = vmatpush.bf16.msra.mxu0 %v2506
        %3877 = vmatpush.bf16.msra.mxu0 %v2502
        %3878 = vmatpush.bf16.msra.mxu0 %v2498
        %3879 = vmatpush.bf16.msra.mxu0 %v2494
        %3880 = vmatpush.bf16.msra.mxu0 %v2490
        %3881 = vmatmul.bf16.gmra.mxu0 %v834
        %v3882 = vpop.f32.mrf.mxu0
        %v3883 = vadd.f32 %v3860, %v3882
        %v3884 = vpop.f32.mrf.mxu0
        %v3885 = vadd.f32 %v3862, %v3884
        %3886 = vmatmul.bf16.gmra.mxu0 %v838
        %v3887 = vpop.f32.mrf.mxu0
        %v3888 = vadd.f32 %v3865, %v3887
        %v3889 = vpop.f32.mrf.mxu0
        %v3890 = vadd.f32 %v3867, %v3889
        %3891 = vmatmul.bf16.gmra.mxu0 %v842
        %v3892 = vpop.f32.mrf.mxu0
        %v3893 = vadd.f32 %v3870, %v3892
        %v3894 = vpop.f32.mrf.mxu0
        %3895 = vdwg.mxu0
        %3896 = vmatpush.bf16.msra.mxu0 %v2550
        %3897 = vmatpush.bf16.msra.mxu0 %v2546
        %3898 = vmatpush.bf16.msra.mxu0 %v2542
        %3899 = vmatpush.bf16.msra.mxu0 %v2538
        %3900 = vmatpush.bf16.msra.mxu0 %v2534
        %3901 = vmatpush.bf16.msra.mxu0 %v2530
        %3902 = vmatpush.bf16.msra.mxu0 %v2526
        %3903 = vmatpush.bf16.msra.mxu0 %v2522
        %3904 = vmatmul.bf16.gmra.mxu0 %v846
        %v3905 = vpop.f32.mrf.mxu0
        %v3906 = vadd.f32 %v3883, %v3905
        %v3907 = vpop.f32.mrf.mxu0
        %v3908 = vadd.f32 %v3885, %v3907
        %3909 = vmatmul.bf16.gmra.mxu0 %v850
        %v3910 = vpop.f32.mrf.mxu0
        %v3911 = vadd.f32 %v3888, %v3910
        %v3912 = vpop.f32.mrf.mxu0
        %v3913 = vadd.f32 %v3890, %v3912
        %3914 = vmatmul.bf16.gmra.mxu0 %v854
        %v3915 = vpop.f32.mrf.mxu0
        %v3916 = vadd.f32 %v3893, %v3915
        %v3917 = vpop.f32.mrf.mxu0
        %3918 = vdwg.mxu0
        %3919 = vmatpush.bf16.msra.mxu0 %v2582
        %3920 = vmatpush.bf16.msra.mxu0 %v2578
        %3921 = vmatpush.bf16.msra.mxu0 %v2574
        %3922 = vmatpush.bf16.msra.mxu0 %v2570
        %3923 = vmatpush.bf16.msra.mxu0 %v2566
        %3924 = vmatpush.bf16.msra.mxu0 %v2562
        %3925 = vmatpush.bf16.msra.mxu0 %v2558
        %3926 = vmatpush.bf16.msra.mxu0 %v2554
        %3927 = vmatmul.bf16.gmra.mxu0 %v930
        %v3928 = vpop.f32.mrf.mxu0
        %v3929 = vadd.f32 %v3906, %v3928
        %v3930 = vpop.f32.mrf.mxu0
        %v3931 = vadd.f32 %v3908, %v3930
        %3932 = vmatmul.bf16.gmra.mxu0 %v933
        %v3933 = vpop.f32.mrf.mxu0
        %v3934 = vadd.f32 %v3911, %v3933
        %v3935 = vpop.f32.mrf.mxu0
        %v3936 = vadd.f32 %v3913, %v3935
        %3937 = vmatmul.bf16.gmra.mxu0 %v937
        %v3938 = vpop.f32.mrf.mxu0
        %v3939 = vadd.f32 %v3916, %v3938
        %v3940 = vpop.f32.mrf.mxu0
        %3941 = vdwg.mxu0
        %3942 = vmatpush.bf16.msra.mxu0 %v2614
        %3943 = vmatpush.bf16.msra.mxu0 %v2610
        %3944 = vmatpush.bf16.msra.mxu0 %v2606
        %3945 = vmatpush.bf16.msra.mxu0 %v2602
        %3946 = vmatpush.bf16.msra.mxu0 %v2598
        %3947 = vmatpush.bf16.msra.mxu0 %v2594
        %3948 = vmatpush.bf16.msra.mxu0 %v2590
        %3949 = vmatpush.bf16.msra.mxu0 %v2586
        %3950 = vmatmul.bf16.gmra.mxu0 %v941
        %v3951 = vpop.f32.mrf.mxu0
        %v3952 = vadd.f32 %v3929, %v3951
        %v3953 = vpop.f32.mrf.mxu0
        %v3954 = vadd.f32 %v3931, %v3953
        %3955 = vmatmul.bf16.gmra.mxu0 %v945
        %v3956 = vpop.f32.mrf.mxu0
        %v3957 = vadd.f32 %v3934, %v3956
        %v3958 = vpop.f32.mrf.mxu0
        %v3959 = vadd.f32 %v3936, %v3958
        %3960 = vmatmul.bf16.gmra.mxu0 %v949
        %v3961 = vpop.f32.mrf.mxu0
        %v3962 = vadd.f32 %v3939, %v3961
        %v3963 = vpop.f32.mrf.mxu0
        %3964 = vdwg.mxu0
        %3965 = vmatpush.bf16.msra.mxu0 0
        %3966 = vmatpush.bf16.msra.mxu0 0
        %3967 = vmatpush.bf16.msra.mxu0 0
        %3968 = vmatpush.bf16.msra.mxu0 0
        %3969 = vmatpush.bf16.msra.mxu0 %v2630
        %3970 = vmatpush.bf16.msra.mxu0 %v2626
        %3971 = vmatpush.bf16.msra.mxu0 %v2622
        %3972 = vmatpush.bf16.msra.mxu0 %v2618
        %3973 = vmatmul.bf16.gmra.mxu0 %v2968
        %v3974 = vpop.f32.mrf.mxu0
        %v3975 = vadd.f32 %v3952, %v3974
        %v3976 = vpop.f32.mrf.mxu0
        %v3977 = vadd.f32 %v3954, %v3976
        %3978 = vmatmul.bf16.gmra.mxu0 %v2971
        %v3979 = vpop.f32.mrf.mxu0
        %v3980 = vadd.f32 %v3957, %v3979
        %v3981 = vpop.f32.mrf.mxu0
        %v3982 = vadd.f32 %v3959, %v3981
        %3983 = vmatmul.bf16.gmra.mxu0 %v2974
        %v3984 = vpop.f32.mrf.mxu0
        %v3985 = vadd.f32 %v3962, %v3984
        %v3986 = vpop.f32.mrf.mxu0
        %3987 = vdwg.mxu0
        %v3988 = vld [vmem:[#allocation6] sm:$0xf]
        %v3990 = vperm.slane %v3988, 0
        %v3991 = vperm.slane %v3988, 1
        %v3992 = vperm.slane %v3988, 2
        %v3993 = vperm.slane %v3988, 3
        %v3998 = vmul.f32 %v3216, %v3990
        %v3999 = vmul.f32 %v3469, %v3991
        %v4000 = vmul.f32 %v3722, %v3992
        %v4001 = vmul.f32 %v3975, %v3993
        %v4002 = vmul.f32 %v3218, %v3990
        %v4003 = vmul.f32 %v3471, %v3991
        %v4004 = vmul.f32 %v3724, %v3992
        %v4005 = vmul.f32 %v3977, %v3993
        %v4006 = vmul.f32 %v3221, %v3990
        %v4007 = vmul.f32 %v3474, %v3991
        %v4008 = vmul.f32 %v3727, %v3992
        %v4009 = vmul.f32 %v3980, %v3993
        %v4010 = vmul.f32 %v3223, %v3990
        %v4011 = vmul.f32 %v3476, %v3991
        %v4012 = vmul.f32 %v3729, %v3992
        %v4013 = vmul.f32 %v3982, %v3993
        %v4014 = vmul.f32 %v3226, %v3990
        %v4015 = vmul.f32 %v3479, %v3991
        %v4016 = vmul.f32 %v3732, %v3992
        %v4017 = vmul.f32 %v3985, %v3993
        %v4018 = vld [vmem:[#allocation8] sm:$0xf]
        %v4020 = vperm.slane %v4018, 0
        %v4021 = vperm.slane %v4018, 1
        %v4022 = vperm.slane %v4018, 2
        %v4023 = vperm.slane %v4018, 3
        %v4028 = vadd.f32 %v3998, %v4020
        %v4029 = vadd.f32 %v3999, %v4021
        %v4030 = vadd.f32 %v4000, %v4022
        %v4031 = vadd.f32 %v4001, %v4023
        %v4032 = vadd.f32 %v4002, %v4020
        %v4033 = vadd.f32 %v4003, %v4021
        %v4034 = vadd.f32 %v4004, %v4022
        %v4035 = vadd.f32 %v4005, %v4023
        %v4036 = vadd.f32 %v4006, %v4020
        %v4037 = vadd.f32 %v4007, %v4021
        %v4038 = vadd.f32 %v4008, %v4022
        %v4039 = vadd.f32 %v4009, %v4023
        %v4040 = vadd.f32 %v4010, %v4020
        %v4041 = vadd.f32 %v4011, %v4021
        %v4042 = vadd.f32 %v4012, %v4022
        %v4043 = vadd.f32 %v4013, %v4023
        %v4044 = vadd.f32 %v4014, %v4020
        %v4045 = vadd.f32 %v4015, %v4021
        %v4046 = vadd.f32 %v4016, %v4022
        %v4047 = vadd.f32 %v4017, %v4023
        %v4048 = vmax.f32 %v4028, 0.0
        %v4049 = vmax.f32 %v4029, 0.0
        %v4050 = vmax.f32 %v4030, 0.0
        %v4051 = vmax.f32 %v4031, 0.0
        %v4052 = vmax.f32 %v4032, 0.0
        %v4053 = vmax.f32 %v4033, 0.0
        %v4054 = vmax.f32 %v4034, 0.0
        %v4055 = vmax.f32 %v4035, 0.0
        %v4056 = vmax.f32 %v4036, 0.0
        %v4057 = vmax.f32 %v4037, 0.0
        %v4058 = vmax.f32 %v4038, 0.0
        %v4059 = vmax.f32 %v4039, 0.0
        %v4060 = vmax.f32 %v4040, 0.0
        %v4061 = vmax.f32 %v4041, 0.0
        %v4062 = vmax.f32 %v4042, 0.0
        %v4063 = vmax.f32 %v4043, 0.0
        %v4064 = vmax.f32 %v4044, 0.0
        %v4065 = vmax.f32 %v4045, 0.0
        %v4066 = vmax.f32 %v4046, 0.0
        %v4067 = vmax.f32 %v4047, 0.0
        %vm4068 = vcmask 1040384
        %vm4069 = vsmask.f32 256
        %vm4070 = vmand %vm4068, %vm4069
        %vm4071 = vcmask 1044484
        %vm4072 = vmand %vm4071, %vm586
        %vm4073 = vmor %vm4072, %vm4070
        %v4074 = vld [vmem:[#allocation3] sm:$0x11]
        %v4075 = vsel %vm4073, 0, %v4074
        %4076 = vst [vmem:[#allocation3] sm:$0x11] %v4075
        %v4077 = vld [vmem:[#allocation3 + $0x8] sm:$0x11]
        %v4078 = vsel %vm4073, 0, %v4077
        %4079 = vst [vmem:[#allocation3 + $0x8] sm:$0x11] %v4078
        %vm4080 = vcmask 1041409
        %vm4081 = vmand %vm4080, %vm382
        %vm4082 = vcmask 1045509
        %vm4083 = vsmask.f32 7958
        %vm4084 = vmand %vm4082, %vm4083
        %vm4085 = vmor %vm4084, %vm4081
        %v4086 = vld [vmem:[#allocation3 + $0x40] sm:$0x22]
        %v4087 = vsel %vm4085, 0, %v4086
        %4088 = vst [vmem:[#allocation3 + $0x40] sm:$0x22] %v4087
        %v4089 = vld [vmem:[#allocation3 + $0x48] sm:$0x22]
        %v4090 = vsel %vm4085, 0, %v4089
        %4091 = vst [vmem:[#allocation3 + $0x48] sm:$0x22] %v4090
        %v4092 = vpack.c.bf16 %v4049, %v4048
        %v4093 = vpack.c.bf16 %v4051, %v4050
        %v4094 = vpack.c.bf16 %v4053, %v4052
        %v4095 = vpack.c.bf16 %v4055, %v4054
        %v4096 = vpack.c.bf16 %v4057, %v4056
        %v4097 = vpack.c.bf16 %v4059, %v4058
        %v4098 = vpack.c.bf16 %v4061, %v4060
        %v4099 = vpack.c.bf16 %v4063, %v4062
        %v4100 = vpack.c.bf16 %v4065, %v4064
        %v4101 = vpack.c.bf16 %v4067, %v4066
        %vm4102 = vsmask.f32 4368
        %vm4103 = vmor %vm4069, %vm4102
        %v4105 = vshrl.u32 %v4092, 16
        %v4107 = vrot.slane %v4105, 7
        %v4108 = vshll.u32 %v4092, 16
        %v4110 = vor.u32 %v4107, %v4108
        %v4112 = vshrl.u32 %v4093, 16
        %v4114 = vrot.slane %v4112, 7
        %v4115 = vshll.u32 %v4093, 16
        %v4117 = vor.u32 %v4114, %v4115
        %v4118 = vrot.slane %v4107, 4
        %v4120 = vshrl.u32 %v4094, 16
        %v4122 = vrot.slane %v4120, 7
        %v4123 = vshll.u32 %v4094, 16
        %v4125 = vor.u32 %v4122, %v4123
        %v4126 = vsel %vm4103, %v4118, %v4125
        %v4127 = vrot.slane %v4114, 4
        %v4129 = vshrl.u32 %v4095, 16
        %v4131 = vrot.slane %v4129, 7
        %v4132 = vshll.u32 %v4095, 16
        %v4134 = vor.u32 %v4131, %v4132
        %v4135 = vsel %vm4103, %v4127, %v4134
        %v4136 = vrot.slane %v4122, 4
        %v4138 = vshrl.u32 %v4096, 16
        %v4140 = vrot.slane %v4138, 7
        %v4141 = vshll.u32 %v4096, 16
        %v4143 = vor.u32 %v4140, %v4141
        %v4144 = vsel %vm4103, %v4136, %v4143
        %v4145 = vrot.slane %v4131, 4
        %v4147 = vshrl.u32 %v4097, 16
        %v4149 = vrot.slane %v4147, 7
        %v4150 = vshll.u32 %v4097, 16
        %v4152 = vor.u32 %v4149, %v4150
        %v4153 = vsel %vm4103, %v4145, %v4152
        %v4154 = vrot.slane %v4140, 4
        %v4156 = vshrl.u32 %v4098, 16
        %v4158 = vrot.slane %v4156, 7
        %v4159 = vshll.u32 %v4098, 16
        %v4161 = vor.u32 %v4158, %v4159
        %v4162 = vsel %vm4103, %v4154, %v4161
        %v4163 = vrot.slane %v4149, 4
        %v4165 = vshrl.u32 %v4099, 16
        %v4167 = vrot.slane %v4165, 7
        %v4168 = vshll.u32 %v4099, 16
        %v4170 = vor.u32 %v4167, %v4168
        %v4171 = vsel %vm4103, %v4163, %v4170
        %v4172 = vrot.slane %v4158, 4
        %v4174 = vshrl.u32 %v4100, 16
        %v4176 = vrot.slane %v4174, 7
        %v4177 = vshll.u32 %v4100, 16
        %v4179 = vor.u32 %v4176, %v4177
        %v4180 = vsel %vm4103, %v4172, %v4179
        %v4181 = vrot.slane %v4167, 4
        %v4183 = vshrl.u32 %v4101, 16
        %v4185 = vrot.slane %v4183, 7
        %v4186 = vshll.u32 %v4101, 16
        %v4188 = vor.u32 %v4185, %v4186
        %v4189 = vsel %vm4103, %v4181, %v4188
        %vm4200 = vcmask 1043456
        %vm4201 = vsmask.f32 7938
        %vm4202 = vmand %vm4200, %vm4201
        %vm4203 = vcmask 1047556
        %vm4204 = vsmask.f32 7954
        %vm4205 = vmand %vm4203, %vm4204
        %vm4206 = vmor %vm4205, %vm4202
        %v4207 = vld [vmem:[#allocation3] sm:$0xff]
        %v4208 = vsel %vm4206, %v4110, %v4207
        %4209 = vst [vmem:[#allocation3] sm:$0xff] %v4208
        %v4210 = vld [vmem:[#allocation3 + $0x8] sm:$0xff]
        %v4211 = vsel %vm4206, %v4117, %v4210
        %4212 = vst [vmem:[#allocation3 + $0x8] sm:$0xff] %v4211
        %4213 = vst [vmem:[#allocation3 + $0x10] sm:$0xff] %v4126
        %4214 = vst [vmem:[#allocation3 + $0x18] sm:$0xff] %v4135
        %4215 = vst [vmem:[#allocation3 + $0x20] sm:$0xff] %v4144
        %4216 = vst [vmem:[#allocation3 + $0x28] sm:$0xff] %v4153
        %4217 = vst [vmem:[#allocation3 + $0x30] sm:$0xff] %v4162
        %4218 = vst [vmem:[#allocation3 + $0x38] sm:$0xff] %v4171
        %vm4219 = vcmask 1041408
        %vm4220 = vmand %vm4219, %vm376
        %vm4221 = vcmask 1045508
        %vm4222 = vmand %vm4221, %vm546
        %vm4223 = vmor %vm4222, %vm4220
        %v4224 = vld [vmem:[#allocation3 + $0x40] sm:$0x33]
        %v4225 = vsel %vm4223, %v4180, %v4224
        %4226 = vst [vmem:[#allocation3 + $0x40] sm:$0x33] %v4225
        %v4227 = vld [vmem:[#allocation3 + $0x48] sm:$0x33]
        %v4228 = vsel %vm4223, %v4189, %v4227
        %4229 = vst [vmem:[#allocation3 + $0x48] sm:$0x33] %v4228
        %v4230 = vld [vmem:[#allocation3] sm:$0xff]
        %v4231 = vld [vmem:[#allocation3 + $0x8] sm:$0xff]
        %v4232 = vld [vmem:[#allocation3 + $0x10] sm:$0xff]
        %v4233 = vld [vmem:[#allocation3 + $0x18] sm:$0xff]
        %v4234 = vld [vmem:[#allocation3 + $0x20] sm:$0xff]
        %v4235 = vld [vmem:[#allocation3 + $0x28] sm:$0xff]
        %v4236 = vld [vmem:[#allocation3 + $0x30] sm:$0xff]
        %v4237 = vld [vmem:[#allocation3 + $0x38] sm:$0xff]
        %v4238 = vld [vmem:[#allocation3 + $0x40] sm:$0x11]
        %v4239 = vld [vmem:[#allocation3 + $0x48] sm:$0x11]
        %v4240 = vld [vmem:[#allocation3 + $0x40] sm:$0x33]
        %v4241 = vld [vmem:[#allocation3 + $0x48] sm:$0x33]
        %v4242 = vld [vmem:[#allocation3] sm:$0xee]
        %v4243 = vld [vmem:[#allocation3 + $0x8] sm:$0xee]
        %v4254 = vunpack.c.l.b16 %v4230
        %v4255 = vunpack.c.h.b16 %v4230
        %v4256 = vunpack.c.l.b16 %v4231
        %v4257 = vunpack.c.h.b16 %v4231
        %v4258 = vunpack.c.l.b16 %v4232
        %v4259 = vunpack.c.h.b16 %v4232
        %v4260 = vunpack.c.l.b16 %v4233
        %v4261 = vunpack.c.h.b16 %v4233
        %v4262 = vunpack.c.l.b16 %v4234
        %v4263 = vunpack.c.h.b16 %v4234
        %v4264 = vunpack.c.l.b16 %v4235
        %v4265 = vunpack.c.h.b16 %v4235
        %v4266 = vunpack.c.l.b16 %v4236
        %v4267 = vunpack.c.h.b16 %v4236
        %v4268 = vunpack.c.l.b16 %v4237
        %v4269 = vunpack.c.h.b16 %v4237
        %v4270 = vunpack.c.l.b16 %v4238
        %v4271 = vunpack.c.h.b16 %v4238
        %v4272 = vunpack.c.l.b16 %v4239
        %v4273 = vunpack.c.h.b16 %v4239
        %v4274 = vpack.c.b16 %v4258, %v4254
        %v4275 = vpack.c.b16 %v4259, %v4255
        %v4276 = vpack.c.b16 %v4260, %v4256
        %v4277 = vpack.c.b16 %v4261, %v4257
        %v4278 = vpack.c.b16 %v4266, %v4262
        %v4279 = vpack.c.b16 %v4267, %v4263
        %v4280 = vpack.c.b16 %v4268, %v4264
        %v4281 = vpack.c.b16 %v4269, %v4265
        %v4282 = vpack.c.b16 %v4270, %v4270
        %v4283 = vpack.c.b16 %v4271, %v4271
        %v4284 = vpack.c.b16 %v4272, %v4272
        %v4285 = vpack.c.b16 %v4273, %v4273
        %v4300 = vunpack.c.l.b16 %v4240
        %v4301 = vunpack.c.h.b16 %v4240
        %v4302 = vunpack.c.l.b16 %v4241
        %v4303 = vunpack.c.h.b16 %v4241
        %v4304 = vpack.c.b16 %v4300, %v4300
        %v4305 = vpack.c.b16 %v4301, %v4301
        %v4306 = vpack.c.b16 %v4302, %v4302
        %v4307 = vpack.c.b16 %v4303, %v4303
        %v4309 = vshrl.u32 %v4274, 16
        %v4311 = vshll.u32 %v4274, 16
        %v4313 = vrot.slane %v4311, 1
        %v4314 = vor.u32 %v4309, %v4313
        %v4316 = vshll.u32 %v4278, 16
        %v4318 = vrot.slane %v4316, 1
        %v4319 = vsel %vm464, %v4314, %v4318
        %v4321 = vshrl.u32 %v4275, 16
        %v4323 = vshll.u32 %v4275, 16
        %v4325 = vrot.slane %v4323, 1
        %v4326 = vor.u32 %v4321, %v4325
        %v4328 = vshll.u32 %v4279, 16
        %v4330 = vrot.slane %v4328, 1
        %v4331 = vsel %vm464, %v4326, %v4330
        %v4333 = vshrl.u32 %v4276, 16
        %v4335 = vshll.u32 %v4276, 16
        %v4337 = vrot.slane %v4335, 1
        %v4338 = vor.u32 %v4333, %v4337
        %v4340 = vshll.u32 %v4280, 16
        %v4342 = vrot.slane %v4340, 1
        %v4343 = vsel %vm464, %v4338, %v4342
        %v4345 = vshrl.u32 %v4277, 16
        %v4347 = vshll.u32 %v4277, 16
        %v4349 = vrot.slane %v4347, 1
        %v4350 = vor.u32 %v4345, %v4349
        %v4352 = vshll.u32 %v4281, 16
        %v4354 = vrot.slane %v4352, 1
        %v4355 = vsel %vm464, %v4350, %v4354
        %v4356 = vshrl.u32 %v4278, 16
        %v4358 = vor.u32 %v4356, %v4318
        %v4360 = vshll.u32 %v4304, 16
        %v4362 = vrot.slane %v4360, 1
        %v4363 = vsel %vm464, %v4358, %v4362
        %v4364 = vshrl.u32 %v4279, 16
        %v4366 = vor.u32 %v4364, %v4330
        %v4368 = vshll.u32 %v4305, 16
        %v4370 = vrot.slane %v4368, 1
        %v4371 = vsel %vm464, %v4366, %v4370
        %v4372 = vshrl.u32 %v4280, 16
        %v4374 = vor.u32 %v4372, %v4342
        %v4376 = vshll.u32 %v4306, 16
        %v4378 = vrot.slane %v4376, 1
        %v4379 = vsel %vm464, %v4374, %v4378
        %v4380 = vshrl.u32 %v4281, 16
        %v4382 = vor.u32 %v4380, %v4354
        %v4384 = vshll.u32 %v4307, 16
        %v4386 = vrot.slane %v4384, 1
        %v4387 = vsel %vm464, %v4382, %v4386
        %v4388 = vshrl.u32 %v4304, 16
        %v4390 = vor.u32 %v4388, %v4362
        %v4391 = vshrl.u32 %v4305, 16
        %v4393 = vor.u32 %v4391, %v4370
        %v4394 = vshrl.u32 %v4306, 16
        %v4396 = vor.u32 %v4394, %v4378
        %v4397 = vshrl.u32 %v4307, 16
        %v4399 = vor.u32 %v4397, %v4386
        %v4414 = vunpack.c.l.b16 %v4242
        %v4415 = vunpack.c.h.b16 %v4242
        %v4416 = vunpack.c.l.b16 %v4243
        %v4417 = vunpack.c.h.b16 %v4243
        %v4418 = vpack.c.b16 %v4258, %v4414
        %v4419 = vpack.c.b16 %v4259, %v4415
        %v4420 = vpack.c.b16 %v4260, %v4416
        %v4421 = vpack.c.b16 %v4261, %v4417
        %v4422 = vrot.slane %v4418, 1
        %v4423 = vrot.slane %v4278, 1
        %v4424 = vsel %vm497, %v4422, %v4423
        %v4425 = vrot.slane %v4419, 1
        %v4426 = vrot.slane %v4279, 1
        %v4427 = vsel %vm497, %v4425, %v4426
        %v4428 = vrot.slane %v4420, 1
        %v4429 = vrot.slane %v4280, 1
        %v4430 = vsel %vm497, %v4428, %v4429
        %v4431 = vrot.slane %v4421, 1
        %v4432 = vrot.slane %v4281, 1
        %v4433 = vsel %vm497, %v4431, %v4432
        %v4434 = vrot.slane %v4304, 1
        %v4435 = vsel %vm497, %v4423, %v4434
        %v4436 = vrot.slane %v4305, 1
        %v4437 = vsel %vm497, %v4426, %v4436
        %v4438 = vrot.slane %v4306, 1
        %v4439 = vsel %vm497, %v4429, %v4438
        %v4440 = vrot.slane %v4307, 1
        %v4441 = vsel %vm497, %v4432, %v4440
        %v4454 = vld [vmem:[#allocation9] sm:$0xff]
        %v4455 = vld [vmem:[#allocation9 + $0x8] sm:$0xff]
        %v4456 = vld [vmem:[#allocation9 + $0x10] sm:$0xff]
        %v4457 = vld [vmem:[#allocation9 + $0x18] sm:$0xff]
        %v4458 = vld [vmem:[#allocation9 + $0x20] sm:$0xff]
        %v4459 = vld [vmem:[#allocation9 + $0x28] sm:$0xff]
        %v4460 = vld [vmem:[#allocation9 + $0x30] sm:$0xff]
        %v4461 = vld [vmem:[#allocation9 + $0x38] sm:$0xff]
        %v4462 = vld [vmem:[#allocation9 + $0x40] sm:$0xff]
        %v4463 = vld [vmem:[#allocation9 + $0x48] sm:$0xff]
        %v4464 = vld [vmem:[#allocation9 + $0x50] sm:$0xff]
        %v4465 = vld [vmem:[#allocation9 + $0x58] sm:$0xff]
        %v4466 = vld [vmem:[#allocation9 + $0x60] sm:$0xff]
        %v4467 = vld [vmem:[#allocation9 + $0x68] sm:$0xff]
        %v4468 = vld [vmem:[#allocation9 + $0x70] sm:$0xff]
        %v4469 = vld [vmem:[#allocation9 + $0x78] sm:$0xff]
        %v4470 = vld [vmem:[#allocation9 + $0x80] sm:$0xff]
        %v4471 = vld [vmem:[#allocation9 + $0x88] sm:$0xff]
        %v4472 = vld [vmem:[#allocation9 + $0x90] sm:$0xff]
        %v4473 = vld [vmem:[#allocation9 + $0x98] sm:$0xff]
        %v4474 = vld [vmem:[#allocation9 + $0xa0] sm:$0xff]
        %v4475 = vld [vmem:[#allocation9 + $0xa8] sm:$0xff]
        %v4476 = vld [vmem:[#allocation9 + $0xb0] sm:$0xff]
        %v4477 = vld [vmem:[#allocation9 + $0xb8] sm:$0xff]
        %v4478 = vld [vmem:[#allocation9 + $0xc0] sm:$0xff]
        %v4479 = vld [vmem:[#allocation9 + $0xc8] sm:$0xff]
        %v4480 = vld [vmem:[#allocation9 + $0xd0] sm:$0xff]
        %v4481 = vld [vmem:[#allocation9 + $0xd8] sm:$0xff]
        %v4482 = vld [vmem:[#allocation9 + $0xe0] sm:$0xff]
        %v4483 = vld [vmem:[#allocation9 + $0xe8] sm:$0xff]
        %v4484 = vld [vmem:[#allocation9 + $0xf0] sm:$0xff]
        %v4485 = vld [vmem:[#allocation9 + $0xf8] sm:$0xff]
        %v4486 = vld [vmem:[#allocation9 + $0x100] sm:$0xff]
        %v4487 = vld [vmem:[#allocation9 + $0x108] sm:$0xff]
        %v4488 = vld [vmem:[#allocation9 + $0x110] sm:$0xff]
        %v4489 = vld [vmem:[#allocation9 + $0x118] sm:$0xff]
        %v4490 = vld [vmem:[#allocation9 + $0x120] sm:$0xff]
        %v4491 = vld [vmem:[#allocation9 + $0x128] sm:$0xff]
        %v4492 = vld [vmem:[#allocation9 + $0x130] sm:$0xff]
        %v4493 = vld [vmem:[#allocation9 + $0x138] sm:$0xff]
        %v4494 = vld [vmem:[#allocation9 + $0x140] sm:$0xff]
        %v4495 = vld [vmem:[#allocation9 + $0x148] sm:$0xff]
        %v4496 = vld [vmem:[#allocation9 + $0x150] sm:$0xff]
        %v4497 = vld [vmem:[#allocation9 + $0x158] sm:$0xff]
        %v4498 = vld [vmem:[#allocation9 + $0x160] sm:$0xff]
        %v4499 = vld [vmem:[#allocation9 + $0x168] sm:$0xff]
        %v4500 = vld [vmem:[#allocation9 + $0x170] sm:$0xff]
        %v4501 = vld [vmem:[#allocation9 + $0x178] sm:$0xff]
        %v4502 = vld [vmem:[#allocation9 + $0x180] sm:$0xff]
        %v4503 = vld [vmem:[#allocation9 + $0x188] sm:$0xff]
        %v4504 = vld [vmem:[#allocation9 + $0x190] sm:$0xff]
        %v4505 = vld [vmem:[#allocation9 + $0x198] sm:$0xff]
        %v4506 = vld [vmem:[#allocation9 + $0x1a0] sm:$0xff]
        %v4507 = vld [vmem:[#allocation9 + $0x1a8] sm:$0xff]
        %v4508 = vld [vmem:[#allocation9 + $0x1b0] sm:$0xff]
        %v4509 = vld [vmem:[#allocation9 + $0x1b8] sm:$0xff]
        %v4510 = vld [vmem:[#allocation9 + $0x1c0] sm:$0xff]
        %v4511 = vld [vmem:[#allocation9 + $0x1c8] sm:$0xff]
        %v4512 = vld [vmem:[#allocation9 + $0x1d0] sm:$0xff]
        %v4513 = vld [vmem:[#allocation9 + $0x1d8] sm:$0xff]
        %v4514 = vld [vmem:[#allocation9 + $0x1e0] sm:$0xff]
        %v4515 = vld [vmem:[#allocation9 + $0x1e8] sm:$0xff]
        %v4516 = vld [vmem:[#allocation9 + $0x1f0] sm:$0xff]
        %v4517 = vld [vmem:[#allocation9 + $0x1f8] sm:$0xff]
        %v4518 = vld [vmem:[#allocation9 + $0x200] sm:$0xff]
        %v4519 = vld [vmem:[#allocation9 + $0x208] sm:$0xff]
        %v4520 = vld [vmem:[#allocation9 + $0x210] sm:$0xff]
        %v4521 = vld [vmem:[#allocation9 + $0x218] sm:$0xff]
        %v4522 = vld [vmem:[#allocation9 + $0x220] sm:$0xff]
        %v4523 = vld [vmem:[#allocation9 + $0x228] sm:$0xff]
        %v4524 = vld [vmem:[#allocation9 + $0x230] sm:$0xff]
        %v4525 = vld [vmem:[#allocation9 + $0x238] sm:$0xff]
        %v4526 = vld [vmem:[#allocation9 + $0x240] sm:$0xff]
        %v4527 = vld [vmem:[#allocation9 + $0x248] sm:$0xff]
        %v4528 = vld [vmem:[#allocation9 + $0x250] sm:$0xff]
        %v4529 = vld [vmem:[#allocation9 + $0x258] sm:$0xff]
        %v4530 = vld [vmem:[#allocation9 + $0x260] sm:$0xff]
        %v4531 = vld [vmem:[#allocation9 + $0x268] sm:$0xff]
        %v4532 = vld [vmem:[#allocation9 + $0x270] sm:$0xff]
        %v4533 = vld [vmem:[#allocation9 + $0x278] sm:$0xff]
        %v4534 = vld [vmem:[#allocation9 + $0x280] sm:$0xff]
        %v4535 = vld [vmem:[#allocation9 + $0x288] sm:$0xff]
        %v4536 = vld [vmem:[#allocation9 + $0x290] sm:$0xff]
        %v4537 = vld [vmem:[#allocation9 + $0x298] sm:$0xff]
        %v4538 = vld [vmem:[#allocation9 + $0x2a0] sm:$0xff]
        %v4539 = vld [vmem:[#allocation9 + $0x2a8] sm:$0xff]
        %v4540 = vld [vmem:[#allocation9 + $0x2b0] sm:$0xff]
        %v4541 = vld [vmem:[#allocation9 + $0x2b8] sm:$0xff]
        %v4542 = vld [vmem:[#allocation9 + $0x2c0] sm:$0xff]
        %v4543 = vld [vmem:[#allocation9 + $0x2c8] sm:$0xff]
        %v4544 = vld [vmem:[#allocation9 + $0x2d0] sm:$0xff]
        %v4545 = vld [vmem:[#allocation9 + $0x2d8] sm:$0xff]
        %v4546 = vld [vmem:[#allocation9 + $0x2e0] sm:$0xff]
        %v4547 = vld [vmem:[#allocation9 + $0x2e8] sm:$0xff]
        %v4548 = vld [vmem:[#allocation9 + $0x2f0] sm:$0xff]
        %v4549 = vld [vmem:[#allocation9 + $0x2f8] sm:$0xff]
        %v4550 = vld [vmem:[#allocation9 + $0x300] sm:$0xff]
        %v4551 = vld [vmem:[#allocation9 + $0x308] sm:$0xff]
        %v4552 = vld [vmem:[#allocation9 + $0x310] sm:$0xff]
        %v4553 = vld [vmem:[#allocation9 + $0x318] sm:$0xff]
        %v4554 = vld [vmem:[#allocation9 + $0x320] sm:$0xff]
        %v4555 = vld [vmem:[#allocation9 + $0x328] sm:$0xff]
        %v4556 = vld [vmem:[#allocation9 + $0x330] sm:$0xff]
        %v4557 = vld [vmem:[#allocation9 + $0x338] sm:$0xff]
        %v4558 = vld [vmem:[#allocation9 + $0x340] sm:$0xff]
        %v4559 = vld [vmem:[#allocation9 + $0x348] sm:$0xff]
        %v4560 = vld [vmem:[#allocation9 + $0x350] sm:$0xff]
        %v4561 = vld [vmem:[#allocation9 + $0x358] sm:$0xff]
        %v4562 = vld [vmem:[#allocation9 + $0x360] sm:$0xff]
        %v4563 = vld [vmem:[#allocation9 + $0x368] sm:$0xff]
        %v4564 = vld [vmem:[#allocation9 + $0x370] sm:$0xff]
        %v4565 = vld [vmem:[#allocation9 + $0x378] sm:$0xff]
        %v4566 = vld [vmem:[#allocation9 + $0x380] sm:$0xff]
        %v4567 = vld [vmem:[#allocation9 + $0x388] sm:$0xff]
        %v4568 = vld [vmem:[#allocation9 + $0x390] sm:$0xff]
        %v4569 = vld [vmem:[#allocation9 + $0x398] sm:$0xff]
        %v4570 = vld [vmem:[#allocation9 + $0x3a0] sm:$0xff]
        %v4571 = vld [vmem:[#allocation9 + $0x3a8] sm:$0xff]
        %v4572 = vld [vmem:[#allocation9 + $0x3b0] sm:$0xff]
        %v4573 = vld [vmem:[#allocation9 + $0x3b8] sm:$0xff]
        %v4574 = vld [vmem:[#allocation9 + $0x3c0] sm:$0xff]
        %v4575 = vld [vmem:[#allocation9 + $0x3c8] sm:$0xff]
        %v4576 = vld [vmem:[#allocation9 + $0x3d0] sm:$0xff]
        %v4577 = vld [vmem:[#allocation9 + $0x3d8] sm:$0xff]
        %v4578 = vld [vmem:[#allocation9 + $0x3e0] sm:$0xff]
        %v4579 = vld [vmem:[#allocation9 + $0x3e8] sm:$0xff]
        %v4580 = vld [vmem:[#allocation9 + $0x3f0] sm:$0xff]
        %v4581 = vld [vmem:[#allocation9 + $0x3f8] sm:$0xff]
        %v4582 = vld [vmem:[#allocation9 + $0x400] sm:$0xff]
        %v4583 = vld [vmem:[#allocation9 + $0x408] sm:$0xff]
        %v4584 = vld [vmem:[#allocation9 + $0x410] sm:$0xff]
        %v4585 = vld [vmem:[#allocation9 + $0x418] sm:$0xff]
        %v4586 = vld [vmem:[#allocation9 + $0x420] sm:$0xff]
        %v4587 = vld [vmem:[#allocation9 + $0x428] sm:$0xff]
        %v4588 = vld [vmem:[#allocation9 + $0x430] sm:$0xff]
        %v4589 = vld [vmem:[#allocation9 + $0x438] sm:$0xff]
        %v4590 = vld [vmem:[#allocation9 + $0x440] sm:$0xff]
        %v4591 = vld [vmem:[#allocation9 + $0x448] sm:$0xff]
        %v4592 = vld [vmem:[#allocation9 + $0x450] sm:$0xff]
        %v4593 = vld [vmem:[#allocation9 + $0x458] sm:$0xff]
        %v4594 = vld [vmem:[#allocation9 + $0x460] sm:$0xff]
        %v4595 = vld [vmem:[#allocation9 + $0x468] sm:$0xff]
        %v4596 = vld [vmem:[#allocation9 + $0x470] sm:$0xff]
        %v4597 = vld [vmem:[#allocation9 + $0x478] sm:$0xff]
        %v4598 = vld [vmem:[#allocation9 + $0x480] sm:$0xff]
        %v4599 = vld [vmem:[#allocation9 + $0x488] sm:$0xff]
        %v4600 = vld [vmem:[#allocation9 + $0x490] sm:$0xff]
        %v4601 = vld [vmem:[#allocation9 + $0x498] sm:$0xff]
        %v4602 = vld [vmem:[#allocation9 + $0x4a0] sm:$0xff]
        %v4603 = vld [vmem:[#allocation9 + $0x4a8] sm:$0xff]
        %v4604 = vld [vmem:[#allocation9 + $0x4b0] sm:$0xff]
        %v4605 = vld [vmem:[#allocation9 + $0x4b8] sm:$0xff]
        %v4606 = vld [vmem:[#allocation9 + $0x4c0] sm:$0xff]
        %v4607 = vld [vmem:[#allocation9 + $0x4c8] sm:$0xff]
        %v4608 = vld [vmem:[#allocation9 + $0x4d0] sm:$0xff]
        %v4609 = vld [vmem:[#allocation9 + $0x4d8] sm:$0xff]
        %v4610 = vld [vmem:[#allocation9 + $0x4e0] sm:$0xff]
        %v4611 = vld [vmem:[#allocation9 + $0x4e8] sm:$0xff]
        %v4612 = vld [vmem:[#allocation9 + $0x4f0] sm:$0xff]
        %v4613 = vld [vmem:[#allocation9 + $0x4f8] sm:$0xff]
        %v4614 = vld [vmem:[#allocation9 + $0x500] sm:$0xff]
        %v4615 = vld [vmem:[#allocation9 + $0x508] sm:$0xff]
        %v4616 = vld [vmem:[#allocation9 + $0x510] sm:$0xff]
        %v4617 = vld [vmem:[#allocation9 + $0x518] sm:$0xff]
        %v4618 = vld [vmem:[#allocation9 + $0x520] sm:$0xff]
        %v4619 = vld [vmem:[#allocation9 + $0x528] sm:$0xff]
        %v4620 = vld [vmem:[#allocation9 + $0x530] sm:$0xff]
        %v4621 = vld [vmem:[#allocation9 + $0x538] sm:$0xff]
        %v4622 = vld [vmem:[#allocation9 + $0x540] sm:$0xff]
        %v4623 = vld [vmem:[#allocation9 + $0x548] sm:$0xff]
        %v4624 = vld [vmem:[#allocation9 + $0x550] sm:$0xff]
        %v4625 = vld [vmem:[#allocation9 + $0x558] sm:$0xff]
        %v4626 = vld [vmem:[#allocation9 + $0x560] sm:$0xff]
        %v4627 = vld [vmem:[#allocation9 + $0x568] sm:$0xff]
        %v4628 = vld [vmem:[#allocation9 + $0x570] sm:$0xff]
        %v4629 = vld [vmem:[#allocation9 + $0x578] sm:$0xff]
        %v4630 = vld [vmem:[#allocation9 + $0x580] sm:$0xff]
        %v4631 = vld [vmem:[#allocation9 + $0x588] sm:$0xff]
        %v4632 = vld [vmem:[#allocation9 + $0x590] sm:$0xff]
        %v4633 = vld [vmem:[#allocation9 + $0x598] sm:$0xff]
        %v4634 = vld [vmem:[#allocation9 + $0x5a0] sm:$0xff]
        %v4635 = vld [vmem:[#allocation9 + $0x5a8] sm:$0xff]
        %v4636 = vld [vmem:[#allocation9 + $0x5b0] sm:$0xff]
        %v4637 = vld [vmem:[#allocation9 + $0x5b8] sm:$0xff]
        %v4638 = vld [vmem:[#allocation9 + $0x5c0] sm:$0xff]
        %v4639 = vld [vmem:[#allocation9 + $0x5c8] sm:$0xff]
        %v4640 = vld [vmem:[#allocation9 + $0x5d0] sm:$0xff]
        %v4641 = vld [vmem:[#allocation9 + $0x5d8] sm:$0xff]
        %v4642 = vld [vmem:[#allocation9 + $0x5e0] sm:$0xff]
        %v4643 = vld [vmem:[#allocation9 + $0x5e8] sm:$0xff]
        %v4644 = vld [vmem:[#allocation9 + $0x5f0] sm:$0xff]
        %v4645 = vld [vmem:[#allocation9 + $0x5f8] sm:$0xff]
        %v4646 = vld [vmem:[#allocation9 + $0x600] sm:$0xff]
        %v4647 = vld [vmem:[#allocation9 + $0x608] sm:$0xff]
        %v4648 = vld [vmem:[#allocation9 + $0x610] sm:$0xff]
        %v4649 = vld [vmem:[#allocation9 + $0x618] sm:$0xff]
        %v4650 = vld [vmem:[#allocation9 + $0x620] sm:$0xff]
        %v4651 = vld [vmem:[#allocation9 + $0x628] sm:$0xff]
        %v4652 = vld [vmem:[#allocation9 + $0x630] sm:$0xff]
        %v4653 = vld [vmem:[#allocation9 + $0x638] sm:$0xff]
        %v4654 = vld [vmem:[#allocation9 + $0x640] sm:$0xff]
        %v4655 = vld [vmem:[#allocation9 + $0x648] sm:$0xff]
        %v4656 = vld [vmem:[#allocation9 + $0x650] sm:$0xff]
        %v4657 = vld [vmem:[#allocation9 + $0x658] sm:$0xff]
        %v4658 = vld [vmem:[#allocation9 + $0x660] sm:$0xff]
        %v4659 = vld [vmem:[#allocation9 + $0x668] sm:$0xff]
        %v4660 = vld [vmem:[#allocation9 + $0x670] sm:$0xff]
        %v4661 = vld [vmem:[#allocation9 + $0x678] sm:$0xff]
        %v4662 = vld [vmem:[#allocation9 + $0x680] sm:$0xff]
        %v4663 = vld [vmem:[#allocation9 + $0x688] sm:$0xff]
        %v4664 = vld [vmem:[#allocation9 + $0x690] sm:$0xff]
        %v4665 = vld [vmem:[#allocation9 + $0x698] sm:$0xff]
        %v4666 = vld [vmem:[#allocation9 + $0x6a0] sm:$0xff]
        %v4667 = vld [vmem:[#allocation9 + $0x6a8] sm:$0xff]
        %v4668 = vld [vmem:[#allocation9 + $0x6b0] sm:$0xff]
        %v4669 = vld [vmem:[#allocation9 + $0x6b8] sm:$0xff]
        %v4670 = vld [vmem:[#allocation9 + $0x6c0] sm:$0xff]
        %v4671 = vld [vmem:[#allocation9 + $0x6c8] sm:$0xff]
        %v4672 = vld [vmem:[#allocation9 + $0x6d0] sm:$0xff]
        %v4673 = vld [vmem:[#allocation9 + $0x6d8] sm:$0xff]
        %v4674 = vld [vmem:[#allocation9 + $0x6e0] sm:$0xff]
        %v4675 = vld [vmem:[#allocation9 + $0x6e8] sm:$0xff]
        %v4676 = vld [vmem:[#allocation9 + $0x6f0] sm:$0xff]
        %v4677 = vld [vmem:[#allocation9 + $0x6f8] sm:$0xff]
        %v4678 = vld [vmem:[#allocation9 + $0x700] sm:$0xff]
        %v4679 = vld [vmem:[#allocation9 + $0x708] sm:$0xff]
        %v4680 = vld [vmem:[#allocation9 + $0x710] sm:$0xff]
        %v4681 = vld [vmem:[#allocation9 + $0x718] sm:$0xff]
        %v4682 = vld [vmem:[#allocation9 + $0x720] sm:$0xff]
        %v4683 = vld [vmem:[#allocation9 + $0x728] sm:$0xff]
        %v4684 = vld [vmem:[#allocation9 + $0x730] sm:$0xff]
        %v4685 = vld [vmem:[#allocation9 + $0x738] sm:$0xff]
        %v4686 = vld [vmem:[#allocation9 + $0x740] sm:$0xff]
        %v4687 = vld [vmem:[#allocation9 + $0x748] sm:$0xff]
        %v4688 = vld [vmem:[#allocation9 + $0x750] sm:$0xff]
        %v4689 = vld [vmem:[#allocation9 + $0x758] sm:$0xff]
        %v4690 = vld [vmem:[#allocation9 + $0x760] sm:$0xff]
        %v4691 = vld [vmem:[#allocation9 + $0x768] sm:$0xff]
        %v4692 = vld [vmem:[#allocation9 + $0x770] sm:$0xff]
        %v4693 = vld [vmem:[#allocation9 + $0x778] sm:$0xff]
        %v4694 = vld [vmem:[#allocation9 + $0x780] sm:$0xff]
        %v4695 = vld [vmem:[#allocation9 + $0x788] sm:$0xff]
        %v4696 = vld [vmem:[#allocation9 + $0x790] sm:$0xff]
        %v4697 = vld [vmem:[#allocation9 + $0x798] sm:$0xff]
        %v4698 = vld [vmem:[#allocation9 + $0x7a0] sm:$0xff]
        %v4699 = vld [vmem:[#allocation9 + $0x7a8] sm:$0xff]
        %v4700 = vld [vmem:[#allocation9 + $0x7b0] sm:$0xff]
        %v4701 = vld [vmem:[#allocation9 + $0x7b8] sm:$0xff]
        %v4702 = vld [vmem:[#allocation9 + $0x7c0] sm:$0xff]
        %v4703 = vld [vmem:[#allocation9 + $0x7c8] sm:$0xff]
        %v4704 = vld [vmem:[#allocation9 + $0x7d0] sm:$0xff]
        %v4705 = vld [vmem:[#allocation9 + $0x7d8] sm:$0xff]
        %v4706 = vld [vmem:[#allocation9 + $0x7e0] sm:$0xff]
        %v4707 = vld [vmem:[#allocation9 + $0x7e8] sm:$0xff]
        %v4708 = vld [vmem:[#allocation9 + $0x7f0] sm:$0xff]
        %v4709 = vld [vmem:[#allocation9 + $0x7f8] sm:$0xff]
        %v4710 = vld [vmem:[#allocation9 + $0x800] sm:$0xff]
        %v4711 = vld [vmem:[#allocation9 + $0x808] sm:$0xff]
        %v4712 = vld [vmem:[#allocation9 + $0x810] sm:$0xff]
        %v4713 = vld [vmem:[#allocation9 + $0x818] sm:$0xff]
        %v4714 = vld [vmem:[#allocation9 + $0x820] sm:$0xff]
        %v4715 = vld [vmem:[#allocation9 + $0x828] sm:$0xff]
        %v4716 = vld [vmem:[#allocation9 + $0x830] sm:$0xff]
        %v4717 = vld [vmem:[#allocation9 + $0x838] sm:$0xff]
        %v4718 = vld [vmem:[#allocation9 + $0x840] sm:$0xff]
        %v4719 = vld [vmem:[#allocation9 + $0x848] sm:$0xff]
        %v4720 = vld [vmem:[#allocation9 + $0x850] sm:$0xff]
        %v4721 = vld [vmem:[#allocation9 + $0x858] sm:$0xff]
        %v4722 = vld [vmem:[#allocation9 + $0x860] sm:$0xff]
        %v4723 = vld [vmem:[#allocation9 + $0x868] sm:$0xff]
        %v4724 = vld [vmem:[#allocation9 + $0x870] sm:$0xff]
        %v4725 = vld [vmem:[#allocation9 + $0x878] sm:$0xff]
        %v4726 = vld [vmem:[#allocation9 + $0x880] sm:$0xff]
        %v4727 = vld [vmem:[#allocation9 + $0x888] sm:$0xff]
        %v4728 = vld [vmem:[#allocation9 + $0x890] sm:$0xff]
        %v4729 = vld [vmem:[#allocation9 + $0x898] sm:$0xff]
        %v4730 = vld [vmem:[#allocation9 + $0x8a0] sm:$0xff]
        %v4731 = vld [vmem:[#allocation9 + $0x8a8] sm:$0xff]
        %v4732 = vld [vmem:[#allocation9 + $0x8b0] sm:$0xff]
        %v4733 = vld [vmem:[#allocation9 + $0x8b8] sm:$0xff]
        %v4734 = vld [vmem:[#allocation9 + $0x8c0] sm:$0xff]
        %v4735 = vld [vmem:[#allocation9 + $0x8c8] sm:$0xff]
        %v4736 = vld [vmem:[#allocation9 + $0x8d0] sm:$0xff]
        %v4737 = vld [vmem:[#allocation9 + $0x8d8] sm:$0xff]
        %v4738 = vld [vmem:[#allocation9 + $0x8e0] sm:$0xff]
        %v4739 = vld [vmem:[#allocation9 + $0x8e8] sm:$0xff]
        %v4740 = vld [vmem:[#allocation9 + $0x8f0] sm:$0xff]
        %v4741 = vld [vmem:[#allocation9 + $0x8f8] sm:$0xff]
        %v4742 = vld [vmem:[#allocation9 + $0x900] sm:$0xff]
        %v4743 = vld [vmem:[#allocation9 + $0x908] sm:$0xff]
        %v4744 = vld [vmem:[#allocation9 + $0x910] sm:$0xff]
        %v4745 = vld [vmem:[#allocation9 + $0x918] sm:$0xff]
        %v4746 = vld [vmem:[#allocation9 + $0x920] sm:$0xff]
        %v4747 = vld [vmem:[#allocation9 + $0x928] sm:$0xff]
        %v4748 = vld [vmem:[#allocation9 + $0x930] sm:$0xff]
        %v4749 = vld [vmem:[#allocation9 + $0x938] sm:$0xff]
        %v4750 = vld [vmem:[#allocation9 + $0x940] sm:$0xff]
        %v4751 = vld [vmem:[#allocation9 + $0x948] sm:$0xff]
        %v4752 = vld [vmem:[#allocation9 + $0x950] sm:$0xff]
        %v4753 = vld [vmem:[#allocation9 + $0x958] sm:$0xff]
        %v4754 = vld [vmem:[#allocation9 + $0x960] sm:$0xff]
        %v4755 = vld [vmem:[#allocation9 + $0x968] sm:$0xff]
        %v4756 = vld [vmem:[#allocation9 + $0x970] sm:$0xff]
        %v4757 = vld [vmem:[#allocation9 + $0x978] sm:$0xff]
        %v4758 = vld [vmem:[#allocation9 + $0x980] sm:$0xff]
        %v4759 = vld [vmem:[#allocation9 + $0x988] sm:$0xff]
        %v4760 = vld [vmem:[#allocation9 + $0x990] sm:$0xff]
        %v4761 = vld [vmem:[#allocation9 + $0x998] sm:$0xff]
        %v4762 = vld [vmem:[#allocation9 + $0x9a0] sm:$0xff]
        %v4763 = vld [vmem:[#allocation9 + $0x9a8] sm:$0xff]
        %v4764 = vld [vmem:[#allocation9 + $0x9b0] sm:$0xff]
        %v4765 = vld [vmem:[#allocation9 + $0x9b8] sm:$0xff]
        %v4766 = vld [vmem:[#allocation9 + $0x9c0] sm:$0xff]
        %v4767 = vld [vmem:[#allocation9 + $0x9c8] sm:$0xff]
        %v4768 = vld [vmem:[#allocation9 + $0x9d0] sm:$0xff]
        %v4769 = vld [vmem:[#allocation9 + $0x9d8] sm:$0xff]
        %v4770 = vld [vmem:[#allocation9 + $0x9e0] sm:$0xff]
        %v4771 = vld [vmem:[#allocation9 + $0x9e8] sm:$0xff]
        %v4772 = vld [vmem:[#allocation9 + $0x9f0] sm:$0xff]
        %v4773 = vld [vmem:[#allocation9 + $0x9f8] sm:$0xff]
        %v4774 = vld [vmem:[#allocation9 + $0xa00] sm:$0xff]
        %v4775 = vld [vmem:[#allocation9 + $0xa08] sm:$0xff]
        %v4776 = vld [vmem:[#allocation9 + $0xa10] sm:$0xff]
        %v4777 = vld [vmem:[#allocation9 + $0xa18] sm:$0xff]
        %v4778 = vld [vmem:[#allocation9 + $0xa20] sm:$0xff]
        %v4779 = vld [vmem:[#allocation9 + $0xa28] sm:$0xff]
        %v4780 = vld [vmem:[#allocation9 + $0xa30] sm:$0xff]
        %v4781 = vld [vmem:[#allocation9 + $0xa38] sm:$0xff]
        %v4782 = vld [vmem:[#allocation9 + $0xa40] sm:$0xff]
        %v4783 = vld [vmem:[#allocation9 + $0xa48] sm:$0xff]
        %v4784 = vld [vmem:[#allocation9 + $0xa50] sm:$0xff]
        %v4785 = vld [vmem:[#allocation9 + $0xa58] sm:$0xff]
        %v4786 = vld [vmem:[#allocation9 + $0xa60] sm:$0xff]
        %v4787 = vld [vmem:[#allocation9 + $0xa68] sm:$0xff]
        %v4788 = vld [vmem:[#allocation9 + $0xa70] sm:$0xff]
        %v4789 = vld [vmem:[#allocation9 + $0xa78] sm:$0xff]
        %v4790 = vld [vmem:[#allocation9 + $0xa80] sm:$0xff]
        %v4791 = vld [vmem:[#allocation9 + $0xa88] sm:$0xff]
        %v4792 = vld [vmem:[#allocation9 + $0xa90] sm:$0xff]
        %v4793 = vld [vmem:[#allocation9 + $0xa98] sm:$0xff]
        %v4794 = vld [vmem:[#allocation9 + $0xaa0] sm:$0xff]
        %v4795 = vld [vmem:[#allocation9 + $0xaa8] sm:$0xff]
        %v4796 = vld [vmem:[#allocation9 + $0xab0] sm:$0xff]
        %v4797 = vld [vmem:[#allocation9 + $0xab8] sm:$0xff]
        %v4798 = vld [vmem:[#allocation9 + $0xac0] sm:$0xff]
        %v4799 = vld [vmem:[#allocation9 + $0xac8] sm:$0xff]
        %v4800 = vld [vmem:[#allocation9 + $0xad0] sm:$0xff]
        %v4801 = vld [vmem:[#allocation9 + $0xad8] sm:$0xff]
        %v4802 = vld [vmem:[#allocation9 + $0xae0] sm:$0xff]
        %v4803 = vld [vmem:[#allocation9 + $0xae8] sm:$0xff]
        %v4804 = vld [vmem:[#allocation9 + $0xaf0] sm:$0xff]
        %v4805 = vld [vmem:[#allocation9 + $0xaf8] sm:$0xff]
        %v4806 = vld [vmem:[#allocation9 + $0xb00] sm:$0xff]
        %v4807 = vld [vmem:[#allocation9 + $0xb08] sm:$0xff]
        %v4808 = vld [vmem:[#allocation9 + $0xb10] sm:$0xff]
        %v4809 = vld [vmem:[#allocation9 + $0xb18] sm:$0xff]
        %v4810 = vld [vmem:[#allocation9 + $0xb20] sm:$0xff]
        %v4811 = vld [vmem:[#allocation9 + $0xb28] sm:$0xff]
        %v4812 = vld [vmem:[#allocation9 + $0xb30] sm:$0xff]
        %v4813 = vld [vmem:[#allocation9 + $0xb38] sm:$0xff]
        %v4814 = vld [vmem:[#allocation9 + $0xb40] sm:$0xff]
        %v4815 = vld [vmem:[#allocation9 + $0xb48] sm:$0xff]
        %v4816 = vld [vmem:[#allocation9 + $0xb50] sm:$0xff]
        %v4817 = vld [vmem:[#allocation9 + $0xb58] sm:$0xff]
        %v4818 = vld [vmem:[#allocation9 + $0xb60] sm:$0xff]
        %v4819 = vld [vmem:[#allocation9 + $0xb68] sm:$0xff]
        %v4820 = vld [vmem:[#allocation9 + $0xb70] sm:$0xff]
        %v4821 = vld [vmem:[#allocation9 + $0xb78] sm:$0xff]
        %v4822 = vld [vmem:[#allocation9 + $0xb80] sm:$0xff]
        %v4823 = vld [vmem:[#allocation9 + $0xb88] sm:$0xff]
        %v4824 = vld [vmem:[#allocation9 + $0xb90] sm:$0xff]
        %v4825 = vld [vmem:[#allocation9 + $0xb98] sm:$0xff]
        %v4826 = vld [vmem:[#allocation9 + $0xba0] sm:$0xff]
        %v4827 = vld [vmem:[#allocation9 + $0xba8] sm:$0xff]
        %v4828 = vld [vmem:[#allocation9 + $0xbb0] sm:$0xff]
        %v4829 = vld [vmem:[#allocation9 + $0xbb8] sm:$0xff]
        %v4830 = vld [vmem:[#allocation9 + $0xbc0] sm:$0xff]
        %v4831 = vld [vmem:[#allocation9 + $0xbc8] sm:$0xff]
        %v4832 = vld [vmem:[#allocation9 + $0xbd0] sm:$0xff]
        %v4833 = vld [vmem:[#allocation9 + $0xbd8] sm:$0xff]
        %v4834 = vld [vmem:[#allocation9 + $0xbe0] sm:$0xff]
        %v4835 = vld [vmem:[#allocation9 + $0xbe8] sm:$0xff]
        %v4836 = vld [vmem:[#allocation9 + $0xbf0] sm:$0xff]
        %v4837 = vld [vmem:[#allocation9 + $0xbf8] sm:$0xff]
        %v5222 = vunpack.c.l.b16 %v4454
        %v5223 = vunpack.c.h.b16 %v4454
        %v5224 = vunpack.c.l.b16 %v4455
        %v5225 = vunpack.c.h.b16 %v4455
        %v5226 = vunpack.c.l.b16 %v4456
        %v5227 = vunpack.c.h.b16 %v4456
        %v5228 = vunpack.c.l.b16 %v4457
        %v5229 = vunpack.c.h.b16 %v4457
        %v5230 = vunpack.c.l.b16 %v4458
        %v5231 = vunpack.c.h.b16 %v4458
        %v5232 = vunpack.c.l.b16 %v4459
        %v5233 = vunpack.c.h.b16 %v4459
        %v5234 = vunpack.c.l.b16 %v4460
        %v5235 = vunpack.c.h.b16 %v4460
        %v5236 = vunpack.c.l.b16 %v4461
        %v5237 = vunpack.c.h.b16 %v4461
        %v5238 = vunpack.c.l.b16 %v4462
        %v5239 = vunpack.c.h.b16 %v4462
        %v5240 = vunpack.c.l.b16 %v4463
        %v5241 = vunpack.c.h.b16 %v4463
        %v5242 = vunpack.c.l.b16 %v4464
        %v5243 = vunpack.c.h.b16 %v4464
        %v5244 = vunpack.c.l.b16 %v4465
        %v5245 = vunpack.c.h.b16 %v4465
        %v5246 = vunpack.c.l.b16 %v4466
        %v5247 = vunpack.c.h.b16 %v4466
        %v5248 = vunpack.c.l.b16 %v4467
        %v5249 = vunpack.c.h.b16 %v4467
        %v5250 = vunpack.c.l.b16 %v4468
        %v5251 = vunpack.c.h.b16 %v4468
        %v5252 = vunpack.c.l.b16 %v4469
        %v5253 = vunpack.c.h.b16 %v4469
        %v5254 = vunpack.c.l.b16 %v4470
        %v5255 = vunpack.c.h.b16 %v4470
        %v5256 = vunpack.c.l.b16 %v4471
        %v5257 = vunpack.c.h.b16 %v4471
        %v5258 = vunpack.c.l.b16 %v4472
        %v5259 = vunpack.c.h.b16 %v4472
        %v5260 = vunpack.c.l.b16 %v4473
        %v5261 = vunpack.c.h.b16 %v4473
        %v5262 = vunpack.c.l.b16 %v4474
        %v5263 = vunpack.c.h.b16 %v4474
        %v5264 = vunpack.c.l.b16 %v4475
        %v5265 = vunpack.c.h.b16 %v4475
        %v5266 = vunpack.c.l.b16 %v4476
        %v5267 = vunpack.c.h.b16 %v4476
        %v5268 = vunpack.c.l.b16 %v4477
        %v5269 = vunpack.c.h.b16 %v4477
        %v5270 = vunpack.c.l.b16 %v4478
        %v5271 = vunpack.c.h.b16 %v4478
        %v5272 = vunpack.c.l.b16 %v4479
        %v5273 = vunpack.c.h.b16 %v4479
        %v5274 = vunpack.c.l.b16 %v4480
        %v5275 = vunpack.c.h.b16 %v4480
        %v5276 = vunpack.c.l.b16 %v4481
        %v5277 = vunpack.c.h.b16 %v4481
        %v5278 = vunpack.c.l.b16 %v4482
        %v5279 = vunpack.c.h.b16 %v4482
        %v5280 = vunpack.c.l.b16 %v4483
        %v5281 = vunpack.c.h.b16 %v4483
        %v5282 = vunpack.c.l.b16 %v4484
        %v5283 = vunpack.c.h.b16 %v4484
        %v5284 = vunpack.c.l.b16 %v4485
        %v5285 = vunpack.c.h.b16 %v4485
        %v5286 = vunpack.c.l.b16 %v4486
        %v5287 = vunpack.c.h.b16 %v4486
        %v5288 = vunpack.c.l.b16 %v4487
        %v5289 = vunpack.c.h.b16 %v4487
        %v5290 = vunpack.c.l.b16 %v4488
        %v5291 = vunpack.c.h.b16 %v4488
        %v5292 = vunpack.c.l.b16 %v4489
        %v5293 = vunpack.c.h.b16 %v4489
        %v5294 = vunpack.c.l.b16 %v4490
        %v5295 = vunpack.c.h.b16 %v4490
        %v5296 = vunpack.c.l.b16 %v4491
        %v5297 = vunpack.c.h.b16 %v4491
        %v5298 = vunpack.c.l.b16 %v4492
        %v5299 = vunpack.c.h.b16 %v4492
        %v5300 = vunpack.c.l.b16 %v4493
        %v5301 = vunpack.c.h.b16 %v4493
        %v5302 = vunpack.c.l.b16 %v4494
        %v5303 = vunpack.c.h.b16 %v4494
        %v5304 = vunpack.c.l.b16 %v4495
        %v5305 = vunpack.c.h.b16 %v4495
        %v5306 = vunpack.c.l.b16 %v4496
        %v5307 = vunpack.c.h.b16 %v4496
        %v5308 = vunpack.c.l.b16 %v4497
        %v5309 = vunpack.c.h.b16 %v4497
        %v5310 = vunpack.c.l.b16 %v4498
        %v5311 = vunpack.c.h.b16 %v4498
        %v5312 = vunpack.c.l.b16 %v4499
        %v5313 = vunpack.c.h.b16 %v4499
        %v5314 = vunpack.c.l.b16 %v4500
        %v5315 = vunpack.c.h.b16 %v4500
        %v5316 = vunpack.c.l.b16 %v4501
        %v5317 = vunpack.c.h.b16 %v4501
        %v5318 = vunpack.c.l.b16 %v4502
        %v5319 = vunpack.c.h.b16 %v4502
        %v5320 = vunpack.c.l.b16 %v4503
        %v5321 = vunpack.c.h.b16 %v4503
        %v5322 = vunpack.c.l.b16 %v4504
        %v5323 = vunpack.c.h.b16 %v4504
        %v5324 = vunpack.c.l.b16 %v4505
        %v5325 = vunpack.c.h.b16 %v4505
        %v5326 = vunpack.c.l.b16 %v4506
        %v5327 = vunpack.c.h.b16 %v4506
        %v5328 = vunpack.c.l.b16 %v4507
        %v5329 = vunpack.c.h.b16 %v4507
        %v5330 = vunpack.c.l.b16 %v4508
        %v5331 = vunpack.c.h.b16 %v4508
        %v5332 = vunpack.c.l.b16 %v4509
        %v5333 = vunpack.c.h.b16 %v4509
        %v5334 = vunpack.c.l.b16 %v4510
        %v5335 = vunpack.c.h.b16 %v4510
        %v5336 = vunpack.c.l.b16 %v4511
        %v5337 = vunpack.c.h.b16 %v4511
        %v5338 = vunpack.c.l.b16 %v4512
        %v5339 = vunpack.c.h.b16 %v4512
        %v5340 = vunpack.c.l.b16 %v4513
        %v5341 = vunpack.c.h.b16 %v4513
        %v5342 = vunpack.c.l.b16 %v4514
        %v5343 = vunpack.c.h.b16 %v4514
        %v5344 = vunpack.c.l.b16 %v4515
        %v5345 = vunpack.c.h.b16 %v4515
        %v5346 = vunpack.c.l.b16 %v4516
        %v5347 = vunpack.c.h.b16 %v4516
        %v5348 = vunpack.c.l.b16 %v4517
        %v5349 = vunpack.c.h.b16 %v4517
        %v5350 = vunpack.c.l.b16 %v4518
        %v5351 = vunpack.c.h.b16 %v4518
        %v5352 = vunpack.c.l.b16 %v4519
        %v5353 = vunpack.c.h.b16 %v4519
        %v5354 = vunpack.c.l.b16 %v4520
        %v5355 = vunpack.c.h.b16 %v4520
        %v5356 = vunpack.c.l.b16 %v4521
        %v5357 = vunpack.c.h.b16 %v4521
        %v5358 = vunpack.c.l.b16 %v4522
        %v5359 = vunpack.c.h.b16 %v4522
        %v5360 = vunpack.c.l.b16 %v4523
        %v5361 = vunpack.c.h.b16 %v4523
        %v5362 = vunpack.c.l.b16 %v4524
        %v5363 = vunpack.c.h.b16 %v4524
        %v5364 = vunpack.c.l.b16 %v4525
        %v5365 = vunpack.c.h.b16 %v4525
        %v5366 = vunpack.c.l.b16 %v4526
        %v5367 = vunpack.c.h.b16 %v4526
        %v5368 = vunpack.c.l.b16 %v4527
        %v5369 = vunpack.c.h.b16 %v4527
        %v5370 = vunpack.c.l.b16 %v4528
        %v5371 = vunpack.c.h.b16 %v4528
        %v5372 = vunpack.c.l.b16 %v4529
        %v5373 = vunpack.c.h.b16 %v4529
        %v5374 = vunpack.c.l.b16 %v4530
        %v5375 = vunpack.c.h.b16 %v4530
        %v5376 = vunpack.c.l.b16 %v4531
        %v5377 = vunpack.c.h.b16 %v4531
        %v5378 = vunpack.c.l.b16 %v4532
        %v5379 = vunpack.c.h.b16 %v4532
        %v5380 = vunpack.c.l.b16 %v4533
        %v5381 = vunpack.c.h.b16 %v4533
        %v5382 = vunpack.c.l.b16 %v4534
        %v5383 = vunpack.c.h.b16 %v4534
        %v5384 = vunpack.c.l.b16 %v4535
        %v5385 = vunpack.c.h.b16 %v4535
        %v5386 = vunpack.c.l.b16 %v4536
        %v5387 = vunpack.c.h.b16 %v4536
        %v5388 = vunpack.c.l.b16 %v4537
        %v5389 = vunpack.c.h.b16 %v4537
        %v5390 = vunpack.c.l.b16 %v4538
        %v5391 = vunpack.c.h.b16 %v4538
        %v5392 = vunpack.c.l.b16 %v4539
        %v5393 = vunpack.c.h.b16 %v4539
        %v5394 = vunpack.c.l.b16 %v4540
        %v5395 = vunpack.c.h.b16 %v4540
        %v5396 = vunpack.c.l.b16 %v4541
        %v5397 = vunpack.c.h.b16 %v4541
        %v5398 = vunpack.c.l.b16 %v4542
        %v5399 = vunpack.c.h.b16 %v4542
        %v5400 = vunpack.c.l.b16 %v4543
        %v5401 = vunpack.c.h.b16 %v4543
        %v5402 = vunpack.c.l.b16 %v4544
        %v5403 = vunpack.c.h.b16 %v4544
        %v5404 = vunpack.c.l.b16 %v4545
        %v5405 = vunpack.c.h.b16 %v4545
        %v5406 = vunpack.c.l.b16 %v4546
        %v5407 = vunpack.c.h.b16 %v4546
        %v5408 = vunpack.c.l.b16 %v4547
        %v5409 = vunpack.c.h.b16 %v4547
        %v5410 = vunpack.c.l.b16 %v4548
        %v5411 = vunpack.c.h.b16 %v4548
        %v5412 = vunpack.c.l.b16 %v4549
        %v5413 = vunpack.c.h.b16 %v4549
        %v5414 = vunpack.c.l.b16 %v4550
        %v5415 = vunpack.c.h.b16 %v4550
        %v5416 = vunpack.c.l.b16 %v4551
        %v5417 = vunpack.c.h.b16 %v4551
        %v5418 = vunpack.c.l.b16 %v4552
        %v5419 = vunpack.c.h.b16 %v4552
        %v5420 = vunpack.c.l.b16 %v4553
        %v5421 = vunpack.c.h.b16 %v4553
        %v5422 = vunpack.c.l.b16 %v4554
        %v5423 = vunpack.c.h.b16 %v4554
        %v5424 = vunpack.c.l.b16 %v4555
        %v5425 = vunpack.c.h.b16 %v4555
        %v5426 = vunpack.c.l.b16 %v4556
        %v5427 = vunpack.c.h.b16 %v4556
        %v5428 = vunpack.c.l.b16 %v4557
        %v5429 = vunpack.c.h.b16 %v4557
        %v5430 = vunpack.c.l.b16 %v4558
        %v5431 = vunpack.c.h.b16 %v4558
        %v5432 = vunpack.c.l.b16 %v4559
        %v5433 = vunpack.c.h.b16 %v4559
        %v5434 = vunpack.c.l.b16 %v4560
        %v5435 = vunpack.c.h.b16 %v4560
        %v5436 = vunpack.c.l.b16 %v4561
        %v5437 = vunpack.c.h.b16 %v4561
        %v5438 = vunpack.c.l.b16 %v4562
        %v5439 = vunpack.c.h.b16 %v4562
        %v5440 = vunpack.c.l.b16 %v4563
        %v5441 = vunpack.c.h.b16 %v4563
        %v5442 = vunpack.c.l.b16 %v4564
        %v5443 = vunpack.c.h.b16 %v4564
        %v5444 = vunpack.c.l.b16 %v4565
        %v5445 = vunpack.c.h.b16 %v4565
        %v5446 = vunpack.c.l.b16 %v4566
        %v5447 = vunpack.c.h.b16 %v4566
        %v5448 = vunpack.c.l.b16 %v4567
        %v5449 = vunpack.c.h.b16 %v4567
        %v5450 = vunpack.c.l.b16 %v4568
        %v5451 = vunpack.c.h.b16 %v4568
        %v5452 = vunpack.c.l.b16 %v4569
        %v5453 = vunpack.c.h.b16 %v4569
        %v5454 = vunpack.c.l.b16 %v4570
        %v5455 = vunpack.c.h.b16 %v4570
        %v5456 = vunpack.c.l.b16 %v4571
        %v5457 = vunpack.c.h.b16 %v4571
        %v5458 = vunpack.c.l.b16 %v4572
        %v5459 = vunpack.c.h.b16 %v4572
        %v5460 = vunpack.c.l.b16 %v4573
        %v5461 = vunpack.c.h.b16 %v4573
        %v5462 = vunpack.c.l.b16 %v4574
        %v5463 = vunpack.c.h.b16 %v4574
        %v5464 = vunpack.c.l.b16 %v4575
        %v5465 = vunpack.c.h.b16 %v4575
        %v5466 = vunpack.c.l.b16 %v4576
        %v5467 = vunpack.c.h.b16 %v4576
        %v5468 = vunpack.c.l.b16 %v4577
        %v5469 = vunpack.c.h.b16 %v4577
        %v5470 = vunpack.c.l.b16 %v4578
        %v5471 = vunpack.c.h.b16 %v4578
        %v5472 = vunpack.c.l.b16 %v4579
        %v5473 = vunpack.c.h.b16 %v4579
        %v5474 = vunpack.c.l.b16 %v4580
        %v5475 = vunpack.c.h.b16 %v4580
        %v5476 = vunpack.c.l.b16 %v4581
        %v5477 = vunpack.c.h.b16 %v4581
        %v5478 = vunpack.c.l.b16 %v4582
        %v5479 = vunpack.c.h.b16 %v4582
        %v5480 = vunpack.c.l.b16 %v4583
        %v5481 = vunpack.c.h.b16 %v4583
        %v5482 = vunpack.c.l.b16 %v4584
        %v5483 = vunpack.c.h.b16 %v4584
        %v5484 = vunpack.c.l.b16 %v4585
        %v5485 = vunpack.c.h.b16 %v4585
        %v5486 = vunpack.c.l.b16 %v4586
        %v5487 = vunpack.c.h.b16 %v4586
        %v5488 = vunpack.c.l.b16 %v4587
        %v5489 = vunpack.c.h.b16 %v4587
        %v5490 = vunpack.c.l.b16 %v4588
        %v5491 = vunpack.c.h.b16 %v4588
        %v5492 = vunpack.c.l.b16 %v4589
        %v5493 = vunpack.c.h.b16 %v4589
        %v5494 = vunpack.c.l.b16 %v4590
        %v5495 = vunpack.c.h.b16 %v4590
        %v5496 = vunpack.c.l.b16 %v4591
        %v5497 = vunpack.c.h.b16 %v4591
        %v5498 = vunpack.c.l.b16 %v4592
        %v5499 = vunpack.c.h.b16 %v4592
        %v5500 = vunpack.c.l.b16 %v4593
        %v5501 = vunpack.c.h.b16 %v4593
        %v5502 = vunpack.c.l.b16 %v4594
        %v5503 = vunpack.c.h.b16 %v4594
        %v5504 = vunpack.c.l.b16 %v4595
        %v5505 = vunpack.c.h.b16 %v4595
        %v5506 = vunpack.c.l.b16 %v4596
        %v5507 = vunpack.c.h.b16 %v4596
        %v5508 = vunpack.c.l.b16 %v4597
        %v5509 = vunpack.c.h.b16 %v4597
        %v5510 = vunpack.c.l.b16 %v4598
        %v5511 = vunpack.c.h.b16 %v4598
        %v5512 = vunpack.c.l.b16 %v4599
        %v5513 = vunpack.c.h.b16 %v4599
        %v5514 = vunpack.c.l.b16 %v4600
        %v5515 = vunpack.c.h.b16 %v4600
        %v5516 = vunpack.c.l.b16 %v4601
        %v5517 = vunpack.c.h.b16 %v4601
        %v5518 = vunpack.c.l.b16 %v4602
        %v5519 = vunpack.c.h.b16 %v4602
        %v5520 = vunpack.c.l.b16 %v4603
        %v5521 = vunpack.c.h.b16 %v4603
        %v5522 = vunpack.c.l.b16 %v4604
        %v5523 = vunpack.c.h.b16 %v4604
        %v5524 = vunpack.c.l.b16 %v4605
        %v5525 = vunpack.c.h.b16 %v4605
        %v5526 = vunpack.c.l.b16 %v4606
        %v5527 = vunpack.c.h.b16 %v4606
        %v5528 = vunpack.c.l.b16 %v4607
        %v5529 = vunpack.c.h.b16 %v4607
        %v5530 = vunpack.c.l.b16 %v4608
        %v5531 = vunpack.c.h.b16 %v4608
        %v5532 = vunpack.c.l.b16 %v4609
        %v5533 = vunpack.c.h.b16 %v4609
        %v5534 = vunpack.c.l.b16 %v4610
        %v5535 = vunpack.c.h.b16 %v4610
        %v5536 = vunpack.c.l.b16 %v4611
        %v5537 = vunpack.c.h.b16 %v4611
        %v5538 = vunpack.c.l.b16 %v4612
        %v5539 = vunpack.c.h.b16 %v4612
        %v5540 = vunpack.c.l.b16 %v4613
        %v5541 = vunpack.c.h.b16 %v4613
        %v5542 = vunpack.c.l.b16 %v4614
        %v5543 = vunpack.c.h.b16 %v4614
        %v5544 = vunpack.c.l.b16 %v4615
        %v5545 = vunpack.c.h.b16 %v4615
        %v5546 = vunpack.c.l.b16 %v4616
        %v5547 = vunpack.c.h.b16 %v4616
        %v5548 = vunpack.c.l.b16 %v4617
        %v5549 = vunpack.c.h.b16 %v4617
        %v5550 = vunpack.c.l.b16 %v4618
        %v5551 = vunpack.c.h.b16 %v4618
        %v5552 = vunpack.c.l.b16 %v4619
        %v5553 = vunpack.c.h.b16 %v4619
        %v5554 = vunpack.c.l.b16 %v4620
        %v5555 = vunpack.c.h.b16 %v4620
        %v5556 = vunpack.c.l.b16 %v4621
        %v5557 = vunpack.c.h.b16 %v4621
        %v5558 = vunpack.c.l.b16 %v4622
        %v5559 = vunpack.c.h.b16 %v4622
        %v5560 = vunpack.c.l.b16 %v4623
        %v5561 = vunpack.c.h.b16 %v4623
        %v5562 = vunpack.c.l.b16 %v4624
        %v5563 = vunpack.c.h.b16 %v4624
        %v5564 = vunpack.c.l.b16 %v4625
        %v5565 = vunpack.c.h.b16 %v4625
        %v5566 = vunpack.c.l.b16 %v4626
        %v5567 = vunpack.c.h.b16 %v4626
        %v5568 = vunpack.c.l.b16 %v4627
        %v5569 = vunpack.c.h.b16 %v4627
        %v5570 = vunpack.c.l.b16 %v4628
        %v5571 = vunpack.c.h.b16 %v4628
        %v5572 = vunpack.c.l.b16 %v4629
        %v5573 = vunpack.c.h.b16 %v4629
        %v5574 = vunpack.c.l.b16 %v4630
        %v5575 = vunpack.c.h.b16 %v4630
        %v5576 = vunpack.c.l.b16 %v4631
        %v5577 = vunpack.c.h.b16 %v4631
        %v5578 = vunpack.c.l.b16 %v4632
        %v5579 = vunpack.c.h.b16 %v4632
        %v5580 = vunpack.c.l.b16 %v4633
        %v5581 = vunpack.c.h.b16 %v4633
        %v5582 = vunpack.c.l.b16 %v4634
        %v5583 = vunpack.c.h.b16 %v4634
        %v5584 = vunpack.c.l.b16 %v4635
        %v5585 = vunpack.c.h.b16 %v4635
        %v5586 = vunpack.c.l.b16 %v4636
        %v5587 = vunpack.c.h.b16 %v4636
        %v5588 = vunpack.c.l.b16 %v4637
        %v5589 = vunpack.c.h.b16 %v4637
        %v5590 = vunpack.c.l.b16 %v4638
        %v5591 = vunpack.c.h.b16 %v4638
        %v5592 = vunpack.c.l.b16 %v4639
        %v5593 = vunpack.c.h.b16 %v4639
        %v5594 = vunpack.c.l.b16 %v4640
        %v5595 = vunpack.c.h.b16 %v4640
        %v5596 = vunpack.c.l.b16 %v4641
        %v5597 = vunpack.c.h.b16 %v4641
        %v5598 = vunpack.c.l.b16 %v4642
        %v5599 = vunpack.c.h.b16 %v4642
        %v5600 = vunpack.c.l.b16 %v4643
        %v5601 = vunpack.c.h.b16 %v4643
        %v5602 = vunpack.c.l.b16 %v4644
        %v5603 = vunpack.c.h.b16 %v4644
        %v5604 = vunpack.c.l.b16 %v4645
        %v5605 = vunpack.c.h.b16 %v4645
        %v5606 = vunpack.c.l.b16 %v4646
        %v5607 = vunpack.c.h.b16 %v4646
        %v5608 = vunpack.c.l.b16 %v4647
        %v5609 = vunpack.c.h.b16 %v4647
        %v5610 = vunpack.c.l.b16 %v4648
        %v5611 = vunpack.c.h.b16 %v4648
        %v5612 = vunpack.c.l.b16 %v4649
        %v5613 = vunpack.c.h.b16 %v4649
        %v5614 = vunpack.c.l.b16 %v4650
        %v5615 = vunpack.c.h.b16 %v4650
        %v5616 = vunpack.c.l.b16 %v4651
        %v5617 = vunpack.c.h.b16 %v4651
        %v5618 = vunpack.c.l.b16 %v4652
        %v5619 = vunpack.c.h.b16 %v4652
        %v5620 = vunpack.c.l.b16 %v4653
        %v5621 = vunpack.c.h.b16 %v4653
        %v5622 = vunpack.c.l.b16 %v4654
        %v5623 = vunpack.c.h.b16 %v4654
        %v5624 = vunpack.c.l.b16 %v4655
        %v5625 = vunpack.c.h.b16 %v4655
        %v5626 = vunpack.c.l.b16 %v4656
        %v5627 = vunpack.c.h.b16 %v4656
        %v5628 = vunpack.c.l.b16 %v4657
        %v5629 = vunpack.c.h.b16 %v4657
        %v5630 = vunpack.c.l.b16 %v4658
        %v5631 = vunpack.c.h.b16 %v4658
        %v5632 = vunpack.c.l.b16 %v4659
        %v5633 = vunpack.c.h.b16 %v4659
        %v5634 = vunpack.c.l.b16 %v4660
        %v5635 = vunpack.c.h.b16 %v4660
        %v5636 = vunpack.c.l.b16 %v4661
        %v5637 = vunpack.c.h.b16 %v4661
        %v5638 = vunpack.c.l.b16 %v4662
        %v5639 = vunpack.c.h.b16 %v4662
        %v5640 = vunpack.c.l.b16 %v4663
        %v5641 = vunpack.c.h.b16 %v4663
        %v5642 = vunpack.c.l.b16 %v4664
        %v5643 = vunpack.c.h.b16 %v4664
        %v5644 = vunpack.c.l.b16 %v4665
        %v5645 = vunpack.c.h.b16 %v4665
        %v5646 = vunpack.c.l.b16 %v4666
        %v5647 = vunpack.c.h.b16 %v4666
        %v5648 = vunpack.c.l.b16 %v4667
        %v5649 = vunpack.c.h.b16 %v4667
        %v5650 = vunpack.c.l.b16 %v4668
        %v5651 = vunpack.c.h.b16 %v4668
        %v5652 = vunpack.c.l.b16 %v4669
        %v5653 = vunpack.c.h.b16 %v4669
        %v5654 = vunpack.c.l.b16 %v4670
        %v5655 = vunpack.c.h.b16 %v4670
        %v5656 = vunpack.c.l.b16 %v4671
        %v5657 = vunpack.c.h.b16 %v4671
        %v5658 = vunpack.c.l.b16 %v4672
        %v5659 = vunpack.c.h.b16 %v4672
        %v5660 = vunpack.c.l.b16 %v4673
        %v5661 = vunpack.c.h.b16 %v4673
        %v5662 = vunpack.c.l.b16 %v4674
        %v5663 = vunpack.c.h.b16 %v4674
        %v5664 = vunpack.c.l.b16 %v4675
        %v5665 = vunpack.c.h.b16 %v4675
        %v5666 = vunpack.c.l.b16 %v4676
        %v5667 = vunpack.c.h.b16 %v4676
        %v5668 = vunpack.c.l.b16 %v4677
        %v5669 = vunpack.c.h.b16 %v4677
        %v5670 = vunpack.c.l.b16 %v4678
        %v5671 = vunpack.c.h.b16 %v4678
        %v5672 = vunpack.c.l.b16 %v4679
        %v5673 = vunpack.c.h.b16 %v4679
        %v5674 = vunpack.c.l.b16 %v4680
        %v5675 = vunpack.c.h.b16 %v4680
        %v5676 = vunpack.c.l.b16 %v4681
        %v5677 = vunpack.c.h.b16 %v4681
        %v5678 = vunpack.c.l.b16 %v4682
        %v5679 = vunpack.c.h.b16 %v4682
        %v5680 = vunpack.c.l.b16 %v4683
        %v5681 = vunpack.c.h.b16 %v4683
        %v5682 = vunpack.c.l.b16 %v4684
        %v5683 = vunpack.c.h.b16 %v4684
        %v5684 = vunpack.c.l.b16 %v4685
        %v5685 = vunpack.c.h.b16 %v4685
        %v5686 = vunpack.c.l.b16 %v4686
        %v5687 = vunpack.c.h.b16 %v4686
        %v5688 = vunpack.c.l.b16 %v4687
        %v5689 = vunpack.c.h.b16 %v4687
        %v5690 = vunpack.c.l.b16 %v4688
        %v5691 = vunpack.c.h.b16 %v4688
        %v5692 = vunpack.c.l.b16 %v4689
        %v5693 = vunpack.c.h.b16 %v4689
        %v5694 = vunpack.c.l.b16 %v4690
        %v5695 = vunpack.c.h.b16 %v4690
        %v5696 = vunpack.c.l.b16 %v4691
        %v5697 = vunpack.c.h.b16 %v4691
        %v5698 = vunpack.c.l.b16 %v4692
        %v5699 = vunpack.c.h.b16 %v4692
        %v5700 = vunpack.c.l.b16 %v4693
        %v5701 = vunpack.c.h.b16 %v4693
        %v5702 = vunpack.c.l.b16 %v4694
        %v5703 = vunpack.c.h.b16 %v4694
        %v5704 = vunpack.c.l.b16 %v4695
        %v5705 = vunpack.c.h.b16 %v4695
        %v5706 = vunpack.c.l.b16 %v4696
        %v5707 = vunpack.c.h.b16 %v4696
        %v5708 = vunpack.c.l.b16 %v4697
        %v5709 = vunpack.c.h.b16 %v4697
        %v5710 = vunpack.c.l.b16 %v4698
        %v5711 = vunpack.c.h.b16 %v4698
        %v5712 = vunpack.c.l.b16 %v4699
        %v5713 = vunpack.c.h.b16 %v4699
        %v5714 = vunpack.c.l.b16 %v4700
        %v5715 = vunpack.c.h.b16 %v4700
        %v5716 = vunpack.c.l.b16 %v4701
        %v5717 = vunpack.c.h.b16 %v4701
        %v5718 = vunpack.c.l.b16 %v4702
        %v5719 = vunpack.c.h.b16 %v4702
        %v5720 = vunpack.c.l.b16 %v4703
        %v5721 = vunpack.c.h.b16 %v4703
        %v5722 = vunpack.c.l.b16 %v4704
        %v5723 = vunpack.c.h.b16 %v4704
        %v5724 = vunpack.c.l.b16 %v4705
        %v5725 = vunpack.c.h.b16 %v4705
        %v5726 = vunpack.c.l.b16 %v4706
        %v5727 = vunpack.c.h.b16 %v4706
        %v5728 = vunpack.c.l.b16 %v4707
        %v5729 = vunpack.c.h.b16 %v4707
        %v5730 = vunpack.c.l.b16 %v4708
        %v5731 = vunpack.c.h.b16 %v4708
        %v5732 = vunpack.c.l.b16 %v4709
        %v5733 = vunpack.c.h.b16 %v4709
        %v5734 = vunpack.c.l.b16 %v4710
        %v5735 = vunpack.c.h.b16 %v4710
        %v5736 = vunpack.c.l.b16 %v4711
        %v5737 = vunpack.c.h.b16 %v4711
        %v5738 = vunpack.c.l.b16 %v4712
        %v5739 = vunpack.c.h.b16 %v4712
        %v5740 = vunpack.c.l.b16 %v4713
        %v5741 = vunpack.c.h.b16 %v4713
        %v5742 = vunpack.c.l.b16 %v4714
        %v5743 = vunpack.c.h.b16 %v4714
        %v5744 = vunpack.c.l.b16 %v4715
        %v5745 = vunpack.c.h.b16 %v4715
        %v5746 = vunpack.c.l.b16 %v4716
        %v5747 = vunpack.c.h.b16 %v4716
        %v5748 = vunpack.c.l.b16 %v4717
        %v5749 = vunpack.c.h.b16 %v4717
        %v5750 = vunpack.c.l.b16 %v4718
        %v5751 = vunpack.c.h.b16 %v4718
        %v5752 = vunpack.c.l.b16 %v4719
        %v5753 = vunpack.c.h.b16 %v4719
        %v5754 = vunpack.c.l.b16 %v4720
        %v5755 = vunpack.c.h.b16 %v4720
        %v5756 = vunpack.c.l.b16 %v4721
        %v5757 = vunpack.c.h.b16 %v4721
        %v5758 = vunpack.c.l.b16 %v4722
        %v5759 = vunpack.c.h.b16 %v4722
        %v5760 = vunpack.c.l.b16 %v4723
        %v5761 = vunpack.c.h.b16 %v4723
        %v5762 = vunpack.c.l.b16 %v4724
        %v5763 = vunpack.c.h.b16 %v4724
        %v5764 = vunpack.c.l.b16 %v4725
        %v5765 = vunpack.c.h.b16 %v4725
        %v5766 = vunpack.c.l.b16 %v4726
        %v5767 = vunpack.c.h.b16 %v4726
        %v5768 = vunpack.c.l.b16 %v4727
        %v5769 = vunpack.c.h.b16 %v4727
        %v5770 = vunpack.c.l.b16 %v4728
        %v5771 = vunpack.c.h.b16 %v4728
        %v5772 = vunpack.c.l.b16 %v4729
        %v5773 = vunpack.c.h.b16 %v4729
        %v5774 = vunpack.c.l.b16 %v4730
        %v5775 = vunpack.c.h.b16 %v4730
        %v5776 = vunpack.c.l.b16 %v4731
        %v5777 = vunpack.c.h.b16 %v4731
        %v5778 = vunpack.c.l.b16 %v4732
        %v5779 = vunpack.c.h.b16 %v4732
        %v5780 = vunpack.c.l.b16 %v4733
        %v5781 = vunpack.c.h.b16 %v4733
        %v5782 = vunpack.c.l.b16 %v4734
        %v5783 = vunpack.c.h.b16 %v4734
        %v5784 = vunpack.c.l.b16 %v4735
        %v5785 = vunpack.c.h.b16 %v4735
        %v5786 = vunpack.c.l.b16 %v4736
        %v5787 = vunpack.c.h.b16 %v4736
        %v5788 = vunpack.c.l.b16 %v4737
        %v5789 = vunpack.c.h.b16 %v4737
        %v5790 = vunpack.c.l.b16 %v4738
        %v5791 = vunpack.c.h.b16 %v4738
        %v5792 = vunpack.c.l.b16 %v4739
        %v5793 = vunpack.c.h.b16 %v4739
        %v5794 = vunpack.c.l.b16 %v4740
        %v5795 = vunpack.c.h.b16 %v4740
        %v5796 = vunpack.c.l.b16 %v4741
        %v5797 = vunpack.c.h.b16 %v4741
        %v5798 = vunpack.c.l.b16 %v4742
        %v5799 = vunpack.c.h.b16 %v4742
        %v5800 = vunpack.c.l.b16 %v4743
        %v5801 = vunpack.c.h.b16 %v4743
        %v5802 = vunpack.c.l.b16 %v4744
        %v5803 = vunpack.c.h.b16 %v4744
        %v5804 = vunpack.c.l.b16 %v4745
        %v5805 = vunpack.c.h.b16 %v4745
        %v5806 = vunpack.c.l.b16 %v4746
        %v5807 = vunpack.c.h.b16 %v4746
        %v5808 = vunpack.c.l.b16 %v4747
        %v5809 = vunpack.c.h.b16 %v4747
        %v5810 = vunpack.c.l.b16 %v4748
        %v5811 = vunpack.c.h.b16 %v4748
        %v5812 = vunpack.c.l.b16 %v4749
        %v5813 = vunpack.c.h.b16 %v4749
        %v5814 = vunpack.c.l.b16 %v4750
        %v5815 = vunpack.c.h.b16 %v4750
        %v5816 = vunpack.c.l.b16 %v4751
        %v5817 = vunpack.c.h.b16 %v4751
        %v5818 = vunpack.c.l.b16 %v4752
        %v5819 = vunpack.c.h.b16 %v4752
        %v5820 = vunpack.c.l.b16 %v4753
        %v5821 = vunpack.c.h.b16 %v4753
        %v5822 = vunpack.c.l.b16 %v4754
        %v5823 = vunpack.c.h.b16 %v4754
        %v5824 = vunpack.c.l.b16 %v4755
        %v5825 = vunpack.c.h.b16 %v4755
        %v5826 = vunpack.c.l.b16 %v4756
        %v5827 = vunpack.c.h.b16 %v4756
        %v5828 = vunpack.c.l.b16 %v4757
        %v5829 = vunpack.c.h.b16 %v4757
        %v5830 = vunpack.c.l.b16 %v4758
        %v5831 = vunpack.c.h.b16 %v4758
        %v5832 = vunpack.c.l.b16 %v4759
        %v5833 = vunpack.c.h.b16 %v4759
        %v5834 = vunpack.c.l.b16 %v4760
        %v5835 = vunpack.c.h.b16 %v4760
        %v5836 = vunpack.c.l.b16 %v4761
        %v5837 = vunpack.c.h.b16 %v4761
        %v5838 = vunpack.c.l.b16 %v4762
        %v5839 = vunpack.c.h.b16 %v4762
        %v5840 = vunpack.c.l.b16 %v4763
        %v5841 = vunpack.c.h.b16 %v4763
        %v5842 = vunpack.c.l.b16 %v4764
        %v5843 = vunpack.c.h.b16 %v4764
        %v5844 = vunpack.c.l.b16 %v4765
        %v5845 = vunpack.c.h.b16 %v4765
        %v5846 = vunpack.c.l.b16 %v4766
        %v5847 = vunpack.c.h.b16 %v4766
        %v5848 = vunpack.c.l.b16 %v4767
        %v5849 = vunpack.c.h.b16 %v4767
        %v5850 = vunpack.c.l.b16 %v4768
        %v5851 = vunpack.c.h.b16 %v4768
        %v5852 = vunpack.c.l.b16 %v4769
        %v5853 = vunpack.c.h.b16 %v4769
        %v5854 = vunpack.c.l.b16 %v4770
        %v5855 = vunpack.c.h.b16 %v4770
        %v5856 = vunpack.c.l.b16 %v4771
        %v5857 = vunpack.c.h.b16 %v4771
        %v5858 = vunpack.c.l.b16 %v4772
        %v5859 = vunpack.c.h.b16 %v4772
        %v5860 = vunpack.c.l.b16 %v4773
        %v5861 = vunpack.c.h.b16 %v4773
        %v5862 = vunpack.c.l.b16 %v4774
        %v5863 = vunpack.c.h.b16 %v4774
        %v5864 = vunpack.c.l.b16 %v4775
        %v5865 = vunpack.c.h.b16 %v4775
        %v5866 = vunpack.c.l.b16 %v4776
        %v5867 = vunpack.c.h.b16 %v4776
        %v5868 = vunpack.c.l.b16 %v4777
        %v5869 = vunpack.c.h.b16 %v4777
        %v5870 = vunpack.c.l.b16 %v4778
        %v5871 = vunpack.c.h.b16 %v4778
        %v5872 = vunpack.c.l.b16 %v4779
        %v5873 = vunpack.c.h.b16 %v4779
        %v5874 = vunpack.c.l.b16 %v4780
        %v5875 = vunpack.c.h.b16 %v4780
        %v5876 = vunpack.c.l.b16 %v4781
        %v5877 = vunpack.c.h.b16 %v4781
        %v5878 = vunpack.c.l.b16 %v4782
        %v5879 = vunpack.c.h.b16 %v4782
        %v5880 = vunpack.c.l.b16 %v4783
        %v5881 = vunpack.c.h.b16 %v4783
        %v5882 = vunpack.c.l.b16 %v4784
        %v5883 = vunpack.c.h.b16 %v4784
        %v5884 = vunpack.c.l.b16 %v4785
        %v5885 = vunpack.c.h.b16 %v4785
        %v5886 = vunpack.c.l.b16 %v4786
        %v5887 = vunpack.c.h.b16 %v4786
        %v5888 = vunpack.c.l.b16 %v4787
        %v5889 = vunpack.c.h.b16 %v4787
        %v5890 = vunpack.c.l.b16 %v4788
        %v5891 = vunpack.c.h.b16 %v4788
        %v5892 = vunpack.c.l.b16 %v4789
        %v5893 = vunpack.c.h.b16 %v4789
        %v5894 = vunpack.c.l.b16 %v4790
        %v5895 = vunpack.c.h.b16 %v4790
        %v5896 = vunpack.c.l.b16 %v4791
        %v5897 = vunpack.c.h.b16 %v4791
        %v5898 = vunpack.c.l.b16 %v4792
        %v5899 = vunpack.c.h.b16 %v4792
        %v5900 = vunpack.c.l.b16 %v4793
        %v5901 = vunpack.c.h.b16 %v4793
        %v5902 = vunpack.c.l.b16 %v4794
        %v5903 = vunpack.c.h.b16 %v4794
        %v5904 = vunpack.c.l.b16 %v4795
        %v5905 = vunpack.c.h.b16 %v4795
        %v5906 = vunpack.c.l.b16 %v4796
        %v5907 = vunpack.c.h.b16 %v4796
        %v5908 = vunpack.c.l.b16 %v4797
        %v5909 = vunpack.c.h.b16 %v4797
        %v5910 = vunpack.c.l.b16 %v4798
        %v5911 = vunpack.c.h.b16 %v4798
        %v5912 = vunpack.c.l.b16 %v4799
        %v5913 = vunpack.c.h.b16 %v4799
        %v5914 = vunpack.c.l.b16 %v4800
        %v5915 = vunpack.c.h.b16 %v4800
        %v5916 = vunpack.c.l.b16 %v4801
        %v5917 = vunpack.c.h.b16 %v4801
        %v5918 = vunpack.c.l.b16 %v4802
        %v5919 = vunpack.c.h.b16 %v4802
        %v5920 = vunpack.c.l.b16 %v4803
        %v5921 = vunpack.c.h.b16 %v4803
        %v5922 = vunpack.c.l.b16 %v4804
        %v5923 = vunpack.c.h.b16 %v4804
        %v5924 = vunpack.c.l.b16 %v4805
        %v5925 = vunpack.c.h.b16 %v4805
        %v5926 = vunpack.c.l.b16 %v4806
        %v5927 = vunpack.c.h.b16 %v4806
        %v5928 = vunpack.c.l.b16 %v4807
        %v5929 = vunpack.c.h.b16 %v4807
        %v5930 = vunpack.c.l.b16 %v4808
        %v5931 = vunpack.c.h.b16 %v4808
        %v5932 = vunpack.c.l.b16 %v4809
        %v5933 = vunpack.c.h.b16 %v4809
        %v5934 = vunpack.c.l.b16 %v4810
        %v5935 = vunpack.c.h.b16 %v4810
        %v5936 = vunpack.c.l.b16 %v4811
        %v5937 = vunpack.c.h.b16 %v4811
        %v5938 = vunpack.c.l.b16 %v4812
        %v5939 = vunpack.c.h.b16 %v4812
        %v5940 = vunpack.c.l.b16 %v4813
        %v5941 = vunpack.c.h.b16 %v4813
        %v5942 = vunpack.c.l.b16 %v4814
        %v5943 = vunpack.c.h.b16 %v4814
        %v5944 = vunpack.c.l.b16 %v4815
        %v5945 = vunpack.c.h.b16 %v4815
        %v5946 = vunpack.c.l.b16 %v4816
        %v5947 = vunpack.c.h.b16 %v4816
        %v5948 = vunpack.c.l.b16 %v4817
        %v5949 = vunpack.c.h.b16 %v4817
        %v5950 = vunpack.c.l.b16 %v4818
        %v5951 = vunpack.c.h.b16 %v4818
        %v5952 = vunpack.c.l.b16 %v4819
        %v5953 = vunpack.c.h.b16 %v4819
        %v5954 = vunpack.c.l.b16 %v4820
        %v5955 = vunpack.c.h.b16 %v4820
        %v5956 = vunpack.c.l.b16 %v4821
        %v5957 = vunpack.c.h.b16 %v4821
        %v5958 = vunpack.c.l.b16 %v4822
        %v5959 = vunpack.c.h.b16 %v4822
        %v5960 = vunpack.c.l.b16 %v4823
        %v5961 = vunpack.c.h.b16 %v4823
        %v5962 = vunpack.c.l.b16 %v4824
        %v5963 = vunpack.c.h.b16 %v4824
        %v5964 = vunpack.c.l.b16 %v4825
        %v5965 = vunpack.c.h.b16 %v4825
        %v5966 = vunpack.c.l.b16 %v4826
        %v5967 = vunpack.c.h.b16 %v4826
        %v5968 = vunpack.c.l.b16 %v4827
        %v5969 = vunpack.c.h.b16 %v4827
        %v5970 = vunpack.c.l.b16 %v4828
        %v5971 = vunpack.c.h.b16 %v4828
        %v5972 = vunpack.c.l.b16 %v4829
        %v5973 = vunpack.c.h.b16 %v4829
        %v5974 = vunpack.c.l.b16 %v4830
        %v5975 = vunpack.c.h.b16 %v4830
        %v5976 = vunpack.c.l.b16 %v4831
        %v5977 = vunpack.c.h.b16 %v4831
        %v5978 = vunpack.c.l.b16 %v4832
        %v5979 = vunpack.c.h.b16 %v4832
        %v5980 = vunpack.c.l.b16 %v4833
        %v5981 = vunpack.c.h.b16 %v4833
        %v5982 = vunpack.c.l.b16 %v4834
        %v5983 = vunpack.c.h.b16 %v4834
        %v5984 = vunpack.c.l.b16 %v4835
        %v5985 = vunpack.c.h.b16 %v4835
        %v5986 = vunpack.c.l.b16 %v4836
        %v5987 = vunpack.c.h.b16 %v4836
        %v5988 = vunpack.c.l.b16 %v4837
        %v5989 = vunpack.c.h.b16 %v4837
        %v5990 = vpack.c.b16 %v5226, %v5222
        %v5991 = vpack.c.b16 %v5227, %v5223
        %v5992 = vpack.c.b16 %v5228, %v5224
        %v5993 = vpack.c.b16 %v5229, %v5225
        %v5994 = vpack.c.b16 %v5234, %v5230
        %v5995 = vpack.c.b16 %v5235, %v5231
        %v5996 = vpack.c.b16 %v5236, %v5232
        %v5997 = vpack.c.b16 %v5237, %v5233
        %v5998 = vpack.c.b16 %v5242, %v5238
        %v5999 = vpack.c.b16 %v5243, %v5239
        %v6000 = vpack.c.b16 %v5244, %v5240
        %v6001 = vpack.c.b16 %v5245, %v5241
        %v6002 = vpack.c.b16 %v5250, %v5246
        %v6003 = vpack.c.b16 %v5251, %v5247
        %v6004 = vpack.c.b16 %v5252, %v5248
        %v6005 = vpack.c.b16 %v5253, %v5249
        %v6006 = vpack.c.b16 %v5258, %v5254
        %v6007 = vpack.c.b16 %v5259, %v5255
        %v6008 = vpack.c.b16 %v5260, %v5256
        %v6009 = vpack.c.b16 %v5261, %v5257
        %v6010 = vpack.c.b16 %v5266, %v5262
        %v6011 = vpack.c.b16 %v5267, %v5263
        %v6012 = vpack.c.b16 %v5268, %v5264
        %v6013 = vpack.c.b16 %v5269, %v5265
        %v6014 = vpack.c.b16 %v5274, %v5270
        %v6015 = vpack.c.b16 %v5275, %v5271
        %v6016 = vpack.c.b16 %v5276, %v5272
        %v6017 = vpack.c.b16 %v5277, %v5273
        %v6018 = vpack.c.b16 %v5282, %v5278
        %v6019 = vpack.c.b16 %v5283, %v5279
        %v6020 = vpack.c.b16 %v5284, %v5280
        %v6021 = vpack.c.b16 %v5285, %v5281
        %v6022 = vpack.c.b16 %v5290, %v5286
        %v6023 = vpack.c.b16 %v5291, %v5287
        %v6024 = vpack.c.b16 %v5292, %v5288
        %v6025 = vpack.c.b16 %v5293, %v5289
        %v6026 = vpack.c.b16 %v5298, %v5294
        %v6027 = vpack.c.b16 %v5299, %v5295
        %v6028 = vpack.c.b16 %v5300, %v5296
        %v6029 = vpack.c.b16 %v5301, %v5297
        %v6030 = vpack.c.b16 %v5306, %v5302
        %v6031 = vpack.c.b16 %v5307, %v5303
        %v6032 = vpack.c.b16 %v5308, %v5304
        %v6033 = vpack.c.b16 %v5309, %v5305
        %v6034 = vpack.c.b16 %v5314, %v5310
        %v6035 = vpack.c.b16 %v5315, %v5311
        %v6036 = vpack.c.b16 %v5316, %v5312
        %v6037 = vpack.c.b16 %v5317, %v5313
        %v6038 = vpack.c.b16 %v5322, %v5318
        %v6039 = vpack.c.b16 %v5323, %v5319
        %v6040 = vpack.c.b16 %v5324, %v5320
        %v6041 = vpack.c.b16 %v5325, %v5321
        %v6042 = vpack.c.b16 %v5330, %v5326
        %v6043 = vpack.c.b16 %v5331, %v5327
        %v6044 = vpack.c.b16 %v5332, %v5328
        %v6045 = vpack.c.b16 %v5333, %v5329
        %v6046 = vpack.c.b16 %v5338, %v5334
        %v6047 = vpack.c.b16 %v5339, %v5335
        %v6048 = vpack.c.b16 %v5340, %v5336
        %v6049 = vpack.c.b16 %v5341, %v5337
        %v6050 = vpack.c.b16 %v5346, %v5342
        %v6051 = vpack.c.b16 %v5347, %v5343
        %v6052 = vpack.c.b16 %v5348, %v5344
        %v6053 = vpack.c.b16 %v5349, %v5345
        %v6054 = vpack.c.b16 %v5354, %v5350
        %v6055 = vpack.c.b16 %v5355, %v5351
        %v6056 = vpack.c.b16 %v5356, %v5352
        %v6057 = vpack.c.b16 %v5357, %v5353
        %v6058 = vpack.c.b16 %v5362, %v5358
        %v6059 = vpack.c.b16 %v5363, %v5359
        %v6060 = vpack.c.b16 %v5364, %v5360
        %v6061 = vpack.c.b16 %v5365, %v5361
        %v6062 = vpack.c.b16 %v5370, %v5366
        %v6063 = vpack.c.b16 %v5371, %v5367
        %v6064 = vpack.c.b16 %v5372, %v5368
        %v6065 = vpack.c.b16 %v5373, %v5369
        %v6066 = vpack.c.b16 %v5378, %v5374
        %v6067 = vpack.c.b16 %v5379, %v5375
        %v6068 = vpack.c.b16 %v5380, %v5376
        %v6069 = vpack.c.b16 %v5381, %v5377
        %v6070 = vpack.c.b16 %v5386, %v5382
        %v6071 = vpack.c.b16 %v5387, %v5383
        %v6072 = vpack.c.b16 %v5388, %v5384
        %v6073 = vpack.c.b16 %v5389, %v5385
        %v6074 = vpack.c.b16 %v5394, %v5390
        %v6075 = vpack.c.b16 %v5395, %v5391
        %v6076 = vpack.c.b16 %v5396, %v5392
        %v6077 = vpack.c.b16 %v5397, %v5393
        %v6078 = vpack.c.b16 %v5402, %v5398
        %v6079 = vpack.c.b16 %v5403, %v5399
        %v6080 = vpack.c.b16 %v5404, %v5400
        %v6081 = vpack.c.b16 %v5405, %v5401
        %v6082 = vpack.c.b16 %v5410, %v5406
        %v6083 = vpack.c.b16 %v5411, %v5407
        %v6084 = vpack.c.b16 %v5412, %v5408
        %v6085 = vpack.c.b16 %v5413, %v5409
        %v6086 = vpack.c.b16 %v5418, %v5414
        %v6087 = vpack.c.b16 %v5419, %v5415
        %v6088 = vpack.c.b16 %v5420, %v5416
        %v6089 = vpack.c.b16 %v5421, %v5417
        %v6090 = vpack.c.b16 %v5426, %v5422
        %v6091 = vpack.c.b16 %v5427, %v5423
        %v6092 = vpack.c.b16 %v5428, %v5424
        %v6093 = vpack.c.b16 %v5429, %v5425
        %v6094 = vpack.c.b16 %v5434, %v5430
        %v6095 = vpack.c.b16 %v5435, %v5431
        %v6096 = vpack.c.b16 %v5436, %v5432
        %v6097 = vpack.c.b16 %v5437, %v5433
        %v6098 = vpack.c.b16 %v5442, %v5438
        %v6099 = vpack.c.b16 %v5443, %v5439
        %v6100 = vpack.c.b16 %v5444, %v5440
        %v6101 = vpack.c.b16 %v5445, %v5441
        %v6102 = vpack.c.b16 %v5450, %v5446
        %v6103 = vpack.c.b16 %v5451, %v5447
        %v6104 = vpack.c.b16 %v5452, %v5448
        %v6105 = vpack.c.b16 %v5453, %v5449
        %v6106 = vpack.c.b16 %v5458, %v5454
        %v6107 = vpack.c.b16 %v5459, %v5455
        %v6108 = vpack.c.b16 %v5460, %v5456
        %v6109 = vpack.c.b16 %v5461, %v5457
        %v6110 = vpack.c.b16 %v5466, %v5462
        %v6111 = vpack.c.b16 %v5467, %v5463
        %v6112 = vpack.c.b16 %v5468, %v5464
        %v6113 = vpack.c.b16 %v5469, %v5465
        %v6114 = vpack.c.b16 %v5474, %v5470
        %v6115 = vpack.c.b16 %v5475, %v5471
        %v6116 = vpack.c.b16 %v5476, %v5472
        %v6117 = vpack.c.b16 %v5477, %v5473
        %v6118 = vpack.c.b16 %v5482, %v5478
        %v6119 = vpack.c.b16 %v5483, %v5479
        %v6120 = vpack.c.b16 %v5484, %v5480
        %v6121 = vpack.c.b16 %v5485, %v5481
        %v6122 = vpack.c.b16 %v5490, %v5486
        %v6123 = vpack.c.b16 %v5491, %v5487
        %v6124 = vpack.c.b16 %v5492, %v5488
        %v6125 = vpack.c.b16 %v5493, %v5489
        %v6126 = vpack.c.b16 %v5498, %v5494
        %v6127 = vpack.c.b16 %v5499, %v5495
        %v6128 = vpack.c.b16 %v5500, %v5496
        %v6129 = vpack.c.b16 %v5501, %v5497
        %v6130 = vpack.c.b16 %v5506, %v5502
        %v6131 = vpack.c.b16 %v5507, %v5503
        %v6132 = vpack.c.b16 %v5508, %v5504
        %v6133 = vpack.c.b16 %v5509, %v5505
        %v6134 = vpack.c.b16 %v5514, %v5510
        %v6135 = vpack.c.b16 %v5515, %v5511
        %v6136 = vpack.c.b16 %v5516, %v5512
        %v6137 = vpack.c.b16 %v5517, %v5513
        %v6138 = vpack.c.b16 %v5522, %v5518
        %v6139 = vpack.c.b16 %v5523, %v5519
        %v6140 = vpack.c.b16 %v5524, %v5520
        %v6141 = vpack.c.b16 %v5525, %v5521
        %v6142 = vpack.c.b16 %v5530, %v5526
        %v6143 = vpack.c.b16 %v5531, %v5527
        %v6144 = vpack.c.b16 %v5532, %v5528
        %v6145 = vpack.c.b16 %v5533, %v5529
        %v6146 = vpack.c.b16 %v5538, %v5534
        %v6147 = vpack.c.b16 %v5539, %v5535
        %v6148 = vpack.c.b16 %v5540, %v5536
        %v6149 = vpack.c.b16 %v5541, %v5537
        %v6150 = vpack.c.b16 %v5546, %v5542
        %v6151 = vpack.c.b16 %v5547, %v5543
        %v6152 = vpack.c.b16 %v5548, %v5544
        %v6153 = vpack.c.b16 %v5549, %v5545
        %v6154 = vpack.c.b16 %v5554, %v5550
        %v6155 = vpack.c.b16 %v5555, %v5551
        %v6156 = vpack.c.b16 %v5556, %v5552
        %v6157 = vpack.c.b16 %v5557, %v5553
        %v6158 = vpack.c.b16 %v5562, %v5558
        %v6159 = vpack.c.b16 %v5563, %v5559
        %v6160 = vpack.c.b16 %v5564, %v5560
        %v6161 = vpack.c.b16 %v5565, %v5561
        %v6162 = vpack.c.b16 %v5570, %v5566
        %v6163 = vpack.c.b16 %v5571, %v5567
        %v6164 = vpack.c.b16 %v5572, %v5568
        %v6165 = vpack.c.b16 %v5573, %v5569
        %v6166 = vpack.c.b16 %v5578, %v5574
        %v6167 = vpack.c.b16 %v5579, %v5575
        %v6168 = vpack.c.b16 %v5580, %v5576
        %v6169 = vpack.c.b16 %v5581, %v5577
        %v6170 = vpack.c.b16 %v5586, %v5582
        %v6171 = vpack.c.b16 %v5587, %v5583
        %v6172 = vpack.c.b16 %v5588, %v5584
        %v6173 = vpack.c.b16 %v5589, %v5585
        %v6174 = vpack.c.b16 %v5594, %v5590
        %v6175 = vpack.c.b16 %v5595, %v5591
        %v6176 = vpack.c.b16 %v5596, %v5592
        %v6177 = vpack.c.b16 %v5597, %v5593
        %v6178 = vpack.c.b16 %v5602, %v5598
        %v6179 = vpack.c.b16 %v5603, %v5599
        %v6180 = vpack.c.b16 %v5604, %v5600
        %v6181 = vpack.c.b16 %v5605, %v5601
        %v6182 = vpack.c.b16 %v5610, %v5606
        %v6183 = vpack.c.b16 %v5611, %v5607
        %v6184 = vpack.c.b16 %v5612, %v5608
        %v6185 = vpack.c.b16 %v5613, %v5609
        %v6186 = vpack.c.b16 %v5618, %v5614
        %v6187 = vpack.c.b16 %v5619, %v5615
        %v6188 = vpack.c.b16 %v5620, %v5616
        %v6189 = vpack.c.b16 %v5621, %v5617
        %v6190 = vpack.c.b16 %v5626, %v5622
        %v6191 = vpack.c.b16 %v5627, %v5623
        %v6192 = vpack.c.b16 %v5628, %v5624
        %v6193 = vpack.c.b16 %v5629, %v5625
        %v6194 = vpack.c.b16 %v5634, %v5630
        %v6195 = vpack.c.b16 %v5635, %v5631
        %v6196 = vpack.c.b16 %v5636, %v5632
        %v6197 = vpack.c.b16 %v5637, %v5633
        %v6198 = vpack.c.b16 %v5642, %v5638
        %v6199 = vpack.c.b16 %v5643, %v5639
        %v6200 = vpack.c.b16 %v5644, %v5640
        %v6201 = vpack.c.b16 %v5645, %v5641
        %v6202 = vpack.c.b16 %v5650, %v5646
        %v6203 = vpack.c.b16 %v5651, %v5647
        %v6204 = vpack.c.b16 %v5652, %v5648
        %v6205 = vpack.c.b16 %v5653, %v5649
        %v6206 = vpack.c.b16 %v5658, %v5654
        %v6207 = vpack.c.b16 %v5659, %v5655
        %v6208 = vpack.c.b16 %v5660, %v5656
        %v6209 = vpack.c.b16 %v5661, %v5657
        %v6210 = vpack.c.b16 %v5666, %v5662
        %v6211 = vpack.c.b16 %v5667, %v5663
        %v6212 = vpack.c.b16 %v5668, %v5664
        %v6213 = vpack.c.b16 %v5669, %v5665
        %v6214 = vpack.c.b16 %v5674, %v5670
        %v6215 = vpack.c.b16 %v5675, %v5671
        %v6216 = vpack.c.b16 %v5676, %v5672
        %v6217 = vpack.c.b16 %v5677, %v5673
        %v6218 = vpack.c.b16 %v5682, %v5678
        %v6219 = vpack.c.b16 %v5683, %v5679
        %v6220 = vpack.c.b16 %v5684, %v5680
        %v6221 = vpack.c.b16 %v5685, %v5681
        %v6222 = vpack.c.b16 %v5690, %v5686
        %v6223 = vpack.c.b16 %v5691, %v5687
        %v6224 = vpack.c.b16 %v5692, %v5688
        %v6225 = vpack.c.b16 %v5693, %v5689
        %v6226 = vpack.c.b16 %v5698, %v5694
        %v6227 = vpack.c.b16 %v5699, %v5695
        %v6228 = vpack.c.b16 %v5700, %v5696
        %v6229 = vpack.c.b16 %v5701, %v5697
        %v6230 = vpack.c.b16 %v5706, %v5702
        %v6231 = vpack.c.b16 %v5707, %v5703
        %v6232 = vpack.c.b16 %v5708, %v5704
        %v6233 = vpack.c.b16 %v5709, %v5705
        %v6234 = vpack.c.b16 %v5714, %v5710
        %v6235 = vpack.c.b16 %v5715, %v5711
        %v6236 = vpack.c.b16 %v5716, %v5712
        %v6237 = vpack.c.b16 %v5717, %v5713
        %v6238 = vpack.c.b16 %v5722, %v5718
        %v6239 = vpack.c.b16 %v5723, %v5719
        %v6240 = vpack.c.b16 %v5724, %v5720
        %v6241 = vpack.c.b16 %v5725, %v5721
        %v6242 = vpack.c.b16 %v5730, %v5726
        %v6243 = vpack.c.b16 %v5731, %v5727
        %v6244 = vpack.c.b16 %v5732, %v5728
        %v6245 = vpack.c.b16 %v5733, %v5729
        %v6246 = vpack.c.b16 %v5738, %v5734
        %v6247 = vpack.c.b16 %v5739, %v5735
        %v6248 = vpack.c.b16 %v5740, %v5736
        %v6249 = vpack.c.b16 %v5741, %v5737
        %v6250 = vpack.c.b16 %v5746, %v5742
        %v6251 = vpack.c.b16 %v5747, %v5743
        %v6252 = vpack.c.b16 %v5748, %v5744
        %v6253 = vpack.c.b16 %v5749, %v5745
        %v6254 = vpack.c.b16 %v5754, %v5750
        %v6255 = vpack.c.b16 %v5755, %v5751
        %v6256 = vpack.c.b16 %v5756, %v5752
        %v6257 = vpack.c.b16 %v5757, %v5753
        %v6258 = vpack.c.b16 %v5762, %v5758
        %v6259 = vpack.c.b16 %v5763, %v5759
        %v6260 = vpack.c.b16 %v5764, %v5760
        %v6261 = vpack.c.b16 %v5765, %v5761
        %v6262 = vpack.c.b16 %v5770, %v5766
        %v6263 = vpack.c.b16 %v5771, %v5767
        %v6264 = vpack.c.b16 %v5772, %v5768
        %v6265 = vpack.c.b16 %v5773, %v5769
        %v6266 = vpack.c.b16 %v5778, %v5774
        %v6267 = vpack.c.b16 %v5779, %v5775
        %v6268 = vpack.c.b16 %v5780, %v5776
        %v6269 = vpack.c.b16 %v5781, %v5777
        %v6270 = vpack.c.b16 %v5786, %v5782
        %v6271 = vpack.c.b16 %v5787, %v5783
        %v6272 = vpack.c.b16 %v5788, %v5784
        %v6273 = vpack.c.b16 %v5789, %v5785
        %v6274 = vpack.c.b16 %v5794, %v5790
        %v6275 = vpack.c.b16 %v5795, %v5791
        %v6276 = vpack.c.b16 %v5796, %v5792
        %v6277 = vpack.c.b16 %v5797, %v5793
        %v6278 = vpack.c.b16 %v5802, %v5798
        %v6279 = vpack.c.b16 %v5803, %v5799
        %v6280 = vpack.c.b16 %v5804, %v5800
        %v6281 = vpack.c.b16 %v5805, %v5801
        %v6282 = vpack.c.b16 %v5810, %v5806
        %v6283 = vpack.c.b16 %v5811, %v5807
        %v6284 = vpack.c.b16 %v5812, %v5808
        %v6285 = vpack.c.b16 %v5813, %v5809
        %v6286 = vpack.c.b16 %v5818, %v5814
        %v6287 = vpack.c.b16 %v5819, %v5815
        %v6288 = vpack.c.b16 %v5820, %v5816
        %v6289 = vpack.c.b16 %v5821, %v5817
        %v6290 = vpack.c.b16 %v5826, %v5822
        %v6291 = vpack.c.b16 %v5827, %v5823
        %v6292 = vpack.c.b16 %v5828, %v5824
        %v6293 = vpack.c.b16 %v5829, %v5825
        %v6294 = vpack.c.b16 %v5834, %v5830
        %v6295 = vpack.c.b16 %v5835, %v5831
        %v6296 = vpack.c.b16 %v5836, %v5832
        %v6297 = vpack.c.b16 %v5837, %v5833
        %v6298 = vpack.c.b16 %v5842, %v5838
        %v6299 = vpack.c.b16 %v5843, %v5839
        %v6300 = vpack.c.b16 %v5844, %v5840
        %v6301 = vpack.c.b16 %v5845, %v5841
        %v6302 = vpack.c.b16 %v5850, %v5846
        %v6303 = vpack.c.b16 %v5851, %v5847
        %v6304 = vpack.c.b16 %v5852, %v5848
        %v6305 = vpack.c.b16 %v5853, %v5849
        %v6306 = vpack.c.b16 %v5858, %v5854
        %v6307 = vpack.c.b16 %v5859, %v5855
        %v6308 = vpack.c.b16 %v5860, %v5856
        %v6309 = vpack.c.b16 %v5861, %v5857
        %v6310 = vpack.c.b16 %v5866, %v5862
        %v6311 = vpack.c.b16 %v5867, %v5863
        %v6312 = vpack.c.b16 %v5868, %v5864
        %v6313 = vpack.c.b16 %v5869, %v5865
        %v6314 = vpack.c.b16 %v5874, %v5870
        %v6315 = vpack.c.b16 %v5875, %v5871
        %v6316 = vpack.c.b16 %v5876, %v5872
        %v6317 = vpack.c.b16 %v5877, %v5873
        %v6318 = vpack.c.b16 %v5882, %v5878
        %v6319 = vpack.c.b16 %v5883, %v5879
        %v6320 = vpack.c.b16 %v5884, %v5880
        %v6321 = vpack.c.b16 %v5885, %v5881
        %v6322 = vpack.c.b16 %v5890, %v5886
        %v6323 = vpack.c.b16 %v5891, %v5887
        %v6324 = vpack.c.b16 %v5892, %v5888
        %v6325 = vpack.c.b16 %v5893, %v5889
        %v6326 = vpack.c.b16 %v5898, %v5894
        %v6327 = vpack.c.b16 %v5899, %v5895
        %v6328 = vpack.c.b16 %v5900, %v5896
        %v6329 = vpack.c.b16 %v5901, %v5897
        %v6330 = vpack.c.b16 %v5906, %v5902
        %v6331 = vpack.c.b16 %v5907, %v5903
        %v6332 = vpack.c.b16 %v5908, %v5904
        %v6333 = vpack.c.b16 %v5909, %v5905
        %v6334 = vpack.c.b16 %v5914, %v5910
        %v6335 = vpack.c.b16 %v5915, %v5911
        %v6336 = vpack.c.b16 %v5916, %v5912
        %v6337 = vpack.c.b16 %v5917, %v5913
        %v6338 = vpack.c.b16 %v5922, %v5918
        %v6339 = vpack.c.b16 %v5923, %v5919
        %v6340 = vpack.c.b16 %v5924, %v5920
        %v6341 = vpack.c.b16 %v5925, %v5921
        %v6342 = vpack.c.b16 %v5930, %v5926
        %v6343 = vpack.c.b16 %v5931, %v5927
        %v6344 = vpack.c.b16 %v5932, %v5928
        %v6345 = vpack.c.b16 %v5933, %v5929
        %v6346 = vpack.c.b16 %v5938, %v5934
        %v6347 = vpack.c.b16 %v5939, %v5935
        %v6348 = vpack.c.b16 %v5940, %v5936
        %v6349 = vpack.c.b16 %v5941, %v5937
        %v6350 = vpack.c.b16 %v5946, %v5942
        %v6351 = vpack.c.b16 %v5947, %v5943
        %v6352 = vpack.c.b16 %v5948, %v5944
        %v6353 = vpack.c.b16 %v5949, %v5945
        %v6354 = vpack.c.b16 %v5954, %v5950
        %v6355 = vpack.c.b16 %v5955, %v5951
        %v6356 = vpack.c.b16 %v5956, %v5952
        %v6357 = vpack.c.b16 %v5957, %v5953
        %v6358 = vpack.c.b16 %v5962, %v5958
        %v6359 = vpack.c.b16 %v5963, %v5959
        %v6360 = vpack.c.b16 %v5964, %v5960
        %v6361 = vpack.c.b16 %v5965, %v5961
        %v6362 = vpack.c.b16 %v5970, %v5966
        %v6363 = vpack.c.b16 %v5971, %v5967
        %v6364 = vpack.c.b16 %v5972, %v5968
        %v6365 = vpack.c.b16 %v5973, %v5969
        %v6366 = vpack.c.b16 %v5978, %v5974
        %v6367 = vpack.c.b16 %v5979, %v5975
        %v6368 = vpack.c.b16 %v5980, %v5976
        %v6369 = vpack.c.b16 %v5981, %v5977
        %v6370 = vpack.c.b16 %v5986, %v5982
        %v6371 = vpack.c.b16 %v5987, %v5983
        %v6372 = vpack.c.b16 %v5988, %v5984
        %v6373 = vpack.c.b16 %v5989, %v5985
        %6758 = vmatpush.bf16.msra.mxu0 %v6018
        %6759 = vmatpush.bf16.msra.mxu0 %v6014
        %6760 = vmatpush.bf16.msra.mxu0 %v6010
        %6761 = vmatpush.bf16.msra.mxu0 %v6006
        %6762 = vmatpush.bf16.msra.mxu0 %v6002
        %6763 = vmatpush.bf16.msra.mxu0 %v5998
        %6764 = vmatpush.bf16.msra.mxu0 %v5994
        %6765 = vmatpush.bf16.msra.mxu0 %v5990
        %6766 = vmatmul.bf16.gmra.mxu0 %v4274
        %v6767 = vpop.f32.mrf.mxu0
        %v6768 = vadd.f32 0.0, %v6767
        %v6769 = vpop.f32.mrf.mxu0
        %v6770 = vadd.f32 0.0, %v6769
        %6771 = vmatmul.bf16.gmra.mxu0 %v4278
        %v6772 = vpop.f32.mrf.mxu0
        %v6773 = vadd.f32 0.0, %v6772
        %v6774 = vpop.f32.mrf.mxu0
        %v6775 = vadd.f32 0.0, %v6774
        %6776 = vmatmul.bf16.gmra.mxu0 %v4282
        %v6777 = vpop.f32.mrf.mxu0
        %v6778 = vadd.f32 0.0, %v6777
        %v6779 = vpop.f32.mrf.mxu0
        %6780 = vdwg.mxu0
        %6781 = vmatpush.bf16.msra.mxu0 %v6050
        %6782 = vmatpush.bf16.msra.mxu0 %v6046
        %6783 = vmatpush.bf16.msra.mxu0 %v6042
        %6784 = vmatpush.bf16.msra.mxu0 %v6038
        %6785 = vmatpush.bf16.msra.mxu0 %v6034
        %6786 = vmatpush.bf16.msra.mxu0 %v6030
        %6787 = vmatpush.bf16.msra.mxu0 %v6026
        %6788 = vmatpush.bf16.msra.mxu0 %v6022
        %6789 = vmatmul.bf16.gmra.mxu0 %v4275
        %v6790 = vpop.f32.mrf.mxu0
        %v6791 = vadd.f32 %v6768, %v6790
        %v6792 = vpop.f32.mrf.mxu0
        %v6793 = vadd.f32 %v6770, %v6792
        %6794 = vmatmul.bf16.gmra.mxu0 %v4279
        %v6795 = vpop.f32.mrf.mxu0
        %v6796 = vadd.f32 %v6773, %v6795
        %v6797 = vpop.f32.mrf.mxu0
        %v6798 = vadd.f32 %v6775, %v6797
        %6799 = vmatmul.bf16.gmra.mxu0 %v4283
        %v6800 = vpop.f32.mrf.mxu0
        %v6801 = vadd.f32 %v6778, %v6800
        %v6802 = vpop.f32.mrf.mxu0
        %6803 = vdwg.mxu0
        %6804 = vmatpush.bf16.msra.mxu0 %v6082
        %6805 = vmatpush.bf16.msra.mxu0 %v6078
        %6806 = vmatpush.bf16.msra.mxu0 %v6074
        %6807 = vmatpush.bf16.msra.mxu0 %v6070
        %6808 = vmatpush.bf16.msra.mxu0 %v6066
        %6809 = vmatpush.bf16.msra.mxu0 %v6062
        %6810 = vmatpush.bf16.msra.mxu0 %v6058
        %6811 = vmatpush.bf16.msra.mxu0 %v6054
        %6812 = vmatmul.bf16.gmra.mxu0 %v4276
        %v6813 = vpop.f32.mrf.mxu0
        %v6814 = vadd.f32 %v6791, %v6813
        %v6815 = vpop.f32.mrf.mxu0
        %v6816 = vadd.f32 %v6793, %v6815
        %6817 = vmatmul.bf16.gmra.mxu0 %v4280
        %v6818 = vpop.f32.mrf.mxu0
        %v6819 = vadd.f32 %v6796, %v6818
        %v6820 = vpop.f32.mrf.mxu0
        %v6821 = vadd.f32 %v6798, %v6820
        %6822 = vmatmul.bf16.gmra.mxu0 %v4284
        %v6823 = vpop.f32.mrf.mxu0
        %v6824 = vadd.f32 %v6801, %v6823
        %v6825 = vpop.f32.mrf.mxu0
        %6826 = vdwg.mxu0
        %6827 = vmatpush.bf16.msra.mxu0 %v6114
        %6828 = vmatpush.bf16.msra.mxu0 %v6110
        %6829 = vmatpush.bf16.msra.mxu0 %v6106
        %6830 = vmatpush.bf16.msra.mxu0 %v6102
        %6831 = vmatpush.bf16.msra.mxu0 %v6098
        %6832 = vmatpush.bf16.msra.mxu0 %v6094
        %6833 = vmatpush.bf16.msra.mxu0 %v6090
        %6834 = vmatpush.bf16.msra.mxu0 %v6086
        %6835 = vmatmul.bf16.gmra.mxu0 %v4277
        %v6836 = vpop.f32.mrf.mxu0
        %v6837 = vadd.f32 %v6814, %v6836
        %v6838 = vpop.f32.mrf.mxu0
        %v6839 = vadd.f32 %v6816, %v6838
        %6840 = vmatmul.bf16.gmra.mxu0 %v4281
        %v6841 = vpop.f32.mrf.mxu0
        %v6842 = vadd.f32 %v6819, %v6841
        %v6843 = vpop.f32.mrf.mxu0
        %v6844 = vadd.f32 %v6821, %v6843
        %6845 = vmatmul.bf16.gmra.mxu0 %v4285
        %v6846 = vpop.f32.mrf.mxu0
        %v6847 = vadd.f32 %v6824, %v6846
        %v6848 = vpop.f32.mrf.mxu0
        %6849 = vdwg.mxu0
        %6850 = vmatpush.bf16.msra.mxu0 %v6146
        %6851 = vmatpush.bf16.msra.mxu0 %v6142
        %6852 = vmatpush.bf16.msra.mxu0 %v6138
        %6853 = vmatpush.bf16.msra.mxu0 %v6134
        %6854 = vmatpush.bf16.msra.mxu0 %v6130
        %6855 = vmatpush.bf16.msra.mxu0 %v6126
        %6856 = vmatpush.bf16.msra.mxu0 %v6122
        %6857 = vmatpush.bf16.msra.mxu0 %v6118
        %6858 = vmatmul.bf16.gmra.mxu0 %v4319
        %v6859 = vpop.f32.mrf.mxu0
        %v6860 = vadd.f32 %v6837, %v6859
        %v6861 = vpop.f32.mrf.mxu0
        %v6862 = vadd.f32 %v6839, %v6861
        %6863 = vmatmul.bf16.gmra.mxu0 %v4363
        %v6864 = vpop.f32.mrf.mxu0
        %v6865 = vadd.f32 %v6842, %v6864
        %v6866 = vpop.f32.mrf.mxu0
        %v6867 = vadd.f32 %v6844, %v6866
        %6868 = vmatmul.bf16.gmra.mxu0 %v4390
        %v6869 = vpop.f32.mrf.mxu0
        %v6870 = vadd.f32 %v6847, %v6869
        %v6871 = vpop.f32.mrf.mxu0
        %6872 = vdwg.mxu0
        %6873 = vmatpush.bf16.msra.mxu0 %v6178
        %6874 = vmatpush.bf16.msra.mxu0 %v6174
        %6875 = vmatpush.bf16.msra.mxu0 %v6170
        %6876 = vmatpush.bf16.msra.mxu0 %v6166
        %6877 = vmatpush.bf16.msra.mxu0 %v6162
        %6878 = vmatpush.bf16.msra.mxu0 %v6158
        %6879 = vmatpush.bf16.msra.mxu0 %v6154
        %6880 = vmatpush.bf16.msra.mxu0 %v6150
        %6881 = vmatmul.bf16.gmra.mxu0 %v4331
        %v6882 = vpop.f32.mrf.mxu0
        %v6883 = vadd.f32 %v6860, %v6882
        %v6884 = vpop.f32.mrf.mxu0
        %v6885 = vadd.f32 %v6862, %v6884
        %6886 = vmatmul.bf16.gmra.mxu0 %v4371
        %v6887 = vpop.f32.mrf.mxu0
        %v6888 = vadd.f32 %v6865, %v6887
        %v6889 = vpop.f32.mrf.mxu0
        %v6890 = vadd.f32 %v6867, %v6889
        %6891 = vmatmul.bf16.gmra.mxu0 %v4393
        %v6892 = vpop.f32.mrf.mxu0
        %v6893 = vadd.f32 %v6870, %v6892
        %v6894 = vpop.f32.mrf.mxu0
        %6895 = vdwg.mxu0
        %6896 = vmatpush.bf16.msra.mxu0 %v6210
        %6897 = vmatpush.bf16.msra.mxu0 %v6206
        %6898 = vmatpush.bf16.msra.mxu0 %v6202
        %6899 = vmatpush.bf16.msra.mxu0 %v6198
        %6900 = vmatpush.bf16.msra.mxu0 %v6194
        %6901 = vmatpush.bf16.msra.mxu0 %v6190
        %6902 = vmatpush.bf16.msra.mxu0 %v6186
        %6903 = vmatpush.bf16.msra.mxu0 %v6182
        %6904 = vmatmul.bf16.gmra.mxu0 %v4343
        %v6905 = vpop.f32.mrf.mxu0
        %v6906 = vadd.f32 %v6883, %v6905
        %v6907 = vpop.f32.mrf.mxu0
        %v6908 = vadd.f32 %v6885, %v6907
        %6909 = vmatmul.bf16.gmra.mxu0 %v4379
        %v6910 = vpop.f32.mrf.mxu0
        %v6911 = vadd.f32 %v6888, %v6910
        %v6912 = vpop.f32.mrf.mxu0
        %v6913 = vadd.f32 %v6890, %v6912
        %6914 = vmatmul.bf16.gmra.mxu0 %v4396
        %v6915 = vpop.f32.mrf.mxu0
        %v6916 = vadd.f32 %v6893, %v6915
        %v6917 = vpop.f32.mrf.mxu0
        %6918 = vdwg.mxu0
        %6919 = vmatpush.bf16.msra.mxu0 %v6242
        %6920 = vmatpush.bf16.msra.mxu0 %v6238
        %6921 = vmatpush.bf16.msra.mxu0 %v6234
        %6922 = vmatpush.bf16.msra.mxu0 %v6230
        %6923 = vmatpush.bf16.msra.mxu0 %v6226
        %6924 = vmatpush.bf16.msra.mxu0 %v6222
        %6925 = vmatpush.bf16.msra.mxu0 %v6218
        %6926 = vmatpush.bf16.msra.mxu0 %v6214
        %6927 = vmatmul.bf16.gmra.mxu0 %v4355
        %v6928 = vpop.f32.mrf.mxu0
        %v6929 = vadd.f32 %v6906, %v6928
        %v6930 = vpop.f32.mrf.mxu0
        %v6931 = vadd.f32 %v6908, %v6930
        %6932 = vmatmul.bf16.gmra.mxu0 %v4387
        %v6933 = vpop.f32.mrf.mxu0
        %v6934 = vadd.f32 %v6911, %v6933
        %v6935 = vpop.f32.mrf.mxu0
        %v6936 = vadd.f32 %v6913, %v6935
        %6937 = vmatmul.bf16.gmra.mxu0 %v4399
        %v6938 = vpop.f32.mrf.mxu0
        %v6939 = vadd.f32 %v6916, %v6938
        %v6940 = vpop.f32.mrf.mxu0
        %6941 = vdwg.mxu0
        %6942 = vmatpush.bf16.msra.mxu0 %v6274
        %6943 = vmatpush.bf16.msra.mxu0 %v6270
        %6944 = vmatpush.bf16.msra.mxu0 %v6266
        %6945 = vmatpush.bf16.msra.mxu0 %v6262
        %6946 = vmatpush.bf16.msra.mxu0 %v6258
        %6947 = vmatpush.bf16.msra.mxu0 %v6254
        %6948 = vmatpush.bf16.msra.mxu0 %v6250
        %6949 = vmatpush.bf16.msra.mxu0 %v6246
        %6950 = vmatmul.bf16.gmra.mxu0 %v4424
        %v6951 = vpop.f32.mrf.mxu0
        %v6952 = vadd.f32 %v6929, %v6951
        %v6953 = vpop.f32.mrf.mxu0
        %v6954 = vadd.f32 %v6931, %v6953
        %6955 = vmatmul.bf16.gmra.mxu0 %v4435
        %v6956 = vpop.f32.mrf.mxu0
        %v6957 = vadd.f32 %v6934, %v6956
        %v6958 = vpop.f32.mrf.mxu0
        %v6959 = vadd.f32 %v6936, %v6958
        %6960 = vmatmul.bf16.gmra.mxu0 %v4434
        %v6961 = vpop.f32.mrf.mxu0
        %v6962 = vadd.f32 %v6939, %v6961
        %v6963 = vpop.f32.mrf.mxu0
        %6964 = vdwg.mxu0
        %6965 = vmatpush.bf16.msra.mxu0 %v6306
        %6966 = vmatpush.bf16.msra.mxu0 %v6302
        %6967 = vmatpush.bf16.msra.mxu0 %v6298
        %6968 = vmatpush.bf16.msra.mxu0 %v6294
        %6969 = vmatpush.bf16.msra.mxu0 %v6290
        %6970 = vmatpush.bf16.msra.mxu0 %v6286
        %6971 = vmatpush.bf16.msra.mxu0 %v6282
        %6972 = vmatpush.bf16.msra.mxu0 %v6278
        %6973 = vmatmul.bf16.gmra.mxu0 %v4427
        %v6974 = vpop.f32.mrf.mxu0
        %v6975 = vadd.f32 %v6952, %v6974
        %v6976 = vpop.f32.mrf.mxu0
        %v6977 = vadd.f32 %v6954, %v6976
        %6978 = vmatmul.bf16.gmra.mxu0 %v4437
        %v6979 = vpop.f32.mrf.mxu0
        %v6980 = vadd.f32 %v6957, %v6979
        %v6981 = vpop.f32.mrf.mxu0
        %v6982 = vadd.f32 %v6959, %v6981
        %6983 = vmatmul.bf16.gmra.mxu0 %v4436
        %v6984 = vpop.f32.mrf.mxu0
        %v6985 = vadd.f32 %v6962, %v6984
        %v6986 = vpop.f32.mrf.mxu0
        %6987 = vdwg.mxu0
        %6988 = vmatpush.bf16.msra.mxu0 %v6338
        %6989 = vmatpush.bf16.msra.mxu0 %v6334
        %6990 = vmatpush.bf16.msra.mxu0 %v6330
        %6991 = vmatpush.bf16.msra.mxu0 %v6326
        %6992 = vmatpush.bf16.msra.mxu0 %v6322
        %6993 = vmatpush.bf16.msra.mxu0 %v6318
        %6994 = vmatpush.bf16.msra.mxu0 %v6314
        %6995 = vmatpush.bf16.msra.mxu0 %v6310
        %6996 = vmatmul.bf16.gmra.mxu0 %v4430
        %v6997 = vpop.f32.mrf.mxu0
        %v6998 = vadd.f32 %v6975, %v6997
        %v6999 = vpop.f32.mrf.mxu0
        %v7000 = vadd.f32 %v6977, %v6999
        %7001 = vmatmul.bf16.gmra.mxu0 %v4439
        %v7002 = vpop.f32.mrf.mxu0
        %v7003 = vadd.f32 %v6980, %v7002
        %v7004 = vpop.f32.mrf.mxu0
        %v7005 = vadd.f32 %v6982, %v7004
        %7006 = vmatmul.bf16.gmra.mxu0 %v4438
        %v7007 = vpop.f32.mrf.mxu0
        %v7008 = vadd.f32 %v6985, %v7007
        %v7009 = vpop.f32.mrf.mxu0
        %7010 = vdwg.mxu0
        %7011 = vmatpush.bf16.msra.mxu0 %v6370
        %7012 = vmatpush.bf16.msra.mxu0 %v6366
        %7013 = vmatpush.bf16.msra.mxu0 %v6362
        %7014 = vmatpush.bf16.msra.mxu0 %v6358
        %7015 = vmatpush.bf16.msra.mxu0 %v6354
        %7016 = vmatpush.bf16.msra.mxu0 %v6350
        %7017 = vmatpush.bf16.msra.mxu0 %v6346
        %7018 = vmatpush.bf16.msra.mxu0 %v6342
        %7019 = vmatmul.bf16.gmra.mxu0 %v4433
        %v7020 = vpop.f32.mrf.mxu0
        %v7021 = vadd.f32 %v6998, %v7020
        %v7022 = vpop.f32.mrf.mxu0
        %v7023 = vadd.f32 %v7000, %v7022
        %7024 = vmatmul.bf16.gmra.mxu0 %v4441
        %v7025 = vpop.f32.mrf.mxu0
        %v7026 = vadd.f32 %v7003, %v7025
        %v7027 = vpop.f32.mrf.mxu0
        %v7028 = vadd.f32 %v7005, %v7027
        %7029 = vmatmul.bf16.gmra.mxu0 %v4440
        %v7030 = vpop.f32.mrf.mxu0
        %v7031 = vadd.f32 %v7008, %v7030
        %v7032 = vpop.f32.mrf.mxu0
        %7033 = vdwg.mxu0
        %7034 = vmatpush.bf16.msra.mxu0 %v6019
        %7035 = vmatpush.bf16.msra.mxu0 %v6015
        %7036 = vmatpush.bf16.msra.mxu0 %v6011
        %7037 = vmatpush.bf16.msra.mxu0 %v6007
        %7038 = vmatpush.bf16.msra.mxu0 %v6003
        %7039 = vmatpush.bf16.msra.mxu0 %v5999
        %7040 = vmatpush.bf16.msra.mxu0 %v5995
        %7041 = vmatpush.bf16.msra.mxu0 %v5991
        %7042 = vmatmul.bf16.gmra.mxu0 %v4274
        %v7043 = vpop.f32.mrf.mxu0
        %v7044 = vadd.f32 0.0, %v7043
        %v7045 = vpop.f32.mrf.mxu0
        %v7046 = vadd.f32 0.0, %v7045
        %7047 = vmatmul.bf16.gmra.mxu0 %v4278
        %v7048 = vpop.f32.mrf.mxu0
        %v7049 = vadd.f32 0.0, %v7048
        %v7050 = vpop.f32.mrf.mxu0
        %v7051 = vadd.f32 0.0, %v7050
        %7052 = vmatmul.bf16.gmra.mxu0 %v4282
        %v7053 = vpop.f32.mrf.mxu0
        %v7054 = vadd.f32 0.0, %v7053
        %v7055 = vpop.f32.mrf.mxu0
        %7056 = vdwg.mxu0
        %7057 = vmatpush.bf16.msra.mxu0 %v6051
        %7058 = vmatpush.bf16.msra.mxu0 %v6047
        %7059 = vmatpush.bf16.msra.mxu0 %v6043
        %7060 = vmatpush.bf16.msra.mxu0 %v6039
        %7061 = vmatpush.bf16.msra.mxu0 %v6035
        %7062 = vmatpush.bf16.msra.mxu0 %v6031
        %7063 = vmatpush.bf16.msra.mxu0 %v6027
        %7064 = vmatpush.bf16.msra.mxu0 %v6023
        %7065 = vmatmul.bf16.gmra.mxu0 %v4275
        %v7066 = vpop.f32.mrf.mxu0
        %v7067 = vadd.f32 %v7044, %v7066
        %v7068 = vpop.f32.mrf.mxu0
        %v7069 = vadd.f32 %v7046, %v7068
        %7070 = vmatmul.bf16.gmra.mxu0 %v4279
        %v7071 = vpop.f32.mrf.mxu0
        %v7072 = vadd.f32 %v7049, %v7071
        %v7073 = vpop.f32.mrf.mxu0
        %v7074 = vadd.f32 %v7051, %v7073
        %7075 = vmatmul.bf16.gmra.mxu0 %v4283
        %v7076 = vpop.f32.mrf.mxu0
        %v7077 = vadd.f32 %v7054, %v7076
        %v7078 = vpop.f32.mrf.mxu0
        %7079 = vdwg.mxu0
        %7080 = vmatpush.bf16.msra.mxu0 %v6083
        %7081 = vmatpush.bf16.msra.mxu0 %v6079
        %7082 = vmatpush.bf16.msra.mxu0 %v6075
        %7083 = vmatpush.bf16.msra.mxu0 %v6071
        %7084 = vmatpush.bf16.msra.mxu0 %v6067
        %7085 = vmatpush.bf16.msra.mxu0 %v6063
        %7086 = vmatpush.bf16.msra.mxu0 %v6059
        %7087 = vmatpush.bf16.msra.mxu0 %v6055
        %7088 = vmatmul.bf16.gmra.mxu0 %v4276
        %v7089 = vpop.f32.mrf.mxu0
        %v7090 = vadd.f32 %v7067, %v7089
        %v7091 = vpop.f32.mrf.mxu0
        %v7092 = vadd.f32 %v7069, %v7091
        %7093 = vmatmul.bf16.gmra.mxu0 %v4280
        %v7094 = vpop.f32.mrf.mxu0
        %v7095 = vadd.f32 %v7072, %v7094
        %v7096 = vpop.f32.mrf.mxu0
        %v7097 = vadd.f32 %v7074, %v7096
        %7098 = vmatmul.bf16.gmra.mxu0 %v4284
        %v7099 = vpop.f32.mrf.mxu0
        %v7100 = vadd.f32 %v7077, %v7099
        %v7101 = vpop.f32.mrf.mxu0
        %7102 = vdwg.mxu0
        %7103 = vmatpush.bf16.msra.mxu0 %v6115
        %7104 = vmatpush.bf16.msra.mxu0 %v6111
        %7105 = vmatpush.bf16.msra.mxu0 %v6107
        %7106 = vmatpush.bf16.msra.mxu0 %v6103
        %7107 = vmatpush.bf16.msra.mxu0 %v6099
        %7108 = vmatpush.bf16.msra.mxu0 %v6095
        %7109 = vmatpush.bf16.msra.mxu0 %v6091
        %7110 = vmatpush.bf16.msra.mxu0 %v6087
        %7111 = vmatmul.bf16.gmra.mxu0 %v4277
        %v7112 = vpop.f32.mrf.mxu0
        %v7113 = vadd.f32 %v7090, %v7112
        %v7114 = vpop.f32.mrf.mxu0
        %v7115 = vadd.f32 %v7092, %v7114
        %7116 = vmatmul.bf16.gmra.mxu0 %v4281
        %v7117 = vpop.f32.mrf.mxu0
        %v7118 = vadd.f32 %v7095, %v7117
        %v7119 = vpop.f32.mrf.mxu0
        %v7120 = vadd.f32 %v7097, %v7119
        %7121 = vmatmul.bf16.gmra.mxu0 %v4285
        %v7122 = vpop.f32.mrf.mxu0
        %v7123 = vadd.f32 %v7100, %v7122
        %v7124 = vpop.f32.mrf.mxu0
        %7125 = vdwg.mxu0
        %7126 = vmatpush.bf16.msra.mxu0 %v6147
        %7127 = vmatpush.bf16.msra.mxu0 %v6143
        %7128 = vmatpush.bf16.msra.mxu0 %v6139
        %7129 = vmatpush.bf16.msra.mxu0 %v6135
        %7130 = vmatpush.bf16.msra.mxu0 %v6131
        %7131 = vmatpush.bf16.msra.mxu0 %v6127
        %7132 = vmatpush.bf16.msra.mxu0 %v6123
        %7133 = vmatpush.bf16.msra.mxu0 %v6119
        %7134 = vmatmul.bf16.gmra.mxu0 %v4319
        %v7135 = vpop.f32.mrf.mxu0
        %v7136 = vadd.f32 %v7113, %v7135
        %v7137 = vpop.f32.mrf.mxu0
        %v7138 = vadd.f32 %v7115, %v7137
        %7139 = vmatmul.bf16.gmra.mxu0 %v4363
        %v7140 = vpop.f32.mrf.mxu0
        %v7141 = vadd.f32 %v7118, %v7140
        %v7142 = vpop.f32.mrf.mxu0
        %v7143 = vadd.f32 %v7120, %v7142
        %7144 = vmatmul.bf16.gmra.mxu0 %v4390
        %v7145 = vpop.f32.mrf.mxu0
        %v7146 = vadd.f32 %v7123, %v7145
        %v7147 = vpop.f32.mrf.mxu0
        %7148 = vdwg.mxu0
        %7149 = vmatpush.bf16.msra.mxu0 %v6179
        %7150 = vmatpush.bf16.msra.mxu0 %v6175
        %7151 = vmatpush.bf16.msra.mxu0 %v6171
        %7152 = vmatpush.bf16.msra.mxu0 %v6167
        %7153 = vmatpush.bf16.msra.mxu0 %v6163
        %7154 = vmatpush.bf16.msra.mxu0 %v6159
        %7155 = vmatpush.bf16.msra.mxu0 %v6155
        %7156 = vmatpush.bf16.msra.mxu0 %v6151
        %7157 = vmatmul.bf16.gmra.mxu0 %v4331
        %v7158 = vpop.f32.mrf.mxu0
        %v7159 = vadd.f32 %v7136, %v7158
        %v7160 = vpop.f32.mrf.mxu0
        %v7161 = vadd.f32 %v7138, %v7160
        %7162 = vmatmul.bf16.gmra.mxu0 %v4371
        %v7163 = vpop.f32.mrf.mxu0
        %v7164 = vadd.f32 %v7141, %v7163
        %v7165 = vpop.f32.mrf.mxu0
        %v7166 = vadd.f32 %v7143, %v7165
        %7167 = vmatmul.bf16.gmra.mxu0 %v4393
        %v7168 = vpop.f32.mrf.mxu0
        %v7169 = vadd.f32 %v7146, %v7168
        %v7170 = vpop.f32.mrf.mxu0
        %7171 = vdwg.mxu0
        %7172 = vmatpush.bf16.msra.mxu0 %v6211
        %7173 = vmatpush.bf16.msra.mxu0 %v6207
        %7174 = vmatpush.bf16.msra.mxu0 %v6203
        %7175 = vmatpush.bf16.msra.mxu0 %v6199
        %7176 = vmatpush.bf16.msra.mxu0 %v6195
        %7177 = vmatpush.bf16.msra.mxu0 %v6191
        %7178 = vmatpush.bf16.msra.mxu0 %v6187
        %7179 = vmatpush.bf16.msra.mxu0 %v6183
        %7180 = vmatmul.bf16.gmra.mxu0 %v4343
        %v7181 = vpop.f32.mrf.mxu0
        %v7182 = vadd.f32 %v7159, %v7181
        %v7183 = vpop.f32.mrf.mxu0
        %v7184 = vadd.f32 %v7161, %v7183
        %7185 = vmatmul.bf16.gmra.mxu0 %v4379
        %v7186 = vpop.f32.mrf.mxu0
        %v7187 = vadd.f32 %v7164, %v7186
        %v7188 = vpop.f32.mrf.mxu0
        %v7189 = vadd.f32 %v7166, %v7188
        %7190 = vmatmul.bf16.gmra.mxu0 %v4396
        %v7191 = vpop.f32.mrf.mxu0
        %v7192 = vadd.f32 %v7169, %v7191
        %v7193 = vpop.f32.mrf.mxu0
        %7194 = vdwg.mxu0
        %7195 = vmatpush.bf16.msra.mxu0 %v6243
        %7196 = vmatpush.bf16.msra.mxu0 %v6239
        %7197 = vmatpush.bf16.msra.mxu0 %v6235
        %7198 = vmatpush.bf16.msra.mxu0 %v6231
        %7199 = vmatpush.bf16.msra.mxu0 %v6227
        %7200 = vmatpush.bf16.msra.mxu0 %v6223
        %7201 = vmatpush.bf16.msra.mxu0 %v6219
        %7202 = vmatpush.bf16.msra.mxu0 %v6215
        %7203 = vmatmul.bf16.gmra.mxu0 %v4355
        %v7204 = vpop.f32.mrf.mxu0
        %v7205 = vadd.f32 %v7182, %v7204
        %v7206 = vpop.f32.mrf.mxu0
        %v7207 = vadd.f32 %v7184, %v7206
        %7208 = vmatmul.bf16.gmra.mxu0 %v4387
        %v7209 = vpop.f32.mrf.mxu0
        %v7210 = vadd.f32 %v7187, %v7209
        %v7211 = vpop.f32.mrf.mxu0
        %v7212 = vadd.f32 %v7189, %v7211
        %7213 = vmatmul.bf16.gmra.mxu0 %v4399
        %v7214 = vpop.f32.mrf.mxu0
        %v7215 = vadd.f32 %v7192, %v7214
        %v7216 = vpop.f32.mrf.mxu0
        %7217 = vdwg.mxu0
        %7218 = vmatpush.bf16.msra.mxu0 %v6275
        %7219 = vmatpush.bf16.msra.mxu0 %v6271
        %7220 = vmatpush.bf16.msra.mxu0 %v6267
        %7221 = vmatpush.bf16.msra.mxu0 %v6263
        %7222 = vmatpush.bf16.msra.mxu0 %v6259
        %7223 = vmatpush.bf16.msra.mxu0 %v6255
        %7224 = vmatpush.bf16.msra.mxu0 %v6251
        %7225 = vmatpush.bf16.msra.mxu0 %v6247
        %7226 = vmatmul.bf16.gmra.mxu0 %v4424
        %v7227 = vpop.f32.mrf.mxu0
        %v7228 = vadd.f32 %v7205, %v7227
        %v7229 = vpop.f32.mrf.mxu0
        %v7230 = vadd.f32 %v7207, %v7229
        %7231 = vmatmul.bf16.gmra.mxu0 %v4435
        %v7232 = vpop.f32.mrf.mxu0
        %v7233 = vadd.f32 %v7210, %v7232
        %v7234 = vpop.f32.mrf.mxu0
        %v7235 = vadd.f32 %v7212, %v7234
        %7236 = vmatmul.bf16.gmra.mxu0 %v4434
        %v7237 = vpop.f32.mrf.mxu0
        %v7238 = vadd.f32 %v7215, %v7237
        %v7239 = vpop.f32.mrf.mxu0
        %7240 = vdwg.mxu0
        %7241 = vmatpush.bf16.msra.mxu0 %v6307
        %7242 = vmatpush.bf16.msra.mxu0 %v6303
        %7243 = vmatpush.bf16.msra.mxu0 %v6299
        %7244 = vmatpush.bf16.msra.mxu0 %v6295
        %7245 = vmatpush.bf16.msra.mxu0 %v6291
        %7246 = vmatpush.bf16.msra.mxu0 %v6287
        %7247 = vmatpush.bf16.msra.mxu0 %v6283
        %7248 = vmatpush.bf16.msra.mxu0 %v6279
        %7249 = vmatmul.bf16.gmra.mxu0 %v4427
        %v7250 = vpop.f32.mrf.mxu0
        %v7251 = vadd.f32 %v7228, %v7250
        %v7252 = vpop.f32.mrf.mxu0
        %v7253 = vadd.f32 %v7230, %v7252
        %7254 = vmatmul.bf16.gmra.mxu0 %v4437
        %v7255 = vpop.f32.mrf.mxu0
        %v7256 = vadd.f32 %v7233, %v7255
        %v7257 = vpop.f32.mrf.mxu0
        %v7258 = vadd.f32 %v7235, %v7257
        %7259 = vmatmul.bf16.gmra.mxu0 %v4436
        %v7260 = vpop.f32.mrf.mxu0
        %v7261 = vadd.f32 %v7238, %v7260
        %v7262 = vpop.f32.mrf.mxu0
        %7263 = vdwg.mxu0
        %7264 = vmatpush.bf16.msra.mxu0 %v6339
        %7265 = vmatpush.bf16.msra.mxu0 %v6335
        %7266 = vmatpush.bf16.msra.mxu0 %v6331
        %7267 = vmatpush.bf16.msra.mxu0 %v6327
        %7268 = vmatpush.bf16.msra.mxu0 %v6323
        %7269 = vmatpush.bf16.msra.mxu0 %v6319
        %7270 = vmatpush.bf16.msra.mxu0 %v6315
        %7271 = vmatpush.bf16.msra.mxu0 %v6311
        %7272 = vmatmul.bf16.gmra.mxu0 %v4430
        %v7273 = vpop.f32.mrf.mxu0
        %v7274 = vadd.f32 %v7251, %v7273
        %v7275 = vpop.f32.mrf.mxu0
        %v7276 = vadd.f32 %v7253, %v7275
        %7277 = vmatmul.bf16.gmra.mxu0 %v4439
        %v7278 = vpop.f32.mrf.mxu0
        %v7279 = vadd.f32 %v7256, %v7278
        %v7280 = vpop.f32.mrf.mxu0
        %v7281 = vadd.f32 %v7258, %v7280
        %7282 = vmatmul.bf16.gmra.mxu0 %v4438
        %v7283 = vpop.f32.mrf.mxu0
        %v7284 = vadd.f32 %v7261, %v7283
        %v7285 = vpop.f32.mrf.mxu0
        %7286 = vdwg.mxu0
        %7287 = vmatpush.bf16.msra.mxu0 %v6371
        %7288 = vmatpush.bf16.msra.mxu0 %v6367
        %7289 = vmatpush.bf16.msra.mxu0 %v6363
        %7290 = vmatpush.bf16.msra.mxu0 %v6359
        %7291 = vmatpush.bf16.msra.mxu0 %v6355
        %7292 = vmatpush.bf16.msra.mxu0 %v6351
        %7293 = vmatpush.bf16.msra.mxu0 %v6347
        %7294 = vmatpush.bf16.msra.mxu0 %v6343
        %7295 = vmatmul.bf16.gmra.mxu0 %v4433
        %v7296 = vpop.f32.mrf.mxu0
        %v7297 = vadd.f32 %v7274, %v7296
        %v7298 = vpop.f32.mrf.mxu0
        %v7299 = vadd.f32 %v7276, %v7298
        %7300 = vmatmul.bf16.gmra.mxu0 %v4441
        %v7301 = vpop.f32.mrf.mxu0
        %v7302 = vadd.f32 %v7279, %v7301
        %v7303 = vpop.f32.mrf.mxu0
        %v7304 = vadd.f32 %v7281, %v7303
        %7305 = vmatmul.bf16.gmra.mxu0 %v4440
        %v7306 = vpop.f32.mrf.mxu0
        %v7307 = vadd.f32 %v7284, %v7306
        %v7308 = vpop.f32.mrf.mxu0
        %7309 = vdwg.mxu0
        %7310 = vmatpush.bf16.msra.mxu0 %v6020
        %7311 = vmatpush.bf16.msra.mxu0 %v6016
        %7312 = vmatpush.bf16.msra.mxu0 %v6012
        %7313 = vmatpush.bf16.msra.mxu0 %v6008
        %7314 = vmatpush.bf16.msra.mxu0 %v6004
        %7315 = vmatpush.bf16.msra.mxu0 %v6000
        %7316 = vmatpush.bf16.msra.mxu0 %v5996
        %7317 = vmatpush.bf16.msra.mxu0 %v5992
        %7318 = vmatmul.bf16.gmra.mxu0 %v4274
        %v7319 = vpop.f32.mrf.mxu0
        %v7320 = vadd.f32 0.0, %v7319
        %v7321 = vpop.f32.mrf.mxu0
        %v7322 = vadd.f32 0.0, %v7321
        %7323 = vmatmul.bf16.gmra.mxu0 %v4278
        %v7324 = vpop.f32.mrf.mxu0
        %v7325 = vadd.f32 0.0, %v7324
        %v7326 = vpop.f32.mrf.mxu0
        %v7327 = vadd.f32 0.0, %v7326
        %7328 = vmatmul.bf16.gmra.mxu0 %v4282
        %v7329 = vpop.f32.mrf.mxu0
        %v7330 = vadd.f32 0.0, %v7329
        %v7331 = vpop.f32.mrf.mxu0
        %7332 = vdwg.mxu0
        %7333 = vmatpush.bf16.msra.mxu0 %v6052
        %7334 = vmatpush.bf16.msra.mxu0 %v6048
        %7335 = vmatpush.bf16.msra.mxu0 %v6044
        %7336 = vmatpush.bf16.msra.mxu0 %v6040
        %7337 = vmatpush.bf16.msra.mxu0 %v6036
        %7338 = vmatpush.bf16.msra.mxu0 %v6032
        %7339 = vmatpush.bf16.msra.mxu0 %v6028
        %7340 = vmatpush.bf16.msra.mxu0 %v6024
        %7341 = vmatmul.bf16.gmra.mxu0 %v4275
        %v7342 = vpop.f32.mrf.mxu0
        %v7343 = vadd.f32 %v7320, %v7342
        %v7344 = vpop.f32.mrf.mxu0
        %v7345 = vadd.f32 %v7322, %v7344
        %7346 = vmatmul.bf16.gmra.mxu0 %v4279
        %v7347 = vpop.f32.mrf.mxu0
        %v7348 = vadd.f32 %v7325, %v7347
        %v7349 = vpop.f32.mrf.mxu0
        %v7350 = vadd.f32 %v7327, %v7349
        %7351 = vmatmul.bf16.gmra.mxu0 %v4283
        %v7352 = vpop.f32.mrf.mxu0
        %v7353 = vadd.f32 %v7330, %v7352
        %v7354 = vpop.f32.mrf.mxu0
        %7355 = vdwg.mxu0
        %7356 = vmatpush.bf16.msra.mxu0 %v6084
        %7357 = vmatpush.bf16.msra.mxu0 %v6080
        %7358 = vmatpush.bf16.msra.mxu0 %v6076
        %7359 = vmatpush.bf16.msra.mxu0 %v6072
        %7360 = vmatpush.bf16.msra.mxu0 %v6068
        %7361 = vmatpush.bf16.msra.mxu0 %v6064
        %7362 = vmatpush.bf16.msra.mxu0 %v6060
        %7363 = vmatpush.bf16.msra.mxu0 %v6056
        %7364 = vmatmul.bf16.gmra.mxu0 %v4276
        %v7365 = vpop.f32.mrf.mxu0
        %v7366 = vadd.f32 %v7343, %v7365
        %v7367 = vpop.f32.mrf.mxu0
        %v7368 = vadd.f32 %v7345, %v7367
        %7369 = vmatmul.bf16.gmra.mxu0 %v4280
        %v7370 = vpop.f32.mrf.mxu0
        %v7371 = vadd.f32 %v7348, %v7370
        %v7372 = vpop.f32.mrf.mxu0
        %v7373 = vadd.f32 %v7350, %v7372
        %7374 = vmatmul.bf16.gmra.mxu0 %v4284
        %v7375 = vpop.f32.mrf.mxu0
        %v7376 = vadd.f32 %v7353, %v7375
        %v7377 = vpop.f32.mrf.mxu0
        %7378 = vdwg.mxu0
        %7379 = vmatpush.bf16.msra.mxu0 %v6116
        %7380 = vmatpush.bf16.msra.mxu0 %v6112
        %7381 = vmatpush.bf16.msra.mxu0 %v6108
        %7382 = vmatpush.bf16.msra.mxu0 %v6104
        %7383 = vmatpush.bf16.msra.mxu0 %v6100
        %7384 = vmatpush.bf16.msra.mxu0 %v6096
        %7385 = vmatpush.bf16.msra.mxu0 %v6092
        %7386 = vmatpush.bf16.msra.mxu0 %v6088
        %7387 = vmatmul.bf16.gmra.mxu0 %v4277
        %v7388 = vpop.f32.mrf.mxu0
        %v7389 = vadd.f32 %v7366, %v7388
        %v7390 = vpop.f32.mrf.mxu0
        %v7391 = vadd.f32 %v7368, %v7390
        %7392 = vmatmul.bf16.gmra.mxu0 %v4281
        %v7393 = vpop.f32.mrf.mxu0
        %v7394 = vadd.f32 %v7371, %v7393
        %v7395 = vpop.f32.mrf.mxu0
        %v7396 = vadd.f32 %v7373, %v7395
        %7397 = vmatmul.bf16.gmra.mxu0 %v4285
        %v7398 = vpop.f32.mrf.mxu0
        %v7399 = vadd.f32 %v7376, %v7398
        %v7400 = vpop.f32.mrf.mxu0
        %7401 = vdwg.mxu0
        %7402 = vmatpush.bf16.msra.mxu0 %v6148
        %7403 = vmatpush.bf16.msra.mxu0 %v6144
        %7404 = vmatpush.bf16.msra.mxu0 %v6140
        %7405 = vmatpush.bf16.msra.mxu0 %v6136
        %7406 = vmatpush.bf16.msra.mxu0 %v6132
        %7407 = vmatpush.bf16.msra.mxu0 %v6128
        %7408 = vmatpush.bf16.msra.mxu0 %v6124
        %7409 = vmatpush.bf16.msra.mxu0 %v6120
        %7410 = vmatmul.bf16.gmra.mxu0 %v4319
        %v7411 = vpop.f32.mrf.mxu0
        %v7412 = vadd.f32 %v7389, %v7411
        %v7413 = vpop.f32.mrf.mxu0
        %v7414 = vadd.f32 %v7391, %v7413
        %7415 = vmatmul.bf16.gmra.mxu0 %v4363
        %v7416 = vpop.f32.mrf.mxu0
        %v7417 = vadd.f32 %v7394, %v7416
        %v7418 = vpop.f32.mrf.mxu0
        %v7419 = vadd.f32 %v7396, %v7418
        %7420 = vmatmul.bf16.gmra.mxu0 %v4390
        %v7421 = vpop.f32.mrf.mxu0
        %v7422 = vadd.f32 %v7399, %v7421
        %v7423 = vpop.f32.mrf.mxu0
        %7424 = vdwg.mxu0
        %7425 = vmatpush.bf16.msra.mxu0 %v6180
        %7426 = vmatpush.bf16.msra.mxu0 %v6176
        %7427 = vmatpush.bf16.msra.mxu0 %v6172
        %7428 = vmatpush.bf16.msra.mxu0 %v6168
        %7429 = vmatpush.bf16.msra.mxu0 %v6164
        %7430 = vmatpush.bf16.msra.mxu0 %v6160
        %7431 = vmatpush.bf16.msra.mxu0 %v6156
        %7432 = vmatpush.bf16.msra.mxu0 %v6152
        %7433 = vmatmul.bf16.gmra.mxu0 %v4331
        %v7434 = vpop.f32.mrf.mxu0
        %v7435 = vadd.f32 %v7412, %v7434
        %v7436 = vpop.f32.mrf.mxu0
        %v7437 = vadd.f32 %v7414, %v7436
        %7438 = vmatmul.bf16.gmra.mxu0 %v4371
        %v7439 = vpop.f32.mrf.mxu0
        %v7440 = vadd.f32 %v7417, %v7439
        %v7441 = vpop.f32.mrf.mxu0
        %v7442 = vadd.f32 %v7419, %v7441
        %7443 = vmatmul.bf16.gmra.mxu0 %v4393
        %v7444 = vpop.f32.mrf.mxu0
        %v7445 = vadd.f32 %v7422, %v7444
        %v7446 = vpop.f32.mrf.mxu0
        %7447 = vdwg.mxu0
        %7448 = vmatpush.bf16.msra.mxu0 %v6212
        %7449 = vmatpush.bf16.msra.mxu0 %v6208
        %7450 = vmatpush.bf16.msra.mxu0 %v6204
        %7451 = vmatpush.bf16.msra.mxu0 %v6200
        %7452 = vmatpush.bf16.msra.mxu0 %v6196
        %7453 = vmatpush.bf16.msra.mxu0 %v6192
        %7454 = vmatpush.bf16.msra.mxu0 %v6188
        %7455 = vmatpush.bf16.msra.mxu0 %v6184
        %7456 = vmatmul.bf16.gmra.mxu0 %v4343
        %v7457 = vpop.f32.mrf.mxu0
        %v7458 = vadd.f32 %v7435, %v7457
        %v7459 = vpop.f32.mrf.mxu0
        %v7460 = vadd.f32 %v7437, %v7459
        %7461 = vmatmul.bf16.gmra.mxu0 %v4379
        %v7462 = vpop.f32.mrf.mxu0
        %v7463 = vadd.f32 %v7440, %v7462
        %v7464 = vpop.f32.mrf.mxu0
        %v7465 = vadd.f32 %v7442, %v7464
        %7466 = vmatmul.bf16.gmra.mxu0 %v4396
        %v7467 = vpop.f32.mrf.mxu0
        %v7468 = vadd.f32 %v7445, %v7467
        %v7469 = vpop.f32.mrf.mxu0
        %7470 = vdwg.mxu0
        %7471 = vmatpush.bf16.msra.mxu0 %v6244
        %7472 = vmatpush.bf16.msra.mxu0 %v6240
        %7473 = vmatpush.bf16.msra.mxu0 %v6236
        %7474 = vmatpush.bf16.msra.mxu0 %v6232
        %7475 = vmatpush.bf16.msra.mxu0 %v6228
        %7476 = vmatpush.bf16.msra.mxu0 %v6224
        %7477 = vmatpush.bf16.msra.mxu0 %v6220
        %7478 = vmatpush.bf16.msra.mxu0 %v6216
        %7479 = vmatmul.bf16.gmra.mxu0 %v4355
        %v7480 = vpop.f32.mrf.mxu0
        %v7481 = vadd.f32 %v7458, %v7480
        %v7482 = vpop.f32.mrf.mxu0
        %v7483 = vadd.f32 %v7460, %v7482
        %7484 = vmatmul.bf16.gmra.mxu0 %v4387
        %v7485 = vpop.f32.mrf.mxu0
        %v7486 = vadd.f32 %v7463, %v7485
        %v7487 = vpop.f32.mrf.mxu0
        %v7488 = vadd.f32 %v7465, %v7487
        %7489 = vmatmul.bf16.gmra.mxu0 %v4399
        %v7490 = vpop.f32.mrf.mxu0
        %v7491 = vadd.f32 %v7468, %v7490
        %v7492 = vpop.f32.mrf.mxu0
        %7493 = vdwg.mxu0
        %7494 = vmatpush.bf16.msra.mxu0 %v6276
        %7495 = vmatpush.bf16.msra.mxu0 %v6272
        %7496 = vmatpush.bf16.msra.mxu0 %v6268
        %7497 = vmatpush.bf16.msra.mxu0 %v6264
        %7498 = vmatpush.bf16.msra.mxu0 %v6260
        %7499 = vmatpush.bf16.msra.mxu0 %v6256
        %7500 = vmatpush.bf16.msra.mxu0 %v6252
        %7501 = vmatpush.bf16.msra.mxu0 %v6248
        %7502 = vmatmul.bf16.gmra.mxu0 %v4424
        %v7503 = vpop.f32.mrf.mxu0
        %v7504 = vadd.f32 %v7481, %v7503
        %v7505 = vpop.f32.mrf.mxu0
        %v7506 = vadd.f32 %v7483, %v7505
        %7507 = vmatmul.bf16.gmra.mxu0 %v4435
        %v7508 = vpop.f32.mrf.mxu0
        %v7509 = vadd.f32 %v7486, %v7508
        %v7510 = vpop.f32.mrf.mxu0
        %v7511 = vadd.f32 %v7488, %v7510
        %7512 = vmatmul.bf16.gmra.mxu0 %v4434
        %v7513 = vpop.f32.mrf.mxu0
        %v7514 = vadd.f32 %v7491, %v7513
        %v7515 = vpop.f32.mrf.mxu0
        %7516 = vdwg.mxu0
        %7517 = vmatpush.bf16.msra.mxu0 %v6308
        %7518 = vmatpush.bf16.msra.mxu0 %v6304
        %7519 = vmatpush.bf16.msra.mxu0 %v6300
        %7520 = vmatpush.bf16.msra.mxu0 %v6296
        %7521 = vmatpush.bf16.msra.mxu0 %v6292
        %7522 = vmatpush.bf16.msra.mxu0 %v6288
        %7523 = vmatpush.bf16.msra.mxu0 %v6284
        %7524 = vmatpush.bf16.msra.mxu0 %v6280
        %7525 = vmatmul.bf16.gmra.mxu0 %v4427
        %v7526 = vpop.f32.mrf.mxu0
        %v7527 = vadd.f32 %v7504, %v7526
        %v7528 = vpop.f32.mrf.mxu0
        %v7529 = vadd.f32 %v7506, %v7528
        %7530 = vmatmul.bf16.gmra.mxu0 %v4437
        %v7531 = vpop.f32.mrf.mxu0
        %v7532 = vadd.f32 %v7509, %v7531
        %v7533 = vpop.f32.mrf.mxu0
        %v7534 = vadd.f32 %v7511, %v7533
        %7535 = vmatmul.bf16.gmra.mxu0 %v4436
        %v7536 = vpop.f32.mrf.mxu0
        %v7537 = vadd.f32 %v7514, %v7536
        %v7538 = vpop.f32.mrf.mxu0
        %7539 = vdwg.mxu0
        %7540 = vmatpush.bf16.msra.mxu0 %v6340
        %7541 = vmatpush.bf16.msra.mxu0 %v6336
        %7542 = vmatpush.bf16.msra.mxu0 %v6332
        %7543 = vmatpush.bf16.msra.mxu0 %v6328
        %7544 = vmatpush.bf16.msra.mxu0 %v6324
        %7545 = vmatpush.bf16.msra.mxu0 %v6320
        %7546 = vmatpush.bf16.msra.mxu0 %v6316
        %7547 = vmatpush.bf16.msra.mxu0 %v6312
        %7548 = vmatmul.bf16.gmra.mxu0 %v4430
        %v7549 = vpop.f32.mrf.mxu0
        %v7550 = vadd.f32 %v7527, %v7549
        %v7551 = vpop.f32.mrf.mxu0
        %v7552 = vadd.f32 %v7529, %v7551
        %7553 = vmatmul.bf16.gmra.mxu0 %v4439
        %v7554 = vpop.f32.mrf.mxu0
        %v7555 = vadd.f32 %v7532, %v7554
        %v7556 = vpop.f32.mrf.mxu0
        %v7557 = vadd.f32 %v7534, %v7556
        %7558 = vmatmul.bf16.gmra.mxu0 %v4438
        %v7559 = vpop.f32.mrf.mxu0
        %v7560 = vadd.f32 %v7537, %v7559
        %v7561 = vpop.f32.mrf.mxu0
        %7562 = vdwg.mxu0
        %7563 = vmatpush.bf16.msra.mxu0 %v6372
        %7564 = vmatpush.bf16.msra.mxu0 %v6368
        %7565 = vmatpush.bf16.msra.mxu0 %v6364
        %7566 = vmatpush.bf16.msra.mxu0 %v6360
        %7567 = vmatpush.bf16.msra.mxu0 %v6356
        %7568 = vmatpush.bf16.msra.mxu0 %v6352
        %7569 = vmatpush.bf16.msra.mxu0 %v6348
        %7570 = vmatpush.bf16.msra.mxu0 %v6344
        %7571 = vmatmul.bf16.gmra.mxu0 %v4433
        %v7572 = vpop.f32.mrf.mxu0
        %v7573 = vadd.f32 %v7550, %v7572
        %v7574 = vpop.f32.mrf.mxu0
        %v7575 = vadd.f32 %v7552, %v7574
        %7576 = vmatmul.bf16.gmra.mxu0 %v4441
        %v7577 = vpop.f32.mrf.mxu0
        %v7578 = vadd.f32 %v7555, %v7577
        %v7579 = vpop.f32.mrf.mxu0
        %v7580 = vadd.f32 %v7557, %v7579
        %7581 = vmatmul.bf16.gmra.mxu0 %v4440
        %v7582 = vpop.f32.mrf.mxu0
        %v7583 = vadd.f32 %v7560, %v7582
        %v7584 = vpop.f32.mrf.mxu0
        %7585 = vdwg.mxu0
        %7586 = vmatpush.bf16.msra.mxu0 %v6021
        %7587 = vmatpush.bf16.msra.mxu0 %v6017
        %7588 = vmatpush.bf16.msra.mxu0 %v6013
        %7589 = vmatpush.bf16.msra.mxu0 %v6009
        %7590 = vmatpush.bf16.msra.mxu0 %v6005
        %7591 = vmatpush.bf16.msra.mxu0 %v6001
        %7592 = vmatpush.bf16.msra.mxu0 %v5997
        %7593 = vmatpush.bf16.msra.mxu0 %v5993
        %7594 = vmatmul.bf16.gmra.mxu0 %v4274
        %v7595 = vpop.f32.mrf.mxu0
        %v7596 = vadd.f32 0.0, %v7595
        %v7597 = vpop.f32.mrf.mxu0
        %v7598 = vadd.f32 0.0, %v7597
        %7599 = vmatmul.bf16.gmra.mxu0 %v4278
        %v7600 = vpop.f32.mrf.mxu0
        %v7601 = vadd.f32 0.0, %v7600
        %v7602 = vpop.f32.mrf.mxu0
        %v7603 = vadd.f32 0.0, %v7602
        %7604 = vmatmul.bf16.gmra.mxu0 %v4282
        %v7605 = vpop.f32.mrf.mxu0
        %v7606 = vadd.f32 0.0, %v7605
        %v7607 = vpop.f32.mrf.mxu0
        %7608 = vdwg.mxu0
        %7609 = vmatpush.bf16.msra.mxu0 %v6053
        %7610 = vmatpush.bf16.msra.mxu0 %v6049
        %7611 = vmatpush.bf16.msra.mxu0 %v6045
        %7612 = vmatpush.bf16.msra.mxu0 %v6041
        %7613 = vmatpush.bf16.msra.mxu0 %v6037
        %7614 = vmatpush.bf16.msra.mxu0 %v6033
        %7615 = vmatpush.bf16.msra.mxu0 %v6029
        %7616 = vmatpush.bf16.msra.mxu0 %v6025
        %7617 = vmatmul.bf16.gmra.mxu0 %v4275
        %v7618 = vpop.f32.mrf.mxu0
        %v7619 = vadd.f32 %v7596, %v7618
        %v7620 = vpop.f32.mrf.mxu0
        %v7621 = vadd.f32 %v7598, %v7620
        %7622 = vmatmul.bf16.gmra.mxu0 %v4279
        %v7623 = vpop.f32.mrf.mxu0
        %v7624 = vadd.f32 %v7601, %v7623
        %v7625 = vpop.f32.mrf.mxu0
        %v7626 = vadd.f32 %v7603, %v7625
        %7627 = vmatmul.bf16.gmra.mxu0 %v4283
        %v7628 = vpop.f32.mrf.mxu0
        %v7629 = vadd.f32 %v7606, %v7628
        %v7630 = vpop.f32.mrf.mxu0
        %7631 = vdwg.mxu0
        %7632 = vmatpush.bf16.msra.mxu0 %v6085
        %7633 = vmatpush.bf16.msra.mxu0 %v6081
        %7634 = vmatpush.bf16.msra.mxu0 %v6077
        %7635 = vmatpush.bf16.msra.mxu0 %v6073
        %7636 = vmatpush.bf16.msra.mxu0 %v6069
        %7637 = vmatpush.bf16.msra.mxu0 %v6065
        %7638 = vmatpush.bf16.msra.mxu0 %v6061
        %7639 = vmatpush.bf16.msra.mxu0 %v6057
        %7640 = vmatmul.bf16.gmra.mxu0 %v4276
        %v7641 = vpop.f32.mrf.mxu0
        %v7642 = vadd.f32 %v7619, %v7641
        %v7643 = vpop.f32.mrf.mxu0
        %v7644 = vadd.f32 %v7621, %v7643
        %7645 = vmatmul.bf16.gmra.mxu0 %v4280
        %v7646 = vpop.f32.mrf.mxu0
        %v7647 = vadd.f32 %v7624, %v7646
        %v7648 = vpop.f32.mrf.mxu0
        %v7649 = vadd.f32 %v7626, %v7648
        %7650 = vmatmul.bf16.gmra.mxu0 %v4284
        %v7651 = vpop.f32.mrf.mxu0
        %v7652 = vadd.f32 %v7629, %v7651
        %v7653 = vpop.f32.mrf.mxu0
        %7654 = vdwg.mxu0
        %7655 = vmatpush.bf16.msra.mxu0 %v6117
        %7656 = vmatpush.bf16.msra.mxu0 %v6113
        %7657 = vmatpush.bf16.msra.mxu0 %v6109
        %7658 = vmatpush.bf16.msra.mxu0 %v6105
        %7659 = vmatpush.bf16.msra.mxu0 %v6101
        %7660 = vmatpush.bf16.msra.mxu0 %v6097
        %7661 = vmatpush.bf16.msra.mxu0 %v6093
        %7662 = vmatpush.bf16.msra.mxu0 %v6089
        %7663 = vmatmul.bf16.gmra.mxu0 %v4277
        %v7664 = vpop.f32.mrf.mxu0
        %v7665 = vadd.f32 %v7642, %v7664
        %v7666 = vpop.f32.mrf.mxu0
        %v7667 = vadd.f32 %v7644, %v7666
        %7668 = vmatmul.bf16.gmra.mxu0 %v4281
        %v7669 = vpop.f32.mrf.mxu0
        %v7670 = vadd.f32 %v7647, %v7669
        %v7671 = vpop.f32.mrf.mxu0
        %v7672 = vadd.f32 %v7649, %v7671
        %7673 = vmatmul.bf16.gmra.mxu0 %v4285
        %v7674 = vpop.f32.mrf.mxu0
        %v7675 = vadd.f32 %v7652, %v7674
        %v7676 = vpop.f32.mrf.mxu0
        %7677 = vdwg.mxu0
        %7678 = vmatpush.bf16.msra.mxu0 %v6149
        %7679 = vmatpush.bf16.msra.mxu0 %v6145
        %7680 = vmatpush.bf16.msra.mxu0 %v6141
        %7681 = vmatpush.bf16.msra.mxu0 %v6137
        %7682 = vmatpush.bf16.msra.mxu0 %v6133
        %7683 = vmatpush.bf16.msra.mxu0 %v6129
        %7684 = vmatpush.bf16.msra.mxu0 %v6125
        %7685 = vmatpush.bf16.msra.mxu0 %v6121
        %7686 = vmatmul.bf16.gmra.mxu0 %v4319
        %v7687 = vpop.f32.mrf.mxu0
        %v7688 = vadd.f32 %v7665, %v7687
        %v7689 = vpop.f32.mrf.mxu0
        %v7690 = vadd.f32 %v7667, %v7689
        %7691 = vmatmul.bf16.gmra.mxu0 %v4363
        %v7692 = vpop.f32.mrf.mxu0
        %v7693 = vadd.f32 %v7670, %v7692
        %v7694 = vpop.f32.mrf.mxu0
        %v7695 = vadd.f32 %v7672, %v7694
        %7696 = vmatmul.bf16.gmra.mxu0 %v4390
        %v7697 = vpop.f32.mrf.mxu0
        %v7698 = vadd.f32 %v7675, %v7697
        %v7699 = vpop.f32.mrf.mxu0
        %7700 = vdwg.mxu0
        %7701 = vmatpush.bf16.msra.mxu0 %v6181
        %7702 = vmatpush.bf16.msra.mxu0 %v6177
        %7703 = vmatpush.bf16.msra.mxu0 %v6173
        %7704 = vmatpush.bf16.msra.mxu0 %v6169
        %7705 = vmatpush.bf16.msra.mxu0 %v6165
        %7706 = vmatpush.bf16.msra.mxu0 %v6161
        %7707 = vmatpush.bf16.msra.mxu0 %v6157
        %7708 = vmatpush.bf16.msra.mxu0 %v6153
        %7709 = vmatmul.bf16.gmra.mxu0 %v4331
        %v7710 = vpop.f32.mrf.mxu0
        %v7711 = vadd.f32 %v7688, %v7710
        %v7712 = vpop.f32.mrf.mxu0
        %v7713 = vadd.f32 %v7690, %v7712
        %7714 = vmatmul.bf16.gmra.mxu0 %v4371
        %v7715 = vpop.f32.mrf.mxu0
        %v7716 = vadd.f32 %v7693, %v7715
        %v7717 = vpop.f32.mrf.mxu0
        %v7718 = vadd.f32 %v7695, %v7717
        %7719 = vmatmul.bf16.gmra.mxu0 %v4393
        %v7720 = vpop.f32.mrf.mxu0
        %v7721 = vadd.f32 %v7698, %v7720
        %v7722 = vpop.f32.mrf.mxu0
        %7723 = vdwg.mxu0
        %7724 = vmatpush.bf16.msra.mxu0 %v6213
        %7725 = vmatpush.bf16.msra.mxu0 %v6209
        %7726 = vmatpush.bf16.msra.mxu0 %v6205
        %7727 = vmatpush.bf16.msra.mxu0 %v6201
        %7728 = vmatpush.bf16.msra.mxu0 %v6197
        %7729 = vmatpush.bf16.msra.mxu0 %v6193
        %7730 = vmatpush.bf16.msra.mxu0 %v6189
        %7731 = vmatpush.bf16.msra.mxu0 %v6185
        %7732 = vmatmul.bf16.gmra.mxu0 %v4343
        %v7733 = vpop.f32.mrf.mxu0
        %v7734 = vadd.f32 %v7711, %v7733
        %v7735 = vpop.f32.mrf.mxu0
        %v7736 = vadd.f32 %v7713, %v7735
        %7737 = vmatmul.bf16.gmra.mxu0 %v4379
        %v7738 = vpop.f32.mrf.mxu0
        %v7739 = vadd.f32 %v7716, %v7738
        %v7740 = vpop.f32.mrf.mxu0
        %v7741 = vadd.f32 %v7718, %v7740
        %7742 = vmatmul.bf16.gmra.mxu0 %v4396
        %v7743 = vpop.f32.mrf.mxu0
        %v7744 = vadd.f32 %v7721, %v7743
        %v7745 = vpop.f32.mrf.mxu0
        %7746 = vdwg.mxu0
        %7747 = vmatpush.bf16.msra.mxu0 %v6245
        %7748 = vmatpush.bf16.msra.mxu0 %v6241
        %7749 = vmatpush.bf16.msra.mxu0 %v6237
        %7750 = vmatpush.bf16.msra.mxu0 %v6233
        %7751 = vmatpush.bf16.msra.mxu0 %v6229
        %7752 = vmatpush.bf16.msra.mxu0 %v6225
        %7753 = vmatpush.bf16.msra.mxu0 %v6221
        %7754 = vmatpush.bf16.msra.mxu0 %v6217
        %7755 = vmatmul.bf16.gmra.mxu0 %v4355
        %v7756 = vpop.f32.mrf.mxu0
        %v7757 = vadd.f32 %v7734, %v7756
        %v7758 = vpop.f32.mrf.mxu0
        %v7759 = vadd.f32 %v7736, %v7758
        %7760 = vmatmul.bf16.gmra.mxu0 %v4387
        %v7761 = vpop.f32.mrf.mxu0
        %v7762 = vadd.f32 %v7739, %v7761
        %v7763 = vpop.f32.mrf.mxu0
        %v7764 = vadd.f32 %v7741, %v7763
        %7765 = vmatmul.bf16.gmra.mxu0 %v4399
        %v7766 = vpop.f32.mrf.mxu0
        %v7767 = vadd.f32 %v7744, %v7766
        %v7768 = vpop.f32.mrf.mxu0
        %7769 = vdwg.mxu0
        %7770 = vmatpush.bf16.msra.mxu0 %v6277
        %7771 = vmatpush.bf16.msra.mxu0 %v6273
        %7772 = vmatpush.bf16.msra.mxu0 %v6269
        %7773 = vmatpush.bf16.msra.mxu0 %v6265
        %7774 = vmatpush.bf16.msra.mxu0 %v6261
        %7775 = vmatpush.bf16.msra.mxu0 %v6257
        %7776 = vmatpush.bf16.msra.mxu0 %v6253
        %7777 = vmatpush.bf16.msra.mxu0 %v6249
        %7778 = vmatmul.bf16.gmra.mxu0 %v4424
        %v7779 = vpop.f32.mrf.mxu0
        %v7780 = vadd.f32 %v7757, %v7779
        %v7781 = vpop.f32.mrf.mxu0
        %v7782 = vadd.f32 %v7759, %v7781
        %7783 = vmatmul.bf16.gmra.mxu0 %v4435
        %v7784 = vpop.f32.mrf.mxu0
        %v7785 = vadd.f32 %v7762, %v7784
        %v7786 = vpop.f32.mrf.mxu0
        %v7787 = vadd.f32 %v7764, %v7786
        %7788 = vmatmul.bf16.gmra.mxu0 %v4434
        %v7789 = vpop.f32.mrf.mxu0
        %v7790 = vadd.f32 %v7767, %v7789
        %v7791 = vpop.f32.mrf.mxu0
        %7792 = vdwg.mxu0
        %7793 = vmatpush.bf16.msra.mxu0 %v6309
        %7794 = vmatpush.bf16.msra.mxu0 %v6305
        %7795 = vmatpush.bf16.msra.mxu0 %v6301
        %7796 = vmatpush.bf16.msra.mxu0 %v6297
        %7797 = vmatpush.bf16.msra.mxu0 %v6293
        %7798 = vmatpush.bf16.msra.mxu0 %v6289
        %7799 = vmatpush.bf16.msra.mxu0 %v6285
        %7800 = vmatpush.bf16.msra.mxu0 %v6281
        %7801 = vmatmul.bf16.gmra.mxu0 %v4427
        %v7802 = vpop.f32.mrf.mxu0
        %v7803 = vadd.f32 %v7780, %v7802
        %v7804 = vpop.f32.mrf.mxu0
        %v7805 = vadd.f32 %v7782, %v7804
        %7806 = vmatmul.bf16.gmra.mxu0 %v4437
        %v7807 = vpop.f32.mrf.mxu0
        %v7808 = vadd.f32 %v7785, %v7807
        %v7809 = vpop.f32.mrf.mxu0
        %v7810 = vadd.f32 %v7787, %v7809
        %7811 = vmatmul.bf16.gmra.mxu0 %v4436
        %v7812 = vpop.f32.mrf.mxu0
        %v7813 = vadd.f32 %v7790, %v7812
        %v7814 = vpop.f32.mrf.mxu0
        %7815 = vdwg.mxu0
        %7816 = vmatpush.bf16.msra.mxu0 %v6341
        %7817 = vmatpush.bf16.msra.mxu0 %v6337
        %7818 = vmatpush.bf16.msra.mxu0 %v6333
        %7819 = vmatpush.bf16.msra.mxu0 %v6329
        %7820 = vmatpush.bf16.msra.mxu0 %v6325
        %7821 = vmatpush.bf16.msra.mxu0 %v6321
        %7822 = vmatpush.bf16.msra.mxu0 %v6317
        %7823 = vmatpush.bf16.msra.mxu0 %v6313
        %7824 = vmatmul.bf16.gmra.mxu0 %v4430
        %v7825 = vpop.f32.mrf.mxu0
        %v7826 = vadd.f32 %v7803, %v7825
        %v7827 = vpop.f32.mrf.mxu0
        %v7828 = vadd.f32 %v7805, %v7827
        %7829 = vmatmul.bf16.gmra.mxu0 %v4439
        %v7830 = vpop.f32.mrf.mxu0
        %v7831 = vadd.f32 %v7808, %v7830
        %v7832 = vpop.f32.mrf.mxu0
        %v7833 = vadd.f32 %v7810, %v7832
        %7834 = vmatmul.bf16.gmra.mxu0 %v4438
        %v7835 = vpop.f32.mrf.mxu0
        %v7836 = vadd.f32 %v7813, %v7835
        %v7837 = vpop.f32.mrf.mxu0
        %7838 = vdwg.mxu0
        %7839 = vmatpush.bf16.msra.mxu0 %v6373
        %7840 = vmatpush.bf16.msra.mxu0 %v6369
        %7841 = vmatpush.bf16.msra.mxu0 %v6365
        %7842 = vmatpush.bf16.msra.mxu0 %v6361
        %7843 = vmatpush.bf16.msra.mxu0 %v6357
        %7844 = vmatpush.bf16.msra.mxu0 %v6353
        %7845 = vmatpush.bf16.msra.mxu0 %v6349
        %7846 = vmatpush.bf16.msra.mxu0 %v6345
        %7847 = vmatmul.bf16.gmra.mxu0 %v4433
        %v7848 = vpop.f32.mrf.mxu0
        %v7849 = vadd.f32 %v7826, %v7848
        %v7850 = vpop.f32.mrf.mxu0
        %v7851 = vadd.f32 %v7828, %v7850
        %7852 = vmatmul.bf16.gmra.mxu0 %v4441
        %v7853 = vpop.f32.mrf.mxu0
        %v7854 = vadd.f32 %v7831, %v7853
        %v7855 = vpop.f32.mrf.mxu0
        %v7856 = vadd.f32 %v7833, %v7855
        %7857 = vmatmul.bf16.gmra.mxu0 %v4440
        %v7858 = vpop.f32.mrf.mxu0
        %v7859 = vadd.f32 %v7836, %v7858
        %v7860 = vpop.f32.mrf.mxu0
        %7861 = vdwg.mxu0
        %v7862 = vld [vmem:[#allocation11] sm:$0xf]
        %v7864 = vperm.slane %v7862, 0
        %v7865 = vperm.slane %v7862, 1
        %v7866 = vperm.slane %v7862, 2
        %v7867 = vperm.slane %v7862, 3
        %v7872 = vmul.f32 %v7021, %v7864
        %v7873 = vmul.f32 %v7297, %v7865
        %v7874 = vmul.f32 %v7573, %v7866
        %v7875 = vmul.f32 %v7849, %v7867
        %v7876 = vmul.f32 %v7023, %v7864
        %v7877 = vmul.f32 %v7299, %v7865
        %v7878 = vmul.f32 %v7575, %v7866
        %v7879 = vmul.f32 %v7851, %v7867
        %v7880 = vmul.f32 %v7026, %v7864
        %v7881 = vmul.f32 %v7302, %v7865
        %v7882 = vmul.f32 %v7578, %v7866
        %v7883 = vmul.f32 %v7854, %v7867
        %v7884 = vmul.f32 %v7028, %v7864
        %v7885 = vmul.f32 %v7304, %v7865
        %v7886 = vmul.f32 %v7580, %v7866
        %v7887 = vmul.f32 %v7856, %v7867
        %v7888 = vmul.f32 %v7031, %v7864
        %v7889 = vmul.f32 %v7307, %v7865
        %v7890 = vmul.f32 %v7583, %v7866
        %v7891 = vmul.f32 %v7859, %v7867
        %v7892 = vld [vmem:[#allocation12] sm:$0xf]
        %v7894 = vperm.slane %v7892, 0
        %v7895 = vperm.slane %v7892, 1
        %v7896 = vperm.slane %v7892, 2
        %v7897 = vperm.slane %v7892, 3
        %v7902 = vadd.f32 %v7872, %v7894
        %v7903 = vadd.f32 %v7873, %v7895
        %v7904 = vadd.f32 %v7874, %v7896
        %v7905 = vadd.f32 %v7875, %v7897
        %v7906 = vadd.f32 %v7876, %v7894
        %v7907 = vadd.f32 %v7877, %v7895
        %v7908 = vadd.f32 %v7878, %v7896
        %v7909 = vadd.f32 %v7879, %v7897
        %v7910 = vadd.f32 %v7880, %v7894
        %v7911 = vadd.f32 %v7881, %v7895
        %v7912 = vadd.f32 %v7882, %v7896
        %v7913 = vadd.f32 %v7883, %v7897
        %v7914 = vadd.f32 %v7884, %v7894
        %v7915 = vadd.f32 %v7885, %v7895
        %v7916 = vadd.f32 %v7886, %v7896
        %v7917 = vadd.f32 %v7887, %v7897
        %v7918 = vadd.f32 %v7888, %v7894
        %v7919 = vadd.f32 %v7889, %v7895
        %v7920 = vadd.f32 %v7890, %v7896
        %v7921 = vadd.f32 %v7891, %v7897
        %v7922 = vmax.f32 %v7902, 0.0
        %v7923 = vmax.f32 %v7903, 0.0
        %v7924 = vmax.f32 %v7904, 0.0
        %v7925 = vmax.f32 %v7905, 0.0
        %v7926 = vmax.f32 %v7906, 0.0
        %v7927 = vmax.f32 %v7907, 0.0
        %v7928 = vmax.f32 %v7908, 0.0
        %v7929 = vmax.f32 %v7909, 0.0
        %v7930 = vmax.f32 %v7910, 0.0
        %v7931 = vmax.f32 %v7911, 0.0
        %v7932 = vmax.f32 %v7912, 0.0
        %v7933 = vmax.f32 %v7913, 0.0
        %v7934 = vmax.f32 %v7914, 0.0
        %v7935 = vmax.f32 %v7915, 0.0
        %v7936 = vmax.f32 %v7916, 0.0
        %v7937 = vmax.f32 %v7917, 0.0
        %v7938 = vmax.f32 %v7918, 0.0
        %v7939 = vmax.f32 %v7919, 0.0
        %v7940 = vmax.f32 %v7920, 0.0
        %v7941 = vmax.f32 %v7921, 0.0
        %7942 = vst [vmem:[%s370] sm:$0xff] %v7922
        %7943 = vst [vmem:[%s370 + $0x8] sm:$0xff] %v7923
        %7944 = vst [vmem:[%s370 + $0x10] sm:$0xff] %v7924
        %7945 = vst [vmem:[%s370 + $0x18] sm:$0xff] %v7925
        %7946 = vst [vmem:[%s370 + $0x20] sm:$0xff] %v7926
        %7947 = vst [vmem:[%s370 + $0x28] sm:$0xff] %v7927
        %7948 = vst [vmem:[%s370 + $0x30] sm:$0xff] %v7928
        %7949 = vst [vmem:[%s370 + $0x38] sm:$0xff] %v7929
        %7950 = vst [vmem:[%s370 + $0x40] sm:$0xff] %v7930
        %7951 = vst [vmem:[%s370 + $0x48] sm:$0xff] %v7931
        %7952 = vst [vmem:[%s370 + $0x50] sm:$0xff] %v7932
        %7953 = vst [vmem:[%s370 + $0x58] sm:$0xff] %v7933
        %7954 = vst [vmem:[%s370 + $0x60] sm:$0xff] %v7934
        %7955 = vst [vmem:[%s370 + $0x68] sm:$0xff] %v7935
        %7956 = vst [vmem:[%s370 + $0x70] sm:$0xff] %v7936
        %7957 = vst [vmem:[%s370 + $0x78] sm:$0xff] %v7937
        %7958 = vst [vmem:[%s370 + $0x80] sm:$0x3] %v7938
        %7959 = vst [vmem:[%s370 + $0x88] sm:$0x3] %v7939
        %7960 = vst [vmem:[%s370 + $0x90] sm:$0x3] %v7940
        %7961 = vst [vmem:[%s370 + $0x98] sm:$0x3] %v7941
        %p7962 = scmp.lt.s32.totalorder %s22, 1
        %s7963 = scalar_select %p7962, %s22, 1
        %s7964 = smul.addr %s7963, 20
        %s7965 = smul.addr %s7964, 8
        %s7966 = scalar_lea.vmem %s7, %s7965
        // Predicated region
        $region73: #{_lambda_.1} parent=47 // pred_check
          %p7967 = pneg %p192
        $region74: #{_lambda_.1} parent=47 // pred_check_branch
          %7969 = sbr.rel (%p7967) target = $region76
        $region75: #{_lambda_.1} parent=47 // pred_region
          _
        $region76: #{_lambda_.1} parent=47 // pred_fallthru
          _
      $region48: #{_lambda_.1} parent=5 // pred_fallthru
        _
      %p7970 = scmp.le.s32.totalorder 2, %s17
      // Predicated region
      $region77: #{_lambda_.1} parent=5 // pred_check
        %p7971 = pneg %p7970
      $region78: #{_lambda_.1} parent=5 // pred_check_branch
        %7973 = sbr.rel (%p7971) target = $region80
      $region79: #{_lambda_.1} parent=5 // pred_region
        %s7974 = ssub.s32 %s17, 2
        // Predicated region
        $region81: #{_lambda_.1} parent=79 // pred_check
          %p7975 = pneg %p198
        $region82: #{_lambda_.1} parent=79 // pred_check_branch
          %7977 = sbr.rel (%p7975) target = $region84
        $region83: #{_lambda_.1} parent=79 // pred_region
          %p7978 = scmp.lt.s32.totalorder %s23, 1
          %s7979 = scalar_select %p7978, %s23, 1
          %s7980 = smul.addr %s7979, 20
          %s7981 = smul.addr %s7980, 8
          %s7982 = scalar_lea.vmem %s7, %s7981
        $region84: #{_lambda_.1} parent=79 // pred_fallthru
          _
      $region80: #{_lambda_.1} parent=5 // pred_fallthru
        _
    $region6: #{_lambda_.1} parent=1 // loop_footer
      %s21 = sadd.s32 1, %s17
    $region7: #{_lambda_.1} parent=1 // loop_footer_branch
      %16 = sbr.rel target = $region3
    $region8: #{_lambda_.1} parent=1 // loop_exit
      _
    %7983 = vsyncpa [#allocation5], 1
    %s7984 = scalar_lea.sflag [#allocation5], 1
    %7985 = vsyncpa %s7984, 1
    %7986 = vsyncpa [#allocation7], 1
    %7987 = vsyncpa [#allocation10], 1
    %7988 = vsyncpa [#allocation13], 1

</llo_original>
